<compile_context>
chip_gen: v6e
topology: v6e:2x2x1
jax: 0.10.0
libtpu: 0.0.40
codegen_flags: <defaults>
</compile_context>

<pallas_src>
import functools

import numpy as np
import jax
import jax.numpy as jnp
from jax.experimental import pallas as pl
from jax.experimental.pallas import tpu as pltpu

# MXU operand dtype for the conv matmuls (accumulation is always f32).
_MXU_DTYPE = jnp.bfloat16


# ----------------------------------------------------------------------------
# In-kernel helpers (pure jnp on values/refs; no reshapes, pads or concats)
# ----------------------------------------------------------------------------
def _conv_taps(x, b_ref, s_ref):
    """Banded-matmul convolution accumulator.

    x:     (H, Win*Cin) float32 activation, channel-fastest row layout.
    b_ref: (KH, Win*Cin, Wout*Cout) lowered horizontal-tap matrices (bf16).
    s_ref: (KH-1, H, H) 0/1 row-shift matrices for the vertical taps (f32).
    Returns the pre-affine accumulator (H, Wout*Cout) in float32.
    """
    kh_total = b_ref.shape[0]
    pad = (kh_total - 1) // 2
    xb = x.astype(_MXU_DTYPE)
    acc = None
    si = 0
    for kh in range(kh_total):
        t = jnp.dot(xb, b_ref[kh], preferred_element_type=jnp.float32)
        if kh != pad:                       # vertical shift (zero-padded rows)
            t = jnp.dot(s_ref[si], t, preferred_element_type=jnp.float32)
            si += 1
        acc = t if acc is None else acc + t
    return acc


def _affine_act(acc, scale_ref, shift_ref, relu=True):
    """Folded eval-mode BatchRenorm (per-channel affine, pre-tiled) + ReLU."""
    y = acc * scale_ref[...] + shift_ref[...]
    return jnp.maximum(y, 0.0) if relu else y


def _conv(x, d, relu=True):
    return _affine_act(_conv_taps(x, d["B"], d["S"]), d["scale"], d["shift"], relu)


def _upsample(x, up):
    """Separable bilinear (align_corners=True): y = Mh @ (x @ kron(Mw^T, I_C))."""
    t = jnp.dot(x, up["Wc"][...], preferred_element_type=jnp.float32)
    return jnp.dot(up["Mh"][...], t, preferred_element_type=jnp.float32)


def _unet_kernel(treedef, n_feats, *refs):
    feat_refs = refs[:n_feats]
    img_ref = refs[n_feats]
    param_refs = refs[n_feats + 1:-1]
    o_ref = refs[-1]
    prm = jax.tree_util.tree_unflatten(treedef, param_refs)

    img = img_ref[0].astype(jnp.float32)

    x = None
    for i, st in enumerate(prm["stages"]):
        f = feat_refs[i][0].astype(jnp.float32)        # (h_i, w_i * C_i)
        y = _conv(f, st["s1"])
        y = _conv(y, st["s2"])
        x = y if i == 0 else x + y                     # fused skip-connection add
        x = _upsample(x, st["up"])
        x = _conv(x, st["u1"])
        x = _conv(x, st["u2"])

    fin = prm["final"]
    # final conv #1 on cat((image, x), channel): two accumulated banded groups.
    acc = _conv_taps(x, fin["c1x"]["B"], fin["c1x"]["S"])
    acc = acc + _conv_taps(img, fin["c1i"]["B"], fin["c1i"]["S"])
    x = _affine_act(acc, fin["c1_scale"], fin["c1_shift"])
    x = _conv(x, fin["c2"])
    # final 7x7 conv (bias, no BRN/ReLU), channel-major output lanes: (H, 2*W).
    logits = _conv_taps(x, fin["c3"]["B"], fin["c3"]["S"]) + fin["c3_bias"][...]

    w_sp = o_ref.shape[3]
    diff = logits[:, w_sp:] - logits[:, :w_sp]         # logit(ch1) - logit(ch0)
    p1 = 1.0 / (1.0 + jnp.exp(-diff))                  # 2-class softmax == sigmoid
    o_ref[0, 0] = (1.0 - p1).astype(o_ref.dtype)
    o_ref[0, 1] = p1.astype(o_ref.dtype)


# ----------------------------------------------------------------------------
# Host-side lowering of conv / upsample parameters to the kernel layout
# ----------------------------------------------------------------------------
def _lower_conv(w_hwio, h_sp, w_sp, pad, channel_major_out=False):
    """Lower a KHxKW conv (HWIO weights) acting on a (h_sp, w_sp*Cin) layout."""
    w = np.asarray(w_hwio, np.float32)
    kh_total, kw_total, cin, cout = w.shape
    n_out = cout * w_sp if channel_major_out else w_sp * cout
    bmats = np.zeros((kh_total, w_sp * cin, n_out), np.float32)
    for kh in range(kh_total):
        for jo in range(w_sp):
            for kw in range(kw_total):
                ji = jo + kw - pad
                if not (0 <= ji < w_sp):
                    continue                 # horizontal zero padding folded away
                if channel_major_out:
                    for co in range(cout):
                        bmats[kh, ji * cin:(ji + 1) * cin, co * w_sp + jo] = w[kh, kw, :, co]
                else:
                    bmats[kh, ji * cin:(ji + 1) * cin, jo * cout:(jo + 1) * cout] = w[kh, kw]
    smats = np.zeros((kh_total - 1, h_sp, h_sp), np.float32)
    si = 0
    for kh in range(kh_total):
        d = kh - pad
        if d == 0:
            continue
        for i in range(h_sp):
            if 0 <= i + d < h_sp:            # vertical zero padding folded away
                smats[si, i, i + d] = 1.0
        si += 1
    return jnp.asarray(bmats, _MXU_DTYPE), jnp.asarray(smats, jnp.float32)


def _tile_row(v, w_sp):
    v = np.asarray(v, np.float32)
    return jnp.asarray(np.tile(v, w_sp).reshape(1, w_sp * v.shape[0]))


def _conv_desc(w_hwio, scale, shift, h_sp, w_sp, pad):
    bmats, smats = _lower_conv(w_hwio, h_sp, w_sp, pad)
    return {"B": bmats, "S": smats,
            "scale": _tile_row(scale, w_sp), "shift": _tile_row(shift, w_sp)}


def _bilinear_matrix(n_in, n_out):
    """1-D interpolation matrix, align_corners=True (nn.UpsamplingBilinear2d)."""
    A = np.zeros((n_out, n_in), np.float32)
    if n_out == 1 or n_in == 1:
        A[:, 0] = 1.0
        return A
    for o in range(n_out):
        src = o * (n_in - 1) / (n_out - 1)
        lo = min(int(np.floor(src)), n_in - 1)
        f = src - lo
        A[o, lo] += 1.0 - f
        if f > 0.0:
            A[o, min(lo + 1, n_in - 1)] += f
    return A


def _upsample_desc(h_in, w_in, c, scale):
    mh = _bilinear_matrix(h_in, h_in * scale)                   # (Hout, Hin)
    mw = _bilinear_matrix(w_in, w_in * scale)                   # (Wout, Win)
    wc = np.kron(mw.T, np.eye(c, dtype=np.float32))             # (Win*C, Wout*C)
    return {"Mh": jnp.asarray(mh), "Wc": jnp.asarray(wc)}


# ----------------------------------------------------------------------------
# Deterministic parameter construction (mirrors UNetComplex.__init__, eval mode)
# ----------------------------------------------------------------------------
class Cfg:
    strides = [4, 2]
    feature_channel = [16, 8]
    out_channel = 8


def _kaiming_conv(key, kh, kw, cin, cout):
    # kaiming_normal_(mode='fan_out', nonlinearity='relu'): std = sqrt(2/(cout*kh*kw))
    std = np.sqrt(2.0 / (cout * kh * kw))
    return jax.random.normal(key, (kh, kw, cin, cout), jnp.float32) * std


def _brn_affine(key, c, eps=1e-5):
    k1, k2, k3, k4 = jax.random.split(key, 4)
    weight = 1.0 + 0.1 * jax.random.normal(k1, (c,), jnp.float32)
    bias = 0.1 * jax.random.normal(k2, (c,), jnp.float32)
    rmean = 0.1 * jax.random.normal(k3, (c,), jnp.float32)
    rvar = 1.0 + 0.1 * jax.random.uniform(k4, (c,), jnp.float32)
    scale = weight / jnp.sqrt(rvar + eps)          # eval-mode BatchRenorm fold
    shift = bias - rmean * scale
    return scale, shift


def build_params(cfg, key):
    keys = iter(jax.random.split(key, 64))
    stages = []
    outc = None
    for i in range(len(cfg.strides)):
        cur = cfg.feature_channel[i]
        outc = (cfg.feature_channel[i + 1] if i + 1 < len(cfg.feature_channel)
                else cfg.out_channel)
        scale_factor = (cfg.strides[i] // cfg.strides[i + 1]
                        if i + 1 < len(cfg.strides) else cfg.strides[i])
        s = {"scale_factor": scale_factor}
        s["skip_w1"] = _kaiming_conv(next(keys), 3, 3, cur, cur)
        s["skip_scale1"], s["skip_shift1"] = _brn_affine(next(keys), cur)
        s["skip_w2"] = _kaiming_conv(next(keys), 3, 3, cur, cur)
        s["skip_scale2"], s["skip_shift2"] = _brn_affine(next(keys), cur)
        s["up_w1"] = _kaiming_conv(next(keys), 3, 3, cur, outc)
        s["up_scale1"], s["up_shift1"] = _brn_affine(next(keys), outc)
        s["up_w2"] = _kaiming_conv(next(keys), 3, 3, outc, outc)
        s["up_scale2"], s["up_shift2"] = _brn_affine(next(keys), outc)
        stages.append(s)

    final = {}
    final["w1"] = _kaiming_conv(next(keys), 3, 3, outc + 3, outc)
    final["scale1"], final["shift1"] = _brn_affine(next(keys), outc)
    final["w2"] = _kaiming_conv(next(keys), 3, 3, outc, outc // 2)
    final["scale2"], final["shift2"] = _brn_affine(next(keys), outc // 2)
    final["w3"] = _kaiming_conv(next(keys), 7, 7, outc // 2, 2)
    fan_in = (outc // 2) * 7 * 7
    bound = 1.0 / np.sqrt(fan_in)
    final["b3"] = jax.random.uniform(next(keys), (2,), jnp.float32,
                                     minval=-bound, maxval=bound)
    return {"stages": stages, "final": final}


def lower_params(raw, cfg, H, W):
    """Lower module parameters to the kernel's banded-matmul representation."""
    stages = []
    for i, s in enumerate(raw["stages"]):
        hi, wi = H // cfg.strides[i], W // cfg.strides[i]
        sf = s["scale_factor"]
        ho, wo = hi * sf, wi * sf
        cur = cfg.feature_channel[i]
        stages.append({
            "s1": _conv_desc(s["skip_w1"], s["skip_scale1"], s["skip_shift1"], hi, wi, 1),
            "s2": _conv_desc(s["skip_w2"], s["skip_scale2"], s["skip_shift2"], hi, wi, 1),
            "up": _upsample_desc(hi, wi, cur, sf),
            "u1": _conv_desc(s["up_w1"], s["up_scale1"], s["up_shift1"], ho, wo, 1),
            "u2": _conv_desc(s["up_w2"], s["up_scale2"], s["up_shift2"], ho, wo, 1),
        })

    f = raw["final"]
    w1 = np.asarray(f["w1"])                  # (3, 3, 3 + outc, outc); image chans first
    b1i, s1i = _lower_conv(w1[:, :, :3, :], H, W, 1)
    b1x, s1x = _lower_conv(w1[:, :, 3:, :], H, W, 1)
    b3, s3 = _lower_conv(f["w3"], H, W, 3, channel_major_out=True)
    bias3 = np.asarray(f["b3"], np.float32)
    final = {
        "c1x": {"B": b1x, "S": s1x},
        "c1i": {"B": b1i, "S": s1i},
        "c1_scale": _tile_row(f["scale1"], W),
        "c1_shift": _tile_row(f["shift1"], W),
        "c2": _conv_desc(f["w2"], f["scale2"], f["shift2"], H, W, 1),
        "c3": {"B": b3, "S": s3},
        "c3_bias": jnp.asarray(np.repeat(bias3, W).reshape(1, 2 * W)),
    }
    return {"stages": stages, "final": final}


# ----------------------------------------------------------------------------
# Wrapper: single fused pallas_call
# ----------------------------------------------------------------------------
def _const_index(ndim, b):
    return (0,) * ndim


def unet_forward(kparams, image_nchw, features_nchw):
    """image: (B, 3, H, W); features: list in original order (forward reverses it).

    Returns {"prob": (B, 2, H, W)} -- softmax over the channel dim, NCHW.
    """
    bsz, _, H, W = image_nchw.shape
    # NCHW -> channel-fastest 2-D row layout (B, h, w*C); forward reverses feats.
    feats = [jnp.transpose(fm, (0, 2, 3, 1)) for fm in features_nchw][::-1]
    feats = [fm.reshape(bsz, fm.shape[1], fm.shape[2] * fm.shape[3]) for fm in feats]
    img = jnp.transpose(image_nchw, (0, 2, 3, 1)).reshape(bsz, H, W * 3)

    leaves, treedef = jax.tree_util.tree_flatten(kparams)
    n_feats = len(kparams["stages"])
    assert len(feats) == n_feats

    def act_spec(a):
        return pl.BlockSpec((1,) + a.shape[1:], lambda b: (b, 0, 0))

    in_specs = ([act_spec(fm) for fm in feats] + [act_spec(img)]
                + [pl.BlockSpec(l.shape, functools.partial(_const_index, l.ndim))
                   for l in leaves])

    out = pl.pallas_call(
        functools.partial(_unet_kernel, treedef, n_feats),
        out_shape=jax.ShapeDtypeStruct((bsz, 2, H, W), jnp.float32),
        grid=(bsz,),
        in_specs=in_specs,
        out_specs=pl.BlockSpec((1, 2, H, W), lambda b: (b, 0, 0, 0)),
        compiler_params=pltpu.CompilerParams(dimension_semantics=("parallel",)),
    )(*feats, img, *leaves)
    return {"prob": out}


# ----------------------------------------------------------------------------
if __name__ == "__main__":
    cfg = Cfg()
    key = jax.random.PRNGKey(0)
    kp, ki, kf0, kf1 = jax.random.split(key, 4)

    B, H, W = 2, 16, 16
    raw_params = build_params(cfg, kp)
    kparams = lower_params(raw_params, cfg, H, W)

    image = jax.random.normal(ki, (B, 3, H, W), jnp.float32)
    # features in ORIGINAL order (forward reverses them):
    #   features[-1]: stride 4, 16 channels -> (B, 16, 4, 4)
    #   features[-2]: stride 2,  8 channels -> (B, 8, 8, 8)
    features = [
        jax.random.normal(kf1, (B, 8, H // 2, W // 2), jnp.float32),
        jax.random.normal(kf0, (B, 16, H // 4, W // 4), jnp.float32),
    ]

    fwd = jax.jit(unet_forward)
    ret = fwd(kparams, image, features)
    prob = jax.block_until_ready(ret["prob"])

    assert prob.shape == (B, 2, H, W), prob.shape
    sums = np.asarray(jnp.sum(prob, axis=1))
    assert np.allclose(sums, 1.0, atol=1e-4), "softmax channels do not sum to 1"
    assert np.all(np.isfinite(np.asarray(prob)))
    print("KERNEL_OK")
</pallas_src>

<mosaic_0001>
module attributes {stable_mosaic.version = 11 : i64} {
  func.func @_unet_kernel(%arg0: i32, %arg1: memref<1x4x64xf32, #tpu.memory_space<vmem>>, %arg2: memref<1x8x64xf32, #tpu.memory_space<vmem>>, %arg3: memref<1x16x48xf32, #tpu.memory_space<vmem>>, %arg4: memref<1x128xf32, #tpu.memory_space<vmem>>, %arg5: memref<1x128xf32, #tpu.memory_space<vmem>>, %arg6: memref<3x48x128xbf16, #tpu.memory_space<vmem>>, %arg7: memref<2x16x16xf32, #tpu.memory_space<vmem>>, %arg8: memref<3x128x128xbf16, #tpu.memory_space<vmem>>, %arg9: memref<2x16x16xf32, #tpu.memory_space<vmem>>, %arg10: memref<3x128x64xbf16, #tpu.memory_space<vmem>>, %arg11: memref<2x16x16xf32, #tpu.memory_space<vmem>>, %arg12: memref<1x64xf32, #tpu.memory_space<vmem>>, %arg13: memref<1x64xf32, #tpu.memory_space<vmem>>, %arg14: memref<7x64x32xbf16, #tpu.memory_space<vmem>>, %arg15: memref<6x16x16xf32, #tpu.memory_space<vmem>>, %arg16: memref<1x32xf32, #tpu.memory_space<vmem>>, %arg17: memref<3x64x64xbf16, #tpu.memory_space<vmem>>, %arg18: memref<2x4x4xf32, #tpu.memory_space<vmem>>, %arg19: memref<1x64xf32, #tpu.memory_space<vmem>>, %arg20: memref<1x64xf32, #tpu.memory_space<vmem>>, %arg21: memref<3x64x64xbf16, #tpu.memory_space<vmem>>, %arg22: memref<2x4x4xf32, #tpu.memory_space<vmem>>, %arg23: memref<1x64xf32, #tpu.memory_space<vmem>>, %arg24: memref<1x64xf32, #tpu.memory_space<vmem>>, %arg25: memref<3x128x64xbf16, #tpu.memory_space<vmem>>, %arg26: memref<2x8x8xf32, #tpu.memory_space<vmem>>, %arg27: memref<1x64xf32, #tpu.memory_space<vmem>>, %arg28: memref<1x64xf32, #tpu.memory_space<vmem>>, %arg29: memref<3x64x64xbf16, #tpu.memory_space<vmem>>, %arg30: memref<2x8x8xf32, #tpu.memory_space<vmem>>, %arg31: memref<1x64xf32, #tpu.memory_space<vmem>>, %arg32: memref<1x64xf32, #tpu.memory_space<vmem>>, %arg33: memref<8x4xf32, #tpu.memory_space<vmem>>, %arg34: memref<64x128xf32, #tpu.memory_space<vmem>>, %arg35: memref<3x64x64xbf16, #tpu.memory_space<vmem>>, %arg36: memref<2x8x8xf32, #tpu.memory_space<vmem>>, %arg37: memref<1x64xf32, #tpu.memory_space<vmem>>, %arg38: memref<1x64xf32, #tpu.memory_space<vmem>>, %arg39: memref<3x64x64xbf16, #tpu.memory_space<vmem>>, %arg40: memref<2x8x8xf32, #tpu.memory_space<vmem>>, %arg41: memref<1x64xf32, #tpu.memory_space<vmem>>, %arg42: memref<1x64xf32, #tpu.memory_space<vmem>>, %arg43: memref<3x128x128xbf16, #tpu.memory_space<vmem>>, %arg44: memref<2x16x16xf32, #tpu.memory_space<vmem>>, %arg45: memref<1x128xf32, #tpu.memory_space<vmem>>, %arg46: memref<1x128xf32, #tpu.memory_space<vmem>>, %arg47: memref<3x128x128xbf16, #tpu.memory_space<vmem>>, %arg48: memref<2x16x16xf32, #tpu.memory_space<vmem>>, %arg49: memref<1x128xf32, #tpu.memory_space<vmem>>, %arg50: memref<1x128xf32, #tpu.memory_space<vmem>>, %arg51: memref<16x8xf32, #tpu.memory_space<vmem>>, %arg52: memref<64x128xf32, #tpu.memory_space<vmem>>, %arg53: memref<1x2x16x16xf32, #tpu.memory_space<vmem>>) attributes {dimension_semantics = [#tpu.dimension_semantics<parallel>], iteration_bounds = array<i64: 2>, scalar_prefetch = 0 : i64, scratch_operands = 0 : i64, tpu.core_type = #tpu.core_type<tc>, window_params = [{transform_indices = @transform_0, window_bounds = array<i64: 1, 4, 64>}, {transform_indices = @transform_1, window_bounds = array<i64: 1, 8, 64>}, {transform_indices = @transform_2, window_bounds = array<i64: 1, 16, 48>}, {pipeline_mode = #tpu.pipeline_mode<synchronous>, transform_indices = @transform_3, window_bounds = array<i64: 1, 128>}, {pipeline_mode = #tpu.pipeline_mode<synchronous>, transform_indices = @transform_4, window_bounds = array<i64: 1, 128>}, {pipeline_mode = #tpu.pipeline_mode<synchronous>, transform_indices = @transform_5, window_bounds = array<i64: 3, 48, 128>}, {pipeline_mode = #tpu.pipeline_mode<synchronous>, transform_indices = @transform_6, window_bounds = array<i64: 2, 16, 16>}, {pipeline_mode = #tpu.pipeline_mode<synchronous>, transform_indices = @transform_7, window_bounds = array<i64: 3, 128, 128>}, {pipeline_mode = #tpu.pipeline_mode<synchronous>, transform_indices = @transform_8, window_bounds = array<i64: 2, 16, 16>}, {pipeline_mode = #tpu.pipeline_mode<synchronous>, transform_indices = @transform_9, window_bounds = array<i64: 3, 128, 64>}, {pipeline_mode = #tpu.pipeline_mode<synchronous>, transform_indices = @transform_10, window_bounds = array<i64: 2, 16, 16>}, {pipeline_mode = #tpu.pipeline_mode<synchronous>, transform_indices = @transform_11, window_bounds = array<i64: 1, 64>}, {pipeline_mode = #tpu.pipeline_mode<synchronous>, transform_indices = @transform_12, window_bounds = array<i64: 1, 64>}, {pipeline_mode = #tpu.pipeline_mode<synchronous>, transform_indices = @transform_13, window_bounds = array<i64: 7, 64, 32>}, {pipeline_mode = #tpu.pipeline_mode<synchronous>, transform_indices = @transform_14, window_bounds = array<i64: 6, 16, 16>}, {pipeline_mode = #tpu.pipeline_mode<synchronous>, transform_indices = @transform_15, window_bounds = array<i64: 1, 32>}, {pipeline_mode = #tpu.pipeline_mode<synchronous>, transform_indices = @transform_16, window_bounds = array<i64: 3, 64, 64>}, {pipeline_mode = #tpu.pipeline_mode<synchronous>, transform_indices = @transform_17, window_bounds = array<i64: 2, 4, 4>}, {pipeline_mode = #tpu.pipeline_mode<synchronous>, transform_indices = @transform_18, window_bounds = array<i64: 1, 64>}, {pipeline_mode = #tpu.pipeline_mode<synchronous>, transform_indices = @transform_19, window_bounds = array<i64: 1, 64>}, {pipeline_mode = #tpu.pipeline_mode<synchronous>, transform_indices = @transform_20, window_bounds = array<i64: 3, 64, 64>}, {pipeline_mode = #tpu.pipeline_mode<synchronous>, transform_indices = @transform_21, window_bounds = array<i64: 2, 4, 4>}, {pipeline_mode = #tpu.pipeline_mode<synchronous>, transform_indices = @transform_22, window_bounds = array<i64: 1, 64>}, {pipeline_mode = #tpu.pipeline_mode<synchronous>, transform_indices = @transform_23, window_bounds = array<i64: 1, 64>}, {pipeline_mode = #tpu.pipeline_mode<synchronous>, transform_indices = @transform_24, window_bounds = array<i64: 3, 128, 64>}, {pipeline_mode = #tpu.pipeline_mode<synchronous>, transform_indices = @transform_25, window_bounds = array<i64: 2, 8, 8>}, {pipeline_mode = #tpu.pipeline_mode<synchronous>, transform_indices = @transform_26, window_bounds = array<i64: 1, 64>}, {pipeline_mode = #tpu.pipeline_mode<synchronous>, transform_indices = @transform_27, window_bounds = array<i64: 1, 64>}, {pipeline_mode = #tpu.pipeline_mode<synchronous>, transform_indices = @transform_28, window_bounds = array<i64: 3, 64, 64>}, {pipeline_mode = #tpu.pipeline_mode<synchronous>, transform_indices = @transform_29, window_bounds = array<i64: 2, 8, 8>}, {pipeline_mode = #tpu.pipeline_mode<synchronous>, transform_indices = @transform_30, window_bounds = array<i64: 1, 64>}, {pipeline_mode = #tpu.pipeline_mode<synchronous>, transform_indices = @transform_31, window_bounds = array<i64: 1, 64>}, {pipeline_mode = #tpu.pipeline_mode<synchronous>, transform_indices = @transform_32, window_bounds = array<i64: 8, 4>}, {pipeline_mode = #tpu.pipeline_mode<synchronous>, transform_indices = @transform_33, window_bounds = array<i64: 64, 128>}, {pipeline_mode = #tpu.pipeline_mode<synchronous>, transform_indices = @transform_34, window_bounds = array<i64: 3, 64, 64>}, {pipeline_mode = #tpu.pipeline_mode<synchronous>, transform_indices = @transform_35, window_bounds = array<i64: 2, 8, 8>}, {pipeline_mode = #tpu.pipeline_mode<synchronous>, transform_indices = @transform_36, window_bounds = array<i64: 1, 64>}, {pipeline_mode = #tpu.pipeline_mode<synchronous>, transform_indices = @transform_37, window_bounds = array<i64: 1, 64>}, {pipeline_mode = #tpu.pipeline_mode<synchronous>, transform_indices = @transform_38, window_bounds = array<i64: 3, 64, 64>}, {pipeline_mode = #tpu.pipeline_mode<synchronous>, transform_indices = @transform_39, window_bounds = array<i64: 2, 8, 8>}, {pipeline_mode = #tpu.pipeline_mode<synchronous>, transform_indices = @transform_40, window_bounds = array<i64: 1, 64>}, {pipeline_mode = #tpu.pipeline_mode<synchronous>, transform_indices = @transform_41, window_bounds = array<i64: 1, 64>}, {pipeline_mode = #tpu.pipeline_mode<synchronous>, transform_indices = @transform_42, window_bounds = array<i64: 3, 128, 128>}, {pipeline_mode = #tpu.pipeline_mode<synchronous>, transform_indices = @transform_43, window_bounds = array<i64: 2, 16, 16>}, {pipeline_mode = #tpu.pipeline_mode<synchronous>, transform_indices = @transform_44, window_bounds = array<i64: 1, 128>}, {pipeline_mode = #tpu.pipeline_mode<synchronous>, transform_indices = @transform_45, window_bounds = array<i64: 1, 128>}, {pipeline_mode = #tpu.pipeline_mode<synchronous>, transform_indices = @transform_46, window_bounds = array<i64: 3, 128, 128>}, {pipeline_mode = #tpu.pipeline_mode<synchronous>, transform_indices = @transform_47, window_bounds = array<i64: 2, 16, 16>}, {pipeline_mode = #tpu.pipeline_mode<synchronous>, transform_indices = @transform_48, window_bounds = array<i64: 1, 128>}, {pipeline_mode = #tpu.pipeline_mode<synchronous>, transform_indices = @transform_49, window_bounds = array<i64: 1, 128>}, {pipeline_mode = #tpu.pipeline_mode<synchronous>, transform_indices = @transform_50, window_bounds = array<i64: 16, 8>}, {pipeline_mode = #tpu.pipeline_mode<synchronous>, transform_indices = @transform_51, window_bounds = array<i64: 64, 128>}, {transform_indices = @transform_52, window_bounds = array<i64: 1, 2, 16, 16>}]} {
    %c0 = arith.constant 0 : index
    %c0_0 = arith.constant 0 : index
    %c0_1 = arith.constant 0 : index
    %0 = vector.load %arg3[%c0, %c0_0, %c0_1] : memref<1x16x48xf32, #tpu.memory_space<vmem>>, vector<1x16x48xf32>
    %1 = vector.shape_cast %0 : vector<1x16x48xf32> to vector<16x48xf32>
    %c0_2 = arith.constant 0 : index
    %c0_3 = arith.constant 0 : index
    %c0_4 = arith.constant 0 : index
    %2 = vector.load %arg1[%c0_2, %c0_3, %c0_4] : memref<1x4x64xf32, #tpu.memory_space<vmem>>, vector<1x4x64xf32>
    %3 = vector.shape_cast %2 : vector<1x4x64xf32> to vector<4x64xf32>
    %4 = arith.truncf %3 : vector<4x64xf32> to vector<4x64xbf16>
    %c0_5 = arith.constant 0 : index
    %c0_6 = arith.constant 0 : index
    %c0_7 = arith.constant 0 : index
    %5 = vector.load %arg17[%c0_5, %c0_6, %c0_7] : memref<3x64x64xbf16, #tpu.memory_space<vmem>>, vector<1x64x64xbf16>
    %6 = vector.shape_cast %5 : vector<1x64x64xbf16> to vector<64x64xbf16>
    %cst = arith.constant dense<0.000000e+00> : vector<4x64xf32>
    %7 = tpu.matmul %4, %6, %cst {dimension_numbers = #tpu.dot_dimension_numbers<[1], [0], [0], [1], [0, 0, 1, 1], [], []>} : vector<4x64xbf16>, vector<64x64xbf16>, vector<4x64xf32> -> vector<4x64xf32>
    %c0_8 = arith.constant 0 : index
    %c0_9 = arith.constant 0 : index
    %c0_10 = arith.constant 0 : index
    %8 = vector.load %arg18[%c0_8, %c0_9, %c0_10] : memref<2x4x4xf32, #tpu.memory_space<vmem>>, vector<1x4x4xf32>
    %9 = vector.shape_cast %8 : vector<1x4x4xf32> to vector<4x4xf32>
    %cst_11 = arith.constant dense<0.000000e+00> : vector<4x64xf32>
    %10 = tpu.matmul %9, %7, %cst_11 {dimension_numbers = #tpu.dot_dimension_numbers<[1], [0], [0], [1], [0, 0, 1, 1], [], []>} : vector<4x4xf32>, vector<4x64xf32>, vector<4x64xf32> -> vector<4x64xf32>
    %c1 = arith.constant 1 : index
    %c0_12 = arith.constant 0 : index
    %c0_13 = arith.constant 0 : index
    %11 = vector.load %arg17[%c1, %c0_12, %c0_13] : memref<3x64x64xbf16, #tpu.memory_space<vmem>>, vector<1x64x64xbf16>
    %12 = vector.shape_cast %11 : vector<1x64x64xbf16> to vector<64x64xbf16>
    %cst_14 = arith.constant dense<0.000000e+00> : vector<4x64xf32>
    %13 = tpu.matmul %4, %12, %cst_14 {dimension_numbers = #tpu.dot_dimension_numbers<[1], [0], [0], [1], [0, 0, 1, 1], [], []>} : vector<4x64xbf16>, vector<64x64xbf16>, vector<4x64xf32> -> vector<4x64xf32>
    %14 = arith.addf %10, %13 : vector<4x64xf32>
    %c2 = arith.constant 2 : index
    %c0_15 = arith.constant 0 : index
    %c0_16 = arith.constant 0 : index
    %15 = vector.load %arg17[%c2, %c0_15, %c0_16] : memref<3x64x64xbf16, #tpu.memory_space<vmem>>, vector<1x64x64xbf16>
    %16 = vector.shape_cast %15 : vector<1x64x64xbf16> to vector<64x64xbf16>
    %cst_17 = arith.constant dense<0.000000e+00> : vector<4x64xf32>
    %17 = tpu.matmul %4, %16, %cst_17 {dimension_numbers = #tpu.dot_dimension_numbers<[1], [0], [0], [1], [0, 0, 1, 1], [], []>} : vector<4x64xbf16>, vector<64x64xbf16>, vector<4x64xf32> -> vector<4x64xf32>
    %c1_18 = arith.constant 1 : index
    %c0_19 = arith.constant 0 : index
    %c0_20 = arith.constant 0 : index
    %18 = vector.load %arg18[%c1_18, %c0_19, %c0_20] : memref<2x4x4xf32, #tpu.memory_space<vmem>>, vector<1x4x4xf32>
    %19 = vector.shape_cast %18 : vector<1x4x4xf32> to vector<4x4xf32>
    %cst_21 = arith.constant dense<0.000000e+00> : vector<4x64xf32>
    %20 = tpu.matmul %19, %17, %cst_21 {dimension_numbers = #tpu.dot_dimension_numbers<[1], [0], [0], [1], [0, 0, 1, 1], [], []>} : vector<4x4xf32>, vector<4x64xf32>, vector<4x64xf32> -> vector<4x64xf32>
    %21 = arith.addf %14, %20 : vector<4x64xf32>
    %c0_22 = arith.constant 0 : index
    %c0_23 = arith.constant 0 : index
    %22 = vector.load %arg19[%c0_22, %c0_23] : memref<1x64xf32, #tpu.memory_space<vmem>>, vector<1x64xf32>
    %23 = vector.broadcast %22 : vector<1x64xf32> to vector<4x64xf32>
    %24 = arith.mulf %21, %23 : vector<4x64xf32>
    %c0_24 = arith.constant 0 : index
    %c0_25 = arith.constant 0 : index
    %25 = vector.load %arg20[%c0_24, %c0_25] : memref<1x64xf32, #tpu.memory_space<vmem>>, vector<1x64xf32>
    %26 = vector.broadcast %25 : vector<1x64xf32> to vector<4x64xf32>
    %27 = arith.addf %24, %26 : vector<4x64xf32>
    %cst_26 = arith.constant 0.000000e+00 : f32
    %28 = vector.broadcast %cst_26 : f32 to vector<4x64xf32>
    %29 = arith.maximumf %27, %28 : vector<4x64xf32>
    %30 = arith.truncf %29 : vector<4x64xf32> to vector<4x64xbf16>
    %c0_27 = arith.constant 0 : index
    %c0_28 = arith.constant 0 : index
    %c0_29 = arith.constant 0 : index
    %31 = vector.load %arg21[%c0_27, %c0_28, %c0_29] : memref<3x64x64xbf16, #tpu.memory_space<vmem>>, vector<1x64x64xbf16>
    %32 = vector.shape_cast %31 : vector<1x64x64xbf16> to vector<64x64xbf16>
    %cst_30 = arith.constant dense<0.000000e+00> : vector<4x64xf32>
    %33 = tpu.matmul %30, %32, %cst_30 {dimension_numbers = #tpu.dot_dimension_numbers<[1], [0], [0], [1], [0, 0, 1, 1], [], []>} : vector<4x64xbf16>, vector<64x64xbf16>, vector<4x64xf32> -> vector<4x64xf32>
    %c0_31 = arith.constant 0 : index
    %c0_32 = arith.constant 0 : index
    %c0_33 = arith.constant 0 : index
    %34 = vector.load %arg22[%c0_31, %c0_32, %c0_33] : memref<2x4x4xf32, #tpu.memory_space<vmem>>, vector<1x4x4xf32>
    %35 = vector.shape_cast %34 : vector<1x4x4xf32> to vector<4x4xf32>
    %cst_34 = arith.constant dense<0.000000e+00> : vector<4x64xf32>
    %36 = tpu.matmul %35, %33, %cst_34 {dimension_numbers = #tpu.dot_dimension_numbers<[1], [0], [0], [1], [0, 0, 1, 1], [], []>} : vector<4x4xf32>, vector<4x64xf32>, vector<4x64xf32> -> vector<4x64xf32>
    %c1_35 = arith.constant 1 : index
    %c0_36 = arith.constant 0 : index
    %c0_37 = arith.constant 0 : index
    %37 = vector.load %arg21[%c1_35, %c0_36, %c0_37] : memref<3x64x64xbf16, #tpu.memory_space<vmem>>, vector<1x64x64xbf16>
    %38 = vector.shape_cast %37 : vector<1x64x64xbf16> to vector<64x64xbf16>
    %cst_38 = arith.constant dense<0.000000e+00> : vector<4x64xf32>
    %39 = tpu.matmul %30, %38, %cst_38 {dimension_numbers = #tpu.dot_dimension_numbers<[1], [0], [0], [1], [0, 0, 1, 1], [], []>} : vector<4x64xbf16>, vector<64x64xbf16>, vector<4x64xf32> -> vector<4x64xf32>
    %40 = arith.addf %36, %39 : vector<4x64xf32>
    %c2_39 = arith.constant 2 : index
    %c0_40 = arith.constant 0 : index
    %c0_41 = arith.constant 0 : index
    %41 = vector.load %arg21[%c2_39, %c0_40, %c0_41] : memref<3x64x64xbf16, #tpu.memory_space<vmem>>, vector<1x64x64xbf16>
    %42 = vector.shape_cast %41 : vector<1x64x64xbf16> to vector<64x64xbf16>
    %cst_42 = arith.constant dense<0.000000e+00> : vector<4x64xf32>
    %43 = tpu.matmul %30, %42, %cst_42 {dimension_numbers = #tpu.dot_dimension_numbers<[1], [0], [0], [1], [0, 0, 1, 1], [], []>} : vector<4x64xbf16>, vector<64x64xbf16>, vector<4x64xf32> -> vector<4x64xf32>
    %c1_43 = arith.constant 1 : index
    %c0_44 = arith.constant 0 : index
    %c0_45 = arith.constant 0 : index
    %44 = vector.load %arg22[%c1_43, %c0_44, %c0_45] : memref<2x4x4xf32, #tpu.memory_space<vmem>>, vector<1x4x4xf32>
    %45 = vector.shape_cast %44 : vector<1x4x4xf32> to vector<4x4xf32>
    %cst_46 = arith.constant dense<0.000000e+00> : vector<4x64xf32>
    %46 = tpu.matmul %45, %43, %cst_46 {dimension_numbers = #tpu.dot_dimension_numbers<[1], [0], [0], [1], [0, 0, 1, 1], [], []>} : vector<4x4xf32>, vector<4x64xf32>, vector<4x64xf32> -> vector<4x64xf32>
    %47 = arith.addf %40, %46 : vector<4x64xf32>
    %c0_47 = arith.constant 0 : index
    %c0_48 = arith.constant 0 : index
    %48 = vector.load %arg23[%c0_47, %c0_48] : memref<1x64xf32, #tpu.memory_space<vmem>>, vector<1x64xf32>
    %49 = vector.broadcast %48 : vector<1x64xf32> to vector<4x64xf32>
    %50 = arith.mulf %47, %49 : vector<4x64xf32>
    %c0_49 = arith.constant 0 : index
    %c0_50 = arith.constant 0 : index
    %51 = vector.load %arg24[%c0_49, %c0_50] : memref<1x64xf32, #tpu.memory_space<vmem>>, vector<1x64xf32>
    %52 = vector.broadcast %51 : vector<1x64xf32> to vector<4x64xf32>
    %53 = arith.addf %50, %52 : vector<4x64xf32>
    %cst_51 = arith.constant 0.000000e+00 : f32
    %54 = vector.broadcast %cst_51 : f32 to vector<4x64xf32>
    %55 = arith.maximumf %53, %54 : vector<4x64xf32>
    %c0_52 = arith.constant 0 : index
    %c0_53 = arith.constant 0 : index
    %56 = vector.load %arg34[%c0_52, %c0_53] : memref<64x128xf32, #tpu.memory_space<vmem>>, vector<64x128xf32>
    %cst_54 = arith.constant dense<0.000000e+00> : vector<4x128xf32>
    %57 = tpu.matmul %55, %56, %cst_54 {dimension_numbers = #tpu.dot_dimension_numbers<[1], [0], [0], [1], [0, 0, 1, 1], [], []>} : vector<4x64xf32>, vector<64x128xf32>, vector<4x128xf32> -> vector<4x128xf32>
    %c0_55 = arith.constant 0 : index
    %c0_56 = arith.constant 0 : index
    %58 = vector.load %arg33[%c0_55, %c0_56] : memref<8x4xf32, #tpu.memory_space<vmem>>, vector<8x4xf32>
    %cst_57 = arith.constant dense<0.000000e+00> : vector<8x128xf32>
    %59 = tpu.matmul %58, %57, %cst_57 {dimension_numbers = #tpu.dot_dimension_numbers<[1], [0], [0], [1], [0, 0, 1, 1], [], []>} : vector<8x4xf32>, vector<4x128xf32>, vector<8x128xf32> -> vector<8x128xf32>
    %60 = arith.truncf %59 : vector<8x128xf32> to vector<8x128xbf16>
    %c0_58 = arith.constant 0 : index
    %c0_59 = arith.constant 0 : index
    %c0_60 = arith.constant 0 : index
    %61 = vector.load %arg25[%c0_58, %c0_59, %c0_60] : memref<3x128x64xbf16, #tpu.memory_space<vmem>>, vector<1x128x64xbf16>
    %62 = vector.shape_cast %61 : vector<1x128x64xbf16> to vector<128x64xbf16>
    %cst_61 = arith.constant dense<0.000000e+00> : vector<8x64xf32>
    %63 = tpu.matmul %60, %62, %cst_61 {dimension_numbers = #tpu.dot_dimension_numbers<[1], [0], [0], [1], [0, 0, 1, 1], [], []>} : vector<8x128xbf16>, vector<128x64xbf16>, vector<8x64xf32> -> vector<8x64xf32>
    %c0_62 = arith.constant 0 : index
    %c0_63 = arith.constant 0 : index
    %c0_64 = arith.constant 0 : index
    %64 = vector.load %arg26[%c0_62, %c0_63, %c0_64] : memref<2x8x8xf32, #tpu.memory_space<vmem>>, vector<1x8x8xf32>
    %65 = vector.shape_cast %64 : vector<1x8x8xf32> to vector<8x8xf32>
    %cst_65 = arith.constant dense<0.000000e+00> : vector<8x64xf32>
    %66 = tpu.matmul %65, %63, %cst_65 {dimension_numbers = #tpu.dot_dimension_numbers<[1], [0], [0], [1], [0, 0, 1, 1], [], []>} : vector<8x8xf32>, vector<8x64xf32>, vector<8x64xf32> -> vector<8x64xf32>
    %c1_66 = arith.constant 1 : index
    %c0_67 = arith.constant 0 : index
    %c0_68 = arith.constant 0 : index
    %67 = vector.load %arg25[%c1_66, %c0_67, %c0_68] : memref<3x128x64xbf16, #tpu.memory_space<vmem>>, vector<1x128x64xbf16>
    %68 = vector.shape_cast %67 : vector<1x128x64xbf16> to vector<128x64xbf16>
    %cst_69 = arith.constant dense<0.000000e+00> : vector<8x64xf32>
    %69 = tpu.matmul %60, %68, %cst_69 {dimension_numbers = #tpu.dot_dimension_numbers<[1], [0], [0], [1], [0, 0, 1, 1], [], []>} : vector<8x128xbf16>, vector<128x64xbf16>, vector<8x64xf32> -> vector<8x64xf32>
    %70 = arith.addf %66, %69 : vector<8x64xf32>
    %c2_70 = arith.constant 2 : index
    %c0_71 = arith.constant 0 : index
    %c0_72 = arith.constant 0 : index
    %71 = vector.load %arg25[%c2_70, %c0_71, %c0_72] : memref<3x128x64xbf16, #tpu.memory_space<vmem>>, vector<1x128x64xbf16>
    %72 = vector.shape_cast %71 : vector<1x128x64xbf16> to vector<128x64xbf16>
    %cst_73 = arith.constant dense<0.000000e+00> : vector<8x64xf32>
    %73 = tpu.matmul %60, %72, %cst_73 {dimension_numbers = #tpu.dot_dimension_numbers<[1], [0], [0], [1], [0, 0, 1, 1], [], []>} : vector<8x128xbf16>, vector<128x64xbf16>, vector<8x64xf32> -> vector<8x64xf32>
    %c1_74 = arith.constant 1 : index
    %c0_75 = arith.constant 0 : index
    %c0_76 = arith.constant 0 : index
    %74 = vector.load %arg26[%c1_74, %c0_75, %c0_76] : memref<2x8x8xf32, #tpu.memory_space<vmem>>, vector<1x8x8xf32>
    %75 = vector.shape_cast %74 : vector<1x8x8xf32> to vector<8x8xf32>
    %cst_77 = arith.constant dense<0.000000e+00> : vector<8x64xf32>
    %76 = tpu.matmul %75, %73, %cst_77 {dimension_numbers = #tpu.dot_dimension_numbers<[1], [0], [0], [1], [0, 0, 1, 1], [], []>} : vector<8x8xf32>, vector<8x64xf32>, vector<8x64xf32> -> vector<8x64xf32>
    %77 = arith.addf %70, %76 : vector<8x64xf32>
    %c0_78 = arith.constant 0 : index
    %c0_79 = arith.constant 0 : index
    %78 = vector.load %arg27[%c0_78, %c0_79] : memref<1x64xf32, #tpu.memory_space<vmem>>, vector<1x64xf32>
    %79 = vector.broadcast %78 : vector<1x64xf32> to vector<8x64xf32>
    %80 = arith.mulf %77, %79 : vector<8x64xf32>
    %c0_80 = arith.constant 0 : index
    %c0_81 = arith.constant 0 : index
    %81 = vector.load %arg28[%c0_80, %c0_81] : memref<1x64xf32, #tpu.memory_space<vmem>>, vector<1x64xf32>
    %82 = vector.broadcast %81 : vector<1x64xf32> to vector<8x64xf32>
    %83 = arith.addf %80, %82 : vector<8x64xf32>
    %cst_82 = arith.constant 0.000000e+00 : f32
    %84 = vector.broadcast %cst_82 : f32 to vector<8x64xf32>
    %85 = arith.maximumf %83, %84 : vector<8x64xf32>
    %86 = arith.truncf %85 : vector<8x64xf32> to vector<8x64xbf16>
    %c0_83 = arith.constant 0 : index
    %c0_84 = arith.constant 0 : index
    %c0_85 = arith.constant 0 : index
    %87 = vector.load %arg29[%c0_83, %c0_84, %c0_85] : memref<3x64x64xbf16, #tpu.memory_space<vmem>>, vector<1x64x64xbf16>
    %88 = vector.shape_cast %87 : vector<1x64x64xbf16> to vector<64x64xbf16>
    %cst_86 = arith.constant dense<0.000000e+00> : vector<8x64xf32>
    %89 = tpu.matmul %86, %88, %cst_86 {dimension_numbers = #tpu.dot_dimension_numbers<[1], [0], [0], [1], [0, 0, 1, 1], [], []>} : vector<8x64xbf16>, vector<64x64xbf16>, vector<8x64xf32> -> vector<8x64xf32>
    %c0_87 = arith.constant 0 : index
    %c0_88 = arith.constant 0 : index
    %c0_89 = arith.constant 0 : index
    %90 = vector.load %arg30[%c0_87, %c0_88, %c0_89] : memref<2x8x8xf32, #tpu.memory_space<vmem>>, vector<1x8x8xf32>
    %91 = vector.shape_cast %90 : vector<1x8x8xf32> to vector<8x8xf32>
    %cst_90 = arith.constant dense<0.000000e+00> : vector<8x64xf32>
    %92 = tpu.matmul %91, %89, %cst_90 {dimension_numbers = #tpu.dot_dimension_numbers<[1], [0], [0], [1], [0, 0, 1, 1], [], []>} : vector<8x8xf32>, vector<8x64xf32>, vector<8x64xf32> -> vector<8x64xf32>
    %c1_91 = arith.constant 1 : index
    %c0_92 = arith.constant 0 : index
    %c0_93 = arith.constant 0 : index
    %93 = vector.load %arg29[%c1_91, %c0_92, %c0_93] : memref<3x64x64xbf16, #tpu.memory_space<vmem>>, vector<1x64x64xbf16>
    %94 = vector.shape_cast %93 : vector<1x64x64xbf16> to vector<64x64xbf16>
    %cst_94 = arith.constant dense<0.000000e+00> : vector<8x64xf32>
    %95 = tpu.matmul %86, %94, %cst_94 {dimension_numbers = #tpu.dot_dimension_numbers<[1], [0], [0], [1], [0, 0, 1, 1], [], []>} : vector<8x64xbf16>, vector<64x64xbf16>, vector<8x64xf32> -> vector<8x64xf32>
    %96 = arith.addf %92, %95 : vector<8x64xf32>
    %c2_95 = arith.constant 2 : index
    %c0_96 = arith.constant 0 : index
    %c0_97 = arith.constant 0 : index
    %97 = vector.load %arg29[%c2_95, %c0_96, %c0_97] : memref<3x64x64xbf16, #tpu.memory_space<vmem>>, vector<1x64x64xbf16>
    %98 = vector.shape_cast %97 : vector<1x64x64xbf16> to vector<64x64xbf16>
    %cst_98 = arith.constant dense<0.000000e+00> : vector<8x64xf32>
    %99 = tpu.matmul %86, %98, %cst_98 {dimension_numbers = #tpu.dot_dimension_numbers<[1], [0], [0], [1], [0, 0, 1, 1], [], []>} : vector<8x64xbf16>, vector<64x64xbf16>, vector<8x64xf32> -> vector<8x64xf32>
    %c1_99 = arith.constant 1 : index
    %c0_100 = arith.constant 0 : index
    %c0_101 = arith.constant 0 : index
    %100 = vector.load %arg30[%c1_99, %c0_100, %c0_101] : memref<2x8x8xf32, #tpu.memory_space<vmem>>, vector<1x8x8xf32>
    %101 = vector.shape_cast %100 : vector<1x8x8xf32> to vector<8x8xf32>
    %cst_102 = arith.constant dense<0.000000e+00> : vector<8x64xf32>
    %102 = tpu.matmul %101, %99, %cst_102 {dimension_numbers = #tpu.dot_dimension_numbers<[1], [0], [0], [1], [0, 0, 1, 1], [], []>} : vector<8x8xf32>, vector<8x64xf32>, vector<8x64xf32> -> vector<8x64xf32>
    %103 = arith.addf %96, %102 : vector<8x64xf32>
    %c0_103 = arith.constant 0 : index
    %c0_104 = arith.constant 0 : index
    %104 = vector.load %arg31[%c0_103, %c0_104] : memref<1x64xf32, #tpu.memory_space<vmem>>, vector<1x64xf32>
    %105 = vector.broadcast %104 : vector<1x64xf32> to vector<8x64xf32>
    %106 = arith.mulf %103, %105 : vector<8x64xf32>
    %c0_105 = arith.constant 0 : index
    %c0_106 = arith.constant 0 : index
    %107 = vector.load %arg32[%c0_105, %c0_106] : memref<1x64xf32, #tpu.memory_space<vmem>>, vector<1x64xf32>
    %108 = vector.broadcast %107 : vector<1x64xf32> to vector<8x64xf32>
    %109 = arith.addf %106, %108 : vector<8x64xf32>
    %cst_107 = arith.constant 0.000000e+00 : f32
    %110 = vector.broadcast %cst_107 : f32 to vector<8x64xf32>
    %111 = arith.maximumf %109, %110 : vector<8x64xf32>
    %c0_108 = arith.constant 0 : index
    %c0_109 = arith.constant 0 : index
    %c0_110 = arith.constant 0 : index
    %112 = vector.load %arg2[%c0_108, %c0_109, %c0_110] : memref<1x8x64xf32, #tpu.memory_space<vmem>>, vector<1x8x64xf32>
    %113 = vector.shape_cast %112 : vector<1x8x64xf32> to vector<8x64xf32>
    %114 = arith.truncf %113 : vector<8x64xf32> to vector<8x64xbf16>
    %c0_111 = arith.constant 0 : index
    %c0_112 = arith.constant 0 : index
    %c0_113 = arith.constant 0 : index
    %115 = vector.load %arg35[%c0_111, %c0_112, %c0_113] : memref<3x64x64xbf16, #tpu.memory_space<vmem>>, vector<1x64x64xbf16>
    %116 = vector.shape_cast %115 : vector<1x64x64xbf16> to vector<64x64xbf16>
    %cst_114 = arith.constant dense<0.000000e+00> : vector<8x64xf32>
    %117 = tpu.matmul %114, %116, %cst_114 {dimension_numbers = #tpu.dot_dimension_numbers<[1], [0], [0], [1], [0, 0, 1, 1], [], []>} : vector<8x64xbf16>, vector<64x64xbf16>, vector<8x64xf32> -> vector<8x64xf32>
    %c0_115 = arith.constant 0 : index
    %c0_116 = arith.constant 0 : index
    %c0_117 = arith.constant 0 : index
    %118 = vector.load %arg36[%c0_115, %c0_116, %c0_117] : memref<2x8x8xf32, #tpu.memory_space<vmem>>, vector<1x8x8xf32>
    %119 = vector.shape_cast %118 : vector<1x8x8xf32> to vector<8x8xf32>
    %cst_118 = arith.constant dense<0.000000e+00> : vector<8x64xf32>
    %120 = tpu.matmul %119, %117, %cst_118 {dimension_numbers = #tpu.dot_dimension_numbers<[1], [0], [0], [1], [0, 0, 1, 1], [], []>} : vector<8x8xf32>, vector<8x64xf32>, vector<8x64xf32> -> vector<8x64xf32>
    %c1_119 = arith.constant 1 : index
    %c0_120 = arith.constant 0 : index
    %c0_121 = arith.constant 0 : index
    %121 = vector.load %arg35[%c1_119, %c0_120, %c0_121] : memref<3x64x64xbf16, #tpu.memory_space<vmem>>, vector<1x64x64xbf16>
    %122 = vector.shape_cast %121 : vector<1x64x64xbf16> to vector<64x64xbf16>
    %cst_122 = arith.constant dense<0.000000e+00> : vector<8x64xf32>
    %123 = tpu.matmul %114, %122, %cst_122 {dimension_numbers = #tpu.dot_dimension_numbers<[1], [0], [0], [1], [0, 0, 1, 1], [], []>} : vector<8x64xbf16>, vector<64x64xbf16>, vector<8x64xf32> -> vector<8x64xf32>
    %124 = arith.addf %120, %123 : vector<8x64xf32>
    %c2_123 = arith.constant 2 : index
    %c0_124 = arith.constant 0 : index
    %c0_125 = arith.constant 0 : index
    %125 = vector.load %arg35[%c2_123, %c0_124, %c0_125] : memref<3x64x64xbf16, #tpu.memory_space<vmem>>, vector<1x64x64xbf16>
    %126 = vector.shape_cast %125 : vector<1x64x64xbf16> to vector<64x64xbf16>
    %cst_126 = arith.constant dense<0.000000e+00> : vector<8x64xf32>
    %127 = tpu.matmul %114, %126, %cst_126 {dimension_numbers = #tpu.dot_dimension_numbers<[1], [0], [0], [1], [0, 0, 1, 1], [], []>} : vector<8x64xbf16>, vector<64x64xbf16>, vector<8x64xf32> -> vector<8x64xf32>
    %c1_127 = arith.constant 1 : index
    %c0_128 = arith.constant 0 : index
    %c0_129 = arith.constant 0 : index
    %128 = vector.load %arg36[%c1_127, %c0_128, %c0_129] : memref<2x8x8xf32, #tpu.memory_space<vmem>>, vector<1x8x8xf32>
    %129 = vector.shape_cast %128 : vector<1x8x8xf32> to vector<8x8xf32>
    %cst_130 = arith.constant dense<0.000000e+00> : vector<8x64xf32>
    %130 = tpu.matmul %129, %127, %cst_130 {dimension_numbers = #tpu.dot_dimension_numbers<[1], [0], [0], [1], [0, 0, 1, 1], [], []>} : vector<8x8xf32>, vector<8x64xf32>, vector<8x64xf32> -> vector<8x64xf32>
    %131 = arith.addf %124, %130 : vector<8x64xf32>
    %c0_131 = arith.constant 0 : index
    %c0_132 = arith.constant 0 : index
    %132 = vector.load %arg37[%c0_131, %c0_132] : memref<1x64xf32, #tpu.memory_space<vmem>>, vector<1x64xf32>
    %133 = vector.broadcast %132 : vector<1x64xf32> to vector<8x64xf32>
    %134 = arith.mulf %131, %133 : vector<8x64xf32>
    %c0_133 = arith.constant 0 : index
    %c0_134 = arith.constant 0 : index
    %135 = vector.load %arg38[%c0_133, %c0_134] : memref<1x64xf32, #tpu.memory_space<vmem>>, vector<1x64xf32>
    %136 = vector.broadcast %135 : vector<1x64xf32> to vector<8x64xf32>
    %137 = arith.addf %134, %136 : vector<8x64xf32>
    %cst_135 = arith.constant 0.000000e+00 : f32
    %138 = vector.broadcast %cst_135 : f32 to vector<8x64xf32>
    %139 = arith.maximumf %137, %138 : vector<8x64xf32>
    %140 = arith.truncf %139 : vector<8x64xf32> to vector<8x64xbf16>
    %c0_136 = arith.constant 0 : index
    %c0_137 = arith.constant 0 : index
    %c0_138 = arith.constant 0 : index
    %141 = vector.load %arg39[%c0_136, %c0_137, %c0_138] : memref<3x64x64xbf16, #tpu.memory_space<vmem>>, vector<1x64x64xbf16>
    %142 = vector.shape_cast %141 : vector<1x64x64xbf16> to vector<64x64xbf16>
    %cst_139 = arith.constant dense<0.000000e+00> : vector<8x64xf32>
    %143 = tpu.matmul %140, %142, %cst_139 {dimension_numbers = #tpu.dot_dimension_numbers<[1], [0], [0], [1], [0, 0, 1, 1], [], []>} : vector<8x64xbf16>, vector<64x64xbf16>, vector<8x64xf32> -> vector<8x64xf32>
    %c0_140 = arith.constant 0 : index
    %c0_141 = arith.constant 0 : index
    %c0_142 = arith.constant 0 : index
    %144 = vector.load %arg40[%c0_140, %c0_141, %c0_142] : memref<2x8x8xf32, #tpu.memory_space<vmem>>, vector<1x8x8xf32>
    %145 = vector.shape_cast %144 : vector<1x8x8xf32> to vector<8x8xf32>
    %cst_143 = arith.constant dense<0.000000e+00> : vector<8x64xf32>
    %146 = tpu.matmul %145, %143, %cst_143 {dimension_numbers = #tpu.dot_dimension_numbers<[1], [0], [0], [1], [0, 0, 1, 1], [], []>} : vector<8x8xf32>, vector<8x64xf32>, vector<8x64xf32> -> vector<8x64xf32>
    %c1_144 = arith.constant 1 : index
    %c0_145 = arith.constant 0 : index
    %c0_146 = arith.constant 0 : index
    %147 = vector.load %arg39[%c1_144, %c0_145, %c0_146] : memref<3x64x64xbf16, #tpu.memory_space<vmem>>, vector<1x64x64xbf16>
    %148 = vector.shape_cast %147 : vector<1x64x64xbf16> to vector<64x64xbf16>
    %cst_147 = arith.constant dense<0.000000e+00> : vector<8x64xf32>
    %149 = tpu.matmul %140, %148, %cst_147 {dimension_numbers = #tpu.dot_dimension_numbers<[1], [0], [0], [1], [0, 0, 1, 1], [], []>} : vector<8x64xbf16>, vector<64x64xbf16>, vector<8x64xf32> -> vector<8x64xf32>
    %150 = arith.addf %146, %149 : vector<8x64xf32>
    %c2_148 = arith.constant 2 : index
    %c0_149 = arith.constant 0 : index
    %c0_150 = arith.constant 0 : index
    %151 = vector.load %arg39[%c2_148, %c0_149, %c0_150] : memref<3x64x64xbf16, #tpu.memory_space<vmem>>, vector<1x64x64xbf16>
    %152 = vector.shape_cast %151 : vector<1x64x64xbf16> to vector<64x64xbf16>
    %cst_151 = arith.constant dense<0.000000e+00> : vector<8x64xf32>
    %153 = tpu.matmul %140, %152, %cst_151 {dimension_numbers = #tpu.dot_dimension_numbers<[1], [0], [0], [1], [0, 0, 1, 1], [], []>} : vector<8x64xbf16>, vector<64x64xbf16>, vector<8x64xf32> -> vector<8x64xf32>
    %c1_152 = arith.constant 1 : index
    %c0_153 = arith.constant 0 : index
    %c0_154 = arith.constant 0 : index
    %154 = vector.load %arg40[%c1_152, %c0_153, %c0_154] : memref<2x8x8xf32, #tpu.memory_space<vmem>>, vector<1x8x8xf32>
    %155 = vector.shape_cast %154 : vector<1x8x8xf32> to vector<8x8xf32>
    %cst_155 = arith.constant dense<0.000000e+00> : vector<8x64xf32>
    %156 = tpu.matmul %155, %153, %cst_155 {dimension_numbers = #tpu.dot_dimension_numbers<[1], [0], [0], [1], [0, 0, 1, 1], [], []>} : vector<8x8xf32>, vector<8x64xf32>, vector<8x64xf32> -> vector<8x64xf32>
    %157 = arith.addf %150, %156 : vector<8x64xf32>
    %c0_156 = arith.constant 0 : index
    %c0_157 = arith.constant 0 : index
    %158 = vector.load %arg41[%c0_156, %c0_157] : memref<1x64xf32, #tpu.memory_space<vmem>>, vector<1x64xf32>
    %159 = vector.broadcast %158 : vector<1x64xf32> to vector<8x64xf32>
    %160 = arith.mulf %157, %159 : vector<8x64xf32>
    %c0_158 = arith.constant 0 : index
    %c0_159 = arith.constant 0 : index
    %161 = vector.load %arg42[%c0_158, %c0_159] : memref<1x64xf32, #tpu.memory_space<vmem>>, vector<1x64xf32>
    %162 = vector.broadcast %161 : vector<1x64xf32> to vector<8x64xf32>
    %163 = arith.addf %160, %162 : vector<8x64xf32>
    %cst_160 = arith.constant 0.000000e+00 : f32
    %164 = vector.broadcast %cst_160 : f32 to vector<8x64xf32>
    %165 = arith.maximumf %163, %164 : vector<8x64xf32>
    %166 = arith.addf %111, %165 : vector<8x64xf32>
    %c0_161 = arith.constant 0 : index
    %c0_162 = arith.constant 0 : index
    %167 = vector.load %arg52[%c0_161, %c0_162] : memref<64x128xf32, #tpu.memory_space<vmem>>, vector<64x128xf32>
    %cst_163 = arith.constant dense<0.000000e+00> : vector<8x128xf32>
    %168 = tpu.matmul %166, %167, %cst_163 {dimension_numbers = #tpu.dot_dimension_numbers<[1], [0], [0], [1], [0, 0, 1, 1], [], []>} : vector<8x64xf32>, vector<64x128xf32>, vector<8x128xf32> -> vector<8x128xf32>
    %c0_164 = arith.constant 0 : index
    %c0_165 = arith.constant 0 : index
    %169 = vector.load %arg51[%c0_164, %c0_165] : memref<16x8xf32, #tpu.memory_space<vmem>>, vector<16x8xf32>
    %cst_166 = arith.constant dense<0.000000e+00> : vector<16x128xf32>
    %170 = tpu.matmul %169, %168, %cst_166 {dimension_numbers = #tpu.dot_dimension_numbers<[1], [0], [0], [1], [0, 0, 1, 1], [], []>} : vector<16x8xf32>, vector<8x128xf32>, vector<16x128xf32> -> vector<16x128xf32>
    %171 = arith.truncf %170 : vector<16x128xf32> to vector<16x128xbf16>
    %c0_167 = arith.constant 0 : index
    %c0_168 = arith.constant 0 : index
    %c0_169 = arith.constant 0 : index
    %172 = vector.load %arg43[%c0_167, %c0_168, %c0_169] : memref<3x128x128xbf16, #tpu.memory_space<vmem>>, vector<1x128x128xbf16>
    %173 = vector.shape_cast %172 : vector<1x128x128xbf16> to vector<128x128xbf16>
    %cst_170 = arith.constant dense<0.000000e+00> : vector<16x128xf32>
    %174 = tpu.matmul %171, %173, %cst_170 {dimension_numbers = #tpu.dot_dimension_numbers<[1], [0], [0], [1], [0, 0, 1, 1], [], []>} : vector<16x128xbf16>, vector<128x128xbf16>, vector<16x128xf32> -> vector<16x128xf32>
    %c0_171 = arith.constant 0 : index
    %c0_172 = arith.constant 0 : index
    %c0_173 = arith.constant 0 : index
    %175 = vector.load %arg44[%c0_171, %c0_172, %c0_173] : memref<2x16x16xf32, #tpu.memory_space<vmem>>, vector<1x16x16xf32>
    %176 = vector.shape_cast %175 : vector<1x16x16xf32> to vector<16x16xf32>
    %cst_174 = arith.constant dense<0.000000e+00> : vector<16x128xf32>
    %177 = tpu.matmul %176, %174, %cst_174 {dimension_numbers = #tpu.dot_dimension_numbers<[1], [0], [0], [1], [0, 0, 1, 1], [], []>} : vector<16x16xf32>, vector<16x128xf32>, vector<16x128xf32> -> vector<16x128xf32>
    %c1_175 = arith.constant 1 : index
    %c0_176 = arith.constant 0 : index
    %c0_177 = arith.constant 0 : index
    %178 = vector.load %arg43[%c1_175, %c0_176, %c0_177] : memref<3x128x128xbf16, #tpu.memory_space<vmem>>, vector<1x128x128xbf16>
    %179 = vector.shape_cast %178 : vector<1x128x128xbf16> to vector<128x128xbf16>
    %cst_178 = arith.constant dense<0.000000e+00> : vector<16x128xf32>
    %180 = tpu.matmul %171, %179, %cst_178 {dimension_numbers = #tpu.dot_dimension_numbers<[1], [0], [0], [1], [0, 0, 1, 1], [], []>} : vector<16x128xbf16>, vector<128x128xbf16>, vector<16x128xf32> -> vector<16x128xf32>
    %181 = arith.addf %177, %180 : vector<16x128xf32>
    %c2_179 = arith.constant 2 : index
    %c0_180 = arith.constant 0 : index
    %c0_181 = arith.constant 0 : index
    %182 = vector.load %arg43[%c2_179, %c0_180, %c0_181] : memref<3x128x128xbf16, #tpu.memory_space<vmem>>, vector<1x128x128xbf16>
    %183 = vector.shape_cast %182 : vector<1x128x128xbf16> to vector<128x128xbf16>
    %cst_182 = arith.constant dense<0.000000e+00> : vector<16x128xf32>
    %184 = tpu.matmul %171, %183, %cst_182 {dimension_numbers = #tpu.dot_dimension_numbers<[1], [0], [0], [1], [0, 0, 1, 1], [], []>} : vector<16x128xbf16>, vector<128x128xbf16>, vector<16x128xf32> -> vector<16x128xf32>
    %c1_183 = arith.constant 1 : index
    %c0_184 = arith.constant 0 : index
    %c0_185 = arith.constant 0 : index
    %185 = vector.load %arg44[%c1_183, %c0_184, %c0_185] : memref<2x16x16xf32, #tpu.memory_space<vmem>>, vector<1x16x16xf32>
    %186 = vector.shape_cast %185 : vector<1x16x16xf32> to vector<16x16xf32>
    %cst_186 = arith.constant dense<0.000000e+00> : vector<16x128xf32>
    %187 = tpu.matmul %186, %184, %cst_186 {dimension_numbers = #tpu.dot_dimension_numbers<[1], [0], [0], [1], [0, 0, 1, 1], [], []>} : vector<16x16xf32>, vector<16x128xf32>, vector<16x128xf32> -> vector<16x128xf32>
    %188 = arith.addf %181, %187 : vector<16x128xf32>
    %c0_187 = arith.constant 0 : index
    %c0_188 = arith.constant 0 : index
    %189 = vector.load %arg45[%c0_187, %c0_188] : memref<1x128xf32, #tpu.memory_space<vmem>>, vector<1x128xf32>
    %190 = vector.broadcast %189 : vector<1x128xf32> to vector<16x128xf32>
    %191 = arith.mulf %188, %190 : vector<16x128xf32>
    %c0_189 = arith.constant 0 : index
    %c0_190 = arith.constant 0 : index
    %192 = vector.load %arg46[%c0_189, %c0_190] : memref<1x128xf32, #tpu.memory_space<vmem>>, vector<1x128xf32>
    %193 = vector.broadcast %192 : vector<1x128xf32> to vector<16x128xf32>
    %194 = arith.addf %191, %193 : vector<16x128xf32>
    %cst_191 = arith.constant 0.000000e+00 : f32
    %195 = vector.broadcast %cst_191 : f32 to vector<16x128xf32>
    %196 = arith.maximumf %194, %195 : vector<16x128xf32>
    %197 = arith.truncf %196 : vector<16x128xf32> to vector<16x128xbf16>
    %c0_192 = arith.constant 0 : index
    %c0_193 = arith.constant 0 : index
    %c0_194 = arith.constant 0 : index
    %198 = vector.load %arg47[%c0_192, %c0_193, %c0_194] : memref<3x128x128xbf16, #tpu.memory_space<vmem>>, vector<1x128x128xbf16>
    %199 = vector.shape_cast %198 : vector<1x128x128xbf16> to vector<128x128xbf16>
    %cst_195 = arith.constant dense<0.000000e+00> : vector<16x128xf32>
    %200 = tpu.matmul %197, %199, %cst_195 {dimension_numbers = #tpu.dot_dimension_numbers<[1], [0], [0], [1], [0, 0, 1, 1], [], []>} : vector<16x128xbf16>, vector<128x128xbf16>, vector<16x128xf32> -> vector<16x128xf32>
    %c0_196 = arith.constant 0 : index
    %c0_197 = arith.constant 0 : index
    %c0_198 = arith.constant 0 : index
    %201 = vector.load %arg48[%c0_196, %c0_197, %c0_198] : memref<2x16x16xf32, #tpu.memory_space<vmem>>, vector<1x16x16xf32>
    %202 = vector.shape_cast %201 : vector<1x16x16xf32> to vector<16x16xf32>
    %cst_199 = arith.constant dense<0.000000e+00> : vector<16x128xf32>
    %203 = tpu.matmul %202, %200, %cst_199 {dimension_numbers = #tpu.dot_dimension_numbers<[1], [0], [0], [1], [0, 0, 1, 1], [], []>} : vector<16x16xf32>, vector<16x128xf32>, vector<16x128xf32> -> vector<16x128xf32>
    %c1_200 = arith.constant 1 : index
    %c0_201 = arith.constant 0 : index
    %c0_202 = arith.constant 0 : index
    %204 = vector.load %arg47[%c1_200, %c0_201, %c0_202] : memref<3x128x128xbf16, #tpu.memory_space<vmem>>, vector<1x128x128xbf16>
    %205 = vector.shape_cast %204 : vector<1x128x128xbf16> to vector<128x128xbf16>
    %cst_203 = arith.constant dense<0.000000e+00> : vector<16x128xf32>
    %206 = tpu.matmul %197, %205, %cst_203 {dimension_numbers = #tpu.dot_dimension_numbers<[1], [0], [0], [1], [0, 0, 1, 1], [], []>} : vector<16x128xbf16>, vector<128x128xbf16>, vector<16x128xf32> -> vector<16x128xf32>
    %207 = arith.addf %203, %206 : vector<16x128xf32>
    %c2_204 = arith.constant 2 : index
    %c0_205 = arith.constant 0 : index
    %c0_206 = arith.constant 0 : index
    %208 = vector.load %arg47[%c2_204, %c0_205, %c0_206] : memref<3x128x128xbf16, #tpu.memory_space<vmem>>, vector<1x128x128xbf16>
    %209 = vector.shape_cast %208 : vector<1x128x128xbf16> to vector<128x128xbf16>
    %cst_207 = arith.constant dense<0.000000e+00> : vector<16x128xf32>
    %210 = tpu.matmul %197, %209, %cst_207 {dimension_numbers = #tpu.dot_dimension_numbers<[1], [0], [0], [1], [0, 0, 1, 1], [], []>} : vector<16x128xbf16>, vector<128x128xbf16>, vector<16x128xf32> -> vector<16x128xf32>
    %c1_208 = arith.constant 1 : index
    %c0_209 = arith.constant 0 : index
    %c0_210 = arith.constant 0 : index
    %211 = vector.load %arg48[%c1_208, %c0_209, %c0_210] : memref<2x16x16xf32, #tpu.memory_space<vmem>>, vector<1x16x16xf32>
    %212 = vector.shape_cast %211 : vector<1x16x16xf32> to vector<16x16xf32>
    %cst_211 = arith.constant dense<0.000000e+00> : vector<16x128xf32>
    %213 = tpu.matmul %212, %210, %cst_211 {dimension_numbers = #tpu.dot_dimension_numbers<[1], [0], [0], [1], [0, 0, 1, 1], [], []>} : vector<16x16xf32>, vector<16x128xf32>, vector<16x128xf32> -> vector<16x128xf32>
    %214 = arith.addf %207, %213 : vector<16x128xf32>
    %c0_212 = arith.constant 0 : index
    %c0_213 = arith.constant 0 : index
    %215 = vector.load %arg49[%c0_212, %c0_213] : memref<1x128xf32, #tpu.memory_space<vmem>>, vector<1x128xf32>
    %216 = vector.broadcast %215 : vector<1x128xf32> to vector<16x128xf32>
    %217 = arith.mulf %214, %216 : vector<16x128xf32>
    %c0_214 = arith.constant 0 : index
    %c0_215 = arith.constant 0 : index
    %218 = vector.load %arg50[%c0_214, %c0_215] : memref<1x128xf32, #tpu.memory_space<vmem>>, vector<1x128xf32>
    %219 = vector.broadcast %218 : vector<1x128xf32> to vector<16x128xf32>
    %220 = arith.addf %217, %219 : vector<16x128xf32>
    %cst_216 = arith.constant 0.000000e+00 : f32
    %221 = vector.broadcast %cst_216 : f32 to vector<16x128xf32>
    %222 = arith.maximumf %220, %221 : vector<16x128xf32>
    %223 = arith.truncf %222 : vector<16x128xf32> to vector<16x128xbf16>
    %c0_217 = arith.constant 0 : index
    %c0_218 = arith.constant 0 : index
    %c0_219 = arith.constant 0 : index
    %224 = vector.load %arg8[%c0_217, %c0_218, %c0_219] : memref<3x128x128xbf16, #tpu.memory_space<vmem>>, vector<1x128x128xbf16>
    %225 = vector.shape_cast %224 : vector<1x128x128xbf16> to vector<128x128xbf16>
    %cst_220 = arith.constant dense<0.000000e+00> : vector<16x128xf32>
    %226 = tpu.matmul %223, %225, %cst_220 {dimension_numbers = #tpu.dot_dimension_numbers<[1], [0], [0], [1], [0, 0, 1, 1], [], []>} : vector<16x128xbf16>, vector<128x128xbf16>, vector<16x128xf32> -> vector<16x128xf32>
    %c0_221 = arith.constant 0 : index
    %c0_222 = arith.constant 0 : index
    %c0_223 = arith.constant 0 : index
    %227 = vector.load %arg9[%c0_221, %c0_222, %c0_223] : memref<2x16x16xf32, #tpu.memory_space<vmem>>, vector<1x16x16xf32>
    %228 = vector.shape_cast %227 : vector<1x16x16xf32> to vector<16x16xf32>
    %cst_224 = arith.constant dense<0.000000e+00> : vector<16x128xf32>
    %229 = tpu.matmul %228, %226, %cst_224 {dimension_numbers = #tpu.dot_dimension_numbers<[1], [0], [0], [1], [0, 0, 1, 1], [], []>} : vector<16x16xf32>, vector<16x128xf32>, vector<16x128xf32> -> vector<16x128xf32>
    %c1_225 = arith.constant 1 : index
    %c0_226 = arith.constant 0 : index
    %c0_227 = arith.constant 0 : index
    %230 = vector.load %arg8[%c1_225, %c0_226, %c0_227] : memref<3x128x128xbf16, #tpu.memory_space<vmem>>, vector<1x128x128xbf16>
    %231 = vector.shape_cast %230 : vector<1x128x128xbf16> to vector<128x128xbf16>
    %cst_228 = arith.constant dense<0.000000e+00> : vector<16x128xf32>
    %232 = tpu.matmul %223, %231, %cst_228 {dimension_numbers = #tpu.dot_dimension_numbers<[1], [0], [0], [1], [0, 0, 1, 1], [], []>} : vector<16x128xbf16>, vector<128x128xbf16>, vector<16x128xf32> -> vector<16x128xf32>
    %233 = arith.addf %229, %232 : vector<16x128xf32>
    %c2_229 = arith.constant 2 : index
    %c0_230 = arith.constant 0 : index
    %c0_231 = arith.constant 0 : index
    %234 = vector.load %arg8[%c2_229, %c0_230, %c0_231] : memref<3x128x128xbf16, #tpu.memory_space<vmem>>, vector<1x128x128xbf16>
    %235 = vector.shape_cast %234 : vector<1x128x128xbf16> to vector<128x128xbf16>
    %cst_232 = arith.constant dense<0.000000e+00> : vector<16x128xf32>
    %236 = tpu.matmul %223, %235, %cst_232 {dimension_numbers = #tpu.dot_dimension_numbers<[1], [0], [0], [1], [0, 0, 1, 1], [], []>} : vector<16x128xbf16>, vector<128x128xbf16>, vector<16x128xf32> -> vector<16x128xf32>
    %c1_233 = arith.constant 1 : index
    %c0_234 = arith.constant 0 : index
    %c0_235 = arith.constant 0 : index
    %237 = vector.load %arg9[%c1_233, %c0_234, %c0_235] : memref<2x16x16xf32, #tpu.memory_space<vmem>>, vector<1x16x16xf32>
    %238 = vector.shape_cast %237 : vector<1x16x16xf32> to vector<16x16xf32>
    %cst_236 = arith.constant dense<0.000000e+00> : vector<16x128xf32>
    %239 = tpu.matmul %238, %236, %cst_236 {dimension_numbers = #tpu.dot_dimension_numbers<[1], [0], [0], [1], [0, 0, 1, 1], [], []>} : vector<16x16xf32>, vector<16x128xf32>, vector<16x128xf32> -> vector<16x128xf32>
    %240 = arith.addf %233, %239 : vector<16x128xf32>
    %241 = arith.truncf %1 : vector<16x48xf32> to vector<16x48xbf16>
    %c0_237 = arith.constant 0 : index
    %c0_238 = arith.constant 0 : index
    %c0_239 = arith.constant 0 : index
    %242 = vector.load %arg6[%c0_237, %c0_238, %c0_239] : memref<3x48x128xbf16, #tpu.memory_space<vmem>>, vector<1x48x128xbf16>
    %243 = vector.shape_cast %242 : vector<1x48x128xbf16> to vector<48x128xbf16>
    %cst_240 = arith.constant dense<0.000000e+00> : vector<16x128xf32>
    %244 = tpu.matmul %241, %243, %cst_240 {dimension_numbers = #tpu.dot_dimension_numbers<[1], [0], [0], [1], [0, 0, 1, 1], [], []>} : vector<16x48xbf16>, vector<48x128xbf16>, vector<16x128xf32> -> vector<16x128xf32>
    %c0_241 = arith.constant 0 : index
    %c0_242 = arith.constant 0 : index
    %c0_243 = arith.constant 0 : index
    %245 = vector.load %arg7[%c0_241, %c0_242, %c0_243] : memref<2x16x16xf32, #tpu.memory_space<vmem>>, vector<1x16x16xf32>
    %246 = vector.shape_cast %245 : vector<1x16x16xf32> to vector<16x16xf32>
    %cst_244 = arith.constant dense<0.000000e+00> : vector<16x128xf32>
    %247 = tpu.matmul %246, %244, %cst_244 {dimension_numbers = #tpu.dot_dimension_numbers<[1], [0], [0], [1], [0, 0, 1, 1], [], []>} : vector<16x16xf32>, vector<16x128xf32>, vector<16x128xf32> -> vector<16x128xf32>
    %c1_245 = arith.constant 1 : index
    %c0_246 = arith.constant 0 : index
    %c0_247 = arith.constant 0 : index
    %248 = vector.load %arg6[%c1_245, %c0_246, %c0_247] : memref<3x48x128xbf16, #tpu.memory_space<vmem>>, vector<1x48x128xbf16>
    %249 = vector.shape_cast %248 : vector<1x48x128xbf16> to vector<48x128xbf16>
    %cst_248 = arith.constant dense<0.000000e+00> : vector<16x128xf32>
    %250 = tpu.matmul %241, %249, %cst_248 {dimension_numbers = #tpu.dot_dimension_numbers<[1], [0], [0], [1], [0, 0, 1, 1], [], []>} : vector<16x48xbf16>, vector<48x128xbf16>, vector<16x128xf32> -> vector<16x128xf32>
    %251 = arith.addf %247, %250 : vector<16x128xf32>
    %c2_249 = arith.constant 2 : index
    %c0_250 = arith.constant 0 : index
    %c0_251 = arith.constant 0 : index
    %252 = vector.load %arg6[%c2_249, %c0_250, %c0_251] : memref<3x48x128xbf16, #tpu.memory_space<vmem>>, vector<1x48x128xbf16>
    %253 = vector.shape_cast %252 : vector<1x48x128xbf16> to vector<48x128xbf16>
    %cst_252 = arith.constant dense<0.000000e+00> : vector<16x128xf32>
    %254 = tpu.matmul %241, %253, %cst_252 {dimension_numbers = #tpu.dot_dimension_numbers<[1], [0], [0], [1], [0, 0, 1, 1], [], []>} : vector<16x48xbf16>, vector<48x128xbf16>, vector<16x128xf32> -> vector<16x128xf32>
    %c1_253 = arith.constant 1 : index
    %c0_254 = arith.constant 0 : index
    %c0_255 = arith.constant 0 : index
    %255 = vector.load %arg7[%c1_253, %c0_254, %c0_255] : memref<2x16x16xf32, #tpu.memory_space<vmem>>, vector<1x16x16xf32>
    %256 = vector.shape_cast %255 : vector<1x16x16xf32> to vector<16x16xf32>
    %cst_256 = arith.constant dense<0.000000e+00> : vector<16x128xf32>
    %257 = tpu.matmul %256, %254, %cst_256 {dimension_numbers = #tpu.dot_dimension_numbers<[1], [0], [0], [1], [0, 0, 1, 1], [], []>} : vector<16x16xf32>, vector<16x128xf32>, vector<16x128xf32> -> vector<16x128xf32>
    %258 = arith.addf %251, %257 : vector<16x128xf32>
    %259 = arith.addf %240, %258 : vector<16x128xf32>
    %c0_257 = arith.constant 0 : index
    %c0_258 = arith.constant 0 : index
    %260 = vector.load %arg4[%c0_257, %c0_258] : memref<1x128xf32, #tpu.memory_space<vmem>>, vector<1x128xf32>
    %261 = vector.broadcast %260 : vector<1x128xf32> to vector<16x128xf32>
    %262 = arith.mulf %259, %261 : vector<16x128xf32>
    %c0_259 = arith.constant 0 : index
    %c0_260 = arith.constant 0 : index
    %263 = vector.load %arg5[%c0_259, %c0_260] : memref<1x128xf32, #tpu.memory_space<vmem>>, vector<1x128xf32>
    %264 = vector.broadcast %263 : vector<1x128xf32> to vector<16x128xf32>
    %265 = arith.addf %262, %264 : vector<16x128xf32>
    %cst_261 = arith.constant 0.000000e+00 : f32
    %266 = vector.broadcast %cst_261 : f32 to vector<16x128xf32>
    %267 = arith.maximumf %265, %266 : vector<16x128xf32>
    %268 = arith.truncf %267 : vector<16x128xf32> to vector<16x128xbf16>
    %c0_262 = arith.constant 0 : index
    %c0_263 = arith.constant 0 : index
    %c0_264 = arith.constant 0 : index
    %269 = vector.load %arg10[%c0_262, %c0_263, %c0_264] : memref<3x128x64xbf16, #tpu.memory_space<vmem>>, vector<1x128x64xbf16>
    %270 = vector.shape_cast %269 : vector<1x128x64xbf16> to vector<128x64xbf16>
    %cst_265 = arith.constant dense<0.000000e+00> : vector<16x64xf32>
    %271 = tpu.matmul %268, %270, %cst_265 {dimension_numbers = #tpu.dot_dimension_numbers<[1], [0], [0], [1], [0, 0, 1, 1], [], []>} : vector<16x128xbf16>, vector<128x64xbf16>, vector<16x64xf32> -> vector<16x64xf32>
    %c0_266 = arith.constant 0 : index
    %c0_267 = arith.constant 0 : index
    %c0_268 = arith.constant 0 : index
    %272 = vector.load %arg11[%c0_266, %c0_267, %c0_268] : memref<2x16x16xf32, #tpu.memory_space<vmem>>, vector<1x16x16xf32>
    %273 = vector.shape_cast %272 : vector<1x16x16xf32> to vector<16x16xf32>
    %cst_269 = arith.constant dense<0.000000e+00> : vector<16x64xf32>
    %274 = tpu.matmul %273, %271, %cst_269 {dimension_numbers = #tpu.dot_dimension_numbers<[1], [0], [0], [1], [0, 0, 1, 1], [], []>} : vector<16x16xf32>, vector<16x64xf32>, vector<16x64xf32> -> vector<16x64xf32>
    %c1_270 = arith.constant 1 : index
    %c0_271 = arith.constant 0 : index
    %c0_272 = arith.constant 0 : index
    %275 = vector.load %arg10[%c1_270, %c0_271, %c0_272] : memref<3x128x64xbf16, #tpu.memory_space<vmem>>, vector<1x128x64xbf16>
    %276 = vector.shape_cast %275 : vector<1x128x64xbf16> to vector<128x64xbf16>
    %cst_273 = arith.constant dense<0.000000e+00> : vector<16x64xf32>
    %277 = tpu.matmul %268, %276, %cst_273 {dimension_numbers = #tpu.dot_dimension_numbers<[1], [0], [0], [1], [0, 0, 1, 1], [], []>} : vector<16x128xbf16>, vector<128x64xbf16>, vector<16x64xf32> -> vector<16x64xf32>
    %278 = arith.addf %274, %277 : vector<16x64xf32>
    %c2_274 = arith.constant 2 : index
    %c0_275 = arith.constant 0 : index
    %c0_276 = arith.constant 0 : index
    %279 = vector.load %arg10[%c2_274, %c0_275, %c0_276] : memref<3x128x64xbf16, #tpu.memory_space<vmem>>, vector<1x128x64xbf16>
    %280 = vector.shape_cast %279 : vector<1x128x64xbf16> to vector<128x64xbf16>
    %cst_277 = arith.constant dense<0.000000e+00> : vector<16x64xf32>
    %281 = tpu.matmul %268, %280, %cst_277 {dimension_numbers = #tpu.dot_dimension_numbers<[1], [0], [0], [1], [0, 0, 1, 1], [], []>} : vector<16x128xbf16>, vector<128x64xbf16>, vector<16x64xf32> -> vector<16x64xf32>
    %c1_278 = arith.constant 1 : index
    %c0_279 = arith.constant 0 : index
    %c0_280 = arith.constant 0 : index
    %282 = vector.load %arg11[%c1_278, %c0_279, %c0_280] : memref<2x16x16xf32, #tpu.memory_space<vmem>>, vector<1x16x16xf32>
    %283 = vector.shape_cast %282 : vector<1x16x16xf32> to vector<16x16xf32>
    %cst_281 = arith.constant dense<0.000000e+00> : vector<16x64xf32>
    %284 = tpu.matmul %283, %281, %cst_281 {dimension_numbers = #tpu.dot_dimension_numbers<[1], [0], [0], [1], [0, 0, 1, 1], [], []>} : vector<16x16xf32>, vector<16x64xf32>, vector<16x64xf32> -> vector<16x64xf32>
    %285 = arith.addf %278, %284 : vector<16x64xf32>
    %c0_282 = arith.constant 0 : index
    %c0_283 = arith.constant 0 : index
    %286 = vector.load %arg12[%c0_282, %c0_283] : memref<1x64xf32, #tpu.memory_space<vmem>>, vector<1x64xf32>
    %287 = vector.broadcast %286 : vector<1x64xf32> to vector<16x64xf32>
    %288 = arith.mulf %285, %287 : vector<16x64xf32>
    %c0_284 = arith.constant 0 : index
    %c0_285 = arith.constant 0 : index
    %289 = vector.load %arg13[%c0_284, %c0_285] : memref<1x64xf32, #tpu.memory_space<vmem>>, vector<1x64xf32>
    %290 = vector.broadcast %289 : vector<1x64xf32> to vector<16x64xf32>
    %291 = arith.addf %288, %290 : vector<16x64xf32>
    %cst_286 = arith.constant 0.000000e+00 : f32
    %292 = vector.broadcast %cst_286 : f32 to vector<16x64xf32>
    %293 = arith.maximumf %291, %292 : vector<16x64xf32>
    %294 = arith.truncf %293 : vector<16x64xf32> to vector<16x64xbf16>
    %c0_287 = arith.constant 0 : index
    %c0_288 = arith.constant 0 : index
    %c0_289 = arith.constant 0 : index
    %295 = vector.load %arg14[%c0_287, %c0_288, %c0_289] : memref<7x64x32xbf16, #tpu.memory_space<vmem>>, vector<1x64x32xbf16>
    %296 = vector.shape_cast %295 : vector<1x64x32xbf16> to vector<64x32xbf16>
    %cst_290 = arith.constant dense<0.000000e+00> : vector<16x32xf32>
    %297 = tpu.matmul %294, %296, %cst_290 {dimension_numbers = #tpu.dot_dimension_numbers<[1], [0], [0], [1], [0, 0, 1, 1], [], []>} : vector<16x64xbf16>, vector<64x32xbf16>, vector<16x32xf32> -> vector<16x32xf32>
    %c0_291 = arith.constant 0 : index
    %c0_292 = arith.constant 0 : index
    %c0_293 = arith.constant 0 : index
    %298 = vector.load %arg15[%c0_291, %c0_292, %c0_293] : memref<6x16x16xf32, #tpu.memory_space<vmem>>, vector<1x16x16xf32>
    %299 = vector.shape_cast %298 : vector<1x16x16xf32> to vector<16x16xf32>
    %cst_294 = arith.constant dense<0.000000e+00> : vector<16x32xf32>
    %300 = tpu.matmul %299, %297, %cst_294 {dimension_numbers = #tpu.dot_dimension_numbers<[1], [0], [0], [1], [0, 0, 1, 1], [], []>} : vector<16x16xf32>, vector<16x32xf32>, vector<16x32xf32> -> vector<16x32xf32>
    %c1_295 = arith.constant 1 : index
    %c0_296 = arith.constant 0 : index
    %c0_297 = arith.constant 0 : index
    %301 = vector.load %arg14[%c1_295, %c0_296, %c0_297] : memref<7x64x32xbf16, #tpu.memory_space<vmem>>, vector<1x64x32xbf16>
    %302 = vector.shape_cast %301 : vector<1x64x32xbf16> to vector<64x32xbf16>
    %cst_298 = arith.constant dense<0.000000e+00> : vector<16x32xf32>
    %303 = tpu.matmul %294, %302, %cst_298 {dimension_numbers = #tpu.dot_dimension_numbers<[1], [0], [0], [1], [0, 0, 1, 1], [], []>} : vector<16x64xbf16>, vector<64x32xbf16>, vector<16x32xf32> -> vector<16x32xf32>
    %c1_299 = arith.constant 1 : index
    %c0_300 = arith.constant 0 : index
    %c0_301 = arith.constant 0 : index
    %304 = vector.load %arg15[%c1_299, %c0_300, %c0_301] : memref<6x16x16xf32, #tpu.memory_space<vmem>>, vector<1x16x16xf32>
    %305 = vector.shape_cast %304 : vector<1x16x16xf32> to vector<16x16xf32>
    %cst_302 = arith.constant dense<0.000000e+00> : vector<16x32xf32>
    %306 = tpu.matmul %305, %303, %cst_302 {dimension_numbers = #tpu.dot_dimension_numbers<[1], [0], [0], [1], [0, 0, 1, 1], [], []>} : vector<16x16xf32>, vector<16x32xf32>, vector<16x32xf32> -> vector<16x32xf32>
    %307 = arith.addf %300, %306 : vector<16x32xf32>
    %c2_303 = arith.constant 2 : index
    %c0_304 = arith.constant 0 : index
    %c0_305 = arith.constant 0 : index
    %308 = vector.load %arg14[%c2_303, %c0_304, %c0_305] : memref<7x64x32xbf16, #tpu.memory_space<vmem>>, vector<1x64x32xbf16>
    %309 = vector.shape_cast %308 : vector<1x64x32xbf16> to vector<64x32xbf16>
    %cst_306 = arith.constant dense<0.000000e+00> : vector<16x32xf32>
    %310 = tpu.matmul %294, %309, %cst_306 {dimension_numbers = #tpu.dot_dimension_numbers<[1], [0], [0], [1], [0, 0, 1, 1], [], []>} : vector<16x64xbf16>, vector<64x32xbf16>, vector<16x32xf32> -> vector<16x32xf32>
    %c2_307 = arith.constant 2 : index
    %c0_308 = arith.constant 0 : index
    %c0_309 = arith.constant 0 : index
    %311 = vector.load %arg15[%c2_307, %c0_308, %c0_309] : memref<6x16x16xf32, #tpu.memory_space<vmem>>, vector<1x16x16xf32>
    %312 = vector.shape_cast %311 : vector<1x16x16xf32> to vector<16x16xf32>
    %cst_310 = arith.constant dense<0.000000e+00> : vector<16x32xf32>
    %313 = tpu.matmul %312, %310, %cst_310 {dimension_numbers = #tpu.dot_dimension_numbers<[1], [0], [0], [1], [0, 0, 1, 1], [], []>} : vector<16x16xf32>, vector<16x32xf32>, vector<16x32xf32> -> vector<16x32xf32>
    %314 = arith.addf %307, %313 : vector<16x32xf32>
    %c3 = arith.constant 3 : index
    %c0_311 = arith.constant 0 : index
    %c0_312 = arith.constant 0 : index
    %315 = vector.load %arg14[%c3, %c0_311, %c0_312] : memref<7x64x32xbf16, #tpu.memory_space<vmem>>, vector<1x64x32xbf16>
    %316 = vector.shape_cast %315 : vector<1x64x32xbf16> to vector<64x32xbf16>
    %cst_313 = arith.constant dense<0.000000e+00> : vector<16x32xf32>
    %317 = tpu.matmul %294, %316, %cst_313 {dimension_numbers = #tpu.dot_dimension_numbers<[1], [0], [0], [1], [0, 0, 1, 1], [], []>} : vector<16x64xbf16>, vector<64x32xbf16>, vector<16x32xf32> -> vector<16x32xf32>
    %318 = arith.addf %314, %317 : vector<16x32xf32>
    %c4 = arith.constant 4 : index
    %c0_314 = arith.constant 0 : index
    %c0_315 = arith.constant 0 : index
    %319 = vector.load %arg14[%c4, %c0_314, %c0_315] : memref<7x64x32xbf16, #tpu.memory_space<vmem>>, vector<1x64x32xbf16>
    %320 = vector.shape_cast %319 : vector<1x64x32xbf16> to vector<64x32xbf16>
    %cst_316 = arith.constant dense<0.000000e+00> : vector<16x32xf32>
    %321 = tpu.matmul %294, %320, %cst_316 {dimension_numbers = #tpu.dot_dimension_numbers<[1], [0], [0], [1], [0, 0, 1, 1], [], []>} : vector<16x64xbf16>, vector<64x32xbf16>, vector<16x32xf32> -> vector<16x32xf32>
    %c3_317 = arith.constant 3 : index
    %c0_318 = arith.constant 0 : index
    %c0_319 = arith.constant 0 : index
    %322 = vector.load %arg15[%c3_317, %c0_318, %c0_319] : memref<6x16x16xf32, #tpu.memory_space<vmem>>, vector<1x16x16xf32>
    %323 = vector.shape_cast %322 : vector<1x16x16xf32> to vector<16x16xf32>
    %cst_320 = arith.constant dense<0.000000e+00> : vector<16x32xf32>
    %324 = tpu.matmul %323, %321, %cst_320 {dimension_numbers = #tpu.dot_dimension_numbers<[1], [0], [0], [1], [0, 0, 1, 1], [], []>} : vector<16x16xf32>, vector<16x32xf32>, vector<16x32xf32> -> vector<16x32xf32>
    %325 = arith.addf %318, %324 : vector<16x32xf32>
    %c5 = arith.constant 5 : index
    %c0_321 = arith.constant 0 : index
    %c0_322 = arith.constant 0 : index
    %326 = vector.load %arg14[%c5, %c0_321, %c0_322] : memref<7x64x32xbf16, #tpu.memory_space<vmem>>, vector<1x64x32xbf16>
    %327 = vector.shape_cast %326 : vector<1x64x32xbf16> to vector<64x32xbf16>
    %cst_323 = arith.constant dense<0.000000e+00> : vector<16x32xf32>
    %328 = tpu.matmul %294, %327, %cst_323 {dimension_numbers = #tpu.dot_dimension_numbers<[1], [0], [0], [1], [0, 0, 1, 1], [], []>} : vector<16x64xbf16>, vector<64x32xbf16>, vector<16x32xf32> -> vector<16x32xf32>
    %c4_324 = arith.constant 4 : index
    %c0_325 = arith.constant 0 : index
    %c0_326 = arith.constant 0 : index
    %329 = vector.load %arg15[%c4_324, %c0_325, %c0_326] : memref<6x16x16xf32, #tpu.memory_space<vmem>>, vector<1x16x16xf32>
    %330 = vector.shape_cast %329 : vector<1x16x16xf32> to vector<16x16xf32>
    %cst_327 = arith.constant dense<0.000000e+00> : vector<16x32xf32>
    %331 = tpu.matmul %330, %328, %cst_327 {dimension_numbers = #tpu.dot_dimension_numbers<[1], [0], [0], [1], [0, 0, 1, 1], [], []>} : vector<16x16xf32>, vector<16x32xf32>, vector<16x32xf32> -> vector<16x32xf32>
    %332 = arith.addf %325, %331 : vector<16x32xf32>
    %c6 = arith.constant 6 : index
    %c0_328 = arith.constant 0 : index
    %c0_329 = arith.constant 0 : index
    %333 = vector.load %arg14[%c6, %c0_328, %c0_329] : memref<7x64x32xbf16, #tpu.memory_space<vmem>>, vector<1x64x32xbf16>
    %334 = vector.shape_cast %333 : vector<1x64x32xbf16> to vector<64x32xbf16>
    %cst_330 = arith.constant dense<0.000000e+00> : vector<16x32xf32>
    %335 = tpu.matmul %294, %334, %cst_330 {dimension_numbers = #tpu.dot_dimension_numbers<[1], [0], [0], [1], [0, 0, 1, 1], [], []>} : vector<16x64xbf16>, vector<64x32xbf16>, vector<16x32xf32> -> vector<16x32xf32>
    %c5_331 = arith.constant 5 : index
    %c0_332 = arith.constant 0 : index
    %c0_333 = arith.constant 0 : index
    %336 = vector.load %arg15[%c5_331, %c0_332, %c0_333] : memref<6x16x16xf32, #tpu.memory_space<vmem>>, vector<1x16x16xf32>
    %337 = vector.shape_cast %336 : vector<1x16x16xf32> to vector<16x16xf32>
    %cst_334 = arith.constant dense<0.000000e+00> : vector<16x32xf32>
    %338 = tpu.matmul %337, %335, %cst_334 {dimension_numbers = #tpu.dot_dimension_numbers<[1], [0], [0], [1], [0, 0, 1, 1], [], []>} : vector<16x16xf32>, vector<16x32xf32>, vector<16x32xf32> -> vector<16x32xf32>
    %339 = arith.addf %332, %338 : vector<16x32xf32>
    %c0_335 = arith.constant 0 : index
    %c0_336 = arith.constant 0 : index
    %340 = vector.load %arg16[%c0_335, %c0_336] : memref<1x32xf32, #tpu.memory_space<vmem>>, vector<1x32xf32>
    %341 = vector.broadcast %340 : vector<1x32xf32> to vector<16x32xf32>
    %342 = arith.addf %339, %341 : vector<16x32xf32>
    %343 = vector.extract_strided_slice %342 {offsets = [0, 16], sizes = [16, 16], strides = [1, 1]} : vector<16x32xf32> to vector<16x16xf32>
    %344 = vector.extract_strided_slice %342 {offsets = [0, 0], sizes = [16, 16], strides = [1, 1]} : vector<16x32xf32> to vector<16x16xf32>
    %345 = arith.subf %343, %344 : vector<16x16xf32>
    %cst_337 = arith.constant 0.000000e+00 : f32
    %346 = vector.broadcast %cst_337 : f32 to vector<16x16xf32>
    %347 = arith.subf %346, %345 : vector<16x16xf32>
    %348 = math.exp %347 : vector<16x16xf32>
    %cst_338 = arith.constant 1.000000e+00 : f32
    %349 = vector.broadcast %cst_338 : f32 to vector<16x16xf32>
    %350 = arith.addf %349, %348 : vector<16x16xf32>
    %cst_339 = arith.constant 1.000000e+00 : f32
    %351 = vector.broadcast %cst_339 : f32 to vector<16x16xf32>
    %352 = arith.divf %351, %350 : vector<16x16xf32>
    %cst_340 = arith.constant 1.000000e+00 : f32
    %353 = vector.broadcast %cst_340 : f32 to vector<16x16xf32>
    %354 = arith.subf %353, %352 : vector<16x16xf32>
    %c0_341 = arith.constant 0 : index
    %c0_342 = arith.constant 0 : index
    %c0_343 = arith.constant 0 : index
    %c0_344 = arith.constant 0 : index
    %355 = vector.load %arg53[%c0_341, %c0_342, %c0_343, %c0_344] : memref<1x2x16x16xf32, #tpu.memory_space<vmem>>, vector<1x1x16x16xf32>
    %356 = vector.shape_cast %355 : vector<1x1x16x16xf32> to vector<16x16xf32>
    %357 = vector.shape_cast %354 : vector<16x16xf32> to vector<1x1x16x16xf32>
    tpu.vector_store %arg53[%c0_341, %c0_342, %c0_343, %c0_344], %357 {strides = array<i32>} : memref<1x2x16x16xf32, #tpu.memory_space<vmem>>, vector<1x1x16x16xf32>,
    %c0_345 = arith.constant 0 : index
    %c1_346 = arith.constant 1 : index
    %c0_347 = arith.constant 0 : index
    %c0_348 = arith.constant 0 : index
    %358 = vector.load %arg53[%c0_345, %c1_346, %c0_347, %c0_348] : memref<1x2x16x16xf32, #tpu.memory_space<vmem>>, vector<1x1x16x16xf32>
    %359 = vector.shape_cast %358 : vector<1x1x16x16xf32> to vector<16x16xf32>
    %360 = vector.shape_cast %352 : vector<16x16xf32> to vector<1x1x16x16xf32>
    tpu.vector_store %arg53[%c0_345, %c1_346, %c0_347, %c0_348], %360 {strides = array<i32>} : memref<1x2x16x16xf32, #tpu.memory_space<vmem>>, vector<1x1x16x16xf32>,
    return
  }
  func.func @transform_0(%arg0: i32) -> (i32, i32, i32) {
    %c0_i32 = arith.constant 0 : i32
    %c0_i32_0 = arith.constant 0 : i32
    %c0_i32_1 = arith.constant 0 : i32
    return %arg0, %c0_i32, %c0_i32_0 : i32, i32, i32
  }
  func.func @transform_1(%arg0: i32) -> (i32, i32, i32) {
    %c0_i32 = arith.constant 0 : i32
    %c0_i32_0 = arith.constant 0 : i32
    %c0_i32_1 = arith.constant 0 : i32
    return %arg0, %c0_i32, %c0_i32_0 : i32, i32, i32
  }
  func.func @transform_2(%arg0: i32) -> (i32, i32, i32) {
    %c0_i32 = arith.constant 0 : i32
    %c0_i32_0 = arith.constant 0 : i32
    %c0_i32_1 = arith.constant 0 : i32
    return %arg0, %c0_i32, %c0_i32_0 : i32, i32, i32
  }
  func.func @transform_3(%arg0: i32) -> (i32, i32) {
    %c0_i32 = arith.constant 0 : i32
    %c0_i32_0 = arith.constant 0 : i32
    %c0_i32_1 = arith.constant 0 : i32
    return %c0_i32, %c0_i32_0 : i32, i32
  }
  func.func @transform_4(%arg0: i32) -> (i32, i32) {
    %c0_i32 = arith.constant 0 : i32
    %c0_i32_0 = arith.constant 0 : i32
    %c0_i32_1 = arith.constant 0 : i32
    return %c0_i32, %c0_i32_0 : i32, i32
  }
  func.func @transform_5(%arg0: i32) -> (i32, i32, i32) {
    %c0_i32 = arith.constant 0 : i32
    %c0_i32_0 = arith.constant 0 : i32
    %c0_i32_1 = arith.constant 0 : i32
    %c0_i32_2 = arith.constant 0 : i32
    return %c0_i32, %c0_i32_0, %c0_i32_1 : i32, i32, i32
  }
  func.func @transform_6(%arg0: i32) -> (i32, i32, i32) {
    %c0_i32 = arith.constant 0 : i32
    %c0_i32_0 = arith.constant 0 : i32
    %c0_i32_1 = arith.constant 0 : i32
    %c0_i32_2 = arith.constant 0 : i32
    return %c0_i32, %c0_i32_0, %c0_i32_1 : i32, i32, i32
  }
  func.func @transform_7(%arg0: i32) -> (i32, i32, i32) {
    %c0_i32 = arith.constant 0 : i32
    %c0_i32_0 = arith.constant 0 : i32
    %c0_i32_1 = arith.constant 0 : i32
    %c0_i32_2 = arith.constant 0 : i32
    return %c0_i32, %c0_i32_0, %c0_i32_1 : i32, i32, i32
  }
  func.func @transform_8(%arg0: i32) -> (i32, i32, i32) {
    %c0_i32 = arith.constant 0 : i32
    %c0_i32_0 = arith.constant 0 : i32
    %c0_i32_1 = arith.constant 0 : i32
    %c0_i32_2 = arith.constant 0 : i32
    return %c0_i32, %c0_i32_0, %c0_i32_1 : i32, i32, i32
  }
  func.func @transform_9(%arg0: i32) -> (i32, i32, i32) {
    %c0_i32 = arith.constant 0 : i32
    %c0_i32_0 = arith.constant 0 : i32
    %c0_i32_1 = arith.constant 0 : i32
    %c0_i32_2 = arith.constant 0 : i32
    return %c0_i32, %c0_i32_0, %c0_i32_1 : i32, i32, i32
  }
  func.func @transform_10(%arg0: i32) -> (i32, i32, i32) {
    %c0_i32 = arith.constant 0 : i32
    %c0_i32_0 = arith.constant 0 : i32
    %c0_i32_1 = arith.constant 0 : i32
    %c0_i32_2 = arith.constant 0 : i32
    return %c0_i32, %c0_i32_0, %c0_i32_1 : i32, i32, i32
  }
  func.func @transform_11(%arg0: i32) -> (i32, i32) {
    %c0_i32 = arith.constant 0 : i32
    %c0_i32_0 = arith.constant 0 : i32
    %c0_i32_1 = arith.constant 0 : i32
    return %c0_i32, %c0_i32_0 : i32, i32
  }
  func.func @transform_12(%arg0: i32) -> (i32, i32) {
    %c0_i32 = arith.constant 0 : i32
    %c0_i32_0 = arith.constant 0 : i32
    %c0_i32_1 = arith.constant 0 : i32
    return %c0_i32, %c0_i32_0 : i32, i32
  }
  func.func @transform_13(%arg0: i32) -> (i32, i32, i32) {
    %c0_i32 = arith.constant 0 : i32
    %c0_i32_0 = arith.constant 0 : i32
    %c0_i32_1 = arith.constant 0 : i32
    %c0_i32_2 = arith.constant 0 : i32
    return %c0_i32, %c0_i32_0, %c0_i32_1 : i32, i32, i32
  }
  func.func @transform_14(%arg0: i32) -> (i32, i32, i32) {
    %c0_i32 = arith.constant 0 : i32
    %c0_i32_0 = arith.constant 0 : i32
    %c0_i32_1 = arith.constant 0 : i32
    %c0_i32_2 = arith.constant 0 : i32
    return %c0_i32, %c0_i32_0, %c0_i32_1 : i32, i32, i32
  }
  func.func @transform_15(%arg0: i32) -> (i32, i32) {
    %c0_i32 = arith.constant 0 : i32
    %c0_i32_0 = arith.constant 0 : i32
    %c0_i32_1 = arith.constant 0 : i32
    return %c0_i32, %c0_i32_0 : i32, i32
  }
  func.func @transform_16(%arg0: i32) -> (i32, i32, i32) {
    %c0_i32 = arith.constant 0 : i32
    %c0_i32_0 = arith.constant 0 : i32
    %c0_i32_1 = arith.constant 0 : i32
    %c0_i32_2 = arith.constant 0 : i32
    return %c0_i32, %c0_i32_0, %c0_i32_1 : i32, i32, i32
  }
  func.func @transform_17(%arg0: i32) -> (i32, i32, i32) {
    %c0_i32 = arith.constant 0 : i32
    %c0_i32_0 = arith.constant 0 : i32
    %c0_i32_1 = arith.constant 0 : i32
    %c0_i32_2 = arith.constant 0 : i32
    return %c0_i32, %c0_i32_0, %c0_i32_1 : i32, i32, i32
  }
  func.func @transform_18(%arg0: i32) -> (i32, i32) {
    %c0_i32 = arith.constant 0 : i32
    %c0_i32_0 = arith.constant 0 : i32
    %c0_i32_1 = arith.constant 0 : i32
    return %c0_i32, %c0_i32_0 : i32, i32
  }
  func.func @transform_19(%arg0: i32) -> (i32, i32) {
    %c0_i32 = arith.constant 0 : i32
    %c0_i32_0 = arith.constant 0 : i32
    %c0_i32_1 = arith.constant 0 : i32
    return %c0_i32, %c0_i32_0 : i32, i32
  }
  func.func @transform_20(%arg0: i32) -> (i32, i32, i32) {
    %c0_i32 = arith.constant 0 : i32
    %c0_i32_0 = arith.constant 0 : i32
    %c0_i32_1 = arith.constant 0 : i32
    %c0_i32_2 = arith.constant 0 : i32
    return %c0_i32, %c0_i32_0, %c0_i32_1 : i32, i32, i32
  }
  func.func @transform_21(%arg0: i32) -> (i32, i32, i32) {
    %c0_i32 = arith.constant 0 : i32
    %c0_i32_0 = arith.constant 0 : i32
    %c0_i32_1 = arith.constant 0 : i32
    %c0_i32_2 = arith.constant 0 : i32
    return %c0_i32, %c0_i32_0, %c0_i32_1 : i32, i32, i32
  }
  func.func @transform_22(%arg0: i32) -> (i32, i32) {
    %c0_i32 = arith.constant 0 : i32
    %c0_i32_0 = arith.constant 0 : i32
    %c0_i32_1 = arith.constant 0 : i32
    return %c0_i32, %c0_i32_0 : i32, i32
  }
  func.func @transform_23(%arg0: i32) -> (i32, i32) {
    %c0_i32 = arith.constant 0 : i32
    %c0_i32_0 = arith.constant 0 : i32
    %c0_i32_1 = arith.constant 0 : i32
    return %c0_i32, %c0_i32_0 : i32, i32
  }
  func.func @transform_24(%arg0: i32) -> (i32, i32, i32) {
    %c0_i32 = arith.constant 0 : i32
    %c0_i32_0 = arith.constant 0 : i32
    %c0_i32_1 = arith.constant 0 : i32
    %c0_i32_2 = arith.constant 0 : i32
    return %c0_i32, %c0_i32_0, %c0_i32_1 : i32, i32, i32
  }
  func.func @transform_25(%arg0: i32) -> (i32, i32, i32) {
    %c0_i32 = arith.constant 0 : i32
    %c0_i32_0 = arith.constant 0 : i32
    %c0_i32_1 = arith.constant 0 : i32
    %c0_i32_2 = arith.constant 0 : i32
    return %c0_i32, %c0_i32_0, %c0_i32_1 : i32, i32, i32
  }
  func.func @transform_26(%arg0: i32) -> (i32, i32) {
    %c0_i32 = arith.constant 0 : i32
    %c0_i32_0 = arith.constant 0 : i32
    %c0_i32_1 = arith.constant 0 : i32
    return %c0_i32, %c0_i32_0 : i32, i32
  }
  func.func @transform_27(%arg0: i32) -> (i32, i32) {
    %c0_i32 = arith.constant 0 : i32
    %c0_i32_0 = arith.constant 0 : i32
    %c0_i32_1 = arith.constant 0 : i32
    return %c0_i32, %c0_i32_0 : i32, i32
  }
  func.func @transform_28(%arg0: i32) -> (i32, i32, i32) {
    %c0_i32 = arith.constant 0 : i32
    %c0_i32_0 = arith.constant 0 : i32
    %c0_i32_1 = arith.constant 0 : i32
    %c0_i32_2 = arith.constant 0 : i32
    return %c0_i32, %c0_i32_0, %c0_i32_1 : i32, i32, i32
  }
  func.func @transform_29(%arg0: i32) -> (i32, i32, i32) {
    %c0_i32 = arith.constant 0 : i32
    %c0_i32_0 = arith.constant 0 : i32
    %c0_i32_1 = arith.constant 0 : i32
    %c0_i32_2 = arith.constant 0 : i32
    return %c0_i32, %c0_i32_0, %c0_i32_1 : i32, i32, i32
  }
  func.func @transform_30(%arg0: i32) -> (i32, i32) {
    %c0_i32 = arith.constant 0 : i32
    %c0_i32_0 = arith.constant 0 : i32
    %c0_i32_1 = arith.constant 0 : i32
    return %c0_i32, %c0_i32_0 : i32, i32
  }
  func.func @transform_31(%arg0: i32) -> (i32, i32) {
    %c0_i32 = arith.constant 0 : i32
    %c0_i32_0 = arith.constant 0 : i32
    %c0_i32_1 = arith.constant 0 : i32
    return %c0_i32, %c0_i32_0 : i32, i32
  }
  func.func @transform_32(%arg0: i32) -> (i32, i32) {
    %c0_i32 = arith.constant 0 : i32
    %c0_i32_0 = arith.constant 0 : i32
    %c0_i32_1 = arith.constant 0 : i32
    return %c0_i32, %c0_i32_0 : i32, i32
  }
  func.func @transform_33(%arg0: i32) -> (i32, i32) {
    %c0_i32 = arith.constant 0 : i32
    %c0_i32_0 = arith.constant 0 : i32
    %c0_i32_1 = arith.constant 0 : i32
    return %c0_i32, %c0_i32_0 : i32, i32
  }
  func.func @transform_34(%arg0: i32) -> (i32, i32, i32) {
    %c0_i32 = arith.constant 0 : i32
    %c0_i32_0 = arith.constant 0 : i32
    %c0_i32_1 = arith.constant 0 : i32
    %c0_i32_2 = arith.constant 0 : i32
    return %c0_i32, %c0_i32_0, %c0_i32_1 : i32, i32, i32
  }
  func.func @transform_35(%arg0: i32) -> (i32, i32, i32) {
    %c0_i32 = arith.constant 0 : i32
    %c0_i32_0 = arith.constant 0 : i32
    %c0_i32_1 = arith.constant 0 : i32
    %c0_i32_2 = arith.constant 0 : i32
    return %c0_i32, %c0_i32_0, %c0_i32_1 : i32, i32, i32
  }
  func.func @transform_36(%arg0: i32) -> (i32, i32) {
    %c0_i32 = arith.constant 0 : i32
    %c0_i32_0 = arith.constant 0 : i32
    %c0_i32_1 = arith.constant 0 : i32
    return %c0_i32, %c0_i32_0 : i32, i32
  }
  func.func @transform_37(%arg0: i32) -> (i32, i32) {
    %c0_i32 = arith.constant 0 : i32
    %c0_i32_0 = arith.constant 0 : i32
    %c0_i32_1 = arith.constant 0 : i32
    return %c0_i32, %c0_i32_0 : i32, i32
  }
  func.func @transform_38(%arg0: i32) -> (i32, i32, i32) {
    %c0_i32 = arith.constant 0 : i32
    %c0_i32_0 = arith.constant 0 : i32
    %c0_i32_1 = arith.constant 0 : i32
    %c0_i32_2 = arith.constant 0 : i32
    return %c0_i32, %c0_i32_0, %c0_i32_1 : i32, i32, i32
  }
  func.func @transform_39(%arg0: i32) -> (i32, i32, i32) {
    %c0_i32 = arith.constant 0 : i32
    %c0_i32_0 = arith.constant 0 : i32
    %c0_i32_1 = arith.constant 0 : i32
    %c0_i32_2 = arith.constant 0 : i32
    return %c0_i32, %c0_i32_0, %c0_i32_1 : i32, i32, i32
  }
  func.func @transform_40(%arg0: i32) -> (i32, i32) {
    %c0_i32 = arith.constant 0 : i32
    %c0_i32_0 = arith.constant 0 : i32
    %c0_i32_1 = arith.constant 0 : i32
    return %c0_i32, %c0_i32_0 : i32, i32
  }
  func.func @transform_41(%arg0: i32) -> (i32, i32) {
    %c0_i32 = arith.constant 0 : i32
    %c0_i32_0 = arith.constant 0 : i32
    %c0_i32_1 = arith.constant 0 : i32
    return %c0_i32, %c0_i32_0 : i32, i32
  }
  func.func @transform_42(%arg0: i32) -> (i32, i32, i32) {
    %c0_i32 = arith.constant 0 : i32
    %c0_i32_0 = arith.constant 0 : i32
    %c0_i32_1 = arith.constant 0 : i32
    %c0_i32_2 = arith.constant 0 : i32
    return %c0_i32, %c0_i32_0, %c0_i32_1 : i32, i32, i32
  }
  func.func @transform_43(%arg0: i32) -> (i32, i32, i32) {
    %c0_i32 = arith.constant 0 : i32
    %c0_i32_0 = arith.constant 0 : i32
    %c0_i32_1 = arith.constant 0 : i32
    %c0_i32_2 = arith.constant 0 : i32
    return %c0_i32, %c0_i32_0, %c0_i32_1 : i32, i32, i32
  }
  func.func @transform_44(%arg0: i32) -> (i32, i32) {
    %c0_i32 = arith.constant 0 : i32
    %c0_i32_0 = arith.constant 0 : i32
    %c0_i32_1 = arith.constant 0 : i32
    return %c0_i32, %c0_i32_0 : i32, i32
  }
  func.func @transform_45(%arg0: i32) -> (i32, i32) {
    %c0_i32 = arith.constant 0 : i32
    %c0_i32_0 = arith.constant 0 : i32
    %c0_i32_1 = arith.constant 0 : i32
    return %c0_i32, %c0_i32_0 : i32, i32
  }
  func.func @transform_46(%arg0: i32) -> (i32, i32, i32) {
    %c0_i32 = arith.constant 0 : i32
    %c0_i32_0 = arith.constant 0 : i32
    %c0_i32_1 = arith.constant 0 : i32
    %c0_i32_2 = arith.constant 0 : i32
    return %c0_i32, %c0_i32_0, %c0_i32_1 : i32, i32, i32
  }
  func.func @transform_47(%arg0: i32) -> (i32, i32, i32) {
    %c0_i32 = arith.constant 0 : i32
    %c0_i32_0 = arith.constant 0 : i32
    %c0_i32_1 = arith.constant 0 : i32
    %c0_i32_2 = arith.constant 0 : i32
    return %c0_i32, %c0_i32_0, %c0_i32_1 : i32, i32, i32
  }
  func.func @transform_48(%arg0: i32) -> (i32, i32) {
    %c0_i32 = arith.constant 0 : i32
    %c0_i32_0 = arith.constant 0 : i32
    %c0_i32_1 = arith.constant 0 : i32
    return %c0_i32, %c0_i32_0 : i32, i32
  }
  func.func @transform_49(%arg0: i32) -> (i32, i32) {
    %c0_i32 = arith.constant 0 : i32
    %c0_i32_0 = arith.constant 0 : i32
    %c0_i32_1 = arith.constant 0 : i32
    return %c0_i32, %c0_i32_0 : i32, i32
  }
  func.func @transform_50(%arg0: i32) -> (i32, i32) {
    %c0_i32 = arith.constant 0 : i32
    %c0_i32_0 = arith.constant 0 : i32
    %c0_i32_1 = arith.constant 0 : i32
    return %c0_i32, %c0_i32_0 : i32, i32
  }
  func.func @transform_51(%arg0: i32) -> (i32, i32) {
    %c0_i32 = arith.constant 0 : i32
    %c0_i32_0 = arith.constant 0 : i32
    %c0_i32_1 = arith.constant 0 : i32
    return %c0_i32, %c0_i32_0 : i32, i32
  }
  func.func @transform_52(%arg0: i32) -> (i32, i32, i32, i32) {
    %c0_i32 = arith.constant 0 : i32
    %c0_i32_0 = arith.constant 0 : i32
    %c0_i32_1 = arith.constant 0 : i32
    %c0_i32_2 = arith.constant 0 : i32
    return %arg0, %c0_i32, %c0_i32_0, %c0_i32_1 : i32, i32, i32, i32
  }
}

</mosaic_0001>

<llo_original>
// kernel: unet_forward.1
$region0: #{unet_forward.1}
  #allocation0 [shape = 'u32[]', space=smem, size = 0x4, offset = 0x4, fixed_abs, tag = 'smem constant byte address 0x4 - core index']
  #allocation1 [shape = 'u32[144,128]{1,0:T(1,128)}', space=vmem, size = 0x12000, scoped, tag = 'internal scratch']
  %s0 = inlined_call_operand.smem [shape: u32[53], index: -1, kind: input, shape index: {}]
  %s1 = sld [smem:[%s0]]
  %s2 = scalar_lea.smem %s0, 1
  %s3 = sld [smem:[%s2]]
  %s4 = scalar_lea.smem %s0, 2
  %s5 = sld [smem:[%s4]]
  %s6 = scalar_lea.smem %s0, 3
  %s7 = sld [smem:[%s6]]
  %s8 = scalar_lea.smem %s0, 4
  %s9 = sld [smem:[%s8]]
  %s10 = scalar_lea.smem %s0, 5
  %s11 = sld [smem:[%s10]]
  %s12 = scalar_lea.smem %s0, 6
  %s13 = sld [smem:[%s12]]
  %s14 = scalar_lea.smem %s0, 7
  %s15 = sld [smem:[%s14]]
  %s16 = scalar_lea.smem %s0, 8
  %s17 = sld [smem:[%s16]]
  %s18 = scalar_lea.smem %s0, 9
  %s19 = sld [smem:[%s18]]
  %s20 = scalar_lea.smem %s0, 10
  %s21 = sld [smem:[%s20]]
  %s22 = scalar_lea.smem %s0, 11
  %s23 = sld [smem:[%s22]]
  %s24 = scalar_lea.smem %s0, 12
  %s25 = sld [smem:[%s24]]
  %s26 = scalar_lea.smem %s0, 13
  %s27 = sld [smem:[%s26]]
  %s28 = scalar_lea.smem %s0, 14
  %s29 = sld [smem:[%s28]]
  %s30 = scalar_lea.smem %s0, 15
  %s31 = sld [smem:[%s30]]
  %s32 = scalar_lea.smem %s0, 16
  %s33 = sld [smem:[%s32]]
  %s34 = scalar_lea.smem %s0, 17
  %s35 = sld [smem:[%s34]]
  %s36 = scalar_lea.smem %s0, 18
  %s37 = sld [smem:[%s36]]
  %s38 = scalar_lea.smem %s0, 19
  %s39 = sld [smem:[%s38]]
  %s40 = scalar_lea.smem %s0, 20
  %s41 = sld [smem:[%s40]]
  %s42 = scalar_lea.smem %s0, 21
  %s43 = sld [smem:[%s42]]
  %s44 = scalar_lea.smem %s0, 22
  %s45 = sld [smem:[%s44]]
  %s46 = scalar_lea.smem %s0, 23
  %s47 = sld [smem:[%s46]]
  %s48 = scalar_lea.smem %s0, 24
  %s49 = sld [smem:[%s48]]
  %s50 = scalar_lea.smem %s0, 25
  %s51 = sld [smem:[%s50]]
  %s52 = scalar_lea.smem %s0, 26
  %s53 = sld [smem:[%s52]]
  %s54 = scalar_lea.smem %s0, 27
  %s55 = sld [smem:[%s54]]
  %s56 = scalar_lea.smem %s0, 28
  %s57 = sld [smem:[%s56]]
  %s58 = scalar_lea.smem %s0, 29
  %s59 = sld [smem:[%s58]]
  %s60 = scalar_lea.smem %s0, 30
  %s61 = sld [smem:[%s60]]
  %s62 = scalar_lea.smem %s0, 31
  %s63 = sld [smem:[%s62]]
  %s64 = scalar_lea.smem %s0, 32
  %s65 = sld [smem:[%s64]]
  %s66 = scalar_lea.smem %s0, 33
  %s67 = sld [smem:[%s66]]
  %s68 = scalar_lea.smem %s0, 34
  %s69 = sld [smem:[%s68]]
  %s70 = scalar_lea.smem %s0, 35
  %s71 = sld [smem:[%s70]]
  %s72 = scalar_lea.smem %s0, 36
  %s73 = sld [smem:[%s72]]
  %s74 = scalar_lea.smem %s0, 37
  %s75 = sld [smem:[%s74]]
  %s76 = scalar_lea.smem %s0, 38
  %s77 = sld [smem:[%s76]]
  %s78 = scalar_lea.smem %s0, 39
  %s79 = sld [smem:[%s78]]
  %s80 = scalar_lea.smem %s0, 40
  %s81 = sld [smem:[%s80]]
  %s82 = scalar_lea.smem %s0, 41
  %s83 = sld [smem:[%s82]]
  %s84 = scalar_lea.smem %s0, 42
  %s85 = sld [smem:[%s84]]
  %s86 = scalar_lea.smem %s0, 43
  %s87 = sld [smem:[%s86]]
  %s88 = scalar_lea.smem %s0, 44
  %s89 = sld [smem:[%s88]]
  %s90 = scalar_lea.smem %s0, 45
  %s91 = sld [smem:[%s90]]
  %s92 = scalar_lea.smem %s0, 46
  %s93 = sld [smem:[%s92]]
  %s94 = scalar_lea.smem %s0, 47
  %s95 = sld [smem:[%s94]]
  %s96 = scalar_lea.smem %s0, 48
  %s97 = sld [smem:[%s96]]
  %s98 = scalar_lea.smem %s0, 49
  %s99 = sld [smem:[%s98]]
  %s100 = scalar_lea.smem %s0, 50
  %s101 = sld [smem:[%s100]]
  %s102 = scalar_lea.smem %s0, 51
  %s103 = sld [smem:[%s102]]
  %s104 = scalar_lea.smem %s0, 52
  %s105 = sld [smem:[%s104]]
  %s106 = sld [smem:[#allocation0]]
  $region353: #{unet_forward.1} parent=0
    _
  %s108 = ssub.s32 1, %s106
  %s109 = scalar_select 0, %s108, %s106
  $region1: #{unet_forward.1} parent=0
    #allocation2 [shape = 'u8[16384]{0}', space=vmem, size = 0x4000, scoped, tag = 'input window, operand 8, single buffered']
    #allocation3 [shape = 's32[2]{0}', space=sflag, size = 0x8, scoped, tag = 'scoped memory for unet_forward.1']
    #allocation4 [shape = 's32[2]{0}', space=sflag, size = 0x8, scoped, tag = 'scoped memory for unet_forward.1']
    #allocation5 [shape = 'u8[16384]{0}', space=vmem, size = 0x4000, scoped, tag = 'input window, operand 10, single buffered']
    #allocation6 [shape = 's32[1]{0}', space=sflag, size = 0x4, scoped, tag = 'scoped memory for unet_forward.1']
    #allocation7 [shape = 'u8[512]{0}', space=vmem, size = 0x400, scoped, tag = 'input window, operand 15, single buffered']
    #allocation8 [shape = 'u8[4096]{0}', space=vmem, size = 0x1000, scoped, tag = 'input window, operand 17, single buffered']
    #allocation9 [shape = 's32[1]{0}', space=sflag, size = 0x4, scoped, tag = 'scoped memory for unet_forward.1']
    #allocation10 [shape = 'u8[512]{0}', space=vmem, size = 0x400, scoped, tag = 'input window, operand 18, single buffered']
    #allocation11 [shape = 'u8[512]{0}', space=vmem, size = 0x400, scoped, tag = 'input window, operand 19, single buffered']
    #allocation12 [shape = 's32[1]{0}', space=sflag, size = 0x4, scoped, tag = 'scoped memory for unet_forward.1']
    #allocation13 [shape = 'u8[4096]{0}', space=vmem, size = 0x1000, scoped, tag = 'input window, operand 21, single buffered']
    #allocation14 [shape = 'u8[512]{0}', space=vmem, size = 0x400, scoped, tag = 'input window, operand 22, single buffered']
    #allocation15 [shape = 's32[1]{0}', space=sflag, size = 0x4, scoped, tag = 'scoped memory for unet_forward.1']
    #allocation16 [shape = 'u8[512]{0}', space=vmem, size = 0x400, scoped, tag = 'input window, operand 23, single buffered']
    #allocation17 [shape = 'u8[512]{0}', space=vmem, size = 0x400, scoped, tag = 'input window, operand 26, single buffered']
    #allocation18 [shape = 's32[1]{0}', space=sflag, size = 0x4, scoped, tag = 'scoped memory for unet_forward.1']
    #allocation19 [shape = 'u8[512]{0}', space=vmem, size = 0x400, scoped, tag = 'input window, operand 27, single buffered']
    #allocation20 [shape = 'u8[8192]{0}', space=vmem, size = 0x2000, scoped, tag = 'input window, operand 29, single buffered']
    #allocation21 [shape = 's32[1]{0}', space=sflag, size = 0x4, scoped, tag = 'scoped memory for unet_forward.1']
    #allocation22 [shape = 'u8[512]{0}', space=vmem, size = 0x400, scoped, tag = 'input window, operand 30, single buffered']
    #allocation23 [shape = 'u8[512]{0}', space=vmem, size = 0x400, scoped, tag = 'input window, operand 31, single buffered']
    #allocation24 [shape = 's32[1]{0}', space=sflag, size = 0x4, scoped, tag = 'scoped memory for unet_forward.1']
    #allocation25 [shape = 'u8[32768]{0}', space=vmem, size = 0x8000, scoped, tag = 'input window, operand 33, single buffered']
    #allocation26 [shape = 'u8[8192]{0}', space=vmem, size = 0x2000, scoped, tag = 'input window, operand 35, single buffered']
    #allocation27 [shape = 's32[1]{0}', space=sflag, size = 0x4, scoped, tag = 'scoped memory for unet_forward.1']
    #allocation28 [shape = 'u8[512]{0}', space=vmem, size = 0x400, scoped, tag = 'input window, operand 36, single buffered']
    #allocation29 [shape = 'u8[512]{0}', space=vmem, size = 0x400, scoped, tag = 'input window, operand 37, single buffered']
    #allocation30 [shape = 's32[1]{0}', space=sflag, size = 0x4, scoped, tag = 'scoped memory for unet_forward.1']
    #allocation31 [shape = 'u8[8192]{0}', space=vmem, size = 0x2000, scoped, tag = 'input window, operand 39, single buffered']
    #allocation32 [shape = 'u8[512]{0}', space=vmem, size = 0x400, scoped, tag = 'input window, operand 40, single buffered']
    #allocation33 [shape = 's32[1]{0}', space=sflag, size = 0x4, scoped, tag = 'scoped memory for unet_forward.1']
    #allocation34 [shape = 'u8[512]{0}', space=vmem, size = 0x400, scoped, tag = 'input window, operand 41, single buffered']
    #allocation35 [shape = 'u8[16384]{0}', space=vmem, size = 0x4000, scoped, tag = 'input window, operand 43, single buffered']
    #allocation36 [shape = 's32[1]{0}', space=sflag, size = 0x4, scoped, tag = 'scoped memory for unet_forward.1']
    #allocation37 [shape = 'u8[512]{0}', space=vmem, size = 0x400, scoped, tag = 'input window, operand 44, single buffered']
    #allocation38 [shape = 'u8[512]{0}', space=vmem, size = 0x400, scoped, tag = 'input window, operand 45, single buffered']
    #allocation39 [shape = 's32[1]{0}', space=sflag, size = 0x4, scoped, tag = 'scoped memory for unet_forward.1']
    #allocation40 [shape = 'u8[16384]{0}', space=vmem, size = 0x4000, scoped, tag = 'input window, operand 47, single buffered']
    #allocation41 [shape = 'u8[512]{0}', space=vmem, size = 0x400, scoped, tag = 'input window, operand 48, single buffered']
    #allocation42 [shape = 's32[1]{0}', space=sflag, size = 0x4, scoped, tag = 'scoped memory for unet_forward.1']
    #allocation43 [shape = 'u8[512]{0}', space=vmem, size = 0x400, scoped, tag = 'input window, operand 49, single buffered']
    #allocation44 [shape = 'u8[32768]{0}', space=vmem, size = 0x8000, scoped, tag = 'input window, operand 51, single buffered']
    #allocation45 [shape = 's32[1]{0}', space=sflag, size = 0x4, scoped, tag = 'scoped memory for unet_forward.1']
    #allocation46 [shape = 'u8[32768]{0}', space=vmem, size = 0x8000, scoped, tag = 'output window, operand 0']
    %110 = vsyncpa [#allocation3], 0
    %111 = vsyncpa [#allocation6], 0
    %112 = vsyncpa [#allocation9], 0
    %113 = vsyncpa [#allocation12], 0
    %114 = vsyncpa [#allocation15], 0
    %115 = vsyncpa [#allocation18], 0
    %116 = vsyncpa [#allocation21], 0
    %117 = vsyncpa [#allocation24], 0
    %118 = vsyncpa [#allocation27], 0
    %119 = vsyncpa [#allocation30], 0
    %120 = vsyncpa [#allocation33], 0
    %121 = vsyncpa [#allocation36], 0
    %122 = vsyncpa [#allocation39], 0
    %123 = vsyncpa [#allocation42], 0
    %124 = vsyncpa [#allocation45], 0
    %125 = vsyncpa [#allocation4], 0
    %s126 = scalar_lea.sflag [#allocation4], 1
    %127 = vsyncpa %s126, 0
    loop: start=0, step=1, limit=4
    $region2: #{unet_forward.1} parent=1 // loop_pre_header
      _
    $region3: #{unet_forward.1} parent=1 // loop_header
      %s129 = sphi 0, %s133
      %p130 = scmp.ge.s32.totalorder %s129, 4
      %s139 = sphi 0, %s141
      %s142 = sphi 0, %s139
      %s143 = sphi 0, %s142
      %s159 = sphi 0, %s143
      %s165 = sphi 0, %s167
      %s168 = sphi 0, %s165
      %s169 = sphi 0, %s168
      %s185 = sphi 0, %s169
      %s191 = sphi 0, %s193
      %s194 = sphi 0, %s191
      %s195 = sphi 0, %s194
      %s211 = sphi 0, %s195
      %s215 = sphi 0, %s215
      %s217 = sphi 0, %s215
      %s218 = sphi 0, %s217
      %s232 = sphi 0, %s218
      %s236 = sphi 0, %s236
      %s238 = sphi 0, %s236
      %s239 = sphi 0, %s238
      %s253 = sphi 0, %s239
      %s257 = sphi 0, %s257
      %s259 = sphi 0, %s257
      %s260 = sphi 0, %s259
      %s274 = sphi 0, %s260
      %s278 = sphi 0, %s278
      %s280 = sphi 0, %s278
      %s281 = sphi 0, %s280
      %s295 = sphi 0, %s281
      %s299 = sphi 0, %s299
      %s301 = sphi 0, %s299
      %s302 = sphi 0, %s301
      %s316 = sphi 0, %s302
      %s320 = sphi 0, %s320
      %s322 = sphi 0, %s320
      %s323 = sphi 0, %s322
      %s337 = sphi 0, %s323
      %s341 = sphi 0, %s341
      %s343 = sphi 0, %s341
      %s344 = sphi 0, %s343
      %s358 = sphi 0, %s344
      %s362 = sphi 0, %s362
      %s364 = sphi 0, %s362
      %s365 = sphi 0, %s364
      %s379 = sphi 0, %s365
      %s383 = sphi 0, %s383
      %s385 = sphi 0, %s383
      %s386 = sphi 0, %s385
      %s400 = sphi 0, %s386
      %s404 = sphi 0, %s404
      %s406 = sphi 0, %s404
      %s407 = sphi 0, %s406
      %s421 = sphi 0, %s407
      %s425 = sphi 0, %s425
      %s427 = sphi 0, %s425
      %s428 = sphi 0, %s427
      %s442 = sphi 0, %s428
      %s446 = sphi 0, %s446
      %s448 = sphi 0, %s446
      %s449 = sphi 0, %s448
      %s463 = sphi 0, %s449
      %s467 = sphi 0, %s467
      %s469 = sphi 0, %s467
      %s470 = sphi 0, %s469
      %s484 = sphi 0, %s470
      %s488 = sphi 0, %s488
      %s490 = sphi 0, %s488
      %s491 = sphi 0, %s490
      %s505 = sphi 0, %s491
      %s509 = sphi 0, %s509
      %s511 = sphi 0, %s509
      %s512 = sphi 0, %s511
      %s526 = sphi 0, %s512
      %s530 = sphi 0, %s530
      %s532 = sphi 0, %s530
      %s533 = sphi 0, %s532
      %s547 = sphi 0, %s533
      %s551 = sphi 0, %s551
      %s553 = sphi 0, %s551
      %s554 = sphi 0, %s553
      %s568 = sphi 0, %s554
      %s572 = sphi 0, %s572
      %s574 = sphi 0, %s572
      %s575 = sphi 0, %s574
      %s589 = sphi 0, %s575
      %s593 = sphi 0, %s593
      %s595 = sphi 0, %s593
      %s596 = sphi 0, %s595
      %s610 = sphi 0, %s596
      %s614 = sphi 0, %s614
      %s616 = sphi 0, %s614
      %s617 = sphi 0, %s616
      %s631 = sphi 0, %s617
      %s635 = sphi 0, %s635
      %s637 = sphi 0, %s635
      %s638 = sphi 0, %s637
      %s652 = sphi 0, %s638
      %s656 = sphi 0, %s656
      %s658 = sphi 0, %s656
      %s659 = sphi 0, %s658
      %s673 = sphi 0, %s659
      %s677 = sphi 0, %s677
      %s679 = sphi 0, %s677
      %s680 = sphi 0, %s679
      %s694 = sphi 0, %s680
      %s698 = sphi 0, %s698
      %s700 = sphi 0, %s698
      %s701 = sphi 0, %s700
      %s715 = sphi 0, %s701
      %s719 = sphi 0, %s719
      %s721 = sphi 0, %s719
      %s722 = sphi 0, %s721
      %s736 = sphi 0, %s722
      %s740 = sphi 0, %s740
      %s742 = sphi 0, %s740
      %s743 = sphi 0, %s742
      %s757 = sphi 0, %s743
      %s761 = sphi 0, %s761
      %s763 = sphi 0, %s761
      %s764 = sphi 0, %s763
      %s778 = sphi 0, %s764
      %s782 = sphi 0, %s782
      %s784 = sphi 0, %s782
      %s785 = sphi 0, %s784
      %s799 = sphi 0, %s785
      %s803 = sphi 0, %s803
      %s805 = sphi 0, %s803
      %s806 = sphi 0, %s805
      %s820 = sphi 0, %s806
      %s824 = sphi 0, %s824
      %s826 = sphi 0, %s824
      %s827 = sphi 0, %s826
      %s841 = sphi 0, %s827
      %s845 = sphi 0, %s845
      %s847 = sphi 0, %s845
      %s848 = sphi 0, %s847
      %s862 = sphi 0, %s848
      %s866 = sphi 0, %s866
      %s868 = sphi 0, %s866
      %s869 = sphi 0, %s868
      %s883 = sphi 0, %s869
      %s887 = sphi 0, %s887
      %s889 = sphi 0, %s887
      %s890 = sphi 0, %s889
      %s904 = sphi 0, %s890
      %s908 = sphi 0, %s908
      %s910 = sphi 0, %s908
      %s911 = sphi 0, %s910
      %s925 = sphi 0, %s911
      %s929 = sphi 0, %s929
      %s931 = sphi 0, %s929
      %s932 = sphi 0, %s931
      %s946 = sphi 0, %s932
      %s950 = sphi 0, %s950
      %s952 = sphi 0, %s950
      %s953 = sphi 0, %s952
      %s967 = sphi 0, %s953
      %s971 = sphi 0, %s971
      %s973 = sphi 0, %s971
      %s974 = sphi 0, %s973
      %s988 = sphi 0, %s974
      %s992 = sphi 0, %s992
      %s994 = sphi 0, %s992
      %s995 = sphi 0, %s994
      %s1009 = sphi 0, %s995
      %s1013 = sphi 0, %s1013
      %s1015 = sphi 0, %s1013
      %s1016 = sphi 0, %s1015
      %s1030 = sphi 0, %s1016
      %s1034 = sphi 0, %s1034
      %s1036 = sphi 0, %s1034
      %s1037 = sphi 0, %s1036
      %s1051 = sphi 0, %s1037
      %s1055 = sphi 0, %s1055
      %s1057 = sphi 0, %s1055
      %s1058 = sphi 0, %s1057
      %s1072 = sphi 0, %s1058
      %s1076 = sphi 0, %s1076
      %s1078 = sphi 0, %s1076
      %s1079 = sphi 0, %s1078
      %s1093 = sphi 0, %s1079
      %s1097 = sphi 0, %s1097
      %s1099 = sphi 0, %s1097
      %s1100 = sphi 0, %s1099
      %s1114 = sphi 0, %s1100
      %s1118 = sphi 0, %s1118
      %s1120 = sphi 0, %s1118
      %s1121 = sphi 0, %s1120
      %s1135 = sphi 0, %s1121
      %s1139 = sphi 0, %s1139
      %s1141 = sphi 0, %s1139
      %s1142 = sphi 0, %s1141
      %s1156 = sphi 0, %s1142
      %s1160 = sphi 0, %s1160
      %s1162 = sphi 0, %s1160
      %s1163 = sphi 0, %s1162
      %s1177 = sphi 0, %s1163
      %s1181 = sphi 0, %s1181
      %s1183 = sphi 0, %s1181
      %s1184 = sphi 0, %s1183
      %s1198 = sphi 0, %s1184
      %s1202 = sphi 0, %s1202
      %s1204 = sphi 0, %s1202
      %s1205 = sphi 0, %s1204
      %s1219 = sphi 0, %s1205
      %s1223 = sphi 0, %s1223
      %s1225 = sphi 0, %s1223
      %s1226 = sphi 0, %s1225
      %s1240 = sphi 0, %s1226
      %s1246 = sphi 0, %s1248
      %s1249 = sphi 0, %s1246
      %s1250 = sphi 0, %s1249
      %s1266 = sphi 0, %s1250
    $region4: #{unet_forward.1} parent=1 // loop_header_branch
      %132 = sbr.rel (%p130) target = $region8
    $region5: #{unet_forward.1} parent=1 // loop_body
      %s134 = ssub.s32 %s129, 1
      %s135 = ssub.s32 %s129, 2
      %s136 = sadd.s32 %s129, 1
      %s137 = ssub.s32 %s129, %s136
      %p138 = scmp.eq.s32.totalorder %s137, 0
      %s140 = sadd.s32 %s139, 1
      %s141 = scalar_select %p138, %s139, %s140
      %p144 = pneg %p138
      %p145 = scmp.eq.s32.totalorder %s129, 1
      %p146 = por %p144, %p145
      %p147 = scmp.ne.s32.totalorder %s139, %s142
      %p148 = scmp.eq.s32.totalorder %s129, 0
      %p149 = por %p147, %p148
      %p150 = scmp.ne.s32.totalorder %s139, %s142
      %p151 = scmp.eq.s32.totalorder %s134, 1
      %p152 = por %p150, %p151
      %p153 = scmp.ne.s32.totalorder %s142, %s143
      %p154 = scmp.eq.s32.totalorder %s134, 0
      %p155 = por %p153, %p154
      %p156 = scmp.ne.s32.totalorder %s142, %s143
      %p157 = scmp.eq.s32.totalorder %s135, 1
      %p158 = por %p156, %p157
      %p160 = scmp.ne.s32.totalorder %s143, %s159
      %p161 = scmp.eq.s32.totalorder %s135, 0
      %p162 = por %p160, %p161
      %s163 = ssub.s32 %s129, %s136
      %p164 = scmp.eq.s32.totalorder %s163, 0
      %s166 = sadd.s32 %s165, 1
      %s167 = scalar_select %p164, %s165, %s166
      %p170 = pneg %p164
      %p171 = scmp.eq.s32.totalorder %s129, 1
      %p172 = por %p170, %p171
      %p173 = scmp.ne.s32.totalorder %s165, %s168
      %p174 = scmp.eq.s32.totalorder %s129, 0
      %p175 = por %p173, %p174
      %p176 = scmp.ne.s32.totalorder %s165, %s168
      %p177 = scmp.eq.s32.totalorder %s134, 1
      %p178 = por %p176, %p177
      %p179 = scmp.ne.s32.totalorder %s168, %s169
      %p180 = scmp.eq.s32.totalorder %s134, 0
      %p181 = por %p179, %p180
      %p182 = scmp.ne.s32.totalorder %s168, %s169
      %p183 = scmp.eq.s32.totalorder %s135, 1
      %p184 = por %p182, %p183
      %p186 = scmp.ne.s32.totalorder %s169, %s185
      %p187 = scmp.eq.s32.totalorder %s135, 0
      %p188 = por %p186, %p187
      %s189 = ssub.s32 %s129, %s136
      %p190 = scmp.eq.s32.totalorder %s189, 0
      %s192 = sadd.s32 %s191, 1
      %s193 = scalar_select %p190, %s191, %s192
      %p196 = pneg %p190
      %p197 = scmp.eq.s32.totalorder %s129, 1
      %p198 = por %p196, %p197
      %p199 = scmp.ne.s32.totalorder %s191, %s194
      %p200 = scmp.eq.s32.totalorder %s129, 0
      %p201 = por %p199, %p200
      %p202 = scmp.ne.s32.totalorder %s191, %s194
      %p203 = scmp.eq.s32.totalorder %s134, 1
      %p204 = por %p202, %p203
      %p205 = scmp.ne.s32.totalorder %s194, %s195
      %p206 = scmp.eq.s32.totalorder %s134, 0
      %p207 = por %p205, %p206
      %p208 = scmp.ne.s32.totalorder %s194, %s195
      %p209 = scmp.eq.s32.totalorder %s135, 1
      %p210 = por %p208, %p209
      %p212 = scmp.ne.s32.totalorder %s195, %s211
      %p213 = scmp.eq.s32.totalorder %s135, 0
      %p214 = por %p212, %p213
      %s216 = sadd.s32 %s215, 1
      %p219 = scmp.eq.s32.totalorder %s129, 1
      %p220 = scmp.ne.s32.totalorder %s215, %s217
      %p221 = scmp.eq.s32.totalorder %s129, 0
      %p222 = por %p220, %p221
      %p223 = scmp.ne.s32.totalorder %s215, %s217
      %p224 = scmp.eq.s32.totalorder %s134, 1
      %p225 = por %p223, %p224
      %p226 = scmp.ne.s32.totalorder %s217, %s218
      %p227 = scmp.eq.s32.totalorder %s134, 0
      %p228 = por %p226, %p227
      %p229 = scmp.ne.s32.totalorder %s217, %s218
      %p230 = scmp.eq.s32.totalorder %s135, 1
      %p231 = por %p229, %p230
      %p233 = scmp.ne.s32.totalorder %s218, %s232
      %p234 = scmp.eq.s32.totalorder %s135, 0
      %p235 = por %p233, %p234
      %s237 = sadd.s32 %s236, 1
      %p240 = scmp.eq.s32.totalorder %s129, 1
      %p241 = scmp.ne.s32.totalorder %s236, %s238
      %p242 = scmp.eq.s32.totalorder %s129, 0
      %p243 = por %p241, %p242
      %p244 = scmp.ne.s32.totalorder %s236, %s238
      %p245 = scmp.eq.s32.totalorder %s134, 1
      %p246 = por %p244, %p245
      %p247 = scmp.ne.s32.totalorder %s238, %s239
      %p248 = scmp.eq.s32.totalorder %s134, 0
      %p249 = por %p247, %p248
      %p250 = scmp.ne.s32.totalorder %s238, %s239
      %p251 = scmp.eq.s32.totalorder %s135, 1
      %p252 = por %p250, %p251
      %p254 = scmp.ne.s32.totalorder %s239, %s253
      %p255 = scmp.eq.s32.totalorder %s135, 0
      %p256 = por %p254, %p255
      %s258 = sadd.s32 %s257, 1
      %p261 = scmp.eq.s32.totalorder %s129, 1
      %p262 = scmp.ne.s32.totalorder %s257, %s259
      %p263 = scmp.eq.s32.totalorder %s129, 0
      %p264 = por %p262, %p263
      %p265 = scmp.ne.s32.totalorder %s257, %s259
      %p266 = scmp.eq.s32.totalorder %s134, 1
      %p267 = por %p265, %p266
      %p268 = scmp.ne.s32.totalorder %s259, %s260
      %p269 = scmp.eq.s32.totalorder %s134, 0
      %p270 = por %p268, %p269
      %p271 = scmp.ne.s32.totalorder %s259, %s260
      %p272 = scmp.eq.s32.totalorder %s135, 1
      %p273 = por %p271, %p272
      %p275 = scmp.ne.s32.totalorder %s260, %s274
      %p276 = scmp.eq.s32.totalorder %s135, 0
      %p277 = por %p275, %p276
      %s279 = sadd.s32 %s278, 1
      %p282 = scmp.eq.s32.totalorder %s129, 1
      %p283 = scmp.ne.s32.totalorder %s278, %s280
      %p284 = scmp.eq.s32.totalorder %s129, 0
      %p285 = por %p283, %p284
      %p286 = scmp.ne.s32.totalorder %s278, %s280
      %p287 = scmp.eq.s32.totalorder %s134, 1
      %p288 = por %p286, %p287
      %p289 = scmp.ne.s32.totalorder %s280, %s281
      %p290 = scmp.eq.s32.totalorder %s134, 0
      %p291 = por %p289, %p290
      %p292 = scmp.ne.s32.totalorder %s280, %s281
      %p293 = scmp.eq.s32.totalorder %s135, 1
      %p294 = por %p292, %p293
      %p296 = scmp.ne.s32.totalorder %s281, %s295
      %p297 = scmp.eq.s32.totalorder %s135, 0
      %p298 = por %p296, %p297
      %s300 = sadd.s32 %s299, 1
      %p303 = scmp.eq.s32.totalorder %s129, 1
      %p304 = scmp.ne.s32.totalorder %s299, %s301
      %p305 = scmp.eq.s32.totalorder %s129, 0
      %p306 = por %p304, %p305
      %p307 = scmp.ne.s32.totalorder %s299, %s301
      %p308 = scmp.eq.s32.totalorder %s134, 1
      %p309 = por %p307, %p308
      %p310 = scmp.ne.s32.totalorder %s301, %s302
      %p311 = scmp.eq.s32.totalorder %s134, 0
      %p312 = por %p310, %p311
      %p313 = scmp.ne.s32.totalorder %s301, %s302
      %p314 = scmp.eq.s32.totalorder %s135, 1
      %p315 = por %p313, %p314
      %p317 = scmp.ne.s32.totalorder %s302, %s316
      %p318 = scmp.eq.s32.totalorder %s135, 0
      %p319 = por %p317, %p318
      %s321 = sadd.s32 %s320, 1
      %p324 = scmp.eq.s32.totalorder %s129, 1
      %p325 = scmp.ne.s32.totalorder %s320, %s322
      %p326 = scmp.eq.s32.totalorder %s129, 0
      %p327 = por %p325, %p326
      %p328 = scmp.ne.s32.totalorder %s320, %s322
      %p329 = scmp.eq.s32.totalorder %s134, 1
      %p330 = por %p328, %p329
      %p331 = scmp.ne.s32.totalorder %s322, %s323
      %p332 = scmp.eq.s32.totalorder %s134, 0
      %p333 = por %p331, %p332
      %p334 = scmp.ne.s32.totalorder %s322, %s323
      %p335 = scmp.eq.s32.totalorder %s135, 1
      %p336 = por %p334, %p335
      %p338 = scmp.ne.s32.totalorder %s323, %s337
      %p339 = scmp.eq.s32.totalorder %s135, 0
      %p340 = por %p338, %p339
      %s342 = sadd.s32 %s341, 1
      %p345 = scmp.eq.s32.totalorder %s129, 1
      %p346 = scmp.ne.s32.totalorder %s341, %s343
      %p347 = scmp.eq.s32.totalorder %s129, 0
      %p348 = por %p346, %p347
      %p349 = scmp.ne.s32.totalorder %s341, %s343
      %p350 = scmp.eq.s32.totalorder %s134, 1
      %p351 = por %p349, %p350
      %p352 = scmp.ne.s32.totalorder %s343, %s344
      %p353 = scmp.eq.s32.totalorder %s134, 0
      %p354 = por %p352, %p353
      %p355 = scmp.ne.s32.totalorder %s343, %s344
      %p356 = scmp.eq.s32.totalorder %s135, 1
      %p357 = por %p355, %p356
      %p359 = scmp.ne.s32.totalorder %s344, %s358
      %p360 = scmp.eq.s32.totalorder %s135, 0
      %p361 = por %p359, %p360
      %s363 = sadd.s32 %s362, 1
      %p366 = scmp.eq.s32.totalorder %s129, 1
      %p367 = scmp.ne.s32.totalorder %s362, %s364
      %p368 = scmp.eq.s32.totalorder %s129, 0
      %p369 = por %p367, %p368
      %p370 = scmp.ne.s32.totalorder %s362, %s364
      %p371 = scmp.eq.s32.totalorder %s134, 1
      %p372 = por %p370, %p371
      %p373 = scmp.ne.s32.totalorder %s364, %s365
      %p374 = scmp.eq.s32.totalorder %s134, 0
      %p375 = por %p373, %p374
      %p376 = scmp.ne.s32.totalorder %s364, %s365
      %p377 = scmp.eq.s32.totalorder %s135, 1
      %p378 = por %p376, %p377
      %p380 = scmp.ne.s32.totalorder %s365, %s379
      %p381 = scmp.eq.s32.totalorder %s135, 0
      %p382 = por %p380, %p381
      %s384 = sadd.s32 %s383, 1
      %p387 = scmp.eq.s32.totalorder %s129, 1
      %p388 = scmp.ne.s32.totalorder %s383, %s385
      %p389 = scmp.eq.s32.totalorder %s129, 0
      %p390 = por %p388, %p389
      %p391 = scmp.ne.s32.totalorder %s383, %s385
      %p392 = scmp.eq.s32.totalorder %s134, 1
      %p393 = por %p391, %p392
      %p394 = scmp.ne.s32.totalorder %s385, %s386
      %p395 = scmp.eq.s32.totalorder %s134, 0
      %p396 = por %p394, %p395
      %p397 = scmp.ne.s32.totalorder %s385, %s386
      %p398 = scmp.eq.s32.totalorder %s135, 1
      %p399 = por %p397, %p398
      %p401 = scmp.ne.s32.totalorder %s386, %s400
      %p402 = scmp.eq.s32.totalorder %s135, 0
      %p403 = por %p401, %p402
      %s405 = sadd.s32 %s404, 1
      %p408 = scmp.eq.s32.totalorder %s129, 1
      %p409 = scmp.ne.s32.totalorder %s404, %s406
      %p410 = scmp.eq.s32.totalorder %s129, 0
      %p411 = por %p409, %p410
      %p412 = scmp.ne.s32.totalorder %s404, %s406
      %p413 = scmp.eq.s32.totalorder %s134, 1
      %p414 = por %p412, %p413
      %p415 = scmp.ne.s32.totalorder %s406, %s407
      %p416 = scmp.eq.s32.totalorder %s134, 0
      %p417 = por %p415, %p416
      %p418 = scmp.ne.s32.totalorder %s406, %s407
      %p419 = scmp.eq.s32.totalorder %s135, 1
      %p420 = por %p418, %p419
      %p422 = scmp.ne.s32.totalorder %s407, %s421
      %p423 = scmp.eq.s32.totalorder %s135, 0
      %p424 = por %p422, %p423
      %s426 = sadd.s32 %s425, 1
      %p429 = scmp.eq.s32.totalorder %s129, 1
      %p430 = scmp.ne.s32.totalorder %s425, %s427
      %p431 = scmp.eq.s32.totalorder %s129, 0
      %p432 = por %p430, %p431
      %p433 = scmp.ne.s32.totalorder %s425, %s427
      %p434 = scmp.eq.s32.totalorder %s134, 1
      %p435 = por %p433, %p434
      %p436 = scmp.ne.s32.totalorder %s427, %s428
      %p437 = scmp.eq.s32.totalorder %s134, 0
      %p438 = por %p436, %p437
      %p439 = scmp.ne.s32.totalorder %s427, %s428
      %p440 = scmp.eq.s32.totalorder %s135, 1
      %p441 = por %p439, %p440
      %p443 = scmp.ne.s32.totalorder %s428, %s442
      %p444 = scmp.eq.s32.totalorder %s135, 0
      %p445 = por %p443, %p444
      %s447 = sadd.s32 %s446, 1
      %p450 = scmp.eq.s32.totalorder %s129, 1
      %p451 = scmp.ne.s32.totalorder %s446, %s448
      %p452 = scmp.eq.s32.totalorder %s129, 0
      %p453 = por %p451, %p452
      %p454 = scmp.ne.s32.totalorder %s446, %s448
      %p455 = scmp.eq.s32.totalorder %s134, 1
      %p456 = por %p454, %p455
      %p457 = scmp.ne.s32.totalorder %s448, %s449
      %p458 = scmp.eq.s32.totalorder %s134, 0
      %p459 = por %p457, %p458
      %p460 = scmp.ne.s32.totalorder %s448, %s449
      %p461 = scmp.eq.s32.totalorder %s135, 1
      %p462 = por %p460, %p461
      %p464 = scmp.ne.s32.totalorder %s449, %s463
      %p465 = scmp.eq.s32.totalorder %s135, 0
      %p466 = por %p464, %p465
      %s468 = sadd.s32 %s467, 1
      %p471 = scmp.eq.s32.totalorder %s129, 1
      %p472 = scmp.ne.s32.totalorder %s467, %s469
      %p473 = scmp.eq.s32.totalorder %s129, 0
      %p474 = por %p472, %p473
      %p475 = scmp.ne.s32.totalorder %s467, %s469
      %p476 = scmp.eq.s32.totalorder %s134, 1
      %p477 = por %p475, %p476
      %p478 = scmp.ne.s32.totalorder %s469, %s470
      %p479 = scmp.eq.s32.totalorder %s134, 0
      %p480 = por %p478, %p479
      %p481 = scmp.ne.s32.totalorder %s469, %s470
      %p482 = scmp.eq.s32.totalorder %s135, 1
      %p483 = por %p481, %p482
      %p485 = scmp.ne.s32.totalorder %s470, %s484
      %p486 = scmp.eq.s32.totalorder %s135, 0
      %p487 = por %p485, %p486
      %s489 = sadd.s32 %s488, 1
      %p492 = scmp.eq.s32.totalorder %s129, 1
      %p493 = scmp.ne.s32.totalorder %s488, %s490
      %p494 = scmp.eq.s32.totalorder %s129, 0
      %p495 = por %p493, %p494
      %p496 = scmp.ne.s32.totalorder %s488, %s490
      %p497 = scmp.eq.s32.totalorder %s134, 1
      %p498 = por %p496, %p497
      %p499 = scmp.ne.s32.totalorder %s490, %s491
      %p500 = scmp.eq.s32.totalorder %s134, 0
      %p501 = por %p499, %p500
      %p502 = scmp.ne.s32.totalorder %s490, %s491
      %p503 = scmp.eq.s32.totalorder %s135, 1
      %p504 = por %p502, %p503
      %p506 = scmp.ne.s32.totalorder %s491, %s505
      %p507 = scmp.eq.s32.totalorder %s135, 0
      %p508 = por %p506, %p507
      %s510 = sadd.s32 %s509, 1
      %p513 = scmp.eq.s32.totalorder %s129, 1
      %p514 = scmp.ne.s32.totalorder %s509, %s511
      %p515 = scmp.eq.s32.totalorder %s129, 0
      %p516 = por %p514, %p515
      %p517 = scmp.ne.s32.totalorder %s509, %s511
      %p518 = scmp.eq.s32.totalorder %s134, 1
      %p519 = por %p517, %p518
      %p520 = scmp.ne.s32.totalorder %s511, %s512
      %p521 = scmp.eq.s32.totalorder %s134, 0
      %p522 = por %p520, %p521
      %p523 = scmp.ne.s32.totalorder %s511, %s512
      %p524 = scmp.eq.s32.totalorder %s135, 1
      %p525 = por %p523, %p524
      %p527 = scmp.ne.s32.totalorder %s512, %s526
      %p528 = scmp.eq.s32.totalorder %s135, 0
      %p529 = por %p527, %p528
      %s531 = sadd.s32 %s530, 1
      %p534 = scmp.eq.s32.totalorder %s129, 1
      %p535 = scmp.ne.s32.totalorder %s530, %s532
      %p536 = scmp.eq.s32.totalorder %s129, 0
      %p537 = por %p535, %p536
      %p538 = scmp.ne.s32.totalorder %s530, %s532
      %p539 = scmp.eq.s32.totalorder %s134, 1
      %p540 = por %p538, %p539
      %p541 = scmp.ne.s32.totalorder %s532, %s533
      %p542 = scmp.eq.s32.totalorder %s134, 0
      %p543 = por %p541, %p542
      %p544 = scmp.ne.s32.totalorder %s532, %s533
      %p545 = scmp.eq.s32.totalorder %s135, 1
      %p546 = por %p544, %p545
      %p548 = scmp.ne.s32.totalorder %s533, %s547
      %p549 = scmp.eq.s32.totalorder %s135, 0
      %p550 = por %p548, %p549
      %s552 = sadd.s32 %s551, 1
      %p555 = scmp.eq.s32.totalorder %s129, 1
      %p556 = scmp.ne.s32.totalorder %s551, %s553
      %p557 = scmp.eq.s32.totalorder %s129, 0
      %p558 = por %p556, %p557
      %p559 = scmp.ne.s32.totalorder %s551, %s553
      %p560 = scmp.eq.s32.totalorder %s134, 1
      %p561 = por %p559, %p560
      %p562 = scmp.ne.s32.totalorder %s553, %s554
      %p563 = scmp.eq.s32.totalorder %s134, 0
      %p564 = por %p562, %p563
      %p565 = scmp.ne.s32.totalorder %s553, %s554
      %p566 = scmp.eq.s32.totalorder %s135, 1
      %p567 = por %p565, %p566
      %p569 = scmp.ne.s32.totalorder %s554, %s568
      %p570 = scmp.eq.s32.totalorder %s135, 0
      %p571 = por %p569, %p570
      %s573 = sadd.s32 %s572, 1
      %p576 = scmp.eq.s32.totalorder %s129, 1
      %p577 = scmp.ne.s32.totalorder %s572, %s574
      %p578 = scmp.eq.s32.totalorder %s129, 0
      %p579 = por %p577, %p578
      %p580 = scmp.ne.s32.totalorder %s572, %s574
      %p581 = scmp.eq.s32.totalorder %s134, 1
      %p582 = por %p580, %p581
      %p583 = scmp.ne.s32.totalorder %s574, %s575
      %p584 = scmp.eq.s32.totalorder %s134, 0
      %p585 = por %p583, %p584
      %p586 = scmp.ne.s32.totalorder %s574, %s575
      %p587 = scmp.eq.s32.totalorder %s135, 1
      %p588 = por %p586, %p587
      %p590 = scmp.ne.s32.totalorder %s575, %s589
      %p591 = scmp.eq.s32.totalorder %s135, 0
      %p592 = por %p590, %p591
      %s594 = sadd.s32 %s593, 1
      %p597 = scmp.eq.s32.totalorder %s129, 1
      %p598 = scmp.ne.s32.totalorder %s593, %s595
      %p599 = scmp.eq.s32.totalorder %s129, 0
      %p600 = por %p598, %p599
      %p601 = scmp.ne.s32.totalorder %s593, %s595
      %p602 = scmp.eq.s32.totalorder %s134, 1
      %p603 = por %p601, %p602
      %p604 = scmp.ne.s32.totalorder %s595, %s596
      %p605 = scmp.eq.s32.totalorder %s134, 0
      %p606 = por %p604, %p605
      %p607 = scmp.ne.s32.totalorder %s595, %s596
      %p608 = scmp.eq.s32.totalorder %s135, 1
      %p609 = por %p607, %p608
      %p611 = scmp.ne.s32.totalorder %s596, %s610
      %p612 = scmp.eq.s32.totalorder %s135, 0
      %p613 = por %p611, %p612
      %s615 = sadd.s32 %s614, 1
      %p618 = scmp.eq.s32.totalorder %s129, 1
      %p619 = scmp.ne.s32.totalorder %s614, %s616
      %p620 = scmp.eq.s32.totalorder %s129, 0
      %p621 = por %p619, %p620
      %p622 = scmp.ne.s32.totalorder %s614, %s616
      %p623 = scmp.eq.s32.totalorder %s134, 1
      %p624 = por %p622, %p623
      %p625 = scmp.ne.s32.totalorder %s616, %s617
      %p626 = scmp.eq.s32.totalorder %s134, 0
      %p627 = por %p625, %p626
      %p628 = scmp.ne.s32.totalorder %s616, %s617
      %p629 = scmp.eq.s32.totalorder %s135, 1
      %p630 = por %p628, %p629
      %p632 = scmp.ne.s32.totalorder %s617, %s631
      %p633 = scmp.eq.s32.totalorder %s135, 0
      %p634 = por %p632, %p633
      %s636 = sadd.s32 %s635, 1
      %p639 = scmp.eq.s32.totalorder %s129, 1
      %p640 = scmp.ne.s32.totalorder %s635, %s637
      %p641 = scmp.eq.s32.totalorder %s129, 0
      %p642 = por %p640, %p641
      %p643 = scmp.ne.s32.totalorder %s635, %s637
      %p644 = scmp.eq.s32.totalorder %s134, 1
      %p645 = por %p643, %p644
      %p646 = scmp.ne.s32.totalorder %s637, %s638
      %p647 = scmp.eq.s32.totalorder %s134, 0
      %p648 = por %p646, %p647
      %p649 = scmp.ne.s32.totalorder %s637, %s638
      %p650 = scmp.eq.s32.totalorder %s135, 1
      %p651 = por %p649, %p650
      %p653 = scmp.ne.s32.totalorder %s638, %s652
      %p654 = scmp.eq.s32.totalorder %s135, 0
      %p655 = por %p653, %p654
      %s657 = sadd.s32 %s656, 1
      %p660 = scmp.eq.s32.totalorder %s129, 1
      %p661 = scmp.ne.s32.totalorder %s656, %s658
      %p662 = scmp.eq.s32.totalorder %s129, 0
      %p663 = por %p661, %p662
      %p664 = scmp.ne.s32.totalorder %s656, %s658
      %p665 = scmp.eq.s32.totalorder %s134, 1
      %p666 = por %p664, %p665
      %p667 = scmp.ne.s32.totalorder %s658, %s659
      %p668 = scmp.eq.s32.totalorder %s134, 0
      %p669 = por %p667, %p668
      %p670 = scmp.ne.s32.totalorder %s658, %s659
      %p671 = scmp.eq.s32.totalorder %s135, 1
      %p672 = por %p670, %p671
      %p674 = scmp.ne.s32.totalorder %s659, %s673
      %p675 = scmp.eq.s32.totalorder %s135, 0
      %p676 = por %p674, %p675
      %s678 = sadd.s32 %s677, 1
      %p681 = scmp.eq.s32.totalorder %s129, 1
      %p682 = scmp.ne.s32.totalorder %s677, %s679
      %p683 = scmp.eq.s32.totalorder %s129, 0
      %p684 = por %p682, %p683
      %p685 = scmp.ne.s32.totalorder %s677, %s679
      %p686 = scmp.eq.s32.totalorder %s134, 1
      %p687 = por %p685, %p686
      %p688 = scmp.ne.s32.totalorder %s679, %s680
      %p689 = scmp.eq.s32.totalorder %s134, 0
      %p690 = por %p688, %p689
      %p691 = scmp.ne.s32.totalorder %s679, %s680
      %p692 = scmp.eq.s32.totalorder %s135, 1
      %p693 = por %p691, %p692
      %p695 = scmp.ne.s32.totalorder %s680, %s694
      %p696 = scmp.eq.s32.totalorder %s135, 0
      %p697 = por %p695, %p696
      %s699 = sadd.s32 %s698, 1
      %p702 = scmp.eq.s32.totalorder %s129, 1
      %p703 = scmp.ne.s32.totalorder %s698, %s700
      %p704 = scmp.eq.s32.totalorder %s129, 0
      %p705 = por %p703, %p704
      %p706 = scmp.ne.s32.totalorder %s698, %s700
      %p707 = scmp.eq.s32.totalorder %s134, 1
      %p708 = por %p706, %p707
      %p709 = scmp.ne.s32.totalorder %s700, %s701
      %p710 = scmp.eq.s32.totalorder %s134, 0
      %p711 = por %p709, %p710
      %p712 = scmp.ne.s32.totalorder %s700, %s701
      %p713 = scmp.eq.s32.totalorder %s135, 1
      %p714 = por %p712, %p713
      %p716 = scmp.ne.s32.totalorder %s701, %s715
      %p717 = scmp.eq.s32.totalorder %s135, 0
      %p718 = por %p716, %p717
      %s720 = sadd.s32 %s719, 1
      %p723 = scmp.eq.s32.totalorder %s129, 1
      %p724 = scmp.ne.s32.totalorder %s719, %s721
      %p725 = scmp.eq.s32.totalorder %s129, 0
      %p726 = por %p724, %p725
      %p727 = scmp.ne.s32.totalorder %s719, %s721
      %p728 = scmp.eq.s32.totalorder %s134, 1
      %p729 = por %p727, %p728
      %p730 = scmp.ne.s32.totalorder %s721, %s722
      %p731 = scmp.eq.s32.totalorder %s134, 0
      %p732 = por %p730, %p731
      %p733 = scmp.ne.s32.totalorder %s721, %s722
      %p734 = scmp.eq.s32.totalorder %s135, 1
      %p735 = por %p733, %p734
      %p737 = scmp.ne.s32.totalorder %s722, %s736
      %p738 = scmp.eq.s32.totalorder %s135, 0
      %p739 = por %p737, %p738
      %s741 = sadd.s32 %s740, 1
      %p744 = scmp.eq.s32.totalorder %s129, 1
      %p745 = scmp.ne.s32.totalorder %s740, %s742
      %p746 = scmp.eq.s32.totalorder %s129, 0
      %p747 = por %p745, %p746
      %p748 = scmp.ne.s32.totalorder %s740, %s742
      %p749 = scmp.eq.s32.totalorder %s134, 1
      %p750 = por %p748, %p749
      %p751 = scmp.ne.s32.totalorder %s742, %s743
      %p752 = scmp.eq.s32.totalorder %s134, 0
      %p753 = por %p751, %p752
      %p754 = scmp.ne.s32.totalorder %s742, %s743
      %p755 = scmp.eq.s32.totalorder %s135, 1
      %p756 = por %p754, %p755
      %p758 = scmp.ne.s32.totalorder %s743, %s757
      %p759 = scmp.eq.s32.totalorder %s135, 0
      %p760 = por %p758, %p759
      %s762 = sadd.s32 %s761, 1
      %p765 = scmp.eq.s32.totalorder %s129, 1
      %p766 = scmp.ne.s32.totalorder %s761, %s763
      %p767 = scmp.eq.s32.totalorder %s129, 0
      %p768 = por %p766, %p767
      %p769 = scmp.ne.s32.totalorder %s761, %s763
      %p770 = scmp.eq.s32.totalorder %s134, 1
      %p771 = por %p769, %p770
      %p772 = scmp.ne.s32.totalorder %s763, %s764
      %p773 = scmp.eq.s32.totalorder %s134, 0
      %p774 = por %p772, %p773
      %p775 = scmp.ne.s32.totalorder %s763, %s764
      %p776 = scmp.eq.s32.totalorder %s135, 1
      %p777 = por %p775, %p776
      %p779 = scmp.ne.s32.totalorder %s764, %s778
      %p780 = scmp.eq.s32.totalorder %s135, 0
      %p781 = por %p779, %p780
      %s783 = sadd.s32 %s782, 1
      %p786 = scmp.eq.s32.totalorder %s129, 1
      %p787 = scmp.ne.s32.totalorder %s782, %s784
      %p788 = scmp.eq.s32.totalorder %s129, 0
      %p789 = por %p787, %p788
      %p790 = scmp.ne.s32.totalorder %s782, %s784
      %p791 = scmp.eq.s32.totalorder %s134, 1
      %p792 = por %p790, %p791
      %p793 = scmp.ne.s32.totalorder %s784, %s785
      %p794 = scmp.eq.s32.totalorder %s134, 0
      %p795 = por %p793, %p794
      %p796 = scmp.ne.s32.totalorder %s784, %s785
      %p797 = scmp.eq.s32.totalorder %s135, 1
      %p798 = por %p796, %p797
      %p800 = scmp.ne.s32.totalorder %s785, %s799
      %p801 = scmp.eq.s32.totalorder %s135, 0
      %p802 = por %p800, %p801
      %s804 = sadd.s32 %s803, 1
      %p807 = scmp.eq.s32.totalorder %s129, 1
      %p808 = scmp.ne.s32.totalorder %s803, %s805
      %p809 = scmp.eq.s32.totalorder %s129, 0
      %p810 = por %p808, %p809
      %p811 = scmp.ne.s32.totalorder %s803, %s805
      %p812 = scmp.eq.s32.totalorder %s134, 1
      %p813 = por %p811, %p812
      %p814 = scmp.ne.s32.totalorder %s805, %s806
      %p815 = scmp.eq.s32.totalorder %s134, 0
      %p816 = por %p814, %p815
      %p817 = scmp.ne.s32.totalorder %s805, %s806
      %p818 = scmp.eq.s32.totalorder %s135, 1
      %p819 = por %p817, %p818
      %p821 = scmp.ne.s32.totalorder %s806, %s820
      %p822 = scmp.eq.s32.totalorder %s135, 0
      %p823 = por %p821, %p822
      %s825 = sadd.s32 %s824, 1
      %p828 = scmp.eq.s32.totalorder %s129, 1
      %p829 = scmp.ne.s32.totalorder %s824, %s826
      %p830 = scmp.eq.s32.totalorder %s129, 0
      %p831 = por %p829, %p830
      %p832 = scmp.ne.s32.totalorder %s824, %s826
      %p833 = scmp.eq.s32.totalorder %s134, 1
      %p834 = por %p832, %p833
      %p835 = scmp.ne.s32.totalorder %s826, %s827
      %p836 = scmp.eq.s32.totalorder %s134, 0
      %p837 = por %p835, %p836
      %p838 = scmp.ne.s32.totalorder %s826, %s827
      %p839 = scmp.eq.s32.totalorder %s135, 1
      %p840 = por %p838, %p839
      %p842 = scmp.ne.s32.totalorder %s827, %s841
      %p843 = scmp.eq.s32.totalorder %s135, 0
      %p844 = por %p842, %p843
      %s846 = sadd.s32 %s845, 1
      %p849 = scmp.eq.s32.totalorder %s129, 1
      %p850 = scmp.ne.s32.totalorder %s845, %s847
      %p851 = scmp.eq.s32.totalorder %s129, 0
      %p852 = por %p850, %p851
      %p853 = scmp.ne.s32.totalorder %s845, %s847
      %p854 = scmp.eq.s32.totalorder %s134, 1
      %p855 = por %p853, %p854
      %p856 = scmp.ne.s32.totalorder %s847, %s848
      %p857 = scmp.eq.s32.totalorder %s134, 0
      %p858 = por %p856, %p857
      %p859 = scmp.ne.s32.totalorder %s847, %s848
      %p860 = scmp.eq.s32.totalorder %s135, 1
      %p861 = por %p859, %p860
      %p863 = scmp.ne.s32.totalorder %s848, %s862
      %p864 = scmp.eq.s32.totalorder %s135, 0
      %p865 = por %p863, %p864
      %s867 = sadd.s32 %s866, 1
      %p870 = scmp.eq.s32.totalorder %s129, 1
      %p871 = scmp.ne.s32.totalorder %s866, %s868
      %p872 = scmp.eq.s32.totalorder %s129, 0
      %p873 = por %p871, %p872
      %p874 = scmp.ne.s32.totalorder %s866, %s868
      %p875 = scmp.eq.s32.totalorder %s134, 1
      %p876 = por %p874, %p875
      %p877 = scmp.ne.s32.totalorder %s868, %s869
      %p878 = scmp.eq.s32.totalorder %s134, 0
      %p879 = por %p877, %p878
      %p880 = scmp.ne.s32.totalorder %s868, %s869
      %p881 = scmp.eq.s32.totalorder %s135, 1
      %p882 = por %p880, %p881
      %p884 = scmp.ne.s32.totalorder %s869, %s883
      %p885 = scmp.eq.s32.totalorder %s135, 0
      %p886 = por %p884, %p885
      %s888 = sadd.s32 %s887, 1
      %p891 = scmp.eq.s32.totalorder %s129, 1
      %p892 = scmp.ne.s32.totalorder %s887, %s889
      %p893 = scmp.eq.s32.totalorder %s129, 0
      %p894 = por %p892, %p893
      %p895 = scmp.ne.s32.totalorder %s887, %s889
      %p896 = scmp.eq.s32.totalorder %s134, 1
      %p897 = por %p895, %p896
      %p898 = scmp.ne.s32.totalorder %s889, %s890
      %p899 = scmp.eq.s32.totalorder %s134, 0
      %p900 = por %p898, %p899
      %p901 = scmp.ne.s32.totalorder %s889, %s890
      %p902 = scmp.eq.s32.totalorder %s135, 1
      %p903 = por %p901, %p902
      %p905 = scmp.ne.s32.totalorder %s890, %s904
      %p906 = scmp.eq.s32.totalorder %s135, 0
      %p907 = por %p905, %p906
      %s909 = sadd.s32 %s908, 1
      %p912 = scmp.eq.s32.totalorder %s129, 1
      %p913 = scmp.ne.s32.totalorder %s908, %s910
      %p914 = scmp.eq.s32.totalorder %s129, 0
      %p915 = por %p913, %p914
      %p916 = scmp.ne.s32.totalorder %s908, %s910
      %p917 = scmp.eq.s32.totalorder %s134, 1
      %p918 = por %p916, %p917
      %p919 = scmp.ne.s32.totalorder %s910, %s911
      %p920 = scmp.eq.s32.totalorder %s134, 0
      %p921 = por %p919, %p920
      %p922 = scmp.ne.s32.totalorder %s910, %s911
      %p923 = scmp.eq.s32.totalorder %s135, 1
      %p924 = por %p922, %p923
      %p926 = scmp.ne.s32.totalorder %s911, %s925
      %p927 = scmp.eq.s32.totalorder %s135, 0
      %p928 = por %p926, %p927
      %s930 = sadd.s32 %s929, 1
      %p933 = scmp.eq.s32.totalorder %s129, 1
      %p934 = scmp.ne.s32.totalorder %s929, %s931
      %p935 = scmp.eq.s32.totalorder %s129, 0
      %p936 = por %p934, %p935
      %p937 = scmp.ne.s32.totalorder %s929, %s931
      %p938 = scmp.eq.s32.totalorder %s134, 1
      %p939 = por %p937, %p938
      %p940 = scmp.ne.s32.totalorder %s931, %s932
      %p941 = scmp.eq.s32.totalorder %s134, 0
      %p942 = por %p940, %p941
      %p943 = scmp.ne.s32.totalorder %s931, %s932
      %p944 = scmp.eq.s32.totalorder %s135, 1
      %p945 = por %p943, %p944
      %p947 = scmp.ne.s32.totalorder %s932, %s946
      %p948 = scmp.eq.s32.totalorder %s135, 0
      %p949 = por %p947, %p948
      %s951 = sadd.s32 %s950, 1
      %p954 = scmp.eq.s32.totalorder %s129, 1
      %p955 = scmp.ne.s32.totalorder %s950, %s952
      %p956 = scmp.eq.s32.totalorder %s129, 0
      %p957 = por %p955, %p956
      %p958 = scmp.ne.s32.totalorder %s950, %s952
      %p959 = scmp.eq.s32.totalorder %s134, 1
      %p960 = por %p958, %p959
      %p961 = scmp.ne.s32.totalorder %s952, %s953
      %p962 = scmp.eq.s32.totalorder %s134, 0
      %p963 = por %p961, %p962
      %p964 = scmp.ne.s32.totalorder %s952, %s953
      %p965 = scmp.eq.s32.totalorder %s135, 1
      %p966 = por %p964, %p965
      %p968 = scmp.ne.s32.totalorder %s953, %s967
      %p969 = scmp.eq.s32.totalorder %s135, 0
      %p970 = por %p968, %p969
      %s972 = sadd.s32 %s971, 1
      %p975 = scmp.eq.s32.totalorder %s129, 1
      %p976 = scmp.ne.s32.totalorder %s971, %s973
      %p977 = scmp.eq.s32.totalorder %s129, 0
      %p978 = por %p976, %p977
      %p979 = scmp.ne.s32.totalorder %s971, %s973
      %p980 = scmp.eq.s32.totalorder %s134, 1
      %p981 = por %p979, %p980
      %p982 = scmp.ne.s32.totalorder %s973, %s974
      %p983 = scmp.eq.s32.totalorder %s134, 0
      %p984 = por %p982, %p983
      %p985 = scmp.ne.s32.totalorder %s973, %s974
      %p986 = scmp.eq.s32.totalorder %s135, 1
      %p987 = por %p985, %p986
      %p989 = scmp.ne.s32.totalorder %s974, %s988
      %p990 = scmp.eq.s32.totalorder %s135, 0
      %p991 = por %p989, %p990
      %s993 = sadd.s32 %s992, 1
      %p996 = scmp.eq.s32.totalorder %s129, 1
      %p997 = scmp.ne.s32.totalorder %s992, %s994
      %p998 = scmp.eq.s32.totalorder %s129, 0
      %p999 = por %p997, %p998
      %p1000 = scmp.ne.s32.totalorder %s992, %s994
      %p1001 = scmp.eq.s32.totalorder %s134, 1
      %p1002 = por %p1000, %p1001
      %p1003 = scmp.ne.s32.totalorder %s994, %s995
      %p1004 = scmp.eq.s32.totalorder %s134, 0
      %p1005 = por %p1003, %p1004
      %p1006 = scmp.ne.s32.totalorder %s994, %s995
      %p1007 = scmp.eq.s32.totalorder %s135, 1
      %p1008 = por %p1006, %p1007
      %p1010 = scmp.ne.s32.totalorder %s995, %s1009
      %p1011 = scmp.eq.s32.totalorder %s135, 0
      %p1012 = por %p1010, %p1011
      %s1014 = sadd.s32 %s1013, 1
      %p1017 = scmp.eq.s32.totalorder %s129, 1
      %p1018 = scmp.ne.s32.totalorder %s1013, %s1015
      %p1019 = scmp.eq.s32.totalorder %s129, 0
      %p1020 = por %p1018, %p1019
      %p1021 = scmp.ne.s32.totalorder %s1013, %s1015
      %p1022 = scmp.eq.s32.totalorder %s134, 1
      %p1023 = por %p1021, %p1022
      %p1024 = scmp.ne.s32.totalorder %s1015, %s1016
      %p1025 = scmp.eq.s32.totalorder %s134, 0
      %p1026 = por %p1024, %p1025
      %p1027 = scmp.ne.s32.totalorder %s1015, %s1016
      %p1028 = scmp.eq.s32.totalorder %s135, 1
      %p1029 = por %p1027, %p1028
      %p1031 = scmp.ne.s32.totalorder %s1016, %s1030
      %p1032 = scmp.eq.s32.totalorder %s135, 0
      %p1033 = por %p1031, %p1032
      %s1035 = sadd.s32 %s1034, 1
      %p1038 = scmp.eq.s32.totalorder %s129, 1
      %p1039 = scmp.ne.s32.totalorder %s1034, %s1036
      %p1040 = scmp.eq.s32.totalorder %s129, 0
      %p1041 = por %p1039, %p1040
      %p1042 = scmp.ne.s32.totalorder %s1034, %s1036
      %p1043 = scmp.eq.s32.totalorder %s134, 1
      %p1044 = por %p1042, %p1043
      %p1045 = scmp.ne.s32.totalorder %s1036, %s1037
      %p1046 = scmp.eq.s32.totalorder %s134, 0
      %p1047 = por %p1045, %p1046
      %p1048 = scmp.ne.s32.totalorder %s1036, %s1037
      %p1049 = scmp.eq.s32.totalorder %s135, 1
      %p1050 = por %p1048, %p1049
      %p1052 = scmp.ne.s32.totalorder %s1037, %s1051
      %p1053 = scmp.eq.s32.totalorder %s135, 0
      %p1054 = por %p1052, %p1053
      %s1056 = sadd.s32 %s1055, 1
      %p1059 = scmp.eq.s32.totalorder %s129, 1
      %p1060 = scmp.ne.s32.totalorder %s1055, %s1057
      %p1061 = scmp.eq.s32.totalorder %s129, 0
      %p1062 = por %p1060, %p1061
      %p1063 = scmp.ne.s32.totalorder %s1055, %s1057
      %p1064 = scmp.eq.s32.totalorder %s134, 1
      %p1065 = por %p1063, %p1064
      %p1066 = scmp.ne.s32.totalorder %s1057, %s1058
      %p1067 = scmp.eq.s32.totalorder %s134, 0
      %p1068 = por %p1066, %p1067
      %p1069 = scmp.ne.s32.totalorder %s1057, %s1058
      %p1070 = scmp.eq.s32.totalorder %s135, 1
      %p1071 = por %p1069, %p1070
      %p1073 = scmp.ne.s32.totalorder %s1058, %s1072
      %p1074 = scmp.eq.s32.totalorder %s135, 0
      %p1075 = por %p1073, %p1074
      %s1077 = sadd.s32 %s1076, 1
      %p1080 = scmp.eq.s32.totalorder %s129, 1
      %p1081 = scmp.ne.s32.totalorder %s1076, %s1078
      %p1082 = scmp.eq.s32.totalorder %s129, 0
      %p1083 = por %p1081, %p1082
      %p1084 = scmp.ne.s32.totalorder %s1076, %s1078
      %p1085 = scmp.eq.s32.totalorder %s134, 1
      %p1086 = por %p1084, %p1085
      %p1087 = scmp.ne.s32.totalorder %s1078, %s1079
      %p1088 = scmp.eq.s32.totalorder %s134, 0
      %p1089 = por %p1087, %p1088
      %p1090 = scmp.ne.s32.totalorder %s1078, %s1079
      %p1091 = scmp.eq.s32.totalorder %s135, 1
      %p1092 = por %p1090, %p1091
      %p1094 = scmp.ne.s32.totalorder %s1079, %s1093
      %p1095 = scmp.eq.s32.totalorder %s135, 0
      %p1096 = por %p1094, %p1095
      %s1098 = sadd.s32 %s1097, 1
      %p1101 = scmp.eq.s32.totalorder %s129, 1
      %p1102 = scmp.ne.s32.totalorder %s1097, %s1099
      %p1103 = scmp.eq.s32.totalorder %s129, 0
      %p1104 = por %p1102, %p1103
      %p1105 = scmp.ne.s32.totalorder %s1097, %s1099
      %p1106 = scmp.eq.s32.totalorder %s134, 1
      %p1107 = por %p1105, %p1106
      %p1108 = scmp.ne.s32.totalorder %s1099, %s1100
      %p1109 = scmp.eq.s32.totalorder %s134, 0
      %p1110 = por %p1108, %p1109
      %p1111 = scmp.ne.s32.totalorder %s1099, %s1100
      %p1112 = scmp.eq.s32.totalorder %s135, 1
      %p1113 = por %p1111, %p1112
      %p1115 = scmp.ne.s32.totalorder %s1100, %s1114
      %p1116 = scmp.eq.s32.totalorder %s135, 0
      %p1117 = por %p1115, %p1116
      %s1119 = sadd.s32 %s1118, 1
      %p1122 = scmp.eq.s32.totalorder %s129, 1
      %p1123 = scmp.ne.s32.totalorder %s1118, %s1120
      %p1124 = scmp.eq.s32.totalorder %s129, 0
      %p1125 = por %p1123, %p1124
      %p1126 = scmp.ne.s32.totalorder %s1118, %s1120
      %p1127 = scmp.eq.s32.totalorder %s134, 1
      %p1128 = por %p1126, %p1127
      %p1129 = scmp.ne.s32.totalorder %s1120, %s1121
      %p1130 = scmp.eq.s32.totalorder %s134, 0
      %p1131 = por %p1129, %p1130
      %p1132 = scmp.ne.s32.totalorder %s1120, %s1121
      %p1133 = scmp.eq.s32.totalorder %s135, 1
      %p1134 = por %p1132, %p1133
      %p1136 = scmp.ne.s32.totalorder %s1121, %s1135
      %p1137 = scmp.eq.s32.totalorder %s135, 0
      %p1138 = por %p1136, %p1137
      %s1140 = sadd.s32 %s1139, 1
      %p1143 = scmp.eq.s32.totalorder %s129, 1
      %p1144 = scmp.ne.s32.totalorder %s1139, %s1141
      %p1145 = scmp.eq.s32.totalorder %s129, 0
      %p1146 = por %p1144, %p1145
      %p1147 = scmp.ne.s32.totalorder %s1139, %s1141
      %p1148 = scmp.eq.s32.totalorder %s134, 1
      %p1149 = por %p1147, %p1148
      %p1150 = scmp.ne.s32.totalorder %s1141, %s1142
      %p1151 = scmp.eq.s32.totalorder %s134, 0
      %p1152 = por %p1150, %p1151
      %p1153 = scmp.ne.s32.totalorder %s1141, %s1142
      %p1154 = scmp.eq.s32.totalorder %s135, 1
      %p1155 = por %p1153, %p1154
      %p1157 = scmp.ne.s32.totalorder %s1142, %s1156
      %p1158 = scmp.eq.s32.totalorder %s135, 0
      %p1159 = por %p1157, %p1158
      %s1161 = sadd.s32 %s1160, 1
      %p1164 = scmp.eq.s32.totalorder %s129, 1
      %p1165 = scmp.ne.s32.totalorder %s1160, %s1162
      %p1166 = scmp.eq.s32.totalorder %s129, 0
      %p1167 = por %p1165, %p1166
      %p1168 = scmp.ne.s32.totalorder %s1160, %s1162
      %p1169 = scmp.eq.s32.totalorder %s134, 1
      %p1170 = por %p1168, %p1169
      %p1171 = scmp.ne.s32.totalorder %s1162, %s1163
      %p1172 = scmp.eq.s32.totalorder %s134, 0
      %p1173 = por %p1171, %p1172
      %p1174 = scmp.ne.s32.totalorder %s1162, %s1163
      %p1175 = scmp.eq.s32.totalorder %s135, 1
      %p1176 = por %p1174, %p1175
      %p1178 = scmp.ne.s32.totalorder %s1163, %s1177
      %p1179 = scmp.eq.s32.totalorder %s135, 0
      %p1180 = por %p1178, %p1179
      %s1182 = sadd.s32 %s1181, 1
      %p1185 = scmp.eq.s32.totalorder %s129, 1
      %p1186 = scmp.ne.s32.totalorder %s1181, %s1183
      %p1187 = scmp.eq.s32.totalorder %s129, 0
      %p1188 = por %p1186, %p1187
      %p1189 = scmp.ne.s32.totalorder %s1181, %s1183
      %p1190 = scmp.eq.s32.totalorder %s134, 1
      %p1191 = por %p1189, %p1190
      %p1192 = scmp.ne.s32.totalorder %s1183, %s1184
      %p1193 = scmp.eq.s32.totalorder %s134, 0
      %p1194 = por %p1192, %p1193
      %p1195 = scmp.ne.s32.totalorder %s1183, %s1184
      %p1196 = scmp.eq.s32.totalorder %s135, 1
      %p1197 = por %p1195, %p1196
      %p1199 = scmp.ne.s32.totalorder %s1184, %s1198
      %p1200 = scmp.eq.s32.totalorder %s135, 0
      %p1201 = por %p1199, %p1200
      %s1203 = sadd.s32 %s1202, 1
      %p1206 = scmp.eq.s32.totalorder %s129, 1
      %p1207 = scmp.ne.s32.totalorder %s1202, %s1204
      %p1208 = scmp.eq.s32.totalorder %s129, 0
      %p1209 = por %p1207, %p1208
      %p1210 = scmp.ne.s32.totalorder %s1202, %s1204
      %p1211 = scmp.eq.s32.totalorder %s134, 1
      %p1212 = por %p1210, %p1211
      %p1213 = scmp.ne.s32.totalorder %s1204, %s1205
      %p1214 = scmp.eq.s32.totalorder %s134, 0
      %p1215 = por %p1213, %p1214
      %p1216 = scmp.ne.s32.totalorder %s1204, %s1205
      %p1217 = scmp.eq.s32.totalorder %s135, 1
      %p1218 = por %p1216, %p1217
      %p1220 = scmp.ne.s32.totalorder %s1205, %s1219
      %p1221 = scmp.eq.s32.totalorder %s135, 0
      %p1222 = por %p1220, %p1221
      %s1224 = sadd.s32 %s1223, 1
      %p1227 = scmp.eq.s32.totalorder %s129, 1
      %p1228 = scmp.ne.s32.totalorder %s1223, %s1225
      %p1229 = scmp.eq.s32.totalorder %s129, 0
      %p1230 = por %p1228, %p1229
      %p1231 = scmp.ne.s32.totalorder %s1223, %s1225
      %p1232 = scmp.eq.s32.totalorder %s134, 1
      %p1233 = por %p1231, %p1232
      %p1234 = scmp.ne.s32.totalorder %s1225, %s1226
      %p1235 = scmp.eq.s32.totalorder %s134, 0
      %p1236 = por %p1234, %p1235
      %p1237 = scmp.ne.s32.totalorder %s1225, %s1226
      %p1238 = scmp.eq.s32.totalorder %s135, 1
      %p1239 = por %p1237, %p1238
      %p1241 = scmp.ne.s32.totalorder %s1226, %s1240
      %p1242 = scmp.eq.s32.totalorder %s135, 0
      %p1243 = por %p1241, %p1242
      %s1244 = ssub.s32 %s129, %s136
      %p1245 = scmp.eq.s32.totalorder %s1244, 0
      %s1247 = sadd.s32 %s1246, 1
      %s1248 = scalar_select %p1245, %s1246, %s1247
      %p1251 = pneg %p1245
      %p1252 = scmp.eq.s32.totalorder %s129, 1
      %p1253 = por %p1251, %p1252
      %p1254 = scmp.ne.s32.totalorder %s1246, %s1249
      %p1255 = scmp.eq.s32.totalorder %s129, 0
      %p1256 = por %p1254, %p1255
      %p1257 = scmp.ne.s32.totalorder %s1246, %s1249
      %p1258 = scmp.eq.s32.totalorder %s134, 1
      %p1259 = por %p1257, %p1258
      %p1260 = scmp.ne.s32.totalorder %s1249, %s1250
      %p1261 = scmp.eq.s32.totalorder %s134, 0
      %p1262 = por %p1260, %p1261
      %p1263 = scmp.ne.s32.totalorder %s1249, %s1250
      %p1264 = scmp.eq.s32.totalorder %s135, 1
      %p1265 = por %p1263, %p1264
      %p1267 = scmp.ne.s32.totalorder %s1250, %s1266
      %p1268 = scmp.eq.s32.totalorder %s135, 0
      %p1269 = por %p1267, %p1268
      %p1270 = scmp.le.s32.totalorder 1, %s129
      %p1271 = scmp.lt.s32.totalorder %s129, 3
      %p1272 = pnand %p1270, %p1271
      %p1273 = pneg %p1272
      // Predicated region
      $region9: #{unet_forward.1} parent=5 // pred_check
        _
      $region10: #{unet_forward.1} parent=5 // pred_check_branch
        %1275 = sbr.rel (%p1272) target = $region12
      $region11: #{unet_forward.1} parent=5 // pred_region
        %s1276 = ssub.s32 %s129, 1
        // Predicated region
        $region13: #{unet_forward.1} parent=11 // pred_check
          %p1277 = pneg %p228
        $region14: #{unet_forward.1} parent=11 // pred_check_branch
          %1279 = sbr.rel (%p1277) target = $region16
        $region15: #{unet_forward.1} parent=11 // pred_region
          _
        $region16: #{unet_forward.1} parent=11 // pred_fallthru
          _
        // Predicated region
        $region17: #{unet_forward.1} parent=11 // pred_check
          %p1280 = pneg %p249
        $region18: #{unet_forward.1} parent=11 // pred_check_branch
          %1282 = sbr.rel (%p1280) target = $region20
        $region19: #{unet_forward.1} parent=11 // pred_region
          _
        $region20: #{unet_forward.1} parent=11 // pred_fallthru
          _
        // Predicated region
        $region21: #{unet_forward.1} parent=11 // pred_check
          %p1283 = pneg %p270
        $region22: #{unet_forward.1} parent=11 // pred_check_branch
          %1285 = sbr.rel (%p1283) target = $region24
        $region23: #{unet_forward.1} parent=11 // pred_region
          _
        $region24: #{unet_forward.1} parent=11 // pred_fallthru
          _
        // Predicated region
        $region25: #{unet_forward.1} parent=11 // pred_check
          %p1286 = pneg %p291
        $region26: #{unet_forward.1} parent=11 // pred_check_branch
          %1288 = sbr.rel (%p1286) target = $region28
        $region27: #{unet_forward.1} parent=11 // pred_region
          _
        $region28: #{unet_forward.1} parent=11 // pred_fallthru
          _
        // Predicated region
        $region29: #{unet_forward.1} parent=11 // pred_check
          %p1289 = pneg %p312
        $region30: #{unet_forward.1} parent=11 // pred_check_branch
          %1291 = sbr.rel (%p1289) target = $region32
        $region31: #{unet_forward.1} parent=11 // pred_region
          _
        $region32: #{unet_forward.1} parent=11 // pred_fallthru
          _
        // Predicated region
        $region33: #{unet_forward.1} parent=11 // pred_check
          %p1292 = pneg %p333
        $region34: #{unet_forward.1} parent=11 // pred_check_branch
          %1294 = sbr.rel (%p1292) target = $region36
        $region35: #{unet_forward.1} parent=11 // pred_region
          %s1296 = ssub.s32 512, 512
          %1297 = vsyncadd [#allocation3], %s1296
          %s1298 = sshll.u32 [#allocation2], 4
          %s1299 = int_to_ptr.vmem [resolvable:$true] %s1298
          %1304 = dma.hbm_to_vmem [thread:$0]  %s17, 512, %s1299, [#allocation3], 128, 128, 8
        $region36: #{unet_forward.1} parent=11 // pred_fallthru
          _
        // Predicated region
        $region37: #{unet_forward.1} parent=11 // pred_check
          %p1305 = pneg %p354
        $region38: #{unet_forward.1} parent=11 // pred_check_branch
          %1307 = sbr.rel (%p1305) target = $region40
        $region39: #{unet_forward.1} parent=11 // pred_region
          _
        $region40: #{unet_forward.1} parent=11 // pred_fallthru
          _
        // Predicated region
        $region41: #{unet_forward.1} parent=11 // pred_check
          %p1308 = pneg %p375
        $region42: #{unet_forward.1} parent=11 // pred_check_branch
          %1310 = sbr.rel (%p1308) target = $region44
        $region43: #{unet_forward.1} parent=11 // pred_region
          %s1312 = ssub.s32 512, 512
          %1313 = vsyncadd [#allocation6], %s1312
          %s1314 = sshll.u32 [#allocation5], 4
          %s1315 = int_to_ptr.vmem [resolvable:$true] %s1314
          %1320 = dma.hbm_to_vmem [thread:$0]  %s21, 512, %s1315, [#allocation6], 128, 128, 8
        $region44: #{unet_forward.1} parent=11 // pred_fallthru
          _
        // Predicated region
        $region45: #{unet_forward.1} parent=11 // pred_check
          %p1321 = pneg %p396
        $region46: #{unet_forward.1} parent=11 // pred_check_branch
          %1323 = sbr.rel (%p1321) target = $region48
        $region47: #{unet_forward.1} parent=11 // pred_region
          _
        $region48: #{unet_forward.1} parent=11 // pred_fallthru
          _
        // Predicated region
        $region49: #{unet_forward.1} parent=11 // pred_check
          %p1324 = pneg %p417
        $region50: #{unet_forward.1} parent=11 // pred_check_branch
          %1326 = sbr.rel (%p1324) target = $region52
        $region51: #{unet_forward.1} parent=11 // pred_region
          _
        $region52: #{unet_forward.1} parent=11 // pred_fallthru
          _
        // Predicated region
        $region53: #{unet_forward.1} parent=11 // pred_check
          %p1327 = pneg %p438
        $region54: #{unet_forward.1} parent=11 // pred_check_branch
          %1329 = sbr.rel (%p1327) target = $region56
        $region55: #{unet_forward.1} parent=11 // pred_region
          _
        $region56: #{unet_forward.1} parent=11 // pred_fallthru
          _
        // Predicated region
        $region57: #{unet_forward.1} parent=11 // pred_check
          %p1330 = pneg %p459
        $region58: #{unet_forward.1} parent=11 // pred_check_branch
          %1332 = sbr.rel (%p1330) target = $region60
        $region59: #{unet_forward.1} parent=11 // pred_region
          _
        $region60: #{unet_forward.1} parent=11 // pred_fallthru
          _
        // Predicated region
        $region61: #{unet_forward.1} parent=11 // pred_check
          %p1333 = pneg %p480
        $region62: #{unet_forward.1} parent=11 // pred_check_branch
          %1335 = sbr.rel (%p1333) target = $region64
        $region63: #{unet_forward.1} parent=11 // pred_region
          %s1337 = ssub.s32 16, 16
          %1338 = vsyncadd [#allocation6], %s1337
          %s1340 = sshll.u32 [#allocation7], 4
          %s1341 = int_to_ptr.vmem [resolvable:$true] %s1340
          %1343 = dma.hbm_to_vmem [thread:$0]  %s31, 16, %s1341, [#allocation6]
        $region64: #{unet_forward.1} parent=11 // pred_fallthru
          _
        // Predicated region
        $region65: #{unet_forward.1} parent=11 // pred_check
          %p1344 = pneg %p501
        $region66: #{unet_forward.1} parent=11 // pred_check_branch
          %1346 = sbr.rel (%p1344) target = $region68
        $region67: #{unet_forward.1} parent=11 // pred_region
          _
        $region68: #{unet_forward.1} parent=11 // pred_fallthru
          _
        // Predicated region
        $region69: #{unet_forward.1} parent=11 // pred_check
          %p1347 = pneg %p522
        $region70: #{unet_forward.1} parent=11 // pred_check_branch
          %1349 = sbr.rel (%p1347) target = $region72
        $region71: #{unet_forward.1} parent=11 // pred_region
          %s1351 = ssub.s32 128, 128
          %1352 = vsyncadd [#allocation9], %s1351
          %s1353 = sshll.u32 [#allocation8], 4
          %s1354 = int_to_ptr.vmem [resolvable:$true] %s1353
          %1359 = dma.hbm_to_vmem [thread:$0]  %s35, 128, %s1354, [#allocation9], 64, 64, 4
        $region72: #{unet_forward.1} parent=11 // pred_fallthru
          _
        // Predicated region
        $region73: #{unet_forward.1} parent=11 // pred_check
          %p1360 = pneg %p543
        $region74: #{unet_forward.1} parent=11 // pred_check_branch
          %1362 = sbr.rel (%p1360) target = $region76
        $region75: #{unet_forward.1} parent=11 // pred_region
          %s1364 = ssub.s32 16, 16
          %1365 = vsyncadd [#allocation9], %s1364
          %s1367 = sshll.u32 [#allocation10], 4
          %s1368 = int_to_ptr.vmem [resolvable:$true] %s1367
          %1370 = dma.hbm_to_vmem [thread:$0]  %s37, 16, %s1368, [#allocation9]
        $region76: #{unet_forward.1} parent=11 // pred_fallthru
          _
        // Predicated region
        $region77: #{unet_forward.1} parent=11 // pred_check
          %p1371 = pneg %p564
        $region78: #{unet_forward.1} parent=11 // pred_check_branch
          %1373 = sbr.rel (%p1371) target = $region80
        $region79: #{unet_forward.1} parent=11 // pred_region
          %s1375 = ssub.s32 16, 16
          %1376 = vsyncadd [#allocation12], %s1375
          %s1378 = sshll.u32 [#allocation11], 4
          %s1379 = int_to_ptr.vmem [resolvable:$true] %s1378
          %1381 = dma.hbm_to_vmem [thread:$0]  %s39, 16, %s1379, [#allocation12]
        $region80: #{unet_forward.1} parent=11 // pred_fallthru
          _
        // Predicated region
        $region81: #{unet_forward.1} parent=11 // pred_check
          %p1382 = pneg %p585
        $region82: #{unet_forward.1} parent=11 // pred_check_branch
          %1384 = sbr.rel (%p1382) target = $region84
        $region83: #{unet_forward.1} parent=11 // pred_region
          _
        $region84: #{unet_forward.1} parent=11 // pred_fallthru
          _
        // Predicated region
        $region85: #{unet_forward.1} parent=11 // pred_check
          %p1385 = pneg %p606
        $region86: #{unet_forward.1} parent=11 // pred_check_branch
          %1387 = sbr.rel (%p1385) target = $region88
        $region87: #{unet_forward.1} parent=11 // pred_region
          %s1389 = ssub.s32 128, 128
          %1390 = vsyncadd [#allocation12], %s1389
          %s1391 = sshll.u32 [#allocation13], 4
          %s1392 = int_to_ptr.vmem [resolvable:$true] %s1391
          %1397 = dma.hbm_to_vmem [thread:$0]  %s43, 128, %s1392, [#allocation12], 64, 64, 4
        $region88: #{unet_forward.1} parent=11 // pred_fallthru
          _
        // Predicated region
        $region89: #{unet_forward.1} parent=11 // pred_check
          %p1398 = pneg %p627
        $region90: #{unet_forward.1} parent=11 // pred_check_branch
          %1400 = sbr.rel (%p1398) target = $region92
        $region91: #{unet_forward.1} parent=11 // pred_region
          %s1402 = ssub.s32 16, 16
          %1403 = vsyncadd [#allocation15], %s1402
          %s1405 = sshll.u32 [#allocation14], 4
          %s1406 = int_to_ptr.vmem [resolvable:$true] %s1405
          %1408 = dma.hbm_to_vmem [thread:$0]  %s45, 16, %s1406, [#allocation15]
        $region92: #{unet_forward.1} parent=11 // pred_fallthru
          _
        // Predicated region
        $region93: #{unet_forward.1} parent=11 // pred_check
          %p1409 = pneg %p648
        $region94: #{unet_forward.1} parent=11 // pred_check_branch
          %1411 = sbr.rel (%p1409) target = $region96
        $region95: #{unet_forward.1} parent=11 // pred_region
          %s1413 = ssub.s32 16, 16
          %1414 = vsyncadd [#allocation15], %s1413
          %s1416 = sshll.u32 [#allocation16], 4
          %s1417 = int_to_ptr.vmem [resolvable:$true] %s1416
          %1419 = dma.hbm_to_vmem [thread:$0]  %s47, 16, %s1417, [#allocation15]
        $region96: #{unet_forward.1} parent=11 // pred_fallthru
          _
        // Predicated region
        $region97: #{unet_forward.1} parent=11 // pred_check
          %p1420 = pneg %p669
        $region98: #{unet_forward.1} parent=11 // pred_check_branch
          %1422 = sbr.rel (%p1420) target = $region100
        $region99: #{unet_forward.1} parent=11 // pred_region
          _
        $region100: #{unet_forward.1} parent=11 // pred_fallthru
          _
        // Predicated region
        $region101: #{unet_forward.1} parent=11 // pred_check
          %p1423 = pneg %p690
        $region102: #{unet_forward.1} parent=11 // pred_check_branch
          %1425 = sbr.rel (%p1423) target = $region104
        $region103: #{unet_forward.1} parent=11 // pred_region
          _
        $region104: #{unet_forward.1} parent=11 // pred_fallthru
          _
        // Predicated region
        $region105: #{unet_forward.1} parent=11 // pred_check
          %p1426 = pneg %p711
        $region106: #{unet_forward.1} parent=11 // pred_check_branch
          %1428 = sbr.rel (%p1426) target = $region108
        $region107: #{unet_forward.1} parent=11 // pred_region
          %s1430 = ssub.s32 16, 16
          %1431 = vsyncadd [#allocation18], %s1430
          %s1433 = sshll.u32 [#allocation17], 4
          %s1434 = int_to_ptr.vmem [resolvable:$true] %s1433
          %1436 = dma.hbm_to_vmem [thread:$0]  %s53, 16, %s1434, [#allocation18]
        $region108: #{unet_forward.1} parent=11 // pred_fallthru
          _
        // Predicated region
        $region109: #{unet_forward.1} parent=11 // pred_check
          %p1437 = pneg %p732
        $region110: #{unet_forward.1} parent=11 // pred_check_branch
          %1439 = sbr.rel (%p1437) target = $region112
        $region111: #{unet_forward.1} parent=11 // pred_region
          %s1441 = ssub.s32 16, 16
          %1442 = vsyncadd [#allocation18], %s1441
          %s1444 = sshll.u32 [#allocation19], 4
          %s1445 = int_to_ptr.vmem [resolvable:$true] %s1444
          %1447 = dma.hbm_to_vmem [thread:$0]  %s55, 16, %s1445, [#allocation18]
        $region112: #{unet_forward.1} parent=11 // pred_fallthru
          _
        // Predicated region
        $region113: #{unet_forward.1} parent=11 // pred_check
          %p1448 = pneg %p753
        $region114: #{unet_forward.1} parent=11 // pred_check_branch
          %1450 = sbr.rel (%p1448) target = $region116
        $region115: #{unet_forward.1} parent=11 // pred_region
          _
        $region116: #{unet_forward.1} parent=11 // pred_fallthru
          _
        // Predicated region
        $region117: #{unet_forward.1} parent=11 // pred_check
          %p1451 = pneg %p774
        $region118: #{unet_forward.1} parent=11 // pred_check_branch
          %1453 = sbr.rel (%p1451) target = $region120
        $region119: #{unet_forward.1} parent=11 // pred_region
          %s1455 = ssub.s32 256, 256
          %1456 = vsyncadd [#allocation21], %s1455
          %s1457 = sshll.u32 [#allocation20], 4
          %s1458 = int_to_ptr.vmem [resolvable:$true] %s1457
          %1463 = dma.hbm_to_vmem [thread:$0]  %s59, 256, %s1458, [#allocation21], 128, 128, 8
        $region120: #{unet_forward.1} parent=11 // pred_fallthru
          _
        // Predicated region
        $region121: #{unet_forward.1} parent=11 // pred_check
          %p1464 = pneg %p795
        $region122: #{unet_forward.1} parent=11 // pred_check_branch
          %1466 = sbr.rel (%p1464) target = $region124
        $region123: #{unet_forward.1} parent=11 // pred_region
          %s1468 = ssub.s32 16, 16
          %1469 = vsyncadd [#allocation21], %s1468
          %s1471 = sshll.u32 [#allocation22], 4
          %s1472 = int_to_ptr.vmem [resolvable:$true] %s1471
          %1474 = dma.hbm_to_vmem [thread:$0]  %s61, 16, %s1472, [#allocation21]
        $region124: #{unet_forward.1} parent=11 // pred_fallthru
          _
        // Predicated region
        $region125: #{unet_forward.1} parent=11 // pred_check
          %p1475 = pneg %p816
        $region126: #{unet_forward.1} parent=11 // pred_check_branch
          %1477 = sbr.rel (%p1475) target = $region128
        $region127: #{unet_forward.1} parent=11 // pred_region
          %s1479 = ssub.s32 16, 16
          %1480 = vsyncadd [#allocation24], %s1479
          %s1482 = sshll.u32 [#allocation23], 4
          %s1483 = int_to_ptr.vmem [resolvable:$true] %s1482
          %1485 = dma.hbm_to_vmem [thread:$0]  %s63, 16, %s1483, [#allocation24]
        $region128: #{unet_forward.1} parent=11 // pred_fallthru
          _
        // Predicated region
        $region129: #{unet_forward.1} parent=11 // pred_check
          %p1486 = pneg %p837
        $region130: #{unet_forward.1} parent=11 // pred_check_branch
          %1488 = sbr.rel (%p1486) target = $region132
        $region131: #{unet_forward.1} parent=11 // pred_region
          _
        $region132: #{unet_forward.1} parent=11 // pred_fallthru
          _
        // Predicated region
        $region133: #{unet_forward.1} parent=11 // pred_check
          %p1489 = pneg %p858
        $region134: #{unet_forward.1} parent=11 // pred_check_branch
          %1491 = sbr.rel (%p1489) target = $region136
        $region135: #{unet_forward.1} parent=11 // pred_region
          %s1493 = ssub.s32 1024, 1024
          %1494 = vsyncadd [#allocation24], %s1493
          %s1495 = sshll.u32 [#allocation25], 4
          %s1496 = int_to_ptr.vmem [resolvable:$true] %s1495
          %1501 = dma.hbm_to_vmem [thread:$0]  %s67, 1024, %s1496, [#allocation24], 128, 128, 8
        $region136: #{unet_forward.1} parent=11 // pred_fallthru
          _
        // Predicated region
        $region137: #{unet_forward.1} parent=11 // pred_check
          %p1502 = pneg %p879
        $region138: #{unet_forward.1} parent=11 // pred_check_branch
          %1504 = sbr.rel (%p1502) target = $region140
        $region139: #{unet_forward.1} parent=11 // pred_region
          _
        $region140: #{unet_forward.1} parent=11 // pred_fallthru
          _
        // Predicated region
        $region141: #{unet_forward.1} parent=11 // pred_check
          %p1505 = pneg %p900
        $region142: #{unet_forward.1} parent=11 // pred_check_branch
          %1507 = sbr.rel (%p1505) target = $region144
        $region143: #{unet_forward.1} parent=11 // pred_region
          %s1509 = ssub.s32 256, 256
          %1510 = vsyncadd [#allocation27], %s1509
          %s1511 = sshll.u32 [#allocation26], 4
          %s1512 = int_to_ptr.vmem [resolvable:$true] %s1511
          %1517 = dma.hbm_to_vmem [thread:$0]  %s71, 256, %s1512, [#allocation27], 128, 128, 8
        $region144: #{unet_forward.1} parent=11 // pred_fallthru
          _
        // Predicated region
        $region145: #{unet_forward.1} parent=11 // pred_check
          %p1518 = pneg %p921
        $region146: #{unet_forward.1} parent=11 // pred_check_branch
          %1520 = sbr.rel (%p1518) target = $region148
        $region147: #{unet_forward.1} parent=11 // pred_region
          %s1522 = ssub.s32 16, 16
          %1523 = vsyncadd [#allocation27], %s1522
          %s1525 = sshll.u32 [#allocation28], 4
          %s1526 = int_to_ptr.vmem [resolvable:$true] %s1525
          %1528 = dma.hbm_to_vmem [thread:$0]  %s73, 16, %s1526, [#allocation27]
        $region148: #{unet_forward.1} parent=11 // pred_fallthru
          _
        // Predicated region
        $region149: #{unet_forward.1} parent=11 // pred_check
          %p1529 = pneg %p942
        $region150: #{unet_forward.1} parent=11 // pred_check_branch
          %1531 = sbr.rel (%p1529) target = $region152
        $region151: #{unet_forward.1} parent=11 // pred_region
          %s1533 = ssub.s32 16, 16
          %1534 = vsyncadd [#allocation30], %s1533
          %s1536 = sshll.u32 [#allocation29], 4
          %s1537 = int_to_ptr.vmem [resolvable:$true] %s1536
          %1539 = dma.hbm_to_vmem [thread:$0]  %s75, 16, %s1537, [#allocation30]
        $region152: #{unet_forward.1} parent=11 // pred_fallthru
          _
        // Predicated region
        $region153: #{unet_forward.1} parent=11 // pred_check
          %p1540 = pneg %p963
        $region154: #{unet_forward.1} parent=11 // pred_check_branch
          %1542 = sbr.rel (%p1540) target = $region156
        $region155: #{unet_forward.1} parent=11 // pred_region
          _
        $region156: #{unet_forward.1} parent=11 // pred_fallthru
          _
        // Predicated region
        $region157: #{unet_forward.1} parent=11 // pred_check
          %p1543 = pneg %p984
        $region158: #{unet_forward.1} parent=11 // pred_check_branch
          %1545 = sbr.rel (%p1543) target = $region160
        $region159: #{unet_forward.1} parent=11 // pred_region
          %s1547 = ssub.s32 256, 256
          %1548 = vsyncadd [#allocation30], %s1547
          %s1549 = sshll.u32 [#allocation31], 4
          %s1550 = int_to_ptr.vmem [resolvable:$true] %s1549
          %1555 = dma.hbm_to_vmem [thread:$0]  %s79, 256, %s1550, [#allocation30], 128, 128, 8
        $region160: #{unet_forward.1} parent=11 // pred_fallthru
          _
        // Predicated region
        $region161: #{unet_forward.1} parent=11 // pred_check
          %p1556 = pneg %p1005
        $region162: #{unet_forward.1} parent=11 // pred_check_branch
          %1558 = sbr.rel (%p1556) target = $region164
        $region163: #{unet_forward.1} parent=11 // pred_region
          %s1560 = ssub.s32 16, 16
          %1561 = vsyncadd [#allocation33], %s1560
          %s1563 = sshll.u32 [#allocation32], 4
          %s1564 = int_to_ptr.vmem [resolvable:$true] %s1563
          %1566 = dma.hbm_to_vmem [thread:$0]  %s81, 16, %s1564, [#allocation33]
        $region164: #{unet_forward.1} parent=11 // pred_fallthru
          _
        // Predicated region
        $region165: #{unet_forward.1} parent=11 // pred_check
          %p1567 = pneg %p1026
        $region166: #{unet_forward.1} parent=11 // pred_check_branch
          %1569 = sbr.rel (%p1567) target = $region168
        $region167: #{unet_forward.1} parent=11 // pred_region
          %s1571 = ssub.s32 16, 16
          %1572 = vsyncadd [#allocation33], %s1571
          %s1574 = sshll.u32 [#allocation34], 4
          %s1575 = int_to_ptr.vmem [resolvable:$true] %s1574
          %1577 = dma.hbm_to_vmem [thread:$0]  %s83, 16, %s1575, [#allocation33]
        $region168: #{unet_forward.1} parent=11 // pred_fallthru
          _
        // Predicated region
        $region169: #{unet_forward.1} parent=11 // pred_check
          %p1578 = pneg %p1047
        $region170: #{unet_forward.1} parent=11 // pred_check_branch
          %1580 = sbr.rel (%p1578) target = $region172
        $region171: #{unet_forward.1} parent=11 // pred_region
          _
        $region172: #{unet_forward.1} parent=11 // pred_fallthru
          _
        // Predicated region
        $region173: #{unet_forward.1} parent=11 // pred_check
          %p1581 = pneg %p1068
        $region174: #{unet_forward.1} parent=11 // pred_check_branch
          %1583 = sbr.rel (%p1581) target = $region176
        $region175: #{unet_forward.1} parent=11 // pred_region
          %s1585 = ssub.s32 512, 512
          %1586 = vsyncadd [#allocation36], %s1585
          %s1587 = sshll.u32 [#allocation35], 4
          %s1588 = int_to_ptr.vmem [resolvable:$true] %s1587
          %1593 = dma.hbm_to_vmem [thread:$0]  %s87, 512, %s1588, [#allocation36], 128, 128, 8
        $region176: #{unet_forward.1} parent=11 // pred_fallthru
          _
        // Predicated region
        $region177: #{unet_forward.1} parent=11 // pred_check
          %p1594 = pneg %p1089
        $region178: #{unet_forward.1} parent=11 // pred_check_branch
          %1596 = sbr.rel (%p1594) target = $region180
        $region179: #{unet_forward.1} parent=11 // pred_region
          %s1598 = ssub.s32 16, 16
          %1599 = vsyncadd [#allocation36], %s1598
          %s1601 = sshll.u32 [#allocation37], 4
          %s1602 = int_to_ptr.vmem [resolvable:$true] %s1601
          %1604 = dma.hbm_to_vmem [thread:$0]  %s89, 16, %s1602, [#allocation36]
        $region180: #{unet_forward.1} parent=11 // pred_fallthru
          _
        // Predicated region
        $region181: #{unet_forward.1} parent=11 // pred_check
          %p1605 = pneg %p1110
        $region182: #{unet_forward.1} parent=11 // pred_check_branch
          %1607 = sbr.rel (%p1605) target = $region184
        $region183: #{unet_forward.1} parent=11 // pred_region
          %s1609 = ssub.s32 16, 16
          %1610 = vsyncadd [#allocation39], %s1609
          %s1612 = sshll.u32 [#allocation38], 4
          %s1613 = int_to_ptr.vmem [resolvable:$true] %s1612
          %1615 = dma.hbm_to_vmem [thread:$0]  %s91, 16, %s1613, [#allocation39]
        $region184: #{unet_forward.1} parent=11 // pred_fallthru
          _
        // Predicated region
        $region185: #{unet_forward.1} parent=11 // pred_check
          %p1616 = pneg %p1131
        $region186: #{unet_forward.1} parent=11 // pred_check_branch
          %1618 = sbr.rel (%p1616) target = $region188
        $region187: #{unet_forward.1} parent=11 // pred_region
          _
        $region188: #{unet_forward.1} parent=11 // pred_fallthru
          _
        // Predicated region
        $region189: #{unet_forward.1} parent=11 // pred_check
          %p1619 = pneg %p1152
        $region190: #{unet_forward.1} parent=11 // pred_check_branch
          %1621 = sbr.rel (%p1619) target = $region192
        $region191: #{unet_forward.1} parent=11 // pred_region
          %s1623 = ssub.s32 512, 512
          %1624 = vsyncadd [#allocation39], %s1623
          %s1625 = sshll.u32 [#allocation40], 4
          %s1626 = int_to_ptr.vmem [resolvable:$true] %s1625
          %1631 = dma.hbm_to_vmem [thread:$0]  %s95, 512, %s1626, [#allocation39], 128, 128, 8
        $region192: #{unet_forward.1} parent=11 // pred_fallthru
          _
        // Predicated region
        $region193: #{unet_forward.1} parent=11 // pred_check
          %p1632 = pneg %p1173
        $region194: #{unet_forward.1} parent=11 // pred_check_branch
          %1634 = sbr.rel (%p1632) target = $region196
        $region195: #{unet_forward.1} parent=11 // pred_region
          %s1636 = ssub.s32 16, 16
          %1637 = vsyncadd [#allocation42], %s1636
          %s1639 = sshll.u32 [#allocation41], 4
          %s1640 = int_to_ptr.vmem [resolvable:$true] %s1639
          %1642 = dma.hbm_to_vmem [thread:$0]  %s97, 16, %s1640, [#allocation42]
        $region196: #{unet_forward.1} parent=11 // pred_fallthru
          _
        // Predicated region
        $region197: #{unet_forward.1} parent=11 // pred_check
          %p1643 = pneg %p1194
        $region198: #{unet_forward.1} parent=11 // pred_check_branch
          %1645 = sbr.rel (%p1643) target = $region200
        $region199: #{unet_forward.1} parent=11 // pred_region
          %s1647 = ssub.s32 16, 16
          %1648 = vsyncadd [#allocation42], %s1647
          %s1650 = sshll.u32 [#allocation43], 4
          %s1651 = int_to_ptr.vmem [resolvable:$true] %s1650
          %1653 = dma.hbm_to_vmem [thread:$0]  %s99, 16, %s1651, [#allocation42]
        $region200: #{unet_forward.1} parent=11 // pred_fallthru
          _
        // Predicated region
        $region201: #{unet_forward.1} parent=11 // pred_check
          %p1654 = pneg %p1215
        $region202: #{unet_forward.1} parent=11 // pred_check_branch
          %1656 = sbr.rel (%p1654) target = $region204
        $region203: #{unet_forward.1} parent=11 // pred_region
          _
        $region204: #{unet_forward.1} parent=11 // pred_fallthru
          _
        // Predicated region
        $region205: #{unet_forward.1} parent=11 // pred_check
          %p1657 = pneg %p1236
        $region206: #{unet_forward.1} parent=11 // pred_check_branch
          %1659 = sbr.rel (%p1657) target = $region208
        $region207: #{unet_forward.1} parent=11 // pred_region
          %s1661 = ssub.s32 1024, 1024
          %1662 = vsyncadd [#allocation45], %s1661
          %s1663 = sshll.u32 [#allocation44], 4
          %s1664 = int_to_ptr.vmem [resolvable:$true] %s1663
          %1669 = dma.hbm_to_vmem [thread:$0]  %s103, 1024, %s1664, [#allocation45], 128, 128, 8
        $region208: #{unet_forward.1} parent=11 // pred_fallthru
          _
      $region12: #{unet_forward.1} parent=5 // pred_fallthru
        _
      %p1670 = scmp.lt.s32.totalorder %s129, 2
      // Predicated region
      $region209: #{unet_forward.1} parent=5 // pred_check
        %p1671 = pneg %p1670
      $region210: #{unet_forward.1} parent=5 // pred_check_branch
        %1673 = sbr.rel (%p1671) target = $region212
      $region211: #{unet_forward.1} parent=5 // pred_region
        // Predicated region
        $region213: #{unet_forward.1} parent=211 // pred_check
          %p1674 = pneg %p149
        $region214: #{unet_forward.1} parent=211 // pred_check_branch
          %1676 = sbr.rel (%p1674) target = $region216
        $region215: #{unet_forward.1} parent=211 // pred_region
          %p1677 = scmp.lt.s32.totalorder %s129, 1
          %s1678 = scalar_select %p1677, %s129, 1
          %s1679 = smul.addr %s1678, 4
          %s1680 = scalar_lea.vmem %s1, %s1679
        $region216: #{unet_forward.1} parent=211 // pred_fallthru
          _
        // Predicated region
        $region217: #{unet_forward.1} parent=211 // pred_check
          %p1681 = pneg %p175
        $region218: #{unet_forward.1} parent=211 // pred_check_branch
          %1683 = sbr.rel (%p1681) target = $region220
        $region219: #{unet_forward.1} parent=211 // pred_region
          %p1684 = scmp.lt.s32.totalorder %s129, 1
          %s1685 = scalar_select %p1684, %s129, 1
          %s1686 = smul.addr %s1685, 8
          %s1687 = scalar_lea.vmem %s3, %s1686
        $region220: #{unet_forward.1} parent=211 // pred_fallthru
          _
        // Predicated region
        $region221: #{unet_forward.1} parent=211 // pred_check
          %p1688 = pneg %p201
        $region222: #{unet_forward.1} parent=211 // pred_check_branch
          %1690 = sbr.rel (%p1688) target = $region224
        $region223: #{unet_forward.1} parent=211 // pred_region
          %p1691 = scmp.lt.s32.totalorder %s129, 1
          %s1692 = scalar_select %p1691, %s129, 1
          %s1693 = smul.addr %s1692, 2
          %s1694 = smul.addr %s1693, 8
          %s1695 = scalar_lea.vmem %s5, %s1694
        $region224: #{unet_forward.1} parent=211 // pred_fallthru
          _
      $region212: #{unet_forward.1} parent=5 // pred_fallthru
        _
      %p1696 = scmp.le.s32.totalorder 1, %s129
      %p1697 = scmp.lt.s32.totalorder %s129, 3
      %p1698 = pnand %p1696, %p1697
      %p1699 = pneg %p1698
      // Predicated region
      $region225: #{unet_forward.1} parent=5 // pred_check
        _
      $region226: #{unet_forward.1} parent=5 // pred_check_branch
        %1701 = sbr.rel (%p1698) target = $region228
      $region227: #{unet_forward.1} parent=5 // pred_region
        %s1702 = ssub.s32 %s129, 1
        // Predicated region
        $region229: #{unet_forward.1} parent=227 // pred_check
          %p1703 = pneg %p333
        $region230: #{unet_forward.1} parent=227 // pred_check_branch
          %1705 = sbr.rel (%p1703) target = $region232
        $region231: #{unet_forward.1} parent=227 // pred_region
          %1706 = dma.done [#allocation3], 512
        $region232: #{unet_forward.1} parent=227 // pred_fallthru
          _
        // Predicated region
        $region233: #{unet_forward.1} parent=227 // pred_check
          %p1707 = pneg %p375
        $region234: #{unet_forward.1} parent=227 // pred_check_branch
          %1709 = sbr.rel (%p1707) target = $region236
        $region235: #{unet_forward.1} parent=227 // pred_region
          %1710 = dma.done [#allocation6], 512
        $region236: #{unet_forward.1} parent=227 // pred_fallthru
          _
        // Predicated region
        $region237: #{unet_forward.1} parent=227 // pred_check
          %p1711 = pneg %p480
        $region238: #{unet_forward.1} parent=227 // pred_check_branch
          %1713 = sbr.rel (%p1711) target = $region240
        $region239: #{unet_forward.1} parent=227 // pred_region
          %1714 = dma.done [#allocation6], 16
        $region240: #{unet_forward.1} parent=227 // pred_fallthru
          _
        // Predicated region
        $region241: #{unet_forward.1} parent=227 // pred_check
          %p1715 = pneg %p522
        $region242: #{unet_forward.1} parent=227 // pred_check_branch
          %1717 = sbr.rel (%p1715) target = $region244
        $region243: #{unet_forward.1} parent=227 // pred_region
          %1718 = dma.done [#allocation9], 128
        $region244: #{unet_forward.1} parent=227 // pred_fallthru
          _
        // Predicated region
        $region245: #{unet_forward.1} parent=227 // pred_check
          %p1719 = pneg %p543
        $region246: #{unet_forward.1} parent=227 // pred_check_branch
          %1721 = sbr.rel (%p1719) target = $region248
        $region247: #{unet_forward.1} parent=227 // pred_region
          %1722 = dma.done [#allocation9], 16
        $region248: #{unet_forward.1} parent=227 // pred_fallthru
          _
        // Predicated region
        $region249: #{unet_forward.1} parent=227 // pred_check
          %p1723 = pneg %p564
        $region250: #{unet_forward.1} parent=227 // pred_check_branch
          %1725 = sbr.rel (%p1723) target = $region252
        $region251: #{unet_forward.1} parent=227 // pred_region
          %1726 = dma.done [#allocation12], 16
        $region252: #{unet_forward.1} parent=227 // pred_fallthru
          _
        // Predicated region
        $region253: #{unet_forward.1} parent=227 // pred_check
          %p1727 = pneg %p606
        $region254: #{unet_forward.1} parent=227 // pred_check_branch
          %1729 = sbr.rel (%p1727) target = $region256
        $region255: #{unet_forward.1} parent=227 // pred_region
          %1730 = dma.done [#allocation12], 128
        $region256: #{unet_forward.1} parent=227 // pred_fallthru
          _
        // Predicated region
        $region257: #{unet_forward.1} parent=227 // pred_check
          %p1731 = pneg %p627
        $region258: #{unet_forward.1} parent=227 // pred_check_branch
          %1733 = sbr.rel (%p1731) target = $region260
        $region259: #{unet_forward.1} parent=227 // pred_region
          %1734 = dma.done [#allocation15], 16
        $region260: #{unet_forward.1} parent=227 // pred_fallthru
          _
        // Predicated region
        $region261: #{unet_forward.1} parent=227 // pred_check
          %p1735 = pneg %p648
        $region262: #{unet_forward.1} parent=227 // pred_check_branch
          %1737 = sbr.rel (%p1735) target = $region264
        $region263: #{unet_forward.1} parent=227 // pred_region
          %1738 = dma.done [#allocation15], 16
        $region264: #{unet_forward.1} parent=227 // pred_fallthru
          _
        // Predicated region
        $region265: #{unet_forward.1} parent=227 // pred_check
          %p1739 = pneg %p711
        $region266: #{unet_forward.1} parent=227 // pred_check_branch
          %1741 = sbr.rel (%p1739) target = $region268
        $region267: #{unet_forward.1} parent=227 // pred_region
          %1742 = dma.done [#allocation18], 16
        $region268: #{unet_forward.1} parent=227 // pred_fallthru
          _
        // Predicated region
        $region269: #{unet_forward.1} parent=227 // pred_check
          %p1743 = pneg %p732
        $region270: #{unet_forward.1} parent=227 // pred_check_branch
          %1745 = sbr.rel (%p1743) target = $region272
        $region271: #{unet_forward.1} parent=227 // pred_region
          %1746 = dma.done [#allocation18], 16
        $region272: #{unet_forward.1} parent=227 // pred_fallthru
          _
        // Predicated region
        $region273: #{unet_forward.1} parent=227 // pred_check
          %p1747 = pneg %p774
        $region274: #{unet_forward.1} parent=227 // pred_check_branch
          %1749 = sbr.rel (%p1747) target = $region276
        $region275: #{unet_forward.1} parent=227 // pred_region
          %1750 = dma.done [#allocation21], 256
        $region276: #{unet_forward.1} parent=227 // pred_fallthru
          _
        // Predicated region
        $region277: #{unet_forward.1} parent=227 // pred_check
          %p1751 = pneg %p795
        $region278: #{unet_forward.1} parent=227 // pred_check_branch
          %1753 = sbr.rel (%p1751) target = $region280
        $region279: #{unet_forward.1} parent=227 // pred_region
          %1754 = dma.done [#allocation21], 16
        $region280: #{unet_forward.1} parent=227 // pred_fallthru
          _
        // Predicated region
        $region281: #{unet_forward.1} parent=227 // pred_check
          %p1755 = pneg %p816
        $region282: #{unet_forward.1} parent=227 // pred_check_branch
          %1757 = sbr.rel (%p1755) target = $region284
        $region283: #{unet_forward.1} parent=227 // pred_region
          %1758 = dma.done [#allocation24], 16
        $region284: #{unet_forward.1} parent=227 // pred_fallthru
          _
        // Predicated region
        $region285: #{unet_forward.1} parent=227 // pred_check
          %p1759 = pneg %p858
        $region286: #{unet_forward.1} parent=227 // pred_check_branch
          %1761 = sbr.rel (%p1759) target = $region288
        $region287: #{unet_forward.1} parent=227 // pred_region
          %1762 = dma.done [#allocation24], 1024
        $region288: #{unet_forward.1} parent=227 // pred_fallthru
          _
        // Predicated region
        $region289: #{unet_forward.1} parent=227 // pred_check
          %p1763 = pneg %p900
        $region290: #{unet_forward.1} parent=227 // pred_check_branch
          %1765 = sbr.rel (%p1763) target = $region292
        $region291: #{unet_forward.1} parent=227 // pred_region
          %1766 = dma.done [#allocation27], 256
        $region292: #{unet_forward.1} parent=227 // pred_fallthru
          _
        // Predicated region
        $region293: #{unet_forward.1} parent=227 // pred_check
          %p1767 = pneg %p921
        $region294: #{unet_forward.1} parent=227 // pred_check_branch
          %1769 = sbr.rel (%p1767) target = $region296
        $region295: #{unet_forward.1} parent=227 // pred_region
          %1770 = dma.done [#allocation27], 16
        $region296: #{unet_forward.1} parent=227 // pred_fallthru
          _
        // Predicated region
        $region297: #{unet_forward.1} parent=227 // pred_check
          %p1771 = pneg %p942
        $region298: #{unet_forward.1} parent=227 // pred_check_branch
          %1773 = sbr.rel (%p1771) target = $region300
        $region299: #{unet_forward.1} parent=227 // pred_region
          %1774 = dma.done [#allocation30], 16
        $region300: #{unet_forward.1} parent=227 // pred_fallthru
          _
        // Predicated region
        $region301: #{unet_forward.1} parent=227 // pred_check
          %p1775 = pneg %p984
        $region302: #{unet_forward.1} parent=227 // pred_check_branch
          %1777 = sbr.rel (%p1775) target = $region304
        $region303: #{unet_forward.1} parent=227 // pred_region
          %1778 = dma.done [#allocation30], 256
        $region304: #{unet_forward.1} parent=227 // pred_fallthru
          _
        // Predicated region
        $region305: #{unet_forward.1} parent=227 // pred_check
          %p1779 = pneg %p1005
        $region306: #{unet_forward.1} parent=227 // pred_check_branch
          %1781 = sbr.rel (%p1779) target = $region308
        $region307: #{unet_forward.1} parent=227 // pred_region
          %1782 = dma.done [#allocation33], 16
        $region308: #{unet_forward.1} parent=227 // pred_fallthru
          _
        // Predicated region
        $region309: #{unet_forward.1} parent=227 // pred_check
          %p1783 = pneg %p1026
        $region310: #{unet_forward.1} parent=227 // pred_check_branch
          %1785 = sbr.rel (%p1783) target = $region312
        $region311: #{unet_forward.1} parent=227 // pred_region
          %1786 = dma.done [#allocation33], 16
        $region312: #{unet_forward.1} parent=227 // pred_fallthru
          _
        // Predicated region
        $region313: #{unet_forward.1} parent=227 // pred_check
          %p1787 = pneg %p1068
        $region314: #{unet_forward.1} parent=227 // pred_check_branch
          %1789 = sbr.rel (%p1787) target = $region316
        $region315: #{unet_forward.1} parent=227 // pred_region
          %1790 = dma.done [#allocation36], 512
        $region316: #{unet_forward.1} parent=227 // pred_fallthru
          _
        // Predicated region
        $region317: #{unet_forward.1} parent=227 // pred_check
          %p1791 = pneg %p1089
        $region318: #{unet_forward.1} parent=227 // pred_check_branch
          %1793 = sbr.rel (%p1791) target = $region320
        $region319: #{unet_forward.1} parent=227 // pred_region
          %1794 = dma.done [#allocation36], 16
        $region320: #{unet_forward.1} parent=227 // pred_fallthru
          _
        // Predicated region
        $region321: #{unet_forward.1} parent=227 // pred_check
          %p1795 = pneg %p1110
        $region322: #{unet_forward.1} parent=227 // pred_check_branch
          %1797 = sbr.rel (%p1795) target = $region324
        $region323: #{unet_forward.1} parent=227 // pred_region
          %1798 = dma.done [#allocation39], 16
        $region324: #{unet_forward.1} parent=227 // pred_fallthru
          _
        // Predicated region
        $region325: #{unet_forward.1} parent=227 // pred_check
          %p1799 = pneg %p1152
        $region326: #{unet_forward.1} parent=227 // pred_check_branch
          %1801 = sbr.rel (%p1799) target = $region328
        $region327: #{unet_forward.1} parent=227 // pred_region
          %1802 = dma.done [#allocation39], 512
        $region328: #{unet_forward.1} parent=227 // pred_fallthru
          _
        // Predicated region
        $region329: #{unet_forward.1} parent=227 // pred_check
          %p1803 = pneg %p1173
        $region330: #{unet_forward.1} parent=227 // pred_check_branch
          %1805 = sbr.rel (%p1803) target = $region332
        $region331: #{unet_forward.1} parent=227 // pred_region
          %1806 = dma.done [#allocation42], 16
        $region332: #{unet_forward.1} parent=227 // pred_fallthru
          _
        // Predicated region
        $region333: #{unet_forward.1} parent=227 // pred_check
          %p1807 = pneg %p1194
        $region334: #{unet_forward.1} parent=227 // pred_check_branch
          %1809 = sbr.rel (%p1807) target = $region336
        $region335: #{unet_forward.1} parent=227 // pred_region
          %1810 = dma.done [#allocation42], 16
        $region336: #{unet_forward.1} parent=227 // pred_fallthru
          _
        // Predicated region
        $region337: #{unet_forward.1} parent=227 // pred_check
          %p1811 = pneg %p1236
        $region338: #{unet_forward.1} parent=227 // pred_check_branch
          %1813 = sbr.rel (%p1811) target = $region340
        $region339: #{unet_forward.1} parent=227 // pred_region
          %1814 = dma.done [#allocation45], 1024
        $region340: #{unet_forward.1} parent=227 // pred_fallthru
          _
        %p1815 = scmp.lt.s32.totalorder %s134, 1
        %s1816 = scalar_select %p1815, %s134, 1
        %s1817 = smul.addr %s1816, 4
        %s1818 = scalar_lea.vmem %s1, %s1817
        %p1819 = pneg %p155
        %p1820 = pneg %p152
        %p1821 = scmp.lt.s32.totalorder %s134, 1
        %s1822 = scalar_select %p1821, %s134, 1
        %s1823 = smul.addr %s1822, 8
        %s1824 = scalar_lea.vmem %s3, %s1823
        %p1825 = pneg %p181
        %p1826 = pneg %p178
        %p1827 = scmp.lt.s32.totalorder %s134, 1
        %s1828 = scalar_select %p1827, %s134, 1
        %s1829 = smul.addr %s1828, 2
        %s1830 = smul.addr %s1829, 8
        %s1831 = scalar_lea.vmem %s5, %s1830
        %p1832 = pneg %p207
        %p1833 = pneg %p204
        %p1834 = pneg %p228
        %p1835 = pneg %p225
        %p1836 = pneg %p249
        %p1837 = pneg %p246
        %p1838 = pneg %p270
        %p1839 = pneg %p267
        %p1840 = pneg %p291
        %p1841 = pneg %p288
        %p1842 = pneg %p312
        %p1843 = pneg %p309
        %p1844 = pneg %p333
        %p1845 = pneg %p330
        %p1846 = pneg %p354
        %p1847 = pneg %p351
        %p1848 = pneg %p375
        %p1849 = pneg %p372
        %p1850 = pneg %p396
        %p1851 = pneg %p393
        %p1852 = pneg %p417
        %p1853 = pneg %p414
        %p1854 = pneg %p438
        %p1855 = pneg %p435
        %p1856 = pneg %p459
        %p1857 = pneg %p456
        %p1858 = pneg %p480
        %p1859 = pneg %p477
        %p1860 = pneg %p501
        %p1861 = pneg %p498
        %p1862 = pneg %p522
        %p1863 = pneg %p519
        %p1864 = pneg %p543
        %p1865 = pneg %p540
        %p1866 = pneg %p564
        %p1867 = pneg %p561
        %p1868 = pneg %p585
        %p1869 = pneg %p582
        %p1870 = pneg %p606
        %p1871 = pneg %p603
        %p1872 = pneg %p627
        %p1873 = pneg %p624
        %p1874 = pneg %p648
        %p1875 = pneg %p645
        %p1876 = pneg %p669
        %p1877 = pneg %p666
        %p1878 = pneg %p690
        %p1879 = pneg %p687
        %p1880 = pneg %p711
        %p1881 = pneg %p708
        %p1882 = pneg %p732
        %p1883 = pneg %p729
        %p1884 = pneg %p753
        %p1885 = pneg %p750
        %p1886 = pneg %p774
        %p1887 = pneg %p771
        %p1888 = pneg %p795
        %p1889 = pneg %p792
        %p1890 = pneg %p816
        %p1891 = pneg %p813
        %p1892 = pneg %p837
        %p1893 = pneg %p834
        %p1894 = pneg %p858
        %p1895 = pneg %p855
        %p1896 = pneg %p879
        %p1897 = pneg %p876
        %p1898 = pneg %p900
        %p1899 = pneg %p897
        %p1900 = pneg %p921
        %p1901 = pneg %p918
        %p1902 = pneg %p942
        %p1903 = pneg %p939
        %p1904 = pneg %p963
        %p1905 = pneg %p960
        %p1906 = pneg %p984
        %p1907 = pneg %p981
        %p1908 = pneg %p1005
        %p1909 = pneg %p1002
        %p1910 = pneg %p1026
        %p1911 = pneg %p1023
        %p1912 = pneg %p1047
        %p1913 = pneg %p1044
        %p1914 = pneg %p1068
        %p1915 = pneg %p1065
        %p1916 = pneg %p1089
        %p1917 = pneg %p1086
        %p1918 = pneg %p1110
        %p1919 = pneg %p1107
        %p1920 = pneg %p1131
        %p1921 = pneg %p1128
        %p1922 = pneg %p1152
        %p1923 = pneg %p1149
        %p1924 = pneg %p1173
        %p1925 = pneg %p1170
        %p1926 = pneg %p1194
        %p1927 = pneg %p1191
        %p1928 = pneg %p1215
        %p1929 = pneg %p1212
        %p1930 = pneg %p1236
        %p1931 = pneg %p1233
        %p1932 = pneg %p1262
        %p1933 = pneg %p1259
        %s1934 = sand.u32 %s1249, 1
        %s1935 = scalar_lea.sflag [#allocation4], %s1934
        %s1936 = sand.u32 %s1249, 1
        %s1937 = smul.addr %s1936, 32
        %s1938 = scalar_lea.vmem [#allocation46], %s1937
        %p1939 = scmp.lt.s32.totalorder %s134, 1
        %s1940 = scalar_select %p1939, %s134, 1
        %s1941 = smul.addr %s1940, 4
        %s1942 = scalar_lea.vmem %s1, %s1941
        %p1943 = scmp.lt.s32.totalorder %s134, 1
        %s1944 = scalar_select %p1943, %s134, 1
        %s1945 = smul.addr %s1944, 8
        %s1946 = scalar_lea.vmem %s3, %s1945
        %p1947 = scmp.lt.s32.totalorder %s134, 1
        %s1948 = scalar_select %p1947, %s134, 1
        %s1949 = smul.addr %s1948, 2
        %s1950 = smul.addr %s1949, 8
        %s1951 = scalar_lea.vmem %s5, %s1950
        %v1953 = vld [vmem:[%s1951] sm:$0xff]
        %v1954 = vld [vmem:[%s1951 + $0x8] sm:$0xff]
        %v1955 = vld [vmem:[%s1942] sm:$0xf]
        %v1956 = vpack.c.bf16 %v1955, %v1955
        %v1957 = vld [vmem:[%s33] sm:$0xf]
        %v1958 = vld [vmem:[%s33 + $0x4] sm:$0xf]
        %v1959 = vld [vmem:[%s33 + $0x8] sm:$0xf]
        %v1960 = vld [vmem:[%s33 + $0xc] sm:$0xf]
        %v1961 = vld [vmem:[%s33 + $0x10] sm:$0xf]
        %v1962 = vld [vmem:[%s33 + $0x14] sm:$0xf]
        %v1963 = vld [vmem:[%s33 + $0x18] sm:$0xf]
        %v1964 = vld [vmem:[%s33 + $0x1c] sm:$0xf]
        %v1973 = vunpack.c.l.b16 %v1957
        %v1974 = vunpack.c.l.b16 %v1958
        %v1975 = vunpack.c.l.b16 %v1959
        %v1976 = vunpack.c.l.b16 %v1960
        %v1977 = vunpack.c.l.b16 %v1961
        %v1978 = vunpack.c.l.b16 %v1962
        %v1979 = vunpack.c.l.b16 %v1963
        %v1980 = vunpack.c.l.b16 %v1964
        %v1981 = vpack.c.b16 %v1974, %v1973
        %v1982 = vpack.c.b16 %v1976, %v1975
        %v1983 = vpack.c.b16 %v1978, %v1977
        %v1984 = vpack.c.b16 %v1980, %v1979
        %vm1989 = vcmask 523264
        %v1991 = vsel %vm1989, %v1956, 0
        %1993 = vmatprep.subr.bf16.mxu0 0
        %1994 = vmatpush1.bf16.msra.mxu0 0
        %1995 = vmatprep.subr.bf16.mxu0 0
        %1996 = vmatpush1.bf16.msra.mxu0 0
        %1997 = vmatprep.subr.bf16.mxu0 0
        %1998 = vmatpush1.bf16.msra.mxu0 0
        %1999 = vmatprep.subr.bf16.mxu0 0
        %2000 = vmatpush1.bf16.msra.mxu0 0
        %2001 = vmatprep.subr.bf16.mxu0 0
        %2002 = vmatpush1.bf16.msra.mxu0 %v1984
        %2003 = vmatprep.subr.bf16.mxu0 0
        %2004 = vmatpush1.bf16.msra.mxu0 %v1983
        %2005 = vmatprep.subr.bf16.mxu0 0
        %2006 = vmatpush1.bf16.msra.mxu0 %v1982
        %2007 = vmatprep.subr.bf16.mxu0 0
        %2008 = vmatpush1.bf16.msra.mxu0 %v1981
        %2009 = vmatprep.subr.bf16.mxu0 0
        %2010 = vmatpush2.bf16.msra.mxu0 0
        %2011 = vmatprep.subr.bf16.mxu0 0
        %2012 = vmatpush2.bf16.msra.mxu0 0
        %2013 = vmatprep.subr.bf16.mxu0 0
        %2014 = vmatpush2.bf16.msra.mxu0 0
        %2015 = vmatprep.subr.bf16.mxu0 0
        %2016 = vmatpush2.bf16.msra.mxu0 0
        %2017 = vmatprep.subr.bf16.mxu0 0
        %2018 = vmatpush2.bf16.msra.mxu0 0
        %2019 = vmatprep.subr.bf16.mxu0 0
        %2020 = vmatpush2.bf16.msra.mxu0 0
        %2021 = vmatprep.subr.bf16.mxu0 0
        %2022 = vmatpush2.bf16.msra.mxu0 0
        %2023 = vmatprep.subr.bf16.mxu0 0
        %2024 = vmatpush2.bf16.msra.mxu0 0
        %2025 = vmatprep.mubr.bf16.mxu0 0
        %2026 = vmatmul.mubr.bf16.gmra.mxu0 %v1991
        %v2027 = vpop.f32.mrf.mxu0
        %v2028 = vadd.f32 0.0, %v2027
        %v2029 = vpop.f32.mrf.mxu0
        %v2030 = vpop.f32.mrf.mxu0
        %v2031 = vpop.f32.mrf.mxu0
        %2032 = vdwg.mxu0
        %v2033 = vld [vmem:[#allocation8] sm:$0xf]
        %s2034 = scalar_lea.vmem %s33, 32
        %v2035 = vld [vmem:[%s2034] sm:$0xf]
        %v2036 = vld [vmem:[%s2034 + $0x4] sm:$0xf]
        %v2037 = vld [vmem:[%s2034 + $0x8] sm:$0xf]
        %v2038 = vld [vmem:[%s2034 + $0xc] sm:$0xf]
        %v2039 = vld [vmem:[%s2034 + $0x10] sm:$0xf]
        %v2040 = vld [vmem:[%s2034 + $0x14] sm:$0xf]
        %v2041 = vld [vmem:[%s2034 + $0x18] sm:$0xf]
        %v2042 = vld [vmem:[%s2034 + $0x1c] sm:$0xf]
        %v2051 = vunpack.c.l.b16 %v2035
        %v2052 = vunpack.c.l.b16 %v2036
        %v2053 = vunpack.c.l.b16 %v2037
        %v2054 = vunpack.c.l.b16 %v2038
        %v2055 = vunpack.c.l.b16 %v2039
        %v2056 = vunpack.c.l.b16 %v2040
        %v2057 = vunpack.c.l.b16 %v2041
        %v2058 = vunpack.c.l.b16 %v2042
        %v2059 = vpack.c.b16 %v2052, %v2051
        %v2060 = vpack.c.b16 %v2054, %v2053
        %v2061 = vpack.c.b16 %v2056, %v2055
        %v2062 = vpack.c.b16 %v2058, %v2057
        %2067 = vmatprep.subr.bf16.mxu0 0
        %2068 = vmatpush1.bf16.msra.mxu0 0
        %2069 = vmatprep.subr.bf16.mxu0 0
        %2070 = vmatpush1.bf16.msra.mxu0 0
        %2071 = vmatprep.subr.bf16.mxu0 0
        %2072 = vmatpush1.bf16.msra.mxu0 0
        %2073 = vmatprep.subr.bf16.mxu0 0
        %2074 = vmatpush1.bf16.msra.mxu0 0
        %2075 = vmatprep.subr.bf16.mxu0 0
        %2076 = vmatpush1.bf16.msra.mxu0 %v2062
        %2077 = vmatprep.subr.bf16.mxu0 0
        %2078 = vmatpush1.bf16.msra.mxu0 %v2061
        %2079 = vmatprep.subr.bf16.mxu0 0
        %2080 = vmatpush1.bf16.msra.mxu0 %v2060
        %2081 = vmatprep.subr.bf16.mxu0 0
        %2082 = vmatpush1.bf16.msra.mxu0 %v2059
        %2083 = vmatprep.subr.bf16.mxu0 0
        %2084 = vmatpush2.bf16.msra.mxu0 0
        %2085 = vmatprep.subr.bf16.mxu0 0
        %2086 = vmatpush2.bf16.msra.mxu0 0
        %2087 = vmatprep.subr.bf16.mxu0 0
        %2088 = vmatpush2.bf16.msra.mxu0 0
        %2089 = vmatprep.subr.bf16.mxu0 0
        %2090 = vmatpush2.bf16.msra.mxu0 0
        %2091 = vmatprep.subr.bf16.mxu0 0
        %2092 = vmatpush2.bf16.msra.mxu0 0
        %2093 = vmatprep.subr.bf16.mxu0 0
        %2094 = vmatpush2.bf16.msra.mxu0 0
        %2095 = vmatprep.subr.bf16.mxu0 0
        %2096 = vmatpush2.bf16.msra.mxu0 0
        %2097 = vmatprep.subr.bf16.mxu0 0
        %2098 = vmatpush2.bf16.msra.mxu0 0
        %2099 = vmatprep.mubr.bf16.mxu0 0
        %2100 = vmatmul.mubr.bf16.gmra.mxu0 %v1991
        %v2101 = vpop.f32.mrf.mxu0
        %v2102 = vadd.f32 0.0, %v2101
        %v2103 = vpop.f32.mrf.mxu0
        %v2104 = vpop.f32.mrf.mxu0
        %v2105 = vpop.f32.mrf.mxu0
        %2106 = vdwg.mxu0
        %vm2107 = vcmask 31744
        %v2109 = vsel %vm2107, %v2033, 0
        %vm2111 = vcmask 1043456
        %v2113 = vsel %vm2111, %v2028, 0
        %2115 = vmatprep.subr.mxu0 0.0
        %2116 = vmatpush1.msra.mxu0 0.0
        %2117 = vmatprep.subr.mxu0 0.0
        %2118 = vmatpush1.msra.mxu0 0.0
        %2119 = vmatprep.subr.mxu0 0.0
        %2120 = vmatpush1.msra.mxu0 0.0
        %2121 = vmatprep.subr.mxu0 0.0
        %2122 = vmatpush1.msra.mxu0 0.0
        %2123 = vmatprep.subr.mxu0 0.0
        %2124 = vmatpush1.msra.mxu0 0.0
        %2125 = vmatprep.subr.mxu0 0.0
        %2126 = vmatpush1.msra.mxu0 0.0
        %2127 = vmatprep.subr.mxu0 0.0
        %2128 = vmatpush1.msra.mxu0 0.0
        %2129 = vmatprep.subr.mxu0 0.0
        %2130 = vmatpush1.msra.mxu0 0.0
        %2131 = vmatprep.subr.mxu0 0.0
        %2132 = vmatpush1.msra.mxu0 0.0
        %2133 = vmatprep.subr.mxu0 0.0
        %2134 = vmatpush1.msra.mxu0 0.0
        %2135 = vmatprep.subr.mxu0 0.0
        %2136 = vmatpush1.msra.mxu0 0.0
        %2137 = vmatprep.subr.mxu0 0.0
        %2138 = vmatpush1.msra.mxu0 0.0
        %2139 = vmatprep.subr.mxu0 0.0
        %2140 = vmatpush1.msra.mxu0 0.0
        %2141 = vmatprep.subr.mxu0 0.0
        %2142 = vmatpush1.msra.mxu0 0.0
        %2143 = vmatprep.subr.mxu0 0.0
        %2144 = vmatpush1.msra.mxu0 0.0
        %2145 = vmatprep.subr.mxu0 0.0
        %2146 = vmatpush1.msra.mxu0 %v2113
        %2147 = vmatprep.subr.mxu0 0.0
        %2148 = vmatpush2.msra.mxu0 0.0
        %2149 = vmatprep.subr.mxu0 0.0
        %2150 = vmatpush2.msra.mxu0 0.0
        %2151 = vmatprep.subr.mxu0 0.0
        %2152 = vmatpush2.msra.mxu0 0.0
        %2153 = vmatprep.subr.mxu0 0.0
        %2154 = vmatpush2.msra.mxu0 0.0
        %2155 = vmatprep.subr.mxu0 0.0
        %2156 = vmatpush2.msra.mxu0 0.0
        %2157 = vmatprep.subr.mxu0 0.0
        %2158 = vmatpush2.msra.mxu0 0.0
        %2159 = vmatprep.subr.mxu0 0.0
        %2160 = vmatpush2.msra.mxu0 0.0
        %2161 = vmatprep.subr.mxu0 0.0
        %2162 = vmatpush2.msra.mxu0 0.0
        %2163 = vmatprep.subr.mxu0 0.0
        %2164 = vmatpush2.msra.mxu0 0.0
        %2165 = vmatprep.subr.mxu0 0.0
        %2166 = vmatpush2.msra.mxu0 0.0
        %2167 = vmatprep.subr.mxu0 0.0
        %2168 = vmatpush2.msra.mxu0 0.0
        %2169 = vmatprep.subr.mxu0 0.0
        %2170 = vmatpush2.msra.mxu0 0.0
        %2171 = vmatprep.subr.mxu0 0.0
        %2172 = vmatpush2.msra.mxu0 0.0
        %2173 = vmatprep.subr.mxu0 0.0
        %2174 = vmatpush2.msra.mxu0 0.0
        %2175 = vmatprep.subr.mxu0 0.0
        %2176 = vmatpush2.msra.mxu0 0.0
        %2177 = vmatprep.subr.mxu0 0.0
        %2178 = vmatpush2.msra.mxu0 0.0
        %2179 = vmatprep.mubr.f32.mxu0 0.0
        %2180 = vmatmul.mubr.f32.gmra.mxu0 %v2109
        %v2181 = vpop.f32.mrf.mxu0
        %v2182 = vadd.f32 %v2102, %v2181
        %v2183 = vpop.f32.mrf.mxu0
        %2184 = vdwg.mxu0
        %s2185 = scalar_lea.vmem %s33, 64
        %v2186 = vld [vmem:[%s2185] sm:$0xf]
        %v2187 = vld [vmem:[%s2185 + $0x4] sm:$0xf]
        %v2188 = vld [vmem:[%s2185 + $0x8] sm:$0xf]
        %v2189 = vld [vmem:[%s2185 + $0xc] sm:$0xf]
        %v2190 = vld [vmem:[%s2185 + $0x10] sm:$0xf]
        %v2191 = vld [vmem:[%s2185 + $0x14] sm:$0xf]
        %v2192 = vld [vmem:[%s2185 + $0x18] sm:$0xf]
        %v2193 = vld [vmem:[%s2185 + $0x1c] sm:$0xf]
        %v2202 = vunpack.c.l.b16 %v2186
        %v2203 = vunpack.c.l.b16 %v2187
        %v2204 = vunpack.c.l.b16 %v2188
        %v2205 = vunpack.c.l.b16 %v2189
        %v2206 = vunpack.c.l.b16 %v2190
        %v2207 = vunpack.c.l.b16 %v2191
        %v2208 = vunpack.c.l.b16 %v2192
        %v2209 = vunpack.c.l.b16 %v2193
        %v2210 = vpack.c.b16 %v2203, %v2202
        %v2211 = vpack.c.b16 %v2205, %v2204
        %v2212 = vpack.c.b16 %v2207, %v2206
        %v2213 = vpack.c.b16 %v2209, %v2208
        %2218 = vmatprep.subr.bf16.mxu0 0
        %2219 = vmatpush1.bf16.msra.mxu0 0
        %2220 = vmatprep.subr.bf16.mxu0 0
        %2221 = vmatpush1.bf16.msra.mxu0 0
        %2222 = vmatprep.subr.bf16.mxu0 0
        %2223 = vmatpush1.bf16.msra.mxu0 0
        %2224 = vmatprep.subr.bf16.mxu0 0
        %2225 = vmatpush1.bf16.msra.mxu0 0
        %2226 = vmatprep.subr.bf16.mxu0 0
        %2227 = vmatpush1.bf16.msra.mxu0 %v2213
        %2228 = vmatprep.subr.bf16.mxu0 0
        %2229 = vmatpush1.bf16.msra.mxu0 %v2212
        %2230 = vmatprep.subr.bf16.mxu0 0
        %2231 = vmatpush1.bf16.msra.mxu0 %v2211
        %2232 = vmatprep.subr.bf16.mxu0 0
        %2233 = vmatpush1.bf16.msra.mxu0 %v2210
        %2234 = vmatprep.subr.bf16.mxu0 0
        %2235 = vmatpush2.bf16.msra.mxu0 0
        %2236 = vmatprep.subr.bf16.mxu0 0
        %2237 = vmatpush2.bf16.msra.mxu0 0
        %2238 = vmatprep.subr.bf16.mxu0 0
        %2239 = vmatpush2.bf16.msra.mxu0 0
        %2240 = vmatprep.subr.bf16.mxu0 0
        %2241 = vmatpush2.bf16.msra.mxu0 0
        %2242 = vmatprep.subr.bf16.mxu0 0
        %2243 = vmatpush2.bf16.msra.mxu0 0
        %2244 = vmatprep.subr.bf16.mxu0 0
        %2245 = vmatpush2.bf16.msra.mxu0 0
        %2246 = vmatprep.subr.bf16.mxu0 0
        %2247 = vmatpush2.bf16.msra.mxu0 0
        %2248 = vmatprep.subr.bf16.mxu0 0
        %2249 = vmatpush2.bf16.msra.mxu0 0
        %2250 = vmatprep.mubr.bf16.mxu0 0
        %2251 = vmatmul.mubr.bf16.gmra.mxu0 %v1991
        %v2252 = vpop.f32.mrf.mxu0
        %v2253 = vadd.f32 0.0, %v2252
        %v2254 = vpop.f32.mrf.mxu0
        %v2255 = vpop.f32.mrf.mxu0
        %v2256 = vpop.f32.mrf.mxu0
        %2257 = vdwg.mxu0
        %s2258 = scalar_lea.vmem [#allocation8], 4
        %v2259 = vld [vmem:[%s2258] sm:$0xf]
        %v2261 = vsel %vm2107, %v2259, 0
        %v2264 = vsel %vm2111, %v2253, 0
        %2266 = vmatprep.subr.mxu0 0.0
        %2267 = vmatpush1.msra.mxu0 0.0
        %2268 = vmatprep.subr.mxu0 0.0
        %2269 = vmatpush1.msra.mxu0 0.0
        %2270 = vmatprep.subr.mxu0 0.0
        %2271 = vmatpush1.msra.mxu0 0.0
        %2272 = vmatprep.subr.mxu0 0.0
        %2273 = vmatpush1.msra.mxu0 0.0
        %2274 = vmatprep.subr.mxu0 0.0
        %2275 = vmatpush1.msra.mxu0 0.0
        %2276 = vmatprep.subr.mxu0 0.0
        %2277 = vmatpush1.msra.mxu0 0.0
        %2278 = vmatprep.subr.mxu0 0.0
        %2279 = vmatpush1.msra.mxu0 0.0
        %2280 = vmatprep.subr.mxu0 0.0
        %2281 = vmatpush1.msra.mxu0 0.0
        %2282 = vmatprep.subr.mxu0 0.0
        %2283 = vmatpush1.msra.mxu0 0.0
        %2284 = vmatprep.subr.mxu0 0.0
        %2285 = vmatpush1.msra.mxu0 0.0
        %2286 = vmatprep.subr.mxu0 0.0
        %2287 = vmatpush1.msra.mxu0 0.0
        %2288 = vmatprep.subr.mxu0 0.0
        %2289 = vmatpush1.msra.mxu0 0.0
        %2290 = vmatprep.subr.mxu0 0.0
        %2291 = vmatpush1.msra.mxu0 0.0
        %2292 = vmatprep.subr.mxu0 0.0
        %2293 = vmatpush1.msra.mxu0 0.0
        %2294 = vmatprep.subr.mxu0 0.0
        %2295 = vmatpush1.msra.mxu0 0.0
        %2296 = vmatprep.subr.mxu0 0.0
        %2297 = vmatpush1.msra.mxu0 %v2264
        %2298 = vmatprep.subr.mxu0 0.0
        %2299 = vmatpush2.msra.mxu0 0.0
        %2300 = vmatprep.subr.mxu0 0.0
        %2301 = vmatpush2.msra.mxu0 0.0
        %2302 = vmatprep.subr.mxu0 0.0
        %2303 = vmatpush2.msra.mxu0 0.0
        %2304 = vmatprep.subr.mxu0 0.0
        %2305 = vmatpush2.msra.mxu0 0.0
        %2306 = vmatprep.subr.mxu0 0.0
        %2307 = vmatpush2.msra.mxu0 0.0
        %2308 = vmatprep.subr.mxu0 0.0
        %2309 = vmatpush2.msra.mxu0 0.0
        %2310 = vmatprep.subr.mxu0 0.0
        %2311 = vmatpush2.msra.mxu0 0.0
        %2312 = vmatprep.subr.mxu0 0.0
        %2313 = vmatpush2.msra.mxu0 0.0
        %2314 = vmatprep.subr.mxu0 0.0
        %2315 = vmatpush2.msra.mxu0 0.0
        %2316 = vmatprep.subr.mxu0 0.0
        %2317 = vmatpush2.msra.mxu0 0.0
        %2318 = vmatprep.subr.mxu0 0.0
        %2319 = vmatpush2.msra.mxu0 0.0
        %2320 = vmatprep.subr.mxu0 0.0
        %2321 = vmatpush2.msra.mxu0 0.0
        %2322 = vmatprep.subr.mxu0 0.0
        %2323 = vmatpush2.msra.mxu0 0.0
        %2324 = vmatprep.subr.mxu0 0.0
        %2325 = vmatpush2.msra.mxu0 0.0
        %2326 = vmatprep.subr.mxu0 0.0
        %2327 = vmatpush2.msra.mxu0 0.0
        %2328 = vmatprep.subr.mxu0 0.0
        %2329 = vmatpush2.msra.mxu0 0.0
        %2330 = vmatprep.mubr.f32.mxu0 0.0
        %2331 = vmatmul.mubr.f32.gmra.mxu0 %v2261
        %v2332 = vpop.f32.mrf.mxu0
        %v2333 = vadd.f32 0.0, %v2332
        %v2334 = vpop.f32.mrf.mxu0
        %2335 = vdwg.mxu0
        %v2336 = vadd.f32 %v2182, %v2333
        %v2337 = vld [vmem:[#allocation10] sm:$0x1]
        %v2339 = vlaneseq
        %v2340 = vshrl.u32 %v2339, 7
        %v2341 = vsub.s32 0, %v2340
        %v2342 = vrot.slane %v2337, %v2341
        %v2344 = vmul.f32 %v2336, %v2342
        %v2345 = vld [vmem:[#allocation11] sm:$0x1]
        %v2347 = vlaneseq
        %v2348 = vshrl.u32 %v2347, 7
        %v2349 = vsub.s32 0, %v2348
        %v2350 = vrot.slane %v2345, %v2349
        %v2352 = vadd.f32 %v2344, %v2350
        %v2353 = vmax.f32 %v2352, 0.0
        %v2354 = vpack.c.bf16 %v2353, %v2353
        %v2355 = vld [vmem:[%s41] sm:$0xf]
        %v2356 = vld [vmem:[%s41 + $0x4] sm:$0xf]
        %v2357 = vld [vmem:[%s41 + $0x8] sm:$0xf]
        %v2358 = vld [vmem:[%s41 + $0xc] sm:$0xf]
        %v2359 = vld [vmem:[%s41 + $0x10] sm:$0xf]
        %v2360 = vld [vmem:[%s41 + $0x14] sm:$0xf]
        %v2361 = vld [vmem:[%s41 + $0x18] sm:$0xf]
        %v2362 = vld [vmem:[%s41 + $0x1c] sm:$0xf]
        %v2371 = vunpack.c.l.b16 %v2355
        %v2372 = vunpack.c.l.b16 %v2356
        %v2373 = vunpack.c.l.b16 %v2357
        %v2374 = vunpack.c.l.b16 %v2358
        %v2375 = vunpack.c.l.b16 %v2359
        %v2376 = vunpack.c.l.b16 %v2360
        %v2377 = vunpack.c.l.b16 %v2361
        %v2378 = vunpack.c.l.b16 %v2362
        %v2379 = vpack.c.b16 %v2372, %v2371
        %v2380 = vpack.c.b16 %v2374, %v2373
        %v2381 = vpack.c.b16 %v2376, %v2375
        %v2382 = vpack.c.b16 %v2378, %v2377
        %v2388 = vsel %vm1989, %v2354, 0
        %2390 = vmatprep.subr.bf16.mxu0 0
        %2391 = vmatpush1.bf16.msra.mxu0 0
        %2392 = vmatprep.subr.bf16.mxu0 0
        %2393 = vmatpush1.bf16.msra.mxu0 0
        %2394 = vmatprep.subr.bf16.mxu0 0
        %2395 = vmatpush1.bf16.msra.mxu0 0
        %2396 = vmatprep.subr.bf16.mxu0 0
        %2397 = vmatpush1.bf16.msra.mxu0 0
        %2398 = vmatprep.subr.bf16.mxu0 0
        %2399 = vmatpush1.bf16.msra.mxu0 %v2382
        %2400 = vmatprep.subr.bf16.mxu0 0
        %2401 = vmatpush1.bf16.msra.mxu0 %v2381
        %2402 = vmatprep.subr.bf16.mxu0 0
        %2403 = vmatpush1.bf16.msra.mxu0 %v2380
        %2404 = vmatprep.subr.bf16.mxu0 0
        %2405 = vmatpush1.bf16.msra.mxu0 %v2379
        %2406 = vmatprep.subr.bf16.mxu0 0
        %2407 = vmatpush2.bf16.msra.mxu0 0
        %2408 = vmatprep.subr.bf16.mxu0 0
        %2409 = vmatpush2.bf16.msra.mxu0 0
        %2410 = vmatprep.subr.bf16.mxu0 0
        %2411 = vmatpush2.bf16.msra.mxu0 0
        %2412 = vmatprep.subr.bf16.mxu0 0
        %2413 = vmatpush2.bf16.msra.mxu0 0
        %2414 = vmatprep.subr.bf16.mxu0 0
        %2415 = vmatpush2.bf16.msra.mxu0 0
        %2416 = vmatprep.subr.bf16.mxu0 0
        %2417 = vmatpush2.bf16.msra.mxu0 0
        %2418 = vmatprep.subr.bf16.mxu0 0
        %2419 = vmatpush2.bf16.msra.mxu0 0
        %2420 = vmatprep.subr.bf16.mxu0 0
        %2421 = vmatpush2.bf16.msra.mxu0 0
        %2422 = vmatprep.mubr.bf16.mxu0 0
        %2423 = vmatmul.mubr.bf16.gmra.mxu0 %v2388
        %v2424 = vpop.f32.mrf.mxu0
        %v2425 = vadd.f32 0.0, %v2424
        %v2426 = vpop.f32.mrf.mxu0
        %v2427 = vpop.f32.mrf.mxu0
        %v2428 = vpop.f32.mrf.mxu0
        %2429 = vdwg.mxu0
        %v2430 = vld [vmem:[#allocation13] sm:$0xf]
        %s2431 = scalar_lea.vmem %s41, 32
        %v2432 = vld [vmem:[%s2431] sm:$0xf]
        %v2433 = vld [vmem:[%s2431 + $0x4] sm:$0xf]
        %v2434 = vld [vmem:[%s2431 + $0x8] sm:$0xf]
        %v2435 = vld [vmem:[%s2431 + $0xc] sm:$0xf]
        %v2436 = vld [vmem:[%s2431 + $0x10] sm:$0xf]
        %v2437 = vld [vmem:[%s2431 + $0x14] sm:$0xf]
        %v2438 = vld [vmem:[%s2431 + $0x18] sm:$0xf]
        %v2439 = vld [vmem:[%s2431 + $0x1c] sm:$0xf]
        %v2448 = vunpack.c.l.b16 %v2432
        %v2449 = vunpack.c.l.b16 %v2433
        %v2450 = vunpack.c.l.b16 %v2434
        %v2451 = vunpack.c.l.b16 %v2435
        %v2452 = vunpack.c.l.b16 %v2436
        %v2453 = vunpack.c.l.b16 %v2437
        %v2454 = vunpack.c.l.b16 %v2438
        %v2455 = vunpack.c.l.b16 %v2439
        %v2456 = vpack.c.b16 %v2449, %v2448
        %v2457 = vpack.c.b16 %v2451, %v2450
        %v2458 = vpack.c.b16 %v2453, %v2452
        %v2459 = vpack.c.b16 %v2455, %v2454
        %2464 = vmatprep.subr.bf16.mxu0 0
        %2465 = vmatpush1.bf16.msra.mxu0 0
        %2466 = vmatprep.subr.bf16.mxu0 0
        %2467 = vmatpush1.bf16.msra.mxu0 0
        %2468 = vmatprep.subr.bf16.mxu0 0
        %2469 = vmatpush1.bf16.msra.mxu0 0
        %2470 = vmatprep.subr.bf16.mxu0 0
        %2471 = vmatpush1.bf16.msra.mxu0 0
        %2472 = vmatprep.subr.bf16.mxu0 0
        %2473 = vmatpush1.bf16.msra.mxu0 %v2459
        %2474 = vmatprep.subr.bf16.mxu0 0
        %2475 = vmatpush1.bf16.msra.mxu0 %v2458
        %2476 = vmatprep.subr.bf16.mxu0 0
        %2477 = vmatpush1.bf16.msra.mxu0 %v2457
        %2478 = vmatprep.subr.bf16.mxu0 0
        %2479 = vmatpush1.bf16.msra.mxu0 %v2456
        %2480 = vmatprep.subr.bf16.mxu0 0
        %2481 = vmatpush2.bf16.msra.mxu0 0
        %2482 = vmatprep.subr.bf16.mxu0 0
        %2483 = vmatpush2.bf16.msra.mxu0 0
        %2484 = vmatprep.subr.bf16.mxu0 0
        %2485 = vmatpush2.bf16.msra.mxu0 0
        %2486 = vmatprep.subr.bf16.mxu0 0
        %2487 = vmatpush2.bf16.msra.mxu0 0
        %2488 = vmatprep.subr.bf16.mxu0 0
        %2489 = vmatpush2.bf16.msra.mxu0 0
        %2490 = vmatprep.subr.bf16.mxu0 0
        %2491 = vmatpush2.bf16.msra.mxu0 0
        %2492 = vmatprep.subr.bf16.mxu0 0
        %2493 = vmatpush2.bf16.msra.mxu0 0
        %2494 = vmatprep.subr.bf16.mxu0 0
        %2495 = vmatpush2.bf16.msra.mxu0 0
        %2496 = vmatprep.mubr.bf16.mxu0 0
        %2497 = vmatmul.mubr.bf16.gmra.mxu0 %v2388
        %v2498 = vpop.f32.mrf.mxu0
        %v2499 = vadd.f32 0.0, %v2498
        %v2500 = vpop.f32.mrf.mxu0
        %v2501 = vpop.f32.mrf.mxu0
        %v2502 = vpop.f32.mrf.mxu0
        %2503 = vdwg.mxu0
        %v2505 = vsel %vm2107, %v2430, 0
        %v2508 = vsel %vm2111, %v2425, 0
        %2510 = vmatprep.subr.mxu0 0.0
        %2511 = vmatpush1.msra.mxu0 0.0
        %2512 = vmatprep.subr.mxu0 0.0
        %2513 = vmatpush1.msra.mxu0 0.0
        %2514 = vmatprep.subr.mxu0 0.0
        %2515 = vmatpush1.msra.mxu0 0.0
        %2516 = vmatprep.subr.mxu0 0.0
        %2517 = vmatpush1.msra.mxu0 0.0
        %2518 = vmatprep.subr.mxu0 0.0
        %2519 = vmatpush1.msra.mxu0 0.0
        %2520 = vmatprep.subr.mxu0 0.0
        %2521 = vmatpush1.msra.mxu0 0.0
        %2522 = vmatprep.subr.mxu0 0.0
        %2523 = vmatpush1.msra.mxu0 0.0
        %2524 = vmatprep.subr.mxu0 0.0
        %2525 = vmatpush1.msra.mxu0 0.0
        %2526 = vmatprep.subr.mxu0 0.0
        %2527 = vmatpush1.msra.mxu0 0.0
        %2528 = vmatprep.subr.mxu0 0.0
        %2529 = vmatpush1.msra.mxu0 0.0
        %2530 = vmatprep.subr.mxu0 0.0
        %2531 = vmatpush1.msra.mxu0 0.0
        %2532 = vmatprep.subr.mxu0 0.0
        %2533 = vmatpush1.msra.mxu0 0.0
        %2534 = vmatprep.subr.mxu0 0.0
        %2535 = vmatpush1.msra.mxu0 0.0
        %2536 = vmatprep.subr.mxu0 0.0
        %2537 = vmatpush1.msra.mxu0 0.0
        %2538 = vmatprep.subr.mxu0 0.0
        %2539 = vmatpush1.msra.mxu0 0.0
        %2540 = vmatprep.subr.mxu0 0.0
        %2541 = vmatpush1.msra.mxu0 %v2508
        %2542 = vmatprep.subr.mxu0 0.0
        %2543 = vmatpush2.msra.mxu0 0.0
        %2544 = vmatprep.subr.mxu0 0.0
        %2545 = vmatpush2.msra.mxu0 0.0
        %2546 = vmatprep.subr.mxu0 0.0
        %2547 = vmatpush2.msra.mxu0 0.0
        %2548 = vmatprep.subr.mxu0 0.0
        %2549 = vmatpush2.msra.mxu0 0.0
        %2550 = vmatprep.subr.mxu0 0.0
        %2551 = vmatpush2.msra.mxu0 0.0
        %2552 = vmatprep.subr.mxu0 0.0
        %2553 = vmatpush2.msra.mxu0 0.0
        %2554 = vmatprep.subr.mxu0 0.0
        %2555 = vmatpush2.msra.mxu0 0.0
        %2556 = vmatprep.subr.mxu0 0.0
        %2557 = vmatpush2.msra.mxu0 0.0
        %2558 = vmatprep.subr.mxu0 0.0
        %2559 = vmatpush2.msra.mxu0 0.0
        %2560 = vmatprep.subr.mxu0 0.0
        %2561 = vmatpush2.msra.mxu0 0.0
        %2562 = vmatprep.subr.mxu0 0.0
        %2563 = vmatpush2.msra.mxu0 0.0
        %2564 = vmatprep.subr.mxu0 0.0
        %2565 = vmatpush2.msra.mxu0 0.0
        %2566 = vmatprep.subr.mxu0 0.0
        %2567 = vmatpush2.msra.mxu0 0.0
        %2568 = vmatprep.subr.mxu0 0.0
        %2569 = vmatpush2.msra.mxu0 0.0
        %2570 = vmatprep.subr.mxu0 0.0
        %2571 = vmatpush2.msra.mxu0 0.0
        %2572 = vmatprep.subr.mxu0 0.0
        %2573 = vmatpush2.msra.mxu0 0.0
        %2574 = vmatprep.mubr.f32.mxu0 0.0
        %2575 = vmatmul.mubr.f32.gmra.mxu0 %v2505
        %v2576 = vpop.f32.mrf.mxu0
        %v2577 = vadd.f32 %v2499, %v2576
        %v2578 = vpop.f32.mrf.mxu0
        %2579 = vdwg.mxu0
        %s2580 = scalar_lea.vmem %s41, 64
        %v2581 = vld [vmem:[%s2580] sm:$0xf]
        %v2582 = vld [vmem:[%s2580 + $0x4] sm:$0xf]
        %v2583 = vld [vmem:[%s2580 + $0x8] sm:$0xf]
        %v2584 = vld [vmem:[%s2580 + $0xc] sm:$0xf]
        %v2585 = vld [vmem:[%s2580 + $0x10] sm:$0xf]
        %v2586 = vld [vmem:[%s2580 + $0x14] sm:$0xf]
        %v2587 = vld [vmem:[%s2580 + $0x18] sm:$0xf]
        %v2588 = vld [vmem:[%s2580 + $0x1c] sm:$0xf]
        %v2597 = vunpack.c.l.b16 %v2581
        %v2598 = vunpack.c.l.b16 %v2582
        %v2599 = vunpack.c.l.b16 %v2583
        %v2600 = vunpack.c.l.b16 %v2584
        %v2601 = vunpack.c.l.b16 %v2585
        %v2602 = vunpack.c.l.b16 %v2586
        %v2603 = vunpack.c.l.b16 %v2587
        %v2604 = vunpack.c.l.b16 %v2588
        %v2605 = vpack.c.b16 %v2598, %v2597
        %v2606 = vpack.c.b16 %v2600, %v2599
        %v2607 = vpack.c.b16 %v2602, %v2601
        %v2608 = vpack.c.b16 %v2604, %v2603
        %2613 = vmatprep.subr.bf16.mxu0 0
        %2614 = vmatpush1.bf16.msra.mxu0 0
        %2615 = vmatprep.subr.bf16.mxu0 0
        %2616 = vmatpush1.bf16.msra.mxu0 0
        %2617 = vmatprep.subr.bf16.mxu0 0
        %2618 = vmatpush1.bf16.msra.mxu0 0
        %2619 = vmatprep.subr.bf16.mxu0 0
        %2620 = vmatpush1.bf16.msra.mxu0 0
        %2621 = vmatprep.subr.bf16.mxu0 0
        %2622 = vmatpush1.bf16.msra.mxu0 %v2608
        %2623 = vmatprep.subr.bf16.mxu0 0
        %2624 = vmatpush1.bf16.msra.mxu0 %v2607
        %2625 = vmatprep.subr.bf16.mxu0 0
        %2626 = vmatpush1.bf16.msra.mxu0 %v2606
        %2627 = vmatprep.subr.bf16.mxu0 0
        %2628 = vmatpush1.bf16.msra.mxu0 %v2605
        %2629 = vmatprep.subr.bf16.mxu0 0
        %2630 = vmatpush2.bf16.msra.mxu0 0
        %2631 = vmatprep.subr.bf16.mxu0 0
        %2632 = vmatpush2.bf16.msra.mxu0 0
        %2633 = vmatprep.subr.bf16.mxu0 0
        %2634 = vmatpush2.bf16.msra.mxu0 0
        %2635 = vmatprep.subr.bf16.mxu0 0
        %2636 = vmatpush2.bf16.msra.mxu0 0
        %2637 = vmatprep.subr.bf16.mxu0 0
        %2638 = vmatpush2.bf16.msra.mxu0 0
        %2639 = vmatprep.subr.bf16.mxu0 0
        %2640 = vmatpush2.bf16.msra.mxu0 0
        %2641 = vmatprep.subr.bf16.mxu0 0
        %2642 = vmatpush2.bf16.msra.mxu0 0
        %2643 = vmatprep.subr.bf16.mxu0 0
        %2644 = vmatpush2.bf16.msra.mxu0 0
        %2645 = vmatprep.mubr.bf16.mxu0 0
        %2646 = vmatmul.mubr.bf16.gmra.mxu0 %v2388
        %v2647 = vpop.f32.mrf.mxu0
        %v2648 = vadd.f32 0.0, %v2647
        %v2649 = vpop.f32.mrf.mxu0
        %v2650 = vpop.f32.mrf.mxu0
        %v2651 = vpop.f32.mrf.mxu0
        %2652 = vdwg.mxu0
        %s2653 = scalar_lea.vmem [#allocation13], 4
        %v2654 = vld [vmem:[%s2653] sm:$0xf]
        %v2656 = vsel %vm2107, %v2654, 0
        %v2659 = vsel %vm2111, %v2648, 0
        %2661 = vmatprep.subr.mxu0 0.0
        %2662 = vmatpush1.msra.mxu0 0.0
        %2663 = vmatprep.subr.mxu0 0.0
        %2664 = vmatpush1.msra.mxu0 0.0
        %2665 = vmatprep.subr.mxu0 0.0
        %2666 = vmatpush1.msra.mxu0 0.0
        %2667 = vmatprep.subr.mxu0 0.0
        %2668 = vmatpush1.msra.mxu0 0.0
        %2669 = vmatprep.subr.mxu0 0.0
        %2670 = vmatpush1.msra.mxu0 0.0
        %2671 = vmatprep.subr.mxu0 0.0
        %2672 = vmatpush1.msra.mxu0 0.0
        %2673 = vmatprep.subr.mxu0 0.0
        %2674 = vmatpush1.msra.mxu0 0.0
        %2675 = vmatprep.subr.mxu0 0.0
        %2676 = vmatpush1.msra.mxu0 0.0
        %2677 = vmatprep.subr.mxu0 0.0
        %2678 = vmatpush1.msra.mxu0 0.0
        %2679 = vmatprep.subr.mxu0 0.0
        %2680 = vmatpush1.msra.mxu0 0.0
        %2681 = vmatprep.subr.mxu0 0.0
        %2682 = vmatpush1.msra.mxu0 0.0
        %2683 = vmatprep.subr.mxu0 0.0
        %2684 = vmatpush1.msra.mxu0 0.0
        %2685 = vmatprep.subr.mxu0 0.0
        %2686 = vmatpush1.msra.mxu0 0.0
        %2687 = vmatprep.subr.mxu0 0.0
        %2688 = vmatpush1.msra.mxu0 0.0
        %2689 = vmatprep.subr.mxu0 0.0
        %2690 = vmatpush1.msra.mxu0 0.0
        %2691 = vmatprep.subr.mxu0 0.0
        %2692 = vmatpush1.msra.mxu0 %v2659
        %2693 = vmatprep.subr.mxu0 0.0
        %2694 = vmatpush2.msra.mxu0 0.0
        %2695 = vmatprep.subr.mxu0 0.0
        %2696 = vmatpush2.msra.mxu0 0.0
        %2697 = vmatprep.subr.mxu0 0.0
        %2698 = vmatpush2.msra.mxu0 0.0
        %2699 = vmatprep.subr.mxu0 0.0
        %2700 = vmatpush2.msra.mxu0 0.0
        %2701 = vmatprep.subr.mxu0 0.0
        %2702 = vmatpush2.msra.mxu0 0.0
        %2703 = vmatprep.subr.mxu0 0.0
        %2704 = vmatpush2.msra.mxu0 0.0
        %2705 = vmatprep.subr.mxu0 0.0
        %2706 = vmatpush2.msra.mxu0 0.0
        %2707 = vmatprep.subr.mxu0 0.0
        %2708 = vmatpush2.msra.mxu0 0.0
        %2709 = vmatprep.subr.mxu0 0.0
        %2710 = vmatpush2.msra.mxu0 0.0
        %2711 = vmatprep.subr.mxu0 0.0
        %2712 = vmatpush2.msra.mxu0 0.0
        %2713 = vmatprep.subr.mxu0 0.0
        %2714 = vmatpush2.msra.mxu0 0.0
        %2715 = vmatprep.subr.mxu0 0.0
        %2716 = vmatpush2.msra.mxu0 0.0
        %2717 = vmatprep.subr.mxu0 0.0
        %2718 = vmatpush2.msra.mxu0 0.0
        %2719 = vmatprep.subr.mxu0 0.0
        %2720 = vmatpush2.msra.mxu0 0.0
        %2721 = vmatprep.subr.mxu0 0.0
        %2722 = vmatpush2.msra.mxu0 0.0
        %2723 = vmatprep.subr.mxu0 0.0
        %2724 = vmatpush2.msra.mxu0 0.0
        %2725 = vmatprep.mubr.f32.mxu0 0.0
        %2726 = vmatmul.mubr.f32.gmra.mxu0 %v2656
        %v2727 = vpop.f32.mrf.mxu0
        %v2728 = vadd.f32 0.0, %v2727
        %v2729 = vpop.f32.mrf.mxu0
        %2730 = vdwg.mxu0
        %v2731 = vadd.f32 %v2577, %v2728
        %v2732 = vld [vmem:[#allocation14] sm:$0x1]
        %v2734 = vlaneseq
        %v2735 = vshrl.u32 %v2734, 7
        %v2736 = vsub.s32 0, %v2735
        %v2737 = vrot.slane %v2732, %v2736
        %v2739 = vmul.f32 %v2731, %v2737
        %v2740 = vld [vmem:[#allocation16] sm:$0x1]
        %v2742 = vlaneseq
        %v2743 = vshrl.u32 %v2742, 7
        %v2744 = vsub.s32 0, %v2743
        %v2745 = vrot.slane %v2740, %v2744
        %v2747 = vadd.f32 %v2739, %v2745
        %v2748 = vmax.f32 %v2747, 0.0
        %v2749 = vld [vmem:[#allocation25] sm:$0xff]
        %v2750 = vld [vmem:[#allocation25 + $0x8] sm:$0xff]
        %v2751 = vld [vmem:[#allocation25 + $0x10] sm:$0xff]
        %v2752 = vld [vmem:[#allocation25 + $0x18] sm:$0xff]
        %v2753 = vld [vmem:[#allocation25 + $0x20] sm:$0xff]
        %v2754 = vld [vmem:[#allocation25 + $0x28] sm:$0xff]
        %v2755 = vld [vmem:[#allocation25 + $0x30] sm:$0xff]
        %v2756 = vld [vmem:[#allocation25 + $0x38] sm:$0xff]
        %v2758 = vsel %vm1989, %v2748, 0
        %2760 = vmatprep.subr.mxu0 0.0
        %2761 = vmatpush1.msra.mxu0 0.0
        %2762 = vmatprep.subr.mxu0 0.0
        %2763 = vmatpush1.msra.mxu0 0.0
        %2764 = vmatprep.subr.mxu0 0.0
        %2765 = vmatpush1.msra.mxu0 0.0
        %2766 = vmatprep.subr.mxu0 0.0
        %2767 = vmatpush1.msra.mxu0 0.0
        %2768 = vmatprep.subr.mxu0 0.0
        %2769 = vmatpush1.msra.mxu0 0.0
        %2770 = vmatprep.subr.mxu0 0.0
        %2771 = vmatpush1.msra.mxu0 0.0
        %2772 = vmatprep.subr.mxu0 0.0
        %2773 = vmatpush1.msra.mxu0 0.0
        %2774 = vmatprep.subr.mxu0 0.0
        %2775 = vmatpush1.msra.mxu0 0.0
        %2776 = vmatprep.subr.mxu0 0.0
        %2777 = vmatpush1.msra.mxu0 %v2756
        %2778 = vmatprep.subr.mxu0 0.0
        %2779 = vmatpush1.msra.mxu0 %v2755
        %2780 = vmatprep.subr.mxu0 0.0
        %2781 = vmatpush1.msra.mxu0 %v2754
        %2782 = vmatprep.subr.mxu0 0.0
        %2783 = vmatpush1.msra.mxu0 %v2753
        %2784 = vmatprep.subr.mxu0 0.0
        %2785 = vmatpush1.msra.mxu0 %v2752
        %2786 = vmatprep.subr.mxu0 0.0
        %2787 = vmatpush1.msra.mxu0 %v2751
        %2788 = vmatprep.subr.mxu0 0.0
        %2789 = vmatpush1.msra.mxu0 %v2750
        %2790 = vmatprep.subr.mxu0 0.0
        %2791 = vmatpush1.msra.mxu0 %v2749
        %2792 = vmatprep.subr.mxu0 0.0
        %2793 = vmatpush2.msra.mxu0 0.0
        %2794 = vmatprep.subr.mxu0 0.0
        %2795 = vmatpush2.msra.mxu0 0.0
        %2796 = vmatprep.subr.mxu0 0.0
        %2797 = vmatpush2.msra.mxu0 0.0
        %2798 = vmatprep.subr.mxu0 0.0
        %2799 = vmatpush2.msra.mxu0 0.0
        %2800 = vmatprep.subr.mxu0 0.0
        %2801 = vmatpush2.msra.mxu0 0.0
        %2802 = vmatprep.subr.mxu0 0.0
        %2803 = vmatpush2.msra.mxu0 0.0
        %2804 = vmatprep.subr.mxu0 0.0
        %2805 = vmatpush2.msra.mxu0 0.0
        %2806 = vmatprep.subr.mxu0 0.0
        %2807 = vmatpush2.msra.mxu0 0.0
        %2808 = vmatprep.subr.mxu0 0.0
        %2809 = vmatpush2.msra.mxu0 0.0
        %2810 = vmatprep.subr.mxu0 0.0
        %2811 = vmatpush2.msra.mxu0 0.0
        %2812 = vmatprep.subr.mxu0 0.0
        %2813 = vmatpush2.msra.mxu0 0.0
        %2814 = vmatprep.subr.mxu0 0.0
        %2815 = vmatpush2.msra.mxu0 0.0
        %2816 = vmatprep.subr.mxu0 0.0
        %2817 = vmatpush2.msra.mxu0 0.0
        %2818 = vmatprep.subr.mxu0 0.0
        %2819 = vmatpush2.msra.mxu0 0.0
        %2820 = vmatprep.subr.mxu0 0.0
        %2821 = vmatpush2.msra.mxu0 0.0
        %2822 = vmatprep.subr.mxu0 0.0
        %2823 = vmatpush2.msra.mxu0 0.0
        %2824 = vmatprep.mubr.f32.mxu0 0.0
        %2825 = vmatmul.mubr.f32.gmra.mxu0 %v2758
        %v2826 = vpop.f32.mrf.mxu0
        %v2827 = vadd.f32 0.0, %v2826
        %v2828 = vpop.f32.mrf.mxu0
        %2829 = vdwg.mxu0
        %v2830 = vld [vmem:[%s65] sm:$0xff]
        %v2832 = vsel %vm2107, %v2830, 0
        %v2835 = vsel %vm2111, %v2827, 0
        %2837 = vmatprep.subr.mxu0 0.0
        %2838 = vmatpush1.msra.mxu0 0.0
        %2839 = vmatprep.subr.mxu0 0.0
        %2840 = vmatpush1.msra.mxu0 0.0
        %2841 = vmatprep.subr.mxu0 0.0
        %2842 = vmatpush1.msra.mxu0 0.0
        %2843 = vmatprep.subr.mxu0 0.0
        %2844 = vmatpush1.msra.mxu0 0.0
        %2845 = vmatprep.subr.mxu0 0.0
        %2846 = vmatpush1.msra.mxu0 0.0
        %2847 = vmatprep.subr.mxu0 0.0
        %2848 = vmatpush1.msra.mxu0 0.0
        %2849 = vmatprep.subr.mxu0 0.0
        %2850 = vmatpush1.msra.mxu0 0.0
        %2851 = vmatprep.subr.mxu0 0.0
        %2852 = vmatpush1.msra.mxu0 0.0
        %2853 = vmatprep.subr.mxu0 0.0
        %2854 = vmatpush1.msra.mxu0 0.0
        %2855 = vmatprep.subr.mxu0 0.0
        %2856 = vmatpush1.msra.mxu0 0.0
        %2857 = vmatprep.subr.mxu0 0.0
        %2858 = vmatpush1.msra.mxu0 0.0
        %2859 = vmatprep.subr.mxu0 0.0
        %2860 = vmatpush1.msra.mxu0 0.0
        %2861 = vmatprep.subr.mxu0 0.0
        %2862 = vmatpush1.msra.mxu0 0.0
        %2863 = vmatprep.subr.mxu0 0.0
        %2864 = vmatpush1.msra.mxu0 0.0
        %2865 = vmatprep.subr.mxu0 0.0
        %2866 = vmatpush1.msra.mxu0 0.0
        %2867 = vmatprep.subr.mxu0 0.0
        %2868 = vmatpush1.msra.mxu0 %v2835
        %2869 = vmatprep.subr.mxu0 0.0
        %2870 = vmatpush2.msra.mxu0 0.0
        %2871 = vmatprep.subr.mxu0 0.0
        %2872 = vmatpush2.msra.mxu0 0.0
        %2873 = vmatprep.subr.mxu0 0.0
        %2874 = vmatpush2.msra.mxu0 0.0
        %2875 = vmatprep.subr.mxu0 0.0
        %2876 = vmatpush2.msra.mxu0 0.0
        %2877 = vmatprep.subr.mxu0 0.0
        %2878 = vmatpush2.msra.mxu0 0.0
        %2879 = vmatprep.subr.mxu0 0.0
        %2880 = vmatpush2.msra.mxu0 0.0
        %2881 = vmatprep.subr.mxu0 0.0
        %2882 = vmatpush2.msra.mxu0 0.0
        %2883 = vmatprep.subr.mxu0 0.0
        %2884 = vmatpush2.msra.mxu0 0.0
        %2885 = vmatprep.subr.mxu0 0.0
        %2886 = vmatpush2.msra.mxu0 0.0
        %2887 = vmatprep.subr.mxu0 0.0
        %2888 = vmatpush2.msra.mxu0 0.0
        %2889 = vmatprep.subr.mxu0 0.0
        %2890 = vmatpush2.msra.mxu0 0.0
        %2891 = vmatprep.subr.mxu0 0.0
        %2892 = vmatpush2.msra.mxu0 0.0
        %2893 = vmatprep.subr.mxu0 0.0
        %2894 = vmatpush2.msra.mxu0 0.0
        %2895 = vmatprep.subr.mxu0 0.0
        %2896 = vmatpush2.msra.mxu0 0.0
        %2897 = vmatprep.subr.mxu0 0.0
        %2898 = vmatpush2.msra.mxu0 0.0
        %2899 = vmatprep.subr.mxu0 0.0
        %2900 = vmatpush2.msra.mxu0 0.0
        %2901 = vmatprep.mubr.f32.mxu0 0.0
        %2902 = vmatmul.mubr.f32.gmra.mxu0 %v2832
        %v2903 = vpop.f32.mrf.mxu0
        %v2904 = vadd.f32 0.0, %v2903
        %v2905 = vpop.f32.mrf.mxu0
        %2906 = vdwg.mxu0
        %v2907 = vpack.c.bf16 %v2904, %v2904
        %v2908 = vld [vmem:[%s49] sm:$0xf]
        %v2909 = vld [vmem:[%s49 + $0x4] sm:$0xf]
        %v2910 = vld [vmem:[%s49 + $0x8] sm:$0xf]
        %v2911 = vld [vmem:[%s49 + $0xc] sm:$0xf]
        %v2912 = vld [vmem:[%s49 + $0x10] sm:$0xf]
        %v2913 = vld [vmem:[%s49 + $0x14] sm:$0xf]
        %v2914 = vld [vmem:[%s49 + $0x18] sm:$0xf]
        %v2915 = vld [vmem:[%s49 + $0x1c] sm:$0xf]
        %v2916 = vld [vmem:[%s49 + $0x20] sm:$0xf]
        %v2917 = vld [vmem:[%s49 + $0x24] sm:$0xf]
        %v2918 = vld [vmem:[%s49 + $0x28] sm:$0xf]
        %v2919 = vld [vmem:[%s49 + $0x2c] sm:$0xf]
        %v2920 = vld [vmem:[%s49 + $0x30] sm:$0xf]
        %v2921 = vld [vmem:[%s49 + $0x34] sm:$0xf]
        %v2922 = vld [vmem:[%s49 + $0x38] sm:$0xf]
        %v2923 = vld [vmem:[%s49 + $0x3c] sm:$0xf]
        %v2940 = vunpack.c.l.b16 %v2908
        %v2941 = vunpack.c.l.b16 %v2909
        %v2942 = vunpack.c.l.b16 %v2910
        %v2943 = vunpack.c.l.b16 %v2911
        %v2944 = vunpack.c.l.b16 %v2912
        %v2945 = vunpack.c.l.b16 %v2913
        %v2946 = vunpack.c.l.b16 %v2914
        %v2947 = vunpack.c.l.b16 %v2915
        %v2948 = vunpack.c.l.b16 %v2916
        %v2949 = vunpack.c.l.b16 %v2917
        %v2950 = vunpack.c.l.b16 %v2918
        %v2951 = vunpack.c.l.b16 %v2919
        %v2952 = vunpack.c.l.b16 %v2920
        %v2953 = vunpack.c.l.b16 %v2921
        %v2954 = vunpack.c.l.b16 %v2922
        %v2955 = vunpack.c.l.b16 %v2923
        %v2956 = vpack.c.b16 %v2941, %v2940
        %v2957 = vpack.c.b16 %v2943, %v2942
        %v2958 = vpack.c.b16 %v2945, %v2944
        %v2959 = vpack.c.b16 %v2947, %v2946
        %v2960 = vpack.c.b16 %v2949, %v2948
        %v2961 = vpack.c.b16 %v2951, %v2950
        %v2962 = vpack.c.b16 %v2953, %v2952
        %v2963 = vpack.c.b16 %v2955, %v2954
        %2972 = vmatprep.subr.bf16.mxu0 0
        %2973 = vmatpush1.bf16.msra.mxu0 %v2963
        %2974 = vmatprep.subr.bf16.mxu0 0
        %2975 = vmatpush1.bf16.msra.mxu0 %v2962
        %2976 = vmatprep.subr.bf16.mxu0 0
        %2977 = vmatpush1.bf16.msra.mxu0 %v2961
        %2978 = vmatprep.subr.bf16.mxu0 0
        %2979 = vmatpush1.bf16.msra.mxu0 %v2960
        %2980 = vmatprep.subr.bf16.mxu0 0
        %2981 = vmatpush1.bf16.msra.mxu0 %v2959
        %2982 = vmatprep.subr.bf16.mxu0 0
        %2983 = vmatpush1.bf16.msra.mxu0 %v2958
        %2984 = vmatprep.subr.bf16.mxu0 0
        %2985 = vmatpush1.bf16.msra.mxu0 %v2957
        %2986 = vmatprep.subr.bf16.mxu0 0
        %2987 = vmatpush1.bf16.msra.mxu0 %v2956
        %2988 = vmatprep.subr.bf16.mxu0 0
        %2989 = vmatpush2.bf16.msra.mxu0 0
        %2990 = vmatprep.subr.bf16.mxu0 0
        %2991 = vmatpush2.bf16.msra.mxu0 0
        %2992 = vmatprep.subr.bf16.mxu0 0
        %2993 = vmatpush2.bf16.msra.mxu0 0
        %2994 = vmatprep.subr.bf16.mxu0 0
        %2995 = vmatpush2.bf16.msra.mxu0 0
        %2996 = vmatprep.subr.bf16.mxu0 0
        %2997 = vmatpush2.bf16.msra.mxu0 0
        %2998 = vmatprep.subr.bf16.mxu0 0
        %2999 = vmatpush2.bf16.msra.mxu0 0
        %3000 = vmatprep.subr.bf16.mxu0 0
        %3001 = vmatpush2.bf16.msra.mxu0 0
        %3002 = vmatprep.subr.bf16.mxu0 0
        %3003 = vmatpush2.bf16.msra.mxu0 0
        %3004 = vmatprep.mubr.bf16.mxu0 0
        %3005 = vmatmul.mubr.bf16.gmra.mxu0 %v2907
        %v3006 = vpop.f32.mrf.mxu0
        %v3007 = vadd.f32 0.0, %v3006
        %v3008 = vpop.f32.mrf.mxu0
        %v3009 = vpop.f32.mrf.mxu0
        %v3010 = vpop.f32.mrf.mxu0
        %3011 = vdwg.mxu0
        %v3012 = vld [vmem:[%s51] sm:$0xff]
        %s3013 = scalar_lea.vmem %s49, 64
        %v3014 = vld [vmem:[%s3013] sm:$0xf]
        %v3015 = vld [vmem:[%s3013 + $0x4] sm:$0xf]
        %v3016 = vld [vmem:[%s3013 + $0x8] sm:$0xf]
        %v3017 = vld [vmem:[%s3013 + $0xc] sm:$0xf]
        %v3018 = vld [vmem:[%s3013 + $0x10] sm:$0xf]
        %v3019 = vld [vmem:[%s3013 + $0x14] sm:$0xf]
        %v3020 = vld [vmem:[%s3013 + $0x18] sm:$0xf]
        %v3021 = vld [vmem:[%s3013 + $0x1c] sm:$0xf]
        %v3022 = vld [vmem:[%s3013 + $0x20] sm:$0xf]
        %v3023 = vld [vmem:[%s3013 + $0x24] sm:$0xf]
        %v3024 = vld [vmem:[%s3013 + $0x28] sm:$0xf]
        %v3025 = vld [vmem:[%s3013 + $0x2c] sm:$0xf]
        %v3026 = vld [vmem:[%s3013 + $0x30] sm:$0xf]
        %v3027 = vld [vmem:[%s3013 + $0x34] sm:$0xf]
        %v3028 = vld [vmem:[%s3013 + $0x38] sm:$0xf]
        %v3029 = vld [vmem:[%s3013 + $0x3c] sm:$0xf]
        %v3046 = vunpack.c.l.b16 %v3014
        %v3047 = vunpack.c.l.b16 %v3015
        %v3048 = vunpack.c.l.b16 %v3016
        %v3049 = vunpack.c.l.b16 %v3017
        %v3050 = vunpack.c.l.b16 %v3018
        %v3051 = vunpack.c.l.b16 %v3019
        %v3052 = vunpack.c.l.b16 %v3020
        %v3053 = vunpack.c.l.b16 %v3021
        %v3054 = vunpack.c.l.b16 %v3022
        %v3055 = vunpack.c.l.b16 %v3023
        %v3056 = vunpack.c.l.b16 %v3024
        %v3057 = vunpack.c.l.b16 %v3025
        %v3058 = vunpack.c.l.b16 %v3026
        %v3059 = vunpack.c.l.b16 %v3027
        %v3060 = vunpack.c.l.b16 %v3028
        %v3061 = vunpack.c.l.b16 %v3029
        %v3062 = vpack.c.b16 %v3047, %v3046
        %v3063 = vpack.c.b16 %v3049, %v3048
        %v3064 = vpack.c.b16 %v3051, %v3050
        %v3065 = vpack.c.b16 %v3053, %v3052
        %v3066 = vpack.c.b16 %v3055, %v3054
        %v3067 = vpack.c.b16 %v3057, %v3056
        %v3068 = vpack.c.b16 %v3059, %v3058
        %v3069 = vpack.c.b16 %v3061, %v3060
        %3078 = vmatprep.subr.bf16.mxu0 0
        %3079 = vmatpush1.bf16.msra.mxu0 %v3069
        %3080 = vmatprep.subr.bf16.mxu0 0
        %3081 = vmatpush1.bf16.msra.mxu0 %v3068
        %3082 = vmatprep.subr.bf16.mxu0 0
        %3083 = vmatpush1.bf16.msra.mxu0 %v3067
        %3084 = vmatprep.subr.bf16.mxu0 0
        %3085 = vmatpush1.bf16.msra.mxu0 %v3066
        %3086 = vmatprep.subr.bf16.mxu0 0
        %3087 = vmatpush1.bf16.msra.mxu0 %v3065
        %3088 = vmatprep.subr.bf16.mxu0 0
        %3089 = vmatpush1.bf16.msra.mxu0 %v3064
        %3090 = vmatprep.subr.bf16.mxu0 0
        %3091 = vmatpush1.bf16.msra.mxu0 %v3063
        %3092 = vmatprep.subr.bf16.mxu0 0
        %3093 = vmatpush1.bf16.msra.mxu0 %v3062
        %3094 = vmatprep.subr.bf16.mxu0 0
        %3095 = vmatpush2.bf16.msra.mxu0 0
        %3096 = vmatprep.subr.bf16.mxu0 0
        %3097 = vmatpush2.bf16.msra.mxu0 0
        %3098 = vmatprep.subr.bf16.mxu0 0
        %3099 = vmatpush2.bf16.msra.mxu0 0
        %3100 = vmatprep.subr.bf16.mxu0 0
        %3101 = vmatpush2.bf16.msra.mxu0 0
        %3102 = vmatprep.subr.bf16.mxu0 0
        %3103 = vmatpush2.bf16.msra.mxu0 0
        %3104 = vmatprep.subr.bf16.mxu0 0
        %3105 = vmatpush2.bf16.msra.mxu0 0
        %3106 = vmatprep.subr.bf16.mxu0 0
        %3107 = vmatpush2.bf16.msra.mxu0 0
        %3108 = vmatprep.subr.bf16.mxu0 0
        %3109 = vmatpush2.bf16.msra.mxu0 0
        %3110 = vmatprep.mubr.bf16.mxu0 0
        %3111 = vmatmul.mubr.bf16.gmra.mxu0 %v2907
        %v3112 = vpop.f32.mrf.mxu0
        %v3113 = vadd.f32 0.0, %v3112
        %v3114 = vpop.f32.mrf.mxu0
        %v3115 = vpop.f32.mrf.mxu0
        %v3116 = vpop.f32.mrf.mxu0
        %3117 = vdwg.mxu0
        %vm3118 = vcmask 64512
        %v3120 = vsel %vm3118, %v3012, 0
        %3122 = vmatprep.subr.mxu0 0.0
        %3123 = vmatpush1.msra.mxu0 0.0
        %3124 = vmatprep.subr.mxu0 0.0
        %3125 = vmatpush1.msra.mxu0 0.0
        %3126 = vmatprep.subr.mxu0 0.0
        %3127 = vmatpush1.msra.mxu0 0.0
        %3128 = vmatprep.subr.mxu0 0.0
        %3129 = vmatpush1.msra.mxu0 0.0
        %3130 = vmatprep.subr.mxu0 0.0
        %3131 = vmatpush1.msra.mxu0 0.0
        %3132 = vmatprep.subr.mxu0 0.0
        %3133 = vmatpush1.msra.mxu0 0.0
        %3134 = vmatprep.subr.mxu0 0.0
        %3135 = vmatpush1.msra.mxu0 0.0
        %3136 = vmatprep.subr.mxu0 0.0
        %3137 = vmatpush1.msra.mxu0 0.0
        %3138 = vmatprep.subr.mxu0 0.0
        %3139 = vmatpush1.msra.mxu0 0.0
        %3140 = vmatprep.subr.mxu0 0.0
        %3141 = vmatpush1.msra.mxu0 0.0
        %3142 = vmatprep.subr.mxu0 0.0
        %3143 = vmatpush1.msra.mxu0 0.0
        %3144 = vmatprep.subr.mxu0 0.0
        %3145 = vmatpush1.msra.mxu0 0.0
        %3146 = vmatprep.subr.mxu0 0.0
        %3147 = vmatpush1.msra.mxu0 0.0
        %3148 = vmatprep.subr.mxu0 0.0
        %3149 = vmatpush1.msra.mxu0 0.0
        %3150 = vmatprep.subr.mxu0 0.0
        %3151 = vmatpush1.msra.mxu0 0.0
        %3152 = vmatprep.subr.mxu0 0.0
        %3153 = vmatpush1.msra.mxu0 %v3007
        %3154 = vmatprep.subr.mxu0 0.0
        %3155 = vmatpush2.msra.mxu0 0.0
        %3156 = vmatprep.subr.mxu0 0.0
        %3157 = vmatpush2.msra.mxu0 0.0
        %3158 = vmatprep.subr.mxu0 0.0
        %3159 = vmatpush2.msra.mxu0 0.0
        %3160 = vmatprep.subr.mxu0 0.0
        %3161 = vmatpush2.msra.mxu0 0.0
        %3162 = vmatprep.subr.mxu0 0.0
        %3163 = vmatpush2.msra.mxu0 0.0
        %3164 = vmatprep.subr.mxu0 0.0
        %3165 = vmatpush2.msra.mxu0 0.0
        %3166 = vmatprep.subr.mxu0 0.0
        %3167 = vmatpush2.msra.mxu0 0.0
        %3168 = vmatprep.subr.mxu0 0.0
        %3169 = vmatpush2.msra.mxu0 0.0
        %3170 = vmatprep.subr.mxu0 0.0
        %3171 = vmatpush2.msra.mxu0 0.0
        %3172 = vmatprep.subr.mxu0 0.0
        %3173 = vmatpush2.msra.mxu0 0.0
        %3174 = vmatprep.subr.mxu0 0.0
        %3175 = vmatpush2.msra.mxu0 0.0
        %3176 = vmatprep.subr.mxu0 0.0
        %3177 = vmatpush2.msra.mxu0 0.0
        %3178 = vmatprep.subr.mxu0 0.0
        %3179 = vmatpush2.msra.mxu0 0.0
        %3180 = vmatprep.subr.mxu0 0.0
        %3181 = vmatpush2.msra.mxu0 0.0
        %3182 = vmatprep.subr.mxu0 0.0
        %3183 = vmatpush2.msra.mxu0 0.0
        %3184 = vmatprep.subr.mxu0 0.0
        %3185 = vmatpush2.msra.mxu0 0.0
        %3186 = vmatprep.mubr.f32.mxu0 0.0
        %3187 = vmatmul.mubr.f32.gmra.mxu0 %v3120
        %v3188 = vpop.f32.mrf.mxu0
        %v3189 = vadd.f32 %v3113, %v3188
        %v3190 = vpop.f32.mrf.mxu0
        %3191 = vdwg.mxu0
        %s3192 = scalar_lea.vmem %s49, 128
        %v3193 = vld [vmem:[%s3192] sm:$0xf]
        %v3194 = vld [vmem:[%s3192 + $0x4] sm:$0xf]
        %v3195 = vld [vmem:[%s3192 + $0x8] sm:$0xf]
        %v3196 = vld [vmem:[%s3192 + $0xc] sm:$0xf]
        %v3197 = vld [vmem:[%s3192 + $0x10] sm:$0xf]
        %v3198 = vld [vmem:[%s3192 + $0x14] sm:$0xf]
        %v3199 = vld [vmem:[%s3192 + $0x18] sm:$0xf]
        %v3200 = vld [vmem:[%s3192 + $0x1c] sm:$0xf]
        %v3201 = vld [vmem:[%s3192 + $0x20] sm:$0xf]
        %v3202 = vld [vmem:[%s3192 + $0x24] sm:$0xf]
        %v3203 = vld [vmem:[%s3192 + $0x28] sm:$0xf]
        %v3204 = vld [vmem:[%s3192 + $0x2c] sm:$0xf]
        %v3205 = vld [vmem:[%s3192 + $0x30] sm:$0xf]
        %v3206 = vld [vmem:[%s3192 + $0x34] sm:$0xf]
        %v3207 = vld [vmem:[%s3192 + $0x38] sm:$0xf]
        %v3208 = vld [vmem:[%s3192 + $0x3c] sm:$0xf]
        %v3225 = vunpack.c.l.b16 %v3193
        %v3226 = vunpack.c.l.b16 %v3194
        %v3227 = vunpack.c.l.b16 %v3195
        %v3228 = vunpack.c.l.b16 %v3196
        %v3229 = vunpack.c.l.b16 %v3197
        %v3230 = vunpack.c.l.b16 %v3198
        %v3231 = vunpack.c.l.b16 %v3199
        %v3232 = vunpack.c.l.b16 %v3200
        %v3233 = vunpack.c.l.b16 %v3201
        %v3234 = vunpack.c.l.b16 %v3202
        %v3235 = vunpack.c.l.b16 %v3203
        %v3236 = vunpack.c.l.b16 %v3204
        %v3237 = vunpack.c.l.b16 %v3205
        %v3238 = vunpack.c.l.b16 %v3206
        %v3239 = vunpack.c.l.b16 %v3207
        %v3240 = vunpack.c.l.b16 %v3208
        %v3241 = vpack.c.b16 %v3226, %v3225
        %v3242 = vpack.c.b16 %v3228, %v3227
        %v3243 = vpack.c.b16 %v3230, %v3229
        %v3244 = vpack.c.b16 %v3232, %v3231
        %v3245 = vpack.c.b16 %v3234, %v3233
        %v3246 = vpack.c.b16 %v3236, %v3235
        %v3247 = vpack.c.b16 %v3238, %v3237
        %v3248 = vpack.c.b16 %v3240, %v3239
        %3257 = vmatprep.subr.bf16.mxu0 0
        %3258 = vmatpush1.bf16.msra.mxu0 %v3248
        %3259 = vmatprep.subr.bf16.mxu0 0
        %3260 = vmatpush1.bf16.msra.mxu0 %v3247
        %3261 = vmatprep.subr.bf16.mxu0 0
        %3262 = vmatpush1.bf16.msra.mxu0 %v3246
        %3263 = vmatprep.subr.bf16.mxu0 0
        %3264 = vmatpush1.bf16.msra.mxu0 %v3245
        %3265 = vmatprep.subr.bf16.mxu0 0
        %3266 = vmatpush1.bf16.msra.mxu0 %v3244
        %3267 = vmatprep.subr.bf16.mxu0 0
        %3268 = vmatpush1.bf16.msra.mxu0 %v3243
        %3269 = vmatprep.subr.bf16.mxu0 0
        %3270 = vmatpush1.bf16.msra.mxu0 %v3242
        %3271 = vmatprep.subr.bf16.mxu0 0
        %3272 = vmatpush1.bf16.msra.mxu0 %v3241
        %3273 = vmatprep.subr.bf16.mxu0 0
        %3274 = vmatpush2.bf16.msra.mxu0 0
        %3275 = vmatprep.subr.bf16.mxu0 0
        %3276 = vmatpush2.bf16.msra.mxu0 0
        %3277 = vmatprep.subr.bf16.mxu0 0
        %3278 = vmatpush2.bf16.msra.mxu0 0
        %3279 = vmatprep.subr.bf16.mxu0 0
        %3280 = vmatpush2.bf16.msra.mxu0 0
        %3281 = vmatprep.subr.bf16.mxu0 0
        %3282 = vmatpush2.bf16.msra.mxu0 0
        %3283 = vmatprep.subr.bf16.mxu0 0
        %3284 = vmatpush2.bf16.msra.mxu0 0
        %3285 = vmatprep.subr.bf16.mxu0 0
        %3286 = vmatpush2.bf16.msra.mxu0 0
        %3287 = vmatprep.subr.bf16.mxu0 0
        %3288 = vmatpush2.bf16.msra.mxu0 0
        %3289 = vmatprep.mubr.bf16.mxu0 0
        %3290 = vmatmul.mubr.bf16.gmra.mxu0 %v2907
        %v3291 = vpop.f32.mrf.mxu0
        %v3292 = vadd.f32 0.0, %v3291
        %v3293 = vpop.f32.mrf.mxu0
        %v3294 = vpop.f32.mrf.mxu0
        %v3295 = vpop.f32.mrf.mxu0
        %3296 = vdwg.mxu0
        %s3297 = scalar_lea.vmem %s51, 8
        %v3298 = vld [vmem:[%s3297] sm:$0xff]
        %v3300 = vsel %vm3118, %v3298, 0
        %3302 = vmatprep.subr.mxu0 0.0
        %3303 = vmatpush1.msra.mxu0 0.0
        %3304 = vmatprep.subr.mxu0 0.0
        %3305 = vmatpush1.msra.mxu0 0.0
        %3306 = vmatprep.subr.mxu0 0.0
        %3307 = vmatpush1.msra.mxu0 0.0
        %3308 = vmatprep.subr.mxu0 0.0
        %3309 = vmatpush1.msra.mxu0 0.0
        %3310 = vmatprep.subr.mxu0 0.0
        %3311 = vmatpush1.msra.mxu0 0.0
        %3312 = vmatprep.subr.mxu0 0.0
        %3313 = vmatpush1.msra.mxu0 0.0
        %3314 = vmatprep.subr.mxu0 0.0
        %3315 = vmatpush1.msra.mxu0 0.0
        %3316 = vmatprep.subr.mxu0 0.0
        %3317 = vmatpush1.msra.mxu0 0.0
        %3318 = vmatprep.subr.mxu0 0.0
        %3319 = vmatpush1.msra.mxu0 0.0
        %3320 = vmatprep.subr.mxu0 0.0
        %3321 = vmatpush1.msra.mxu0 0.0
        %3322 = vmatprep.subr.mxu0 0.0
        %3323 = vmatpush1.msra.mxu0 0.0
        %3324 = vmatprep.subr.mxu0 0.0
        %3325 = vmatpush1.msra.mxu0 0.0
        %3326 = vmatprep.subr.mxu0 0.0
        %3327 = vmatpush1.msra.mxu0 0.0
        %3328 = vmatprep.subr.mxu0 0.0
        %3329 = vmatpush1.msra.mxu0 0.0
        %3330 = vmatprep.subr.mxu0 0.0
        %3331 = vmatpush1.msra.mxu0 0.0
        %3332 = vmatprep.subr.mxu0 0.0
        %3333 = vmatpush1.msra.mxu0 %v3292
        %3334 = vmatprep.subr.mxu0 0.0
        %3335 = vmatpush2.msra.mxu0 0.0
        %3336 = vmatprep.subr.mxu0 0.0
        %3337 = vmatpush2.msra.mxu0 0.0
        %3338 = vmatprep.subr.mxu0 0.0
        %3339 = vmatpush2.msra.mxu0 0.0
        %3340 = vmatprep.subr.mxu0 0.0
        %3341 = vmatpush2.msra.mxu0 0.0
        %3342 = vmatprep.subr.mxu0 0.0
        %3343 = vmatpush2.msra.mxu0 0.0
        %3344 = vmatprep.subr.mxu0 0.0
        %3345 = vmatpush2.msra.mxu0 0.0
        %3346 = vmatprep.subr.mxu0 0.0
        %3347 = vmatpush2.msra.mxu0 0.0
        %3348 = vmatprep.subr.mxu0 0.0
        %3349 = vmatpush2.msra.mxu0 0.0
        %3350 = vmatprep.subr.mxu0 0.0
        %3351 = vmatpush2.msra.mxu0 0.0
        %3352 = vmatprep.subr.mxu0 0.0
        %3353 = vmatpush2.msra.mxu0 0.0
        %3354 = vmatprep.subr.mxu0 0.0
        %3355 = vmatpush2.msra.mxu0 0.0
        %3356 = vmatprep.subr.mxu0 0.0
        %3357 = vmatpush2.msra.mxu0 0.0
        %3358 = vmatprep.subr.mxu0 0.0
        %3359 = vmatpush2.msra.mxu0 0.0
        %3360 = vmatprep.subr.mxu0 0.0
        %3361 = vmatpush2.msra.mxu0 0.0
        %3362 = vmatprep.subr.mxu0 0.0
        %3363 = vmatpush2.msra.mxu0 0.0
        %3364 = vmatprep.subr.mxu0 0.0
        %3365 = vmatpush2.msra.mxu0 0.0
        %3366 = vmatprep.mubr.f32.mxu0 0.0
        %3367 = vmatmul.mubr.f32.gmra.mxu0 %v3300
        %v3368 = vpop.f32.mrf.mxu0
        %v3369 = vadd.f32 0.0, %v3368
        %v3370 = vpop.f32.mrf.mxu0
        %3371 = vdwg.mxu0
        %v3372 = vadd.f32 %v3189, %v3369
        %v3373 = vld [vmem:[#allocation17] sm:$0x1]
        %v3375 = vlaneseq
        %v3376 = vshrl.u32 %v3375, 7
        %v3377 = vsub.s32 0, %v3376
        %v3378 = vrot.slane %v3373, %v3377
        %v3380 = vmul.f32 %v3372, %v3378
        %v3381 = vld [vmem:[#allocation19] sm:$0x1]
        %v3383 = vlaneseq
        %v3384 = vshrl.u32 %v3383, 7
        %v3385 = vsub.s32 0, %v3384
        %v3386 = vrot.slane %v3381, %v3385
        %v3388 = vadd.f32 %v3380, %v3386
        %v3389 = vmax.f32 %v3388, 0.0
        %v3390 = vpack.c.bf16 %v3389, %v3389
        %v3391 = vld [vmem:[%s57] sm:$0xf]
        %v3392 = vld [vmem:[%s57 + $0x4] sm:$0xf]
        %v3393 = vld [vmem:[%s57 + $0x8] sm:$0xf]
        %v3394 = vld [vmem:[%s57 + $0xc] sm:$0xf]
        %v3395 = vld [vmem:[%s57 + $0x10] sm:$0xf]
        %v3396 = vld [vmem:[%s57 + $0x14] sm:$0xf]
        %v3397 = vld [vmem:[%s57 + $0x18] sm:$0xf]
        %v3398 = vld [vmem:[%s57 + $0x1c] sm:$0xf]
        %v3407 = vunpack.c.l.b16 %v3391
        %v3408 = vunpack.c.l.b16 %v3392
        %v3409 = vunpack.c.l.b16 %v3393
        %v3410 = vunpack.c.l.b16 %v3394
        %v3411 = vunpack.c.l.b16 %v3395
        %v3412 = vunpack.c.l.b16 %v3396
        %v3413 = vunpack.c.l.b16 %v3397
        %v3414 = vunpack.c.l.b16 %v3398
        %v3415 = vpack.c.b16 %v3408, %v3407
        %v3416 = vpack.c.b16 %v3410, %v3409
        %v3417 = vpack.c.b16 %v3412, %v3411
        %v3418 = vpack.c.b16 %v3414, %v3413
        %v3424 = vsel %vm1989, %v3390, 0
        %3426 = vmatprep.subr.bf16.mxu0 0
        %3427 = vmatpush1.bf16.msra.mxu0 0
        %3428 = vmatprep.subr.bf16.mxu0 0
        %3429 = vmatpush1.bf16.msra.mxu0 0
        %3430 = vmatprep.subr.bf16.mxu0 0
        %3431 = vmatpush1.bf16.msra.mxu0 0
        %3432 = vmatprep.subr.bf16.mxu0 0
        %3433 = vmatpush1.bf16.msra.mxu0 0
        %3434 = vmatprep.subr.bf16.mxu0 0
        %3435 = vmatpush1.bf16.msra.mxu0 %v3418
        %3436 = vmatprep.subr.bf16.mxu0 0
        %3437 = vmatpush1.bf16.msra.mxu0 %v3417
        %3438 = vmatprep.subr.bf16.mxu0 0
        %3439 = vmatpush1.bf16.msra.mxu0 %v3416
        %3440 = vmatprep.subr.bf16.mxu0 0
        %3441 = vmatpush1.bf16.msra.mxu0 %v3415
        %3442 = vmatprep.subr.bf16.mxu0 0
        %3443 = vmatpush2.bf16.msra.mxu0 0
        %3444 = vmatprep.subr.bf16.mxu0 0
        %3445 = vmatpush2.bf16.msra.mxu0 0
        %3446 = vmatprep.subr.bf16.mxu0 0
        %3447 = vmatpush2.bf16.msra.mxu0 0
        %3448 = vmatprep.subr.bf16.mxu0 0
        %3449 = vmatpush2.bf16.msra.mxu0 0
        %3450 = vmatprep.subr.bf16.mxu0 0
        %3451 = vmatpush2.bf16.msra.mxu0 0
        %3452 = vmatprep.subr.bf16.mxu0 0
        %3453 = vmatpush2.bf16.msra.mxu0 0
        %3454 = vmatprep.subr.bf16.mxu0 0
        %3455 = vmatpush2.bf16.msra.mxu0 0
        %3456 = vmatprep.subr.bf16.mxu0 0
        %3457 = vmatpush2.bf16.msra.mxu0 0
        %3458 = vmatprep.mubr.bf16.mxu0 0
        %3459 = vmatmul.mubr.bf16.gmra.mxu0 %v3424
        %v3460 = vpop.f32.mrf.mxu0
        %v3461 = vadd.f32 0.0, %v3460
        %v3462 = vpop.f32.mrf.mxu0
        %v3463 = vpop.f32.mrf.mxu0
        %v3464 = vpop.f32.mrf.mxu0
        %3465 = vdwg.mxu0
        %v3466 = vld [vmem:[#allocation20] sm:$0xff]
        %s3467 = scalar_lea.vmem %s57, 32
        %v3468 = vld [vmem:[%s3467] sm:$0xf]
        %v3469 = vld [vmem:[%s3467 + $0x4] sm:$0xf]
        %v3470 = vld [vmem:[%s3467 + $0x8] sm:$0xf]
        %v3471 = vld [vmem:[%s3467 + $0xc] sm:$0xf]
        %v3472 = vld [vmem:[%s3467 + $0x10] sm:$0xf]
        %v3473 = vld [vmem:[%s3467 + $0x14] sm:$0xf]
        %v3474 = vld [vmem:[%s3467 + $0x18] sm:$0xf]
        %v3475 = vld [vmem:[%s3467 + $0x1c] sm:$0xf]
        %v3484 = vunpack.c.l.b16 %v3468
        %v3485 = vunpack.c.l.b16 %v3469
        %v3486 = vunpack.c.l.b16 %v3470
        %v3487 = vunpack.c.l.b16 %v3471
        %v3488 = vunpack.c.l.b16 %v3472
        %v3489 = vunpack.c.l.b16 %v3473
        %v3490 = vunpack.c.l.b16 %v3474
        %v3491 = vunpack.c.l.b16 %v3475
        %v3492 = vpack.c.b16 %v3485, %v3484
        %v3493 = vpack.c.b16 %v3487, %v3486
        %v3494 = vpack.c.b16 %v3489, %v3488
        %v3495 = vpack.c.b16 %v3491, %v3490
        %3500 = vmatprep.subr.bf16.mxu0 0
        %3501 = vmatpush1.bf16.msra.mxu0 0
        %3502 = vmatprep.subr.bf16.mxu0 0
        %3503 = vmatpush1.bf16.msra.mxu0 0
        %3504 = vmatprep.subr.bf16.mxu0 0
        %3505 = vmatpush1.bf16.msra.mxu0 0
        %3506 = vmatprep.subr.bf16.mxu0 0
        %3507 = vmatpush1.bf16.msra.mxu0 0
        %3508 = vmatprep.subr.bf16.mxu0 0
        %3509 = vmatpush1.bf16.msra.mxu0 %v3495
        %3510 = vmatprep.subr.bf16.mxu0 0
        %3511 = vmatpush1.bf16.msra.mxu0 %v3494
        %3512 = vmatprep.subr.bf16.mxu0 0
        %3513 = vmatpush1.bf16.msra.mxu0 %v3493
        %3514 = vmatprep.subr.bf16.mxu0 0
        %3515 = vmatpush1.bf16.msra.mxu0 %v3492
        %3516 = vmatprep.subr.bf16.mxu0 0
        %3517 = vmatpush2.bf16.msra.mxu0 0
        %3518 = vmatprep.subr.bf16.mxu0 0
        %3519 = vmatpush2.bf16.msra.mxu0 0
        %3520 = vmatprep.subr.bf16.mxu0 0
        %3521 = vmatpush2.bf16.msra.mxu0 0
        %3522 = vmatprep.subr.bf16.mxu0 0
        %3523 = vmatpush2.bf16.msra.mxu0 0
        %3524 = vmatprep.subr.bf16.mxu0 0
        %3525 = vmatpush2.bf16.msra.mxu0 0
        %3526 = vmatprep.subr.bf16.mxu0 0
        %3527 = vmatpush2.bf16.msra.mxu0 0
        %3528 = vmatprep.subr.bf16.mxu0 0
        %3529 = vmatpush2.bf16.msra.mxu0 0
        %3530 = vmatprep.subr.bf16.mxu0 0
        %3531 = vmatpush2.bf16.msra.mxu0 0
        %3532 = vmatprep.mubr.bf16.mxu0 0
        %3533 = vmatmul.mubr.bf16.gmra.mxu0 %v3424
        %v3534 = vpop.f32.mrf.mxu0
        %v3535 = vadd.f32 0.0, %v3534
        %v3536 = vpop.f32.mrf.mxu0
        %v3537 = vpop.f32.mrf.mxu0
        %v3538 = vpop.f32.mrf.mxu0
        %3539 = vdwg.mxu0
        %v3541 = vsel %vm3118, %v3466, 0
        %3543 = vmatprep.subr.mxu0 0.0
        %3544 = vmatpush1.msra.mxu0 0.0
        %3545 = vmatprep.subr.mxu0 0.0
        %3546 = vmatpush1.msra.mxu0 0.0
        %3547 = vmatprep.subr.mxu0 0.0
        %3548 = vmatpush1.msra.mxu0 0.0
        %3549 = vmatprep.subr.mxu0 0.0
        %3550 = vmatpush1.msra.mxu0 0.0
        %3551 = vmatprep.subr.mxu0 0.0
        %3552 = vmatpush1.msra.mxu0 0.0
        %3553 = vmatprep.subr.mxu0 0.0
        %3554 = vmatpush1.msra.mxu0 0.0
        %3555 = vmatprep.subr.mxu0 0.0
        %3556 = vmatpush1.msra.mxu0 0.0
        %3557 = vmatprep.subr.mxu0 0.0
        %3558 = vmatpush1.msra.mxu0 0.0
        %3559 = vmatprep.subr.mxu0 0.0
        %3560 = vmatpush1.msra.mxu0 0.0
        %3561 = vmatprep.subr.mxu0 0.0
        %3562 = vmatpush1.msra.mxu0 0.0
        %3563 = vmatprep.subr.mxu0 0.0
        %3564 = vmatpush1.msra.mxu0 0.0
        %3565 = vmatprep.subr.mxu0 0.0
        %3566 = vmatpush1.msra.mxu0 0.0
        %3567 = vmatprep.subr.mxu0 0.0
        %3568 = vmatpush1.msra.mxu0 0.0
        %3569 = vmatprep.subr.mxu0 0.0
        %3570 = vmatpush1.msra.mxu0 0.0
        %3571 = vmatprep.subr.mxu0 0.0
        %3572 = vmatpush1.msra.mxu0 0.0
        %3573 = vmatprep.subr.mxu0 0.0
        %3574 = vmatpush1.msra.mxu0 %v3461
        %3575 = vmatprep.subr.mxu0 0.0
        %3576 = vmatpush2.msra.mxu0 0.0
        %3577 = vmatprep.subr.mxu0 0.0
        %3578 = vmatpush2.msra.mxu0 0.0
        %3579 = vmatprep.subr.mxu0 0.0
        %3580 = vmatpush2.msra.mxu0 0.0
        %3581 = vmatprep.subr.mxu0 0.0
        %3582 = vmatpush2.msra.mxu0 0.0
        %3583 = vmatprep.subr.mxu0 0.0
        %3584 = vmatpush2.msra.mxu0 0.0
        %3585 = vmatprep.subr.mxu0 0.0
        %3586 = vmatpush2.msra.mxu0 0.0
        %3587 = vmatprep.subr.mxu0 0.0
        %3588 = vmatpush2.msra.mxu0 0.0
        %3589 = vmatprep.subr.mxu0 0.0
        %3590 = vmatpush2.msra.mxu0 0.0
        %3591 = vmatprep.subr.mxu0 0.0
        %3592 = vmatpush2.msra.mxu0 0.0
        %3593 = vmatprep.subr.mxu0 0.0
        %3594 = vmatpush2.msra.mxu0 0.0
        %3595 = vmatprep.subr.mxu0 0.0
        %3596 = vmatpush2.msra.mxu0 0.0
        %3597 = vmatprep.subr.mxu0 0.0
        %3598 = vmatpush2.msra.mxu0 0.0
        %3599 = vmatprep.subr.mxu0 0.0
        %3600 = vmatpush2.msra.mxu0 0.0
        %3601 = vmatprep.subr.mxu0 0.0
        %3602 = vmatpush2.msra.mxu0 0.0
        %3603 = vmatprep.subr.mxu0 0.0
        %3604 = vmatpush2.msra.mxu0 0.0
        %3605 = vmatprep.subr.mxu0 0.0
        %3606 = vmatpush2.msra.mxu0 0.0
        %3607 = vmatprep.mubr.f32.mxu0 0.0
        %3608 = vmatmul.mubr.f32.gmra.mxu0 %v3541
        %v3609 = vpop.f32.mrf.mxu0
        %v3610 = vadd.f32 %v3535, %v3609
        %v3611 = vpop.f32.mrf.mxu0
        %3612 = vdwg.mxu0
        %s3613 = scalar_lea.vmem %s57, 64
        %v3614 = vld [vmem:[%s3613] sm:$0xf]
        %v3615 = vld [vmem:[%s3613 + $0x4] sm:$0xf]
        %v3616 = vld [vmem:[%s3613 + $0x8] sm:$0xf]
        %v3617 = vld [vmem:[%s3613 + $0xc] sm:$0xf]
        %v3618 = vld [vmem:[%s3613 + $0x10] sm:$0xf]
        %v3619 = vld [vmem:[%s3613 + $0x14] sm:$0xf]
        %v3620 = vld [vmem:[%s3613 + $0x18] sm:$0xf]
        %v3621 = vld [vmem:[%s3613 + $0x1c] sm:$0xf]
        %v3630 = vunpack.c.l.b16 %v3614
        %v3631 = vunpack.c.l.b16 %v3615
        %v3632 = vunpack.c.l.b16 %v3616
        %v3633 = vunpack.c.l.b16 %v3617
        %v3634 = vunpack.c.l.b16 %v3618
        %v3635 = vunpack.c.l.b16 %v3619
        %v3636 = vunpack.c.l.b16 %v3620
        %v3637 = vunpack.c.l.b16 %v3621
        %v3638 = vpack.c.b16 %v3631, %v3630
        %v3639 = vpack.c.b16 %v3633, %v3632
        %v3640 = vpack.c.b16 %v3635, %v3634
        %v3641 = vpack.c.b16 %v3637, %v3636
        %3646 = vmatprep.subr.bf16.mxu0 0
        %3647 = vmatpush1.bf16.msra.mxu0 0
        %3648 = vmatprep.subr.bf16.mxu0 0
        %3649 = vmatpush1.bf16.msra.mxu0 0
        %3650 = vmatprep.subr.bf16.mxu0 0
        %3651 = vmatpush1.bf16.msra.mxu0 0
        %3652 = vmatprep.subr.bf16.mxu0 0
        %3653 = vmatpush1.bf16.msra.mxu0 0
        %3654 = vmatprep.subr.bf16.mxu0 0
        %3655 = vmatpush1.bf16.msra.mxu0 %v3641
        %3656 = vmatprep.subr.bf16.mxu0 0
        %3657 = vmatpush1.bf16.msra.mxu0 %v3640
        %3658 = vmatprep.subr.bf16.mxu0 0
        %3659 = vmatpush1.bf16.msra.mxu0 %v3639
        %3660 = vmatprep.subr.bf16.mxu0 0
        %3661 = vmatpush1.bf16.msra.mxu0 %v3638
        %3662 = vmatprep.subr.bf16.mxu0 0
        %3663 = vmatpush2.bf16.msra.mxu0 0
        %3664 = vmatprep.subr.bf16.mxu0 0
        %3665 = vmatpush2.bf16.msra.mxu0 0
        %3666 = vmatprep.subr.bf16.mxu0 0
        %3667 = vmatpush2.bf16.msra.mxu0 0
        %3668 = vmatprep.subr.bf16.mxu0 0
        %3669 = vmatpush2.bf16.msra.mxu0 0
        %3670 = vmatprep.subr.bf16.mxu0 0
        %3671 = vmatpush2.bf16.msra.mxu0 0
        %3672 = vmatprep.subr.bf16.mxu0 0
        %3673 = vmatpush2.bf16.msra.mxu0 0
        %3674 = vmatprep.subr.bf16.mxu0 0
        %3675 = vmatpush2.bf16.msra.mxu0 0
        %3676 = vmatprep.subr.bf16.mxu0 0
        %3677 = vmatpush2.bf16.msra.mxu0 0
        %3678 = vmatprep.mubr.bf16.mxu0 0
        %3679 = vmatmul.mubr.bf16.gmra.mxu0 %v3424
        %v3680 = vpop.f32.mrf.mxu0
        %v3681 = vadd.f32 0.0, %v3680
        %v3682 = vpop.f32.mrf.mxu0
        %v3683 = vpop.f32.mrf.mxu0
        %v3684 = vpop.f32.mrf.mxu0
        %3685 = vdwg.mxu0
        %s3686 = scalar_lea.vmem [#allocation20], 8
        %v3687 = vld [vmem:[%s3686] sm:$0xff]
        %v3689 = vsel %vm3118, %v3687, 0
        %3691 = vmatprep.subr.mxu0 0.0
        %3692 = vmatpush1.msra.mxu0 0.0
        %3693 = vmatprep.subr.mxu0 0.0
        %3694 = vmatpush1.msra.mxu0 0.0
        %3695 = vmatprep.subr.mxu0 0.0
        %3696 = vmatpush1.msra.mxu0 0.0
        %3697 = vmatprep.subr.mxu0 0.0
        %3698 = vmatpush1.msra.mxu0 0.0
        %3699 = vmatprep.subr.mxu0 0.0
        %3700 = vmatpush1.msra.mxu0 0.0
        %3701 = vmatprep.subr.mxu0 0.0
        %3702 = vmatpush1.msra.mxu0 0.0
        %3703 = vmatprep.subr.mxu0 0.0
        %3704 = vmatpush1.msra.mxu0 0.0
        %3705 = vmatprep.subr.mxu0 0.0
        %3706 = vmatpush1.msra.mxu0 0.0
        %3707 = vmatprep.subr.mxu0 0.0
        %3708 = vmatpush1.msra.mxu0 0.0
        %3709 = vmatprep.subr.mxu0 0.0
        %3710 = vmatpush1.msra.mxu0 0.0
        %3711 = vmatprep.subr.mxu0 0.0
        %3712 = vmatpush1.msra.mxu0 0.0
        %3713 = vmatprep.subr.mxu0 0.0
        %3714 = vmatpush1.msra.mxu0 0.0
        %3715 = vmatprep.subr.mxu0 0.0
        %3716 = vmatpush1.msra.mxu0 0.0
        %3717 = vmatprep.subr.mxu0 0.0
        %3718 = vmatpush1.msra.mxu0 0.0
        %3719 = vmatprep.subr.mxu0 0.0
        %3720 = vmatpush1.msra.mxu0 0.0
        %3721 = vmatprep.subr.mxu0 0.0
        %3722 = vmatpush1.msra.mxu0 %v3681
        %3723 = vmatprep.subr.mxu0 0.0
        %3724 = vmatpush2.msra.mxu0 0.0
        %3725 = vmatprep.subr.mxu0 0.0
        %3726 = vmatpush2.msra.mxu0 0.0
        %3727 = vmatprep.subr.mxu0 0.0
        %3728 = vmatpush2.msra.mxu0 0.0
        %3729 = vmatprep.subr.mxu0 0.0
        %3730 = vmatpush2.msra.mxu0 0.0
        %3731 = vmatprep.subr.mxu0 0.0
        %3732 = vmatpush2.msra.mxu0 0.0
        %3733 = vmatprep.subr.mxu0 0.0
        %3734 = vmatpush2.msra.mxu0 0.0
        %3735 = vmatprep.subr.mxu0 0.0
        %3736 = vmatpush2.msra.mxu0 0.0
        %3737 = vmatprep.subr.mxu0 0.0
        %3738 = vmatpush2.msra.mxu0 0.0
        %3739 = vmatprep.subr.mxu0 0.0
        %3740 = vmatpush2.msra.mxu0 0.0
        %3741 = vmatprep.subr.mxu0 0.0
        %3742 = vmatpush2.msra.mxu0 0.0
        %3743 = vmatprep.subr.mxu0 0.0
        %3744 = vmatpush2.msra.mxu0 0.0
        %3745 = vmatprep.subr.mxu0 0.0
        %3746 = vmatpush2.msra.mxu0 0.0
        %3747 = vmatprep.subr.mxu0 0.0
        %3748 = vmatpush2.msra.mxu0 0.0
        %3749 = vmatprep.subr.mxu0 0.0
        %3750 = vmatpush2.msra.mxu0 0.0
        %3751 = vmatprep.subr.mxu0 0.0
        %3752 = vmatpush2.msra.mxu0 0.0
        %3753 = vmatprep.subr.mxu0 0.0
        %3754 = vmatpush2.msra.mxu0 0.0
        %3755 = vmatprep.mubr.f32.mxu0 0.0
        %3756 = vmatmul.mubr.f32.gmra.mxu0 %v3689
        %v3757 = vpop.f32.mrf.mxu0
        %v3758 = vadd.f32 0.0, %v3757
        %v3759 = vpop.f32.mrf.mxu0
        %3760 = vdwg.mxu0
        %v3761 = vadd.f32 %v3610, %v3758
        %v3762 = vld [vmem:[#allocation22] sm:$0x1]
        %v3764 = vlaneseq
        %v3765 = vshrl.u32 %v3764, 7
        %v3766 = vsub.s32 0, %v3765
        %v3767 = vrot.slane %v3762, %v3766
        %v3769 = vmul.f32 %v3761, %v3767
        %v3770 = vld [vmem:[#allocation23] sm:$0x1]
        %v3772 = vlaneseq
        %v3773 = vshrl.u32 %v3772, 7
        %v3774 = vsub.s32 0, %v3773
        %v3775 = vrot.slane %v3770, %v3774
        %v3777 = vadd.f32 %v3769, %v3775
        %v3778 = vmax.f32 %v3777, 0.0
        %v3779 = vld [vmem:[%s1946] sm:$0xff]
        %v3780 = vpack.c.bf16 %v3779, %v3779
        %v3781 = vld [vmem:[%s69] sm:$0xf]
        %v3782 = vld [vmem:[%s69 + $0x4] sm:$0xf]
        %v3783 = vld [vmem:[%s69 + $0x8] sm:$0xf]
        %v3784 = vld [vmem:[%s69 + $0xc] sm:$0xf]
        %v3785 = vld [vmem:[%s69 + $0x10] sm:$0xf]
        %v3786 = vld [vmem:[%s69 + $0x14] sm:$0xf]
        %v3787 = vld [vmem:[%s69 + $0x18] sm:$0xf]
        %v3788 = vld [vmem:[%s69 + $0x1c] sm:$0xf]
        %v3797 = vunpack.c.l.b16 %v3781
        %v3798 = vunpack.c.l.b16 %v3782
        %v3799 = vunpack.c.l.b16 %v3783
        %v3800 = vunpack.c.l.b16 %v3784
        %v3801 = vunpack.c.l.b16 %v3785
        %v3802 = vunpack.c.l.b16 %v3786
        %v3803 = vunpack.c.l.b16 %v3787
        %v3804 = vunpack.c.l.b16 %v3788
        %v3805 = vpack.c.b16 %v3798, %v3797
        %v3806 = vpack.c.b16 %v3800, %v3799
        %v3807 = vpack.c.b16 %v3802, %v3801
        %v3808 = vpack.c.b16 %v3804, %v3803
        %v3814 = vsel %vm1989, %v3780, 0
        %3816 = vmatprep.subr.bf16.mxu0 0
        %3817 = vmatpush1.bf16.msra.mxu0 0
        %3818 = vmatprep.subr.bf16.mxu0 0
        %3819 = vmatpush1.bf16.msra.mxu0 0
        %3820 = vmatprep.subr.bf16.mxu0 0
        %3821 = vmatpush1.bf16.msra.mxu0 0
        %3822 = vmatprep.subr.bf16.mxu0 0
        %3823 = vmatpush1.bf16.msra.mxu0 0
        %3824 = vmatprep.subr.bf16.mxu0 0
        %3825 = vmatpush1.bf16.msra.mxu0 %v3808
        %3826 = vmatprep.subr.bf16.mxu0 0
        %3827 = vmatpush1.bf16.msra.mxu0 %v3807
        %3828 = vmatprep.subr.bf16.mxu0 0
        %3829 = vmatpush1.bf16.msra.mxu0 %v3806
        %3830 = vmatprep.subr.bf16.mxu0 0
        %3831 = vmatpush1.bf16.msra.mxu0 %v3805
        %3832 = vmatprep.subr.bf16.mxu0 0
        %3833 = vmatpush2.bf16.msra.mxu0 0
        %3834 = vmatprep.subr.bf16.mxu0 0
        %3835 = vmatpush2.bf16.msra.mxu0 0
        %3836 = vmatprep.subr.bf16.mxu0 0
        %3837 = vmatpush2.bf16.msra.mxu0 0
        %3838 = vmatprep.subr.bf16.mxu0 0
        %3839 = vmatpush2.bf16.msra.mxu0 0
        %3840 = vmatprep.subr.bf16.mxu0 0
        %3841 = vmatpush2.bf16.msra.mxu0 0
        %3842 = vmatprep.subr.bf16.mxu0 0
        %3843 = vmatpush2.bf16.msra.mxu0 0
        %3844 = vmatprep.subr.bf16.mxu0 0
        %3845 = vmatpush2.bf16.msra.mxu0 0
        %3846 = vmatprep.subr.bf16.mxu0 0
        %3847 = vmatpush2.bf16.msra.mxu0 0
        %3848 = vmatprep.mubr.bf16.mxu0 0
        %3849 = vmatmul.mubr.bf16.gmra.mxu0 %v3814
        %v3850 = vpop.f32.mrf.mxu0
        %v3851 = vadd.f32 0.0, %v3850
        %v3852 = vpop.f32.mrf.mxu0
        %v3853 = vpop.f32.mrf.mxu0
        %v3854 = vpop.f32.mrf.mxu0
        %3855 = vdwg.mxu0
        %v3856 = vld [vmem:[#allocation26] sm:$0xff]
        %s3857 = scalar_lea.vmem %s69, 32
        %v3858 = vld [vmem:[%s3857] sm:$0xf]
        %v3859 = vld [vmem:[%s3857 + $0x4] sm:$0xf]
        %v3860 = vld [vmem:[%s3857 + $0x8] sm:$0xf]
        %v3861 = vld [vmem:[%s3857 + $0xc] sm:$0xf]
        %v3862 = vld [vmem:[%s3857 + $0x10] sm:$0xf]
        %v3863 = vld [vmem:[%s3857 + $0x14] sm:$0xf]
        %v3864 = vld [vmem:[%s3857 + $0x18] sm:$0xf]
        %v3865 = vld [vmem:[%s3857 + $0x1c] sm:$0xf]
        %v3874 = vunpack.c.l.b16 %v3858
        %v3875 = vunpack.c.l.b16 %v3859
        %v3876 = vunpack.c.l.b16 %v3860
        %v3877 = vunpack.c.l.b16 %v3861
        %v3878 = vunpack.c.l.b16 %v3862
        %v3879 = vunpack.c.l.b16 %v3863
        %v3880 = vunpack.c.l.b16 %v3864
        %v3881 = vunpack.c.l.b16 %v3865
        %v3882 = vpack.c.b16 %v3875, %v3874
        %v3883 = vpack.c.b16 %v3877, %v3876
        %v3884 = vpack.c.b16 %v3879, %v3878
        %v3885 = vpack.c.b16 %v3881, %v3880
        %3890 = vmatprep.subr.bf16.mxu0 0
        %3891 = vmatpush1.bf16.msra.mxu0 0
        %3892 = vmatprep.subr.bf16.mxu0 0
        %3893 = vmatpush1.bf16.msra.mxu0 0
        %3894 = vmatprep.subr.bf16.mxu0 0
        %3895 = vmatpush1.bf16.msra.mxu0 0
        %3896 = vmatprep.subr.bf16.mxu0 0
        %3897 = vmatpush1.bf16.msra.mxu0 0
        %3898 = vmatprep.subr.bf16.mxu0 0
        %3899 = vmatpush1.bf16.msra.mxu0 %v3885
        %3900 = vmatprep.subr.bf16.mxu0 0
        %3901 = vmatpush1.bf16.msra.mxu0 %v3884
        %3902 = vmatprep.subr.bf16.mxu0 0
        %3903 = vmatpush1.bf16.msra.mxu0 %v3883
        %3904 = vmatprep.subr.bf16.mxu0 0
        %3905 = vmatpush1.bf16.msra.mxu0 %v3882
        %3906 = vmatprep.subr.bf16.mxu0 0
        %3907 = vmatpush2.bf16.msra.mxu0 0
        %3908 = vmatprep.subr.bf16.mxu0 0
        %3909 = vmatpush2.bf16.msra.mxu0 0
        %3910 = vmatprep.subr.bf16.mxu0 0
        %3911 = vmatpush2.bf16.msra.mxu0 0
        %3912 = vmatprep.subr.bf16.mxu0 0
        %3913 = vmatpush2.bf16.msra.mxu0 0
        %3914 = vmatprep.subr.bf16.mxu0 0
        %3915 = vmatpush2.bf16.msra.mxu0 0
        %3916 = vmatprep.subr.bf16.mxu0 0
        %3917 = vmatpush2.bf16.msra.mxu0 0
        %3918 = vmatprep.subr.bf16.mxu0 0
        %3919 = vmatpush2.bf16.msra.mxu0 0
        %3920 = vmatprep.subr.bf16.mxu0 0
        %3921 = vmatpush2.bf16.msra.mxu0 0
        %3922 = vmatprep.mubr.bf16.mxu0 0
        %3923 = vmatmul.mubr.bf16.gmra.mxu0 %v3814
        %v3924 = vpop.f32.mrf.mxu0
        %v3925 = vadd.f32 0.0, %v3924
        %v3926 = vpop.f32.mrf.mxu0
        %v3927 = vpop.f32.mrf.mxu0
        %v3928 = vpop.f32.mrf.mxu0
        %3929 = vdwg.mxu0
        %v3931 = vsel %vm3118, %v3856, 0
        %3933 = vmatprep.subr.mxu0 0.0
        %3934 = vmatpush1.msra.mxu0 0.0
        %3935 = vmatprep.subr.mxu0 0.0
        %3936 = vmatpush1.msra.mxu0 0.0
        %3937 = vmatprep.subr.mxu0 0.0
        %3938 = vmatpush1.msra.mxu0 0.0
        %3939 = vmatprep.subr.mxu0 0.0
        %3940 = vmatpush1.msra.mxu0 0.0
        %3941 = vmatprep.subr.mxu0 0.0
        %3942 = vmatpush1.msra.mxu0 0.0
        %3943 = vmatprep.subr.mxu0 0.0
        %3944 = vmatpush1.msra.mxu0 0.0
        %3945 = vmatprep.subr.mxu0 0.0
        %3946 = vmatpush1.msra.mxu0 0.0
        %3947 = vmatprep.subr.mxu0 0.0
        %3948 = vmatpush1.msra.mxu0 0.0
        %3949 = vmatprep.subr.mxu0 0.0
        %3950 = vmatpush1.msra.mxu0 0.0
        %3951 = vmatprep.subr.mxu0 0.0
        %3952 = vmatpush1.msra.mxu0 0.0
        %3953 = vmatprep.subr.mxu0 0.0
        %3954 = vmatpush1.msra.mxu0 0.0
        %3955 = vmatprep.subr.mxu0 0.0
        %3956 = vmatpush1.msra.mxu0 0.0
        %3957 = vmatprep.subr.mxu0 0.0
        %3958 = vmatpush1.msra.mxu0 0.0
        %3959 = vmatprep.subr.mxu0 0.0
        %3960 = vmatpush1.msra.mxu0 0.0
        %3961 = vmatprep.subr.mxu0 0.0
        %3962 = vmatpush1.msra.mxu0 0.0
        %3963 = vmatprep.subr.mxu0 0.0
        %3964 = vmatpush1.msra.mxu0 %v3851
        %3965 = vmatprep.subr.mxu0 0.0
        %3966 = vmatpush2.msra.mxu0 0.0
        %3967 = vmatprep.subr.mxu0 0.0
        %3968 = vmatpush2.msra.mxu0 0.0
        %3969 = vmatprep.subr.mxu0 0.0
        %3970 = vmatpush2.msra.mxu0 0.0
        %3971 = vmatprep.subr.mxu0 0.0
        %3972 = vmatpush2.msra.mxu0 0.0
        %3973 = vmatprep.subr.mxu0 0.0
        %3974 = vmatpush2.msra.mxu0 0.0
        %3975 = vmatprep.subr.mxu0 0.0
        %3976 = vmatpush2.msra.mxu0 0.0
        %3977 = vmatprep.subr.mxu0 0.0
        %3978 = vmatpush2.msra.mxu0 0.0
        %3979 = vmatprep.subr.mxu0 0.0
        %3980 = vmatpush2.msra.mxu0 0.0
        %3981 = vmatprep.subr.mxu0 0.0
        %3982 = vmatpush2.msra.mxu0 0.0
        %3983 = vmatprep.subr.mxu0 0.0
        %3984 = vmatpush2.msra.mxu0 0.0
        %3985 = vmatprep.subr.mxu0 0.0
        %3986 = vmatpush2.msra.mxu0 0.0
        %3987 = vmatprep.subr.mxu0 0.0
        %3988 = vmatpush2.msra.mxu0 0.0
        %3989 = vmatprep.subr.mxu0 0.0
        %3990 = vmatpush2.msra.mxu0 0.0
        %3991 = vmatprep.subr.mxu0 0.0
        %3992 = vmatpush2.msra.mxu0 0.0
        %3993 = vmatprep.subr.mxu0 0.0
        %3994 = vmatpush2.msra.mxu0 0.0
        %3995 = vmatprep.subr.mxu0 0.0
        %3996 = vmatpush2.msra.mxu0 0.0
        %3997 = vmatprep.mubr.f32.mxu0 0.0
        %3998 = vmatmul.mubr.f32.gmra.mxu0 %v3931
        %v3999 = vpop.f32.mrf.mxu0
        %v4000 = vadd.f32 %v3925, %v3999
        %v4001 = vpop.f32.mrf.mxu0
        %4002 = vdwg.mxu0
        %s4003 = scalar_lea.vmem %s69, 64
        %v4004 = vld [vmem:[%s4003] sm:$0xf]
        %v4005 = vld [vmem:[%s4003 + $0x4] sm:$0xf]
        %v4006 = vld [vmem:[%s4003 + $0x8] sm:$0xf]
        %v4007 = vld [vmem:[%s4003 + $0xc] sm:$0xf]
        %v4008 = vld [vmem:[%s4003 + $0x10] sm:$0xf]
        %v4009 = vld [vmem:[%s4003 + $0x14] sm:$0xf]
        %v4010 = vld [vmem:[%s4003 + $0x18] sm:$0xf]
        %v4011 = vld [vmem:[%s4003 + $0x1c] sm:$0xf]
        %v4020 = vunpack.c.l.b16 %v4004
        %v4021 = vunpack.c.l.b16 %v4005
        %v4022 = vunpack.c.l.b16 %v4006
        %v4023 = vunpack.c.l.b16 %v4007
        %v4024 = vunpack.c.l.b16 %v4008
        %v4025 = vunpack.c.l.b16 %v4009
        %v4026 = vunpack.c.l.b16 %v4010
        %v4027 = vunpack.c.l.b16 %v4011
        %v4028 = vpack.c.b16 %v4021, %v4020
        %v4029 = vpack.c.b16 %v4023, %v4022
        %v4030 = vpack.c.b16 %v4025, %v4024
        %v4031 = vpack.c.b16 %v4027, %v4026
        %4036 = vmatprep.subr.bf16.mxu0 0
        %4037 = vmatpush1.bf16.msra.mxu0 0
        %4038 = vmatprep.subr.bf16.mxu0 0
        %4039 = vmatpush1.bf16.msra.mxu0 0
        %4040 = vmatprep.subr.bf16.mxu0 0
        %4041 = vmatpush1.bf16.msra.mxu0 0
        %4042 = vmatprep.subr.bf16.mxu0 0
        %4043 = vmatpush1.bf16.msra.mxu0 0
        %4044 = vmatprep.subr.bf16.mxu0 0
        %4045 = vmatpush1.bf16.msra.mxu0 %v4031
        %4046 = vmatprep.subr.bf16.mxu0 0
        %4047 = vmatpush1.bf16.msra.mxu0 %v4030
        %4048 = vmatprep.subr.bf16.mxu0 0
        %4049 = vmatpush1.bf16.msra.mxu0 %v4029
        %4050 = vmatprep.subr.bf16.mxu0 0
        %4051 = vmatpush1.bf16.msra.mxu0 %v4028
        %4052 = vmatprep.subr.bf16.mxu0 0
        %4053 = vmatpush2.bf16.msra.mxu0 0
        %4054 = vmatprep.subr.bf16.mxu0 0
        %4055 = vmatpush2.bf16.msra.mxu0 0
        %4056 = vmatprep.subr.bf16.mxu0 0
        %4057 = vmatpush2.bf16.msra.mxu0 0
        %4058 = vmatprep.subr.bf16.mxu0 0
        %4059 = vmatpush2.bf16.msra.mxu0 0
        %4060 = vmatprep.subr.bf16.mxu0 0
        %4061 = vmatpush2.bf16.msra.mxu0 0
        %4062 = vmatprep.subr.bf16.mxu0 0
        %4063 = vmatpush2.bf16.msra.mxu0 0
        %4064 = vmatprep.subr.bf16.mxu0 0
        %4065 = vmatpush2.bf16.msra.mxu0 0
        %4066 = vmatprep.subr.bf16.mxu0 0
        %4067 = vmatpush2.bf16.msra.mxu0 0
        %4068 = vmatprep.mubr.bf16.mxu0 0
        %4069 = vmatmul.mubr.bf16.gmra.mxu0 %v3814
        %v4070 = vpop.f32.mrf.mxu0
        %v4071 = vadd.f32 0.0, %v4070
        %v4072 = vpop.f32.mrf.mxu0
        %v4073 = vpop.f32.mrf.mxu0
        %v4074 = vpop.f32.mrf.mxu0
        %4075 = vdwg.mxu0
        %s4076 = scalar_lea.vmem [#allocation26], 8
        %v4077 = vld [vmem:[%s4076] sm:$0xff]
        %v4079 = vsel %vm3118, %v4077, 0
        %4081 = vmatprep.subr.mxu0 0.0
        %4082 = vmatpush1.msra.mxu0 0.0
        %4083 = vmatprep.subr.mxu0 0.0
        %4084 = vmatpush1.msra.mxu0 0.0
        %4085 = vmatprep.subr.mxu0 0.0
        %4086 = vmatpush1.msra.mxu0 0.0
        %4087 = vmatprep.subr.mxu0 0.0
        %4088 = vmatpush1.msra.mxu0 0.0
        %4089 = vmatprep.subr.mxu0 0.0
        %4090 = vmatpush1.msra.mxu0 0.0
        %4091 = vmatprep.subr.mxu0 0.0
        %4092 = vmatpush1.msra.mxu0 0.0
        %4093 = vmatprep.subr.mxu0 0.0
        %4094 = vmatpush1.msra.mxu0 0.0
        %4095 = vmatprep.subr.mxu0 0.0
        %4096 = vmatpush1.msra.mxu0 0.0
        %4097 = vmatprep.subr.mxu0 0.0
        %4098 = vmatpush1.msra.mxu0 0.0
        %4099 = vmatprep.subr.mxu0 0.0
        %4100 = vmatpush1.msra.mxu0 0.0
        %4101 = vmatprep.subr.mxu0 0.0
        %4102 = vmatpush1.msra.mxu0 0.0
        %4103 = vmatprep.subr.mxu0 0.0
        %4104 = vmatpush1.msra.mxu0 0.0
        %4105 = vmatprep.subr.mxu0 0.0
        %4106 = vmatpush1.msra.mxu0 0.0
        %4107 = vmatprep.subr.mxu0 0.0
        %4108 = vmatpush1.msra.mxu0 0.0
        %4109 = vmatprep.subr.mxu0 0.0
        %4110 = vmatpush1.msra.mxu0 0.0
        %4111 = vmatprep.subr.mxu0 0.0
        %4112 = vmatpush1.msra.mxu0 %v4071
        %4113 = vmatprep.subr.mxu0 0.0
        %4114 = vmatpush2.msra.mxu0 0.0
        %4115 = vmatprep.subr.mxu0 0.0
        %4116 = vmatpush2.msra.mxu0 0.0
        %4117 = vmatprep.subr.mxu0 0.0
        %4118 = vmatpush2.msra.mxu0 0.0
        %4119 = vmatprep.subr.mxu0 0.0
        %4120 = vmatpush2.msra.mxu0 0.0
        %4121 = vmatprep.subr.mxu0 0.0
        %4122 = vmatpush2.msra.mxu0 0.0
        %4123 = vmatprep.subr.mxu0 0.0
        %4124 = vmatpush2.msra.mxu0 0.0
        %4125 = vmatprep.subr.mxu0 0.0
        %4126 = vmatpush2.msra.mxu0 0.0
        %4127 = vmatprep.subr.mxu0 0.0
        %4128 = vmatpush2.msra.mxu0 0.0
        %4129 = vmatprep.subr.mxu0 0.0
        %4130 = vmatpush2.msra.mxu0 0.0
        %4131 = vmatprep.subr.mxu0 0.0
        %4132 = vmatpush2.msra.mxu0 0.0
        %4133 = vmatprep.subr.mxu0 0.0
        %4134 = vmatpush2.msra.mxu0 0.0
        %4135 = vmatprep.subr.mxu0 0.0
        %4136 = vmatpush2.msra.mxu0 0.0
        %4137 = vmatprep.subr.mxu0 0.0
        %4138 = vmatpush2.msra.mxu0 0.0
        %4139 = vmatprep.subr.mxu0 0.0
        %4140 = vmatpush2.msra.mxu0 0.0
        %4141 = vmatprep.subr.mxu0 0.0
        %4142 = vmatpush2.msra.mxu0 0.0
        %4143 = vmatprep.subr.mxu0 0.0
        %4144 = vmatpush2.msra.mxu0 0.0
        %4145 = vmatprep.mubr.f32.mxu0 0.0
        %4146 = vmatmul.mubr.f32.gmra.mxu0 %v4079
        %v4147 = vpop.f32.mrf.mxu0
        %v4148 = vadd.f32 0.0, %v4147
        %v4149 = vpop.f32.mrf.mxu0
        %4150 = vdwg.mxu0
        %v4151 = vadd.f32 %v4000, %v4148
        %v4152 = vld [vmem:[#allocation28] sm:$0x1]
        %v4154 = vlaneseq
        %v4155 = vshrl.u32 %v4154, 7
        %v4156 = vsub.s32 0, %v4155
        %v4157 = vrot.slane %v4152, %v4156
        %v4159 = vmul.f32 %v4151, %v4157
        %v4160 = vld [vmem:[#allocation29] sm:$0x1]
        %v4162 = vlaneseq
        %v4163 = vshrl.u32 %v4162, 7
        %v4164 = vsub.s32 0, %v4163
        %v4165 = vrot.slane %v4160, %v4164
        %v4167 = vadd.f32 %v4159, %v4165
        %v4168 = vmax.f32 %v4167, 0.0
        %v4169 = vpack.c.bf16 %v4168, %v4168
        %v4170 = vld [vmem:[%s77] sm:$0xf]
        %v4171 = vld [vmem:[%s77 + $0x4] sm:$0xf]
        %v4172 = vld [vmem:[%s77 + $0x8] sm:$0xf]
        %v4173 = vld [vmem:[%s77 + $0xc] sm:$0xf]
        %v4174 = vld [vmem:[%s77 + $0x10] sm:$0xf]
        %v4175 = vld [vmem:[%s77 + $0x14] sm:$0xf]
        %v4176 = vld [vmem:[%s77 + $0x18] sm:$0xf]
        %v4177 = vld [vmem:[%s77 + $0x1c] sm:$0xf]
        %v4186 = vunpack.c.l.b16 %v4170
        %v4187 = vunpack.c.l.b16 %v4171
        %v4188 = vunpack.c.l.b16 %v4172
        %v4189 = vunpack.c.l.b16 %v4173
        %v4190 = vunpack.c.l.b16 %v4174
        %v4191 = vunpack.c.l.b16 %v4175
        %v4192 = vunpack.c.l.b16 %v4176
        %v4193 = vunpack.c.l.b16 %v4177
        %v4194 = vpack.c.b16 %v4187, %v4186
        %v4195 = vpack.c.b16 %v4189, %v4188
        %v4196 = vpack.c.b16 %v4191, %v4190
        %v4197 = vpack.c.b16 %v4193, %v4192
        %v4203 = vsel %vm1989, %v4169, 0
        %4205 = vmatprep.subr.bf16.mxu0 0
        %4206 = vmatpush1.bf16.msra.mxu0 0
        %4207 = vmatprep.subr.bf16.mxu0 0
        %4208 = vmatpush1.bf16.msra.mxu0 0
        %4209 = vmatprep.subr.bf16.mxu0 0
        %4210 = vmatpush1.bf16.msra.mxu0 0
        %4211 = vmatprep.subr.bf16.mxu0 0
        %4212 = vmatpush1.bf16.msra.mxu0 0
        %4213 = vmatprep.subr.bf16.mxu0 0
        %4214 = vmatpush1.bf16.msra.mxu0 %v4197
        %4215 = vmatprep.subr.bf16.mxu0 0
        %4216 = vmatpush1.bf16.msra.mxu0 %v4196
        %4217 = vmatprep.subr.bf16.mxu0 0
        %4218 = vmatpush1.bf16.msra.mxu0 %v4195
        %4219 = vmatprep.subr.bf16.mxu0 0
        %4220 = vmatpush1.bf16.msra.mxu0 %v4194
        %4221 = vmatprep.subr.bf16.mxu0 0
        %4222 = vmatpush2.bf16.msra.mxu0 0
        %4223 = vmatprep.subr.bf16.mxu0 0
        %4224 = vmatpush2.bf16.msra.mxu0 0
        %4225 = vmatprep.subr.bf16.mxu0 0
        %4226 = vmatpush2.bf16.msra.mxu0 0
        %4227 = vmatprep.subr.bf16.mxu0 0
        %4228 = vmatpush2.bf16.msra.mxu0 0
        %4229 = vmatprep.subr.bf16.mxu0 0
        %4230 = vmatpush2.bf16.msra.mxu0 0
        %4231 = vmatprep.subr.bf16.mxu0 0
        %4232 = vmatpush2.bf16.msra.mxu0 0
        %4233 = vmatprep.subr.bf16.mxu0 0
        %4234 = vmatpush2.bf16.msra.mxu0 0
        %4235 = vmatprep.subr.bf16.mxu0 0
        %4236 = vmatpush2.bf16.msra.mxu0 0
        %4237 = vmatprep.mubr.bf16.mxu0 0
        %4238 = vmatmul.mubr.bf16.gmra.mxu0 %v4203
        %v4239 = vpop.f32.mrf.mxu0
        %v4240 = vadd.f32 0.0, %v4239
        %v4241 = vpop.f32.mrf.mxu0
        %v4242 = vpop.f32.mrf.mxu0
        %v4243 = vpop.f32.mrf.mxu0
        %4244 = vdwg.mxu0
        %v4245 = vld [vmem:[#allocation31] sm:$0xff]
        %s4246 = scalar_lea.vmem %s77, 32
        %v4247 = vld [vmem:[%s4246] sm:$0xf]
        %v4248 = vld [vmem:[%s4246 + $0x4] sm:$0xf]
        %v4249 = vld [vmem:[%s4246 + $0x8] sm:$0xf]
        %v4250 = vld [vmem:[%s4246 + $0xc] sm:$0xf]
        %v4251 = vld [vmem:[%s4246 + $0x10] sm:$0xf]
        %v4252 = vld [vmem:[%s4246 + $0x14] sm:$0xf]
        %v4253 = vld [vmem:[%s4246 + $0x18] sm:$0xf]
        %v4254 = vld [vmem:[%s4246 + $0x1c] sm:$0xf]
        %v4263 = vunpack.c.l.b16 %v4247
        %v4264 = vunpack.c.l.b16 %v4248
        %v4265 = vunpack.c.l.b16 %v4249
        %v4266 = vunpack.c.l.b16 %v4250
        %v4267 = vunpack.c.l.b16 %v4251
        %v4268 = vunpack.c.l.b16 %v4252
        %v4269 = vunpack.c.l.b16 %v4253
        %v4270 = vunpack.c.l.b16 %v4254
        %v4271 = vpack.c.b16 %v4264, %v4263
        %v4272 = vpack.c.b16 %v4266, %v4265
        %v4273 = vpack.c.b16 %v4268, %v4267
        %v4274 = vpack.c.b16 %v4270, %v4269
        %4279 = vmatprep.subr.bf16.mxu0 0
        %4280 = vmatpush1.bf16.msra.mxu0 0
        %4281 = vmatprep.subr.bf16.mxu0 0
        %4282 = vmatpush1.bf16.msra.mxu0 0
        %4283 = vmatprep.subr.bf16.mxu0 0
        %4284 = vmatpush1.bf16.msra.mxu0 0
        %4285 = vmatprep.subr.bf16.mxu0 0
        %4286 = vmatpush1.bf16.msra.mxu0 0
        %4287 = vmatprep.subr.bf16.mxu0 0
        %4288 = vmatpush1.bf16.msra.mxu0 %v4274
        %4289 = vmatprep.subr.bf16.mxu0 0
        %4290 = vmatpush1.bf16.msra.mxu0 %v4273
        %4291 = vmatprep.subr.bf16.mxu0 0
        %4292 = vmatpush1.bf16.msra.mxu0 %v4272
        %4293 = vmatprep.subr.bf16.mxu0 0
        %4294 = vmatpush1.bf16.msra.mxu0 %v4271
        %4295 = vmatprep.subr.bf16.mxu0 0
        %4296 = vmatpush2.bf16.msra.mxu0 0
        %4297 = vmatprep.subr.bf16.mxu0 0
        %4298 = vmatpush2.bf16.msra.mxu0 0
        %4299 = vmatprep.subr.bf16.mxu0 0
        %4300 = vmatpush2.bf16.msra.mxu0 0
        %4301 = vmatprep.subr.bf16.mxu0 0
        %4302 = vmatpush2.bf16.msra.mxu0 0
        %4303 = vmatprep.subr.bf16.mxu0 0
        %4304 = vmatpush2.bf16.msra.mxu0 0
        %4305 = vmatprep.subr.bf16.mxu0 0
        %4306 = vmatpush2.bf16.msra.mxu0 0
        %4307 = vmatprep.subr.bf16.mxu0 0
        %4308 = vmatpush2.bf16.msra.mxu0 0
        %4309 = vmatprep.subr.bf16.mxu0 0
        %4310 = vmatpush2.bf16.msra.mxu0 0
        %4311 = vmatprep.mubr.bf16.mxu0 0
        %4312 = vmatmul.mubr.bf16.gmra.mxu0 %v4203
        %v4313 = vpop.f32.mrf.mxu0
        %v4314 = vadd.f32 0.0, %v4313
        %v4315 = vpop.f32.mrf.mxu0
        %v4316 = vpop.f32.mrf.mxu0
        %v4317 = vpop.f32.mrf.mxu0
        %4318 = vdwg.mxu0
        %v4320 = vsel %vm3118, %v4245, 0
        %4322 = vmatprep.subr.mxu0 0.0
        %4323 = vmatpush1.msra.mxu0 0.0
        %4324 = vmatprep.subr.mxu0 0.0
        %4325 = vmatpush1.msra.mxu0 0.0
        %4326 = vmatprep.subr.mxu0 0.0
        %4327 = vmatpush1.msra.mxu0 0.0
        %4328 = vmatprep.subr.mxu0 0.0
        %4329 = vmatpush1.msra.mxu0 0.0
        %4330 = vmatprep.subr.mxu0 0.0
        %4331 = vmatpush1.msra.mxu0 0.0
        %4332 = vmatprep.subr.mxu0 0.0
        %4333 = vmatpush1.msra.mxu0 0.0
        %4334 = vmatprep.subr.mxu0 0.0
        %4335 = vmatpush1.msra.mxu0 0.0
        %4336 = vmatprep.subr.mxu0 0.0
        %4337 = vmatpush1.msra.mxu0 0.0
        %4338 = vmatprep.subr.mxu0 0.0
        %4339 = vmatpush1.msra.mxu0 0.0
        %4340 = vmatprep.subr.mxu0 0.0
        %4341 = vmatpush1.msra.mxu0 0.0
        %4342 = vmatprep.subr.mxu0 0.0
        %4343 = vmatpush1.msra.mxu0 0.0
        %4344 = vmatprep.subr.mxu0 0.0
        %4345 = vmatpush1.msra.mxu0 0.0
        %4346 = vmatprep.subr.mxu0 0.0
        %4347 = vmatpush1.msra.mxu0 0.0
        %4348 = vmatprep.subr.mxu0 0.0
        %4349 = vmatpush1.msra.mxu0 0.0
        %4350 = vmatprep.subr.mxu0 0.0
        %4351 = vmatpush1.msra.mxu0 0.0
        %4352 = vmatprep.subr.mxu0 0.0
        %4353 = vmatpush1.msra.mxu0 %v4240
        %4354 = vmatprep.subr.mxu0 0.0
        %4355 = vmatpush2.msra.mxu0 0.0
        %4356 = vmatprep.subr.mxu0 0.0
        %4357 = vmatpush2.msra.mxu0 0.0
        %4358 = vmatprep.subr.mxu0 0.0
        %4359 = vmatpush2.msra.mxu0 0.0
        %4360 = vmatprep.subr.mxu0 0.0
        %4361 = vmatpush2.msra.mxu0 0.0
        %4362 = vmatprep.subr.mxu0 0.0
        %4363 = vmatpush2.msra.mxu0 0.0
        %4364 = vmatprep.subr.mxu0 0.0
        %4365 = vmatpush2.msra.mxu0 0.0
        %4366 = vmatprep.subr.mxu0 0.0
        %4367 = vmatpush2.msra.mxu0 0.0
        %4368 = vmatprep.subr.mxu0 0.0
        %4369 = vmatpush2.msra.mxu0 0.0
        %4370 = vmatprep.subr.mxu0 0.0
        %4371 = vmatpush2.msra.mxu0 0.0
        %4372 = vmatprep.subr.mxu0 0.0
        %4373 = vmatpush2.msra.mxu0 0.0
        %4374 = vmatprep.subr.mxu0 0.0
        %4375 = vmatpush2.msra.mxu0 0.0
        %4376 = vmatprep.subr.mxu0 0.0
        %4377 = vmatpush2.msra.mxu0 0.0
        %4378 = vmatprep.subr.mxu0 0.0
        %4379 = vmatpush2.msra.mxu0 0.0
        %4380 = vmatprep.subr.mxu0 0.0
        %4381 = vmatpush2.msra.mxu0 0.0
        %4382 = vmatprep.subr.mxu0 0.0
        %4383 = vmatpush2.msra.mxu0 0.0
        %4384 = vmatprep.subr.mxu0 0.0
        %4385 = vmatpush2.msra.mxu0 0.0
        %4386 = vmatprep.mubr.f32.mxu0 0.0
        %4387 = vmatmul.mubr.f32.gmra.mxu0 %v4320
        %v4388 = vpop.f32.mrf.mxu0
        %v4389 = vadd.f32 %v4314, %v4388
        %v4390 = vpop.f32.mrf.mxu0
        %4391 = vdwg.mxu0
        %s4392 = scalar_lea.vmem %s77, 64
        %v4393 = vld [vmem:[%s4392] sm:$0xf]
        %v4394 = vld [vmem:[%s4392 + $0x4] sm:$0xf]
        %v4395 = vld [vmem:[%s4392 + $0x8] sm:$0xf]
        %v4396 = vld [vmem:[%s4392 + $0xc] sm:$0xf]
        %v4397 = vld [vmem:[%s4392 + $0x10] sm:$0xf]
        %v4398 = vld [vmem:[%s4392 + $0x14] sm:$0xf]
        %v4399 = vld [vmem:[%s4392 + $0x18] sm:$0xf]
        %v4400 = vld [vmem:[%s4392 + $0x1c] sm:$0xf]
        %v4409 = vunpack.c.l.b16 %v4393
        %v4410 = vunpack.c.l.b16 %v4394
        %v4411 = vunpack.c.l.b16 %v4395
        %v4412 = vunpack.c.l.b16 %v4396
        %v4413 = vunpack.c.l.b16 %v4397
        %v4414 = vunpack.c.l.b16 %v4398
        %v4415 = vunpack.c.l.b16 %v4399
        %v4416 = vunpack.c.l.b16 %v4400
        %v4417 = vpack.c.b16 %v4410, %v4409
        %v4418 = vpack.c.b16 %v4412, %v4411
        %v4419 = vpack.c.b16 %v4414, %v4413
        %v4420 = vpack.c.b16 %v4416, %v4415
        %4425 = vmatprep.subr.bf16.mxu0 0
        %4426 = vmatpush1.bf16.msra.mxu0 0
        %4427 = vmatprep.subr.bf16.mxu0 0
        %4428 = vmatpush1.bf16.msra.mxu0 0
        %4429 = vmatprep.subr.bf16.mxu0 0
        %4430 = vmatpush1.bf16.msra.mxu0 0
        %4431 = vmatprep.subr.bf16.mxu0 0
        %4432 = vmatpush1.bf16.msra.mxu0 0
        %4433 = vmatprep.subr.bf16.mxu0 0
        %4434 = vmatpush1.bf16.msra.mxu0 %v4420
        %4435 = vmatprep.subr.bf16.mxu0 0
        %4436 = vmatpush1.bf16.msra.mxu0 %v4419
        %4437 = vmatprep.subr.bf16.mxu0 0
        %4438 = vmatpush1.bf16.msra.mxu0 %v4418
        %4439 = vmatprep.subr.bf16.mxu0 0
        %4440 = vmatpush1.bf16.msra.mxu0 %v4417
        %4441 = vmatprep.subr.bf16.mxu0 0
        %4442 = vmatpush2.bf16.msra.mxu0 0
        %4443 = vmatprep.subr.bf16.mxu0 0
        %4444 = vmatpush2.bf16.msra.mxu0 0
        %4445 = vmatprep.subr.bf16.mxu0 0
        %4446 = vmatpush2.bf16.msra.mxu0 0
        %4447 = vmatprep.subr.bf16.mxu0 0
        %4448 = vmatpush2.bf16.msra.mxu0 0
        %4449 = vmatprep.subr.bf16.mxu0 0
        %4450 = vmatpush2.bf16.msra.mxu0 0
        %4451 = vmatprep.subr.bf16.mxu0 0
        %4452 = vmatpush2.bf16.msra.mxu0 0
        %4453 = vmatprep.subr.bf16.mxu0 0
        %4454 = vmatpush2.bf16.msra.mxu0 0
        %4455 = vmatprep.subr.bf16.mxu0 0
        %4456 = vmatpush2.bf16.msra.mxu0 0
        %4457 = vmatprep.mubr.bf16.mxu0 0
        %4458 = vmatmul.mubr.bf16.gmra.mxu0 %v4203
        %v4459 = vpop.f32.mrf.mxu0
        %v4460 = vadd.f32 0.0, %v4459
        %v4461 = vpop.f32.mrf.mxu0
        %v4462 = vpop.f32.mrf.mxu0
        %v4463 = vpop.f32.mrf.mxu0
        %4464 = vdwg.mxu0
        %s4465 = scalar_lea.vmem [#allocation31], 8
        %v4466 = vld [vmem:[%s4465] sm:$0xff]
        %v4468 = vsel %vm3118, %v4466, 0
        %4470 = vmatprep.subr.mxu0 0.0
        %4471 = vmatpush1.msra.mxu0 0.0
        %4472 = vmatprep.subr.mxu0 0.0
        %4473 = vmatpush1.msra.mxu0 0.0
        %4474 = vmatprep.subr.mxu0 0.0
        %4475 = vmatpush1.msra.mxu0 0.0
        %4476 = vmatprep.subr.mxu0 0.0
        %4477 = vmatpush1.msra.mxu0 0.0
        %4478 = vmatprep.subr.mxu0 0.0
        %4479 = vmatpush1.msra.mxu0 0.0
        %4480 = vmatprep.subr.mxu0 0.0
        %4481 = vmatpush1.msra.mxu0 0.0
        %4482 = vmatprep.subr.mxu0 0.0
        %4483 = vmatpush1.msra.mxu0 0.0
        %4484 = vmatprep.subr.mxu0 0.0
        %4485 = vmatpush1.msra.mxu0 0.0
        %4486 = vmatprep.subr.mxu0 0.0
        %4487 = vmatpush1.msra.mxu0 0.0
        %4488 = vmatprep.subr.mxu0 0.0
        %4489 = vmatpush1.msra.mxu0 0.0
        %4490 = vmatprep.subr.mxu0 0.0
        %4491 = vmatpush1.msra.mxu0 0.0
        %4492 = vmatprep.subr.mxu0 0.0
        %4493 = vmatpush1.msra.mxu0 0.0
        %4494 = vmatprep.subr.mxu0 0.0
        %4495 = vmatpush1.msra.mxu0 0.0
        %4496 = vmatprep.subr.mxu0 0.0
        %4497 = vmatpush1.msra.mxu0 0.0
        %4498 = vmatprep.subr.mxu0 0.0
        %4499 = vmatpush1.msra.mxu0 0.0
        %4500 = vmatprep.subr.mxu0 0.0
        %4501 = vmatpush1.msra.mxu0 %v4460
        %4502 = vmatprep.subr.mxu0 0.0
        %4503 = vmatpush2.msra.mxu0 0.0
        %4504 = vmatprep.subr.mxu0 0.0
        %4505 = vmatpush2.msra.mxu0 0.0
        %4506 = vmatprep.subr.mxu0 0.0
        %4507 = vmatpush2.msra.mxu0 0.0
        %4508 = vmatprep.subr.mxu0 0.0
        %4509 = vmatpush2.msra.mxu0 0.0
        %4510 = vmatprep.subr.mxu0 0.0
        %4511 = vmatpush2.msra.mxu0 0.0
        %4512 = vmatprep.subr.mxu0 0.0
        %4513 = vmatpush2.msra.mxu0 0.0
        %4514 = vmatprep.subr.mxu0 0.0
        %4515 = vmatpush2.msra.mxu0 0.0
        %4516 = vmatprep.subr.mxu0 0.0
        %4517 = vmatpush2.msra.mxu0 0.0
        %4518 = vmatprep.subr.mxu0 0.0
        %4519 = vmatpush2.msra.mxu0 0.0
        %4520 = vmatprep.subr.mxu0 0.0
        %4521 = vmatpush2.msra.mxu0 0.0
        %4522 = vmatprep.subr.mxu0 0.0
        %4523 = vmatpush2.msra.mxu0 0.0
        %4524 = vmatprep.subr.mxu0 0.0
        %4525 = vmatpush2.msra.mxu0 0.0
        %4526 = vmatprep.subr.mxu0 0.0
        %4527 = vmatpush2.msra.mxu0 0.0
        %4528 = vmatprep.subr.mxu0 0.0
        %4529 = vmatpush2.msra.mxu0 0.0
        %4530 = vmatprep.subr.mxu0 0.0
        %4531 = vmatpush2.msra.mxu0 0.0
        %4532 = vmatprep.subr.mxu0 0.0
        %4533 = vmatpush2.msra.mxu0 0.0
        %4534 = vmatprep.mubr.f32.mxu0 0.0
        %4535 = vmatmul.mubr.f32.gmra.mxu0 %v4468
        %v4536 = vpop.f32.mrf.mxu0
        %v4537 = vadd.f32 0.0, %v4536
        %v4538 = vpop.f32.mrf.mxu0
        %4539 = vdwg.mxu0
        %v4540 = vadd.f32 %v4389, %v4537
        %v4541 = vld [vmem:[#allocation32] sm:$0x1]
        %v4543 = vlaneseq
        %v4544 = vshrl.u32 %v4543, 7
        %v4545 = vsub.s32 0, %v4544
        %v4546 = vrot.slane %v4541, %v4545
        %v4548 = vmul.f32 %v4540, %v4546
        %v4549 = vld [vmem:[#allocation34] sm:$0x1]
        %v4551 = vlaneseq
        %v4552 = vshrl.u32 %v4551, 7
        %v4553 = vsub.s32 0, %v4552
        %v4554 = vrot.slane %v4549, %v4553
        %v4556 = vadd.f32 %v4548, %v4554
        %v4557 = vmax.f32 %v4556, 0.0
        %v4558 = vadd.f32 %v3778, %v4557
        %v4559 = vld [vmem:[#allocation44] sm:$0xff]
        %v4560 = vld [vmem:[#allocation44 + $0x8] sm:$0xff]
        %v4561 = vld [vmem:[#allocation44 + $0x10] sm:$0xff]
        %v4562 = vld [vmem:[#allocation44 + $0x18] sm:$0xff]
        %v4563 = vld [vmem:[#allocation44 + $0x20] sm:$0xff]
        %v4564 = vld [vmem:[#allocation44 + $0x28] sm:$0xff]
        %v4565 = vld [vmem:[#allocation44 + $0x30] sm:$0xff]
        %v4566 = vld [vmem:[#allocation44 + $0x38] sm:$0xff]
        %v4568 = vsel %vm1989, %v4558, 0
        %4570 = vmatprep.subr.mxu0 0.0
        %4571 = vmatpush1.msra.mxu0 0.0
        %4572 = vmatprep.subr.mxu0 0.0
        %4573 = vmatpush1.msra.mxu0 0.0
        %4574 = vmatprep.subr.mxu0 0.0
        %4575 = vmatpush1.msra.mxu0 0.0
        %4576 = vmatprep.subr.mxu0 0.0
        %4577 = vmatpush1.msra.mxu0 0.0
        %4578 = vmatprep.subr.mxu0 0.0
        %4579 = vmatpush1.msra.mxu0 0.0
        %4580 = vmatprep.subr.mxu0 0.0
        %4581 = vmatpush1.msra.mxu0 0.0
        %4582 = vmatprep.subr.mxu0 0.0
        %4583 = vmatpush1.msra.mxu0 0.0
        %4584 = vmatprep.subr.mxu0 0.0
        %4585 = vmatpush1.msra.mxu0 0.0
        %4586 = vmatprep.subr.mxu0 0.0
        %4587 = vmatpush1.msra.mxu0 %v4566
        %4588 = vmatprep.subr.mxu0 0.0
        %4589 = vmatpush1.msra.mxu0 %v4565
        %4590 = vmatprep.subr.mxu0 0.0
        %4591 = vmatpush1.msra.mxu0 %v4564
        %4592 = vmatprep.subr.mxu0 0.0
        %4593 = vmatpush1.msra.mxu0 %v4563
        %4594 = vmatprep.subr.mxu0 0.0
        %4595 = vmatpush1.msra.mxu0 %v4562
        %4596 = vmatprep.subr.mxu0 0.0
        %4597 = vmatpush1.msra.mxu0 %v4561
        %4598 = vmatprep.subr.mxu0 0.0
        %4599 = vmatpush1.msra.mxu0 %v4560
        %4600 = vmatprep.subr.mxu0 0.0
        %4601 = vmatpush1.msra.mxu0 %v4559
        %4602 = vmatprep.subr.mxu0 0.0
        %4603 = vmatpush2.msra.mxu0 0.0
        %4604 = vmatprep.subr.mxu0 0.0
        %4605 = vmatpush2.msra.mxu0 0.0
        %4606 = vmatprep.subr.mxu0 0.0
        %4607 = vmatpush2.msra.mxu0 0.0
        %4608 = vmatprep.subr.mxu0 0.0
        %4609 = vmatpush2.msra.mxu0 0.0
        %4610 = vmatprep.subr.mxu0 0.0
        %4611 = vmatpush2.msra.mxu0 0.0
        %4612 = vmatprep.subr.mxu0 0.0
        %4613 = vmatpush2.msra.mxu0 0.0
        %4614 = vmatprep.subr.mxu0 0.0
        %4615 = vmatpush2.msra.mxu0 0.0
        %4616 = vmatprep.subr.mxu0 0.0
        %4617 = vmatpush2.msra.mxu0 0.0
        %4618 = vmatprep.subr.mxu0 0.0
        %4619 = vmatpush2.msra.mxu0 0.0
        %4620 = vmatprep.subr.mxu0 0.0
        %4621 = vmatpush2.msra.mxu0 0.0
        %4622 = vmatprep.subr.mxu0 0.0
        %4623 = vmatpush2.msra.mxu0 0.0
        %4624 = vmatprep.subr.mxu0 0.0
        %4625 = vmatpush2.msra.mxu0 0.0
        %4626 = vmatprep.subr.mxu0 0.0
        %4627 = vmatpush2.msra.mxu0 0.0
        %4628 = vmatprep.subr.mxu0 0.0
        %4629 = vmatpush2.msra.mxu0 0.0
        %4630 = vmatprep.subr.mxu0 0.0
        %4631 = vmatpush2.msra.mxu0 0.0
        %4632 = vmatprep.subr.mxu0 0.0
        %4633 = vmatpush2.msra.mxu0 0.0
        %4634 = vmatprep.mubr.f32.mxu0 0.0
        %4635 = vmatmul.mubr.f32.gmra.mxu0 %v4568
        %v4636 = vpop.f32.mrf.mxu0
        %v4637 = vadd.f32 0.0, %v4636
        %v4638 = vpop.f32.mrf.mxu0
        %4639 = vdwg.mxu0
        %v4640 = vld [vmem:[%s101] sm:$0xff]
        %v4641 = vld [vmem:[%s101 + $0x8] sm:$0xff]
        %v4643 = vsel %vm3118, %v4640, 0
        %v4646 = vsel %vm3118, %v4641, 0
        %4648 = vmatprep.subr.mxu0 0.0
        %4649 = vmatpush1.msra.mxu0 0.0
        %4650 = vmatprep.subr.mxu0 0.0
        %4651 = vmatpush1.msra.mxu0 0.0
        %4652 = vmatprep.subr.mxu0 0.0
        %4653 = vmatpush1.msra.mxu0 0.0
        %4654 = vmatprep.subr.mxu0 0.0
        %4655 = vmatpush1.msra.mxu0 0.0
        %4656 = vmatprep.subr.mxu0 0.0
        %4657 = vmatpush1.msra.mxu0 0.0
        %4658 = vmatprep.subr.mxu0 0.0
        %4659 = vmatpush1.msra.mxu0 0.0
        %4660 = vmatprep.subr.mxu0 0.0
        %4661 = vmatpush1.msra.mxu0 0.0
        %4662 = vmatprep.subr.mxu0 0.0
        %4663 = vmatpush1.msra.mxu0 0.0
        %4664 = vmatprep.subr.mxu0 0.0
        %4665 = vmatpush1.msra.mxu0 0.0
        %4666 = vmatprep.subr.mxu0 0.0
        %4667 = vmatpush1.msra.mxu0 0.0
        %4668 = vmatprep.subr.mxu0 0.0
        %4669 = vmatpush1.msra.mxu0 0.0
        %4670 = vmatprep.subr.mxu0 0.0
        %4671 = vmatpush1.msra.mxu0 0.0
        %4672 = vmatprep.subr.mxu0 0.0
        %4673 = vmatpush1.msra.mxu0 0.0
        %4674 = vmatprep.subr.mxu0 0.0
        %4675 = vmatpush1.msra.mxu0 0.0
        %4676 = vmatprep.subr.mxu0 0.0
        %4677 = vmatpush1.msra.mxu0 0.0
        %4678 = vmatprep.subr.mxu0 0.0
        %4679 = vmatpush1.msra.mxu0 %v4637
        %4680 = vmatprep.subr.mxu0 0.0
        %4681 = vmatpush2.msra.mxu0 0.0
        %4682 = vmatprep.subr.mxu0 0.0
        %4683 = vmatpush2.msra.mxu0 0.0
        %4684 = vmatprep.subr.mxu0 0.0
        %4685 = vmatpush2.msra.mxu0 0.0
        %4686 = vmatprep.subr.mxu0 0.0
        %4687 = vmatpush2.msra.mxu0 0.0
        %4688 = vmatprep.subr.mxu0 0.0
        %4689 = vmatpush2.msra.mxu0 0.0
        %4690 = vmatprep.subr.mxu0 0.0
        %4691 = vmatpush2.msra.mxu0 0.0
        %4692 = vmatprep.subr.mxu0 0.0
        %4693 = vmatpush2.msra.mxu0 0.0
        %4694 = vmatprep.subr.mxu0 0.0
        %4695 = vmatpush2.msra.mxu0 0.0
        %4696 = vmatprep.subr.mxu0 0.0
        %4697 = vmatpush2.msra.mxu0 0.0
        %4698 = vmatprep.subr.mxu0 0.0
        %4699 = vmatpush2.msra.mxu0 0.0
        %4700 = vmatprep.subr.mxu0 0.0
        %4701 = vmatpush2.msra.mxu0 0.0
        %4702 = vmatprep.subr.mxu0 0.0
        %4703 = vmatpush2.msra.mxu0 0.0
        %4704 = vmatprep.subr.mxu0 0.0
        %4705 = vmatpush2.msra.mxu0 0.0
        %4706 = vmatprep.subr.mxu0 0.0
        %4707 = vmatpush2.msra.mxu0 0.0
        %4708 = vmatprep.subr.mxu0 0.0
        %4709 = vmatpush2.msra.mxu0 0.0
        %4710 = vmatprep.subr.mxu0 0.0
        %4711 = vmatpush2.msra.mxu0 0.0
        %4712 = vmatprep.mubr.f32.mxu0 0.0
        %4713 = vmatmul.mubr.f32.gmra.mxu0 %v4643
        %v4714 = vpop.f32.mrf.mxu0
        %v4715 = vadd.f32 0.0, %v4714
        %v4716 = vpop.f32.mrf.mxu0
        %4717 = vmatprep.mubr.f32.mxu0 0.0
        %4718 = vmatmul.mubr.f32.gmra.mxu0 %v4646
        %v4719 = vpop.f32.mrf.mxu0
        %v4720 = vadd.f32 0.0, %v4719
        %v4721 = vpop.f32.mrf.mxu0
        %4722 = vdwg.mxu0
        %v4723 = vpack.c.bf16 %v4720, %v4715
        %v4724 = vld [vmem:[%s85] sm:$0xf]
        %v4725 = vld [vmem:[%s85 + $0x4] sm:$0xf]
        %v4726 = vld [vmem:[%s85 + $0x8] sm:$0xf]
        %v4727 = vld [vmem:[%s85 + $0xc] sm:$0xf]
        %v4728 = vld [vmem:[%s85 + $0x10] sm:$0xf]
        %v4729 = vld [vmem:[%s85 + $0x14] sm:$0xf]
        %v4730 = vld [vmem:[%s85 + $0x18] sm:$0xf]
        %v4731 = vld [vmem:[%s85 + $0x1c] sm:$0xf]
        %v4732 = vld [vmem:[%s85 + $0x20] sm:$0xf]
        %v4733 = vld [vmem:[%s85 + $0x24] sm:$0xf]
        %v4734 = vld [vmem:[%s85 + $0x28] sm:$0xf]
        %v4735 = vld [vmem:[%s85 + $0x2c] sm:$0xf]
        %v4736 = vld [vmem:[%s85 + $0x30] sm:$0xf]
        %v4737 = vld [vmem:[%s85 + $0x34] sm:$0xf]
        %v4738 = vld [vmem:[%s85 + $0x38] sm:$0xf]
        %v4739 = vld [vmem:[%s85 + $0x3c] sm:$0xf]
        %v4756 = vunpack.c.l.b16 %v4724
        %v4757 = vunpack.c.l.b16 %v4725
        %v4758 = vunpack.c.l.b16 %v4726
        %v4759 = vunpack.c.l.b16 %v4727
        %v4760 = vunpack.c.l.b16 %v4728
        %v4761 = vunpack.c.l.b16 %v4729
        %v4762 = vunpack.c.l.b16 %v4730
        %v4763 = vunpack.c.l.b16 %v4731
        %v4764 = vunpack.c.l.b16 %v4732
        %v4765 = vunpack.c.l.b16 %v4733
        %v4766 = vunpack.c.l.b16 %v4734
        %v4767 = vunpack.c.l.b16 %v4735
        %v4768 = vunpack.c.l.b16 %v4736
        %v4769 = vunpack.c.l.b16 %v4737
        %v4770 = vunpack.c.l.b16 %v4738
        %v4771 = vunpack.c.l.b16 %v4739
        %v4772 = vpack.c.b16 %v4757, %v4756
        %v4773 = vpack.c.b16 %v4759, %v4758
        %v4774 = vpack.c.b16 %v4761, %v4760
        %v4775 = vpack.c.b16 %v4763, %v4762
        %v4776 = vpack.c.b16 %v4765, %v4764
        %v4777 = vpack.c.b16 %v4767, %v4766
        %v4778 = vpack.c.b16 %v4769, %v4768
        %v4779 = vpack.c.b16 %v4771, %v4770
        %4788 = vmatprep.subr.bf16.mxu0 0
        %4789 = vmatpush1.bf16.msra.mxu0 %v4779
        %4790 = vmatprep.subr.bf16.mxu0 0
        %4791 = vmatpush1.bf16.msra.mxu0 %v4778
        %4792 = vmatprep.subr.bf16.mxu0 0
        %4793 = vmatpush1.bf16.msra.mxu0 %v4777
        %4794 = vmatprep.subr.bf16.mxu0 0
        %4795 = vmatpush1.bf16.msra.mxu0 %v4776
        %4796 = vmatprep.subr.bf16.mxu0 0
        %4797 = vmatpush1.bf16.msra.mxu0 %v4775
        %4798 = vmatprep.subr.bf16.mxu0 0
        %4799 = vmatpush1.bf16.msra.mxu0 %v4774
        %4800 = vmatprep.subr.bf16.mxu0 0
        %4801 = vmatpush1.bf16.msra.mxu0 %v4773
        %4802 = vmatprep.subr.bf16.mxu0 0
        %4803 = vmatpush1.bf16.msra.mxu0 %v4772
        %4804 = vmatprep.subr.bf16.mxu0 0
        %4805 = vmatpush2.bf16.msra.mxu0 0
        %4806 = vmatprep.subr.bf16.mxu0 0
        %4807 = vmatpush2.bf16.msra.mxu0 0
        %4808 = vmatprep.subr.bf16.mxu0 0
        %4809 = vmatpush2.bf16.msra.mxu0 0
        %4810 = vmatprep.subr.bf16.mxu0 0
        %4811 = vmatpush2.bf16.msra.mxu0 0
        %4812 = vmatprep.subr.bf16.mxu0 0
        %4813 = vmatpush2.bf16.msra.mxu0 0
        %4814 = vmatprep.subr.bf16.mxu0 0
        %4815 = vmatpush2.bf16.msra.mxu0 0
        %4816 = vmatprep.subr.bf16.mxu0 0
        %4817 = vmatpush2.bf16.msra.mxu0 0
        %4818 = vmatprep.subr.bf16.mxu0 0
        %4819 = vmatpush2.bf16.msra.mxu0 0
        %4820 = vmatprep.mubr.bf16.mxu0 0
        %4821 = vmatmul.mubr.bf16.gmra.mxu0 %v4723
        %v4822 = vpop.f32.mrf.mxu0
        %v4823 = vadd.f32 0.0, %v4822
        %v4824 = vpop.f32.mrf.mxu0
        %v4825 = vpop.f32.mrf.mxu0
        %v4826 = vadd.f32 0.0, %v4825
        %v4827 = vpop.f32.mrf.mxu0
        %4828 = vdwg.mxu0
        %v4829 = vld [vmem:[#allocation35] sm:$0xff]
        %v4830 = vld [vmem:[#allocation35 + $0x8] sm:$0xff]
        %s4831 = scalar_lea.vmem %s85, 64
        %v4832 = vld [vmem:[%s4831] sm:$0xf]
        %v4833 = vld [vmem:[%s4831 + $0x4] sm:$0xf]
        %v4834 = vld [vmem:[%s4831 + $0x8] sm:$0xf]
        %v4835 = vld [vmem:[%s4831 + $0xc] sm:$0xf]
        %v4836 = vld [vmem:[%s4831 + $0x10] sm:$0xf]
        %v4837 = vld [vmem:[%s4831 + $0x14] sm:$0xf]
        %v4838 = vld [vmem:[%s4831 + $0x18] sm:$0xf]
        %v4839 = vld [vmem:[%s4831 + $0x1c] sm:$0xf]
        %v4840 = vld [vmem:[%s4831 + $0x20] sm:$0xf]
        %v4841 = vld [vmem:[%s4831 + $0x24] sm:$0xf]
        %v4842 = vld [vmem:[%s4831 + $0x28] sm:$0xf]
        %v4843 = vld [vmem:[%s4831 + $0x2c] sm:$0xf]
        %v4844 = vld [vmem:[%s4831 + $0x30] sm:$0xf]
        %v4845 = vld [vmem:[%s4831 + $0x34] sm:$0xf]
        %v4846 = vld [vmem:[%s4831 + $0x38] sm:$0xf]
        %v4847 = vld [vmem:[%s4831 + $0x3c] sm:$0xf]
        %v4864 = vunpack.c.l.b16 %v4832
        %v4865 = vunpack.c.l.b16 %v4833
        %v4866 = vunpack.c.l.b16 %v4834
        %v4867 = vunpack.c.l.b16 %v4835
        %v4868 = vunpack.c.l.b16 %v4836
        %v4869 = vunpack.c.l.b16 %v4837
        %v4870 = vunpack.c.l.b16 %v4838
        %v4871 = vunpack.c.l.b16 %v4839
        %v4872 = vunpack.c.l.b16 %v4840
        %v4873 = vunpack.c.l.b16 %v4841
        %v4874 = vunpack.c.l.b16 %v4842
        %v4875 = vunpack.c.l.b16 %v4843
        %v4876 = vunpack.c.l.b16 %v4844
        %v4877 = vunpack.c.l.b16 %v4845
        %v4878 = vunpack.c.l.b16 %v4846
        %v4879 = vunpack.c.l.b16 %v4847
        %v4880 = vpack.c.b16 %v4865, %v4864
        %v4881 = vpack.c.b16 %v4867, %v4866
        %v4882 = vpack.c.b16 %v4869, %v4868
        %v4883 = vpack.c.b16 %v4871, %v4870
        %v4884 = vpack.c.b16 %v4873, %v4872
        %v4885 = vpack.c.b16 %v4875, %v4874
        %v4886 = vpack.c.b16 %v4877, %v4876
        %v4887 = vpack.c.b16 %v4879, %v4878
        %4896 = vmatprep.subr.bf16.mxu0 0
        %4897 = vmatpush1.bf16.msra.mxu0 %v4887
        %4898 = vmatprep.subr.bf16.mxu0 0
        %4899 = vmatpush1.bf16.msra.mxu0 %v4886
        %4900 = vmatprep.subr.bf16.mxu0 0
        %4901 = vmatpush1.bf16.msra.mxu0 %v4885
        %4902 = vmatprep.subr.bf16.mxu0 0
        %4903 = vmatpush1.bf16.msra.mxu0 %v4884
        %4904 = vmatprep.subr.bf16.mxu0 0
        %4905 = vmatpush1.bf16.msra.mxu0 %v4883
        %4906 = vmatprep.subr.bf16.mxu0 0
        %4907 = vmatpush1.bf16.msra.mxu0 %v4882
        %4908 = vmatprep.subr.bf16.mxu0 0
        %4909 = vmatpush1.bf16.msra.mxu0 %v4881
        %4910 = vmatprep.subr.bf16.mxu0 0
        %4911 = vmatpush1.bf16.msra.mxu0 %v4880
        %4912 = vmatprep.subr.bf16.mxu0 0
        %4913 = vmatpush2.bf16.msra.mxu0 0
        %4914 = vmatprep.subr.bf16.mxu0 0
        %4915 = vmatpush2.bf16.msra.mxu0 0
        %4916 = vmatprep.subr.bf16.mxu0 0
        %4917 = vmatpush2.bf16.msra.mxu0 0
        %4918 = vmatprep.subr.bf16.mxu0 0
        %4919 = vmatpush2.bf16.msra.mxu0 0
        %4920 = vmatprep.subr.bf16.mxu0 0
        %4921 = vmatpush2.bf16.msra.mxu0 0
        %4922 = vmatprep.subr.bf16.mxu0 0
        %4923 = vmatpush2.bf16.msra.mxu0 0
        %4924 = vmatprep.subr.bf16.mxu0 0
        %4925 = vmatpush2.bf16.msra.mxu0 0
        %4926 = vmatprep.subr.bf16.mxu0 0
        %4927 = vmatpush2.bf16.msra.mxu0 0
        %4928 = vmatprep.mubr.bf16.mxu0 0
        %4929 = vmatmul.mubr.bf16.gmra.mxu0 %v4723
        %v4930 = vpop.f32.mrf.mxu0
        %v4931 = vadd.f32 0.0, %v4930
        %v4932 = vpop.f32.mrf.mxu0
        %v4933 = vpop.f32.mrf.mxu0
        %v4934 = vadd.f32 0.0, %v4933
        %v4935 = vpop.f32.mrf.mxu0
        %4936 = vdwg.mxu0
        %vm4937 = vcmask 130048
        %v4939 = vsel %vm4937, %v4829, 0
        %v4942 = vsel %vm4937, %v4830, 0
        %4944 = vmatprep.subr.mxu0 0.0
        %4945 = vmatpush1.msra.mxu0 0.0
        %4946 = vmatprep.subr.mxu0 0.0
        %4947 = vmatpush1.msra.mxu0 0.0
        %4948 = vmatprep.subr.mxu0 0.0
        %4949 = vmatpush1.msra.mxu0 0.0
        %4950 = vmatprep.subr.mxu0 0.0
        %4951 = vmatpush1.msra.mxu0 0.0
        %4952 = vmatprep.subr.mxu0 0.0
        %4953 = vmatpush1.msra.mxu0 0.0
        %4954 = vmatprep.subr.mxu0 0.0
        %4955 = vmatpush1.msra.mxu0 0.0
        %4956 = vmatprep.subr.mxu0 0.0
        %4957 = vmatpush1.msra.mxu0 0.0
        %4958 = vmatprep.subr.mxu0 0.0
        %4959 = vmatpush1.msra.mxu0 0.0
        %4960 = vmatprep.subr.mxu0 0.0
        %4961 = vmatpush1.msra.mxu0 0.0
        %4962 = vmatprep.subr.mxu0 0.0
        %4963 = vmatpush1.msra.mxu0 0.0
        %4964 = vmatprep.subr.mxu0 0.0
        %4965 = vmatpush1.msra.mxu0 0.0
        %4966 = vmatprep.subr.mxu0 0.0
        %4967 = vmatpush1.msra.mxu0 0.0
        %4968 = vmatprep.subr.mxu0 0.0
        %4969 = vmatpush1.msra.mxu0 0.0
        %4970 = vmatprep.subr.mxu0 0.0
        %4971 = vmatpush1.msra.mxu0 0.0
        %4972 = vmatprep.subr.mxu0 0.0
        %4973 = vmatpush1.msra.mxu0 %v4826
        %4974 = vmatprep.subr.mxu0 0.0
        %4975 = vmatpush1.msra.mxu0 %v4823
        %4976 = vmatprep.subr.mxu0 0.0
        %4977 = vmatpush2.msra.mxu0 0.0
        %4978 = vmatprep.subr.mxu0 0.0
        %4979 = vmatpush2.msra.mxu0 0.0
        %4980 = vmatprep.subr.mxu0 0.0
        %4981 = vmatpush2.msra.mxu0 0.0
        %4982 = vmatprep.subr.mxu0 0.0
        %4983 = vmatpush2.msra.mxu0 0.0
        %4984 = vmatprep.subr.mxu0 0.0
        %4985 = vmatpush2.msra.mxu0 0.0
        %4986 = vmatprep.subr.mxu0 0.0
        %4987 = vmatpush2.msra.mxu0 0.0
        %4988 = vmatprep.subr.mxu0 0.0
        %4989 = vmatpush2.msra.mxu0 0.0
        %4990 = vmatprep.subr.mxu0 0.0
        %4991 = vmatpush2.msra.mxu0 0.0
        %4992 = vmatprep.subr.mxu0 0.0
        %4993 = vmatpush2.msra.mxu0 0.0
        %4994 = vmatprep.subr.mxu0 0.0
        %4995 = vmatpush2.msra.mxu0 0.0
        %4996 = vmatprep.subr.mxu0 0.0
        %4997 = vmatpush2.msra.mxu0 0.0
        %4998 = vmatprep.subr.mxu0 0.0
        %4999 = vmatpush2.msra.mxu0 0.0
        %5000 = vmatprep.subr.mxu0 0.0
        %5001 = vmatpush2.msra.mxu0 0.0
        %5002 = vmatprep.subr.mxu0 0.0
        %5003 = vmatpush2.msra.mxu0 0.0
        %5004 = vmatprep.subr.mxu0 0.0
        %5005 = vmatpush2.msra.mxu0 0.0
        %5006 = vmatprep.subr.mxu0 0.0
        %5007 = vmatpush2.msra.mxu0 0.0
        %5008 = vmatprep.mubr.f32.mxu0 0.0
        %5009 = vmatmul.mubr.f32.gmra.mxu0 %v4939
        %v5010 = vpop.f32.mrf.mxu0
        %v5011 = vadd.f32 %v4931, %v5010
        %v5012 = vpop.f32.mrf.mxu0
        %5013 = vmatprep.mubr.f32.mxu0 0.0
        %5014 = vmatmul.mubr.f32.gmra.mxu0 %v4942
        %v5015 = vpop.f32.mrf.mxu0
        %v5016 = vadd.f32 %v4934, %v5015
        %v5017 = vpop.f32.mrf.mxu0
        %5018 = vdwg.mxu0
        %s5019 = scalar_lea.vmem %s85, 128
        %v5020 = vld [vmem:[%s5019] sm:$0xf]
        %v5021 = vld [vmem:[%s5019 + $0x4] sm:$0xf]
        %v5022 = vld [vmem:[%s5019 + $0x8] sm:$0xf]
        %v5023 = vld [vmem:[%s5019 + $0xc] sm:$0xf]
        %v5024 = vld [vmem:[%s5019 + $0x10] sm:$0xf]
        %v5025 = vld [vmem:[%s5019 + $0x14] sm:$0xf]
        %v5026 = vld [vmem:[%s5019 + $0x18] sm:$0xf]
        %v5027 = vld [vmem:[%s5019 + $0x1c] sm:$0xf]
        %v5028 = vld [vmem:[%s5019 + $0x20] sm:$0xf]
        %v5029 = vld [vmem:[%s5019 + $0x24] sm:$0xf]
        %v5030 = vld [vmem:[%s5019 + $0x28] sm:$0xf]
        %v5031 = vld [vmem:[%s5019 + $0x2c] sm:$0xf]
        %v5032 = vld [vmem:[%s5019 + $0x30] sm:$0xf]
        %v5033 = vld [vmem:[%s5019 + $0x34] sm:$0xf]
        %v5034 = vld [vmem:[%s5019 + $0x38] sm:$0xf]
        %v5035 = vld [vmem:[%s5019 + $0x3c] sm:$0xf]
        %v5052 = vunpack.c.l.b16 %v5020
        %v5053 = vunpack.c.l.b16 %v5021
        %v5054 = vunpack.c.l.b16 %v5022
        %v5055 = vunpack.c.l.b16 %v5023
        %v5056 = vunpack.c.l.b16 %v5024
        %v5057 = vunpack.c.l.b16 %v5025
        %v5058 = vunpack.c.l.b16 %v5026
        %v5059 = vunpack.c.l.b16 %v5027
        %v5060 = vunpack.c.l.b16 %v5028
        %v5061 = vunpack.c.l.b16 %v5029
        %v5062 = vunpack.c.l.b16 %v5030
        %v5063 = vunpack.c.l.b16 %v5031
        %v5064 = vunpack.c.l.b16 %v5032
        %v5065 = vunpack.c.l.b16 %v5033
        %v5066 = vunpack.c.l.b16 %v5034
        %v5067 = vunpack.c.l.b16 %v5035
        %v5068 = vpack.c.b16 %v5053, %v5052
        %v5069 = vpack.c.b16 %v5055, %v5054
        %v5070 = vpack.c.b16 %v5057, %v5056
        %v5071 = vpack.c.b16 %v5059, %v5058
        %v5072 = vpack.c.b16 %v5061, %v5060
        %v5073 = vpack.c.b16 %v5063, %v5062
        %v5074 = vpack.c.b16 %v5065, %v5064
        %v5075 = vpack.c.b16 %v5067, %v5066
        %5084 = vmatprep.subr.bf16.mxu0 0
        %5085 = vmatpush1.bf16.msra.mxu0 %v5075
        %5086 = vmatprep.subr.bf16.mxu0 0
        %5087 = vmatpush1.bf16.msra.mxu0 %v5074
        %5088 = vmatprep.subr.bf16.mxu0 0
        %5089 = vmatpush1.bf16.msra.mxu0 %v5073
        %5090 = vmatprep.subr.bf16.mxu0 0
        %5091 = vmatpush1.bf16.msra.mxu0 %v5072
        %5092 = vmatprep.subr.bf16.mxu0 0
        %5093 = vmatpush1.bf16.msra.mxu0 %v5071
        %5094 = vmatprep.subr.bf16.mxu0 0
        %5095 = vmatpush1.bf16.msra.mxu0 %v5070
        %5096 = vmatprep.subr.bf16.mxu0 0
        %5097 = vmatpush1.bf16.msra.mxu0 %v5069
        %5098 = vmatprep.subr.bf16.mxu0 0
        %5099 = vmatpush1.bf16.msra.mxu0 %v5068
        %5100 = vmatprep.subr.bf16.mxu0 0
        %5101 = vmatpush2.bf16.msra.mxu0 0
        %5102 = vmatprep.subr.bf16.mxu0 0
        %5103 = vmatpush2.bf16.msra.mxu0 0
        %5104 = vmatprep.subr.bf16.mxu0 0
        %5105 = vmatpush2.bf16.msra.mxu0 0
        %5106 = vmatprep.subr.bf16.mxu0 0
        %5107 = vmatpush2.bf16.msra.mxu0 0
        %5108 = vmatprep.subr.bf16.mxu0 0
        %5109 = vmatpush2.bf16.msra.mxu0 0
        %5110 = vmatprep.subr.bf16.mxu0 0
        %5111 = vmatpush2.bf16.msra.mxu0 0
        %5112 = vmatprep.subr.bf16.mxu0 0
        %5113 = vmatpush2.bf16.msra.mxu0 0
        %5114 = vmatprep.subr.bf16.mxu0 0
        %5115 = vmatpush2.bf16.msra.mxu0 0
        %5116 = vmatprep.mubr.bf16.mxu0 0
        %5117 = vmatmul.mubr.bf16.gmra.mxu0 %v4723
        %v5118 = vpop.f32.mrf.mxu0
        %v5119 = vadd.f32 0.0, %v5118
        %v5120 = vpop.f32.mrf.mxu0
        %v5121 = vpop.f32.mrf.mxu0
        %v5122 = vadd.f32 0.0, %v5121
        %v5123 = vpop.f32.mrf.mxu0
        %5124 = vdwg.mxu0
        %s5125 = scalar_lea.vmem [#allocation35], 16
        %v5126 = vld [vmem:[%s5125] sm:$0xff]
        %v5127 = vld [vmem:[%s5125 + $0x8] sm:$0xff]
        %v5129 = vsel %vm4937, %v5126, 0
        %v5132 = vsel %vm4937, %v5127, 0
        %5134 = vmatprep.subr.mxu0 0.0
        %5135 = vmatpush1.msra.mxu0 0.0
        %5136 = vmatprep.subr.mxu0 0.0
        %5137 = vmatpush1.msra.mxu0 0.0
        %5138 = vmatprep.subr.mxu0 0.0
        %5139 = vmatpush1.msra.mxu0 0.0
        %5140 = vmatprep.subr.mxu0 0.0
        %5141 = vmatpush1.msra.mxu0 0.0
        %5142 = vmatprep.subr.mxu0 0.0
        %5143 = vmatpush1.msra.mxu0 0.0
        %5144 = vmatprep.subr.mxu0 0.0
        %5145 = vmatpush1.msra.mxu0 0.0
        %5146 = vmatprep.subr.mxu0 0.0
        %5147 = vmatpush1.msra.mxu0 0.0
        %5148 = vmatprep.subr.mxu0 0.0
        %5149 = vmatpush1.msra.mxu0 0.0
        %5150 = vmatprep.subr.mxu0 0.0
        %5151 = vmatpush1.msra.mxu0 0.0
        %5152 = vmatprep.subr.mxu0 0.0
        %5153 = vmatpush1.msra.mxu0 0.0
        %5154 = vmatprep.subr.mxu0 0.0
        %5155 = vmatpush1.msra.mxu0 0.0
        %5156 = vmatprep.subr.mxu0 0.0
        %5157 = vmatpush1.msra.mxu0 0.0
        %5158 = vmatprep.subr.mxu0 0.0
        %5159 = vmatpush1.msra.mxu0 0.0
        %5160 = vmatprep.subr.mxu0 0.0
        %5161 = vmatpush1.msra.mxu0 0.0
        %5162 = vmatprep.subr.mxu0 0.0
        %5163 = vmatpush1.msra.mxu0 %v5122
        %5164 = vmatprep.subr.mxu0 0.0
        %5165 = vmatpush1.msra.mxu0 %v5119
        %5166 = vmatprep.subr.mxu0 0.0
        %5167 = vmatpush2.msra.mxu0 0.0
        %5168 = vmatprep.subr.mxu0 0.0
        %5169 = vmatpush2.msra.mxu0 0.0
        %5170 = vmatprep.subr.mxu0 0.0
        %5171 = vmatpush2.msra.mxu0 0.0
        %5172 = vmatprep.subr.mxu0 0.0
        %5173 = vmatpush2.msra.mxu0 0.0
        %5174 = vmatprep.subr.mxu0 0.0
        %5175 = vmatpush2.msra.mxu0 0.0
        %5176 = vmatprep.subr.mxu0 0.0
        %5177 = vmatpush2.msra.mxu0 0.0
        %5178 = vmatprep.subr.mxu0 0.0
        %5179 = vmatpush2.msra.mxu0 0.0
        %5180 = vmatprep.subr.mxu0 0.0
        %5181 = vmatpush2.msra.mxu0 0.0
        %5182 = vmatprep.subr.mxu0 0.0
        %5183 = vmatpush2.msra.mxu0 0.0
        %5184 = vmatprep.subr.mxu0 0.0
        %5185 = vmatpush2.msra.mxu0 0.0
        %5186 = vmatprep.subr.mxu0 0.0
        %5187 = vmatpush2.msra.mxu0 0.0
        %5188 = vmatprep.subr.mxu0 0.0
        %5189 = vmatpush2.msra.mxu0 0.0
        %5190 = vmatprep.subr.mxu0 0.0
        %5191 = vmatpush2.msra.mxu0 0.0
        %5192 = vmatprep.subr.mxu0 0.0
        %5193 = vmatpush2.msra.mxu0 0.0
        %5194 = vmatprep.subr.mxu0 0.0
        %5195 = vmatpush2.msra.mxu0 0.0
        %5196 = vmatprep.subr.mxu0 0.0
        %5197 = vmatpush2.msra.mxu0 0.0
        %5198 = vmatprep.mubr.f32.mxu0 0.0
        %5199 = vmatmul.mubr.f32.gmra.mxu0 %v5129
        %v5200 = vpop.f32.mrf.mxu0
        %v5201 = vadd.f32 0.0, %v5200
        %v5202 = vpop.f32.mrf.mxu0
        %5203 = vmatprep.mubr.f32.mxu0 0.0
        %5204 = vmatmul.mubr.f32.gmra.mxu0 %v5132
        %v5205 = vpop.f32.mrf.mxu0
        %v5206 = vadd.f32 0.0, %v5205
        %v5207 = vpop.f32.mrf.mxu0
        %5208 = vdwg.mxu0
        %v5209 = vadd.f32 %v5011, %v5201
        %v5210 = vadd.f32 %v5016, %v5206
        %v5211 = vld [vmem:[#allocation37] sm:$0x1]
        %v5213 = vlaneseq
        %v5214 = vshrl.u32 %v5213, 7
        %v5215 = vsub.s32 0, %v5214
        %v5216 = vrot.slane %v5211, %v5215
        %v5218 = vmul.f32 %v5209, %v5216
        %v5219 = vmul.f32 %v5210, %v5216
        %v5220 = vld [vmem:[#allocation38] sm:$0x1]
        %v5222 = vlaneseq
        %v5223 = vshrl.u32 %v5222, 7
        %v5224 = vsub.s32 0, %v5223
        %v5225 = vrot.slane %v5220, %v5224
        %v5227 = vadd.f32 %v5218, %v5225
        %v5228 = vadd.f32 %v5219, %v5225
        %v5229 = vmax.f32 %v5227, 0.0
        %v5230 = vmax.f32 %v5228, 0.0
        %v5231 = vpack.c.bf16 %v5230, %v5229
        %v5232 = vld [vmem:[%s93] sm:$0xf]
        %v5233 = vld [vmem:[%s93 + $0x4] sm:$0xf]
        %v5234 = vld [vmem:[%s93 + $0x8] sm:$0xf]
        %v5235 = vld [vmem:[%s93 + $0xc] sm:$0xf]
        %v5236 = vld [vmem:[%s93 + $0x10] sm:$0xf]
        %v5237 = vld [vmem:[%s93 + $0x14] sm:$0xf]
        %v5238 = vld [vmem:[%s93 + $0x18] sm:$0xf]
        %v5239 = vld [vmem:[%s93 + $0x1c] sm:$0xf]
        %v5240 = vld [vmem:[%s93 + $0x20] sm:$0xf]
        %v5241 = vld [vmem:[%s93 + $0x24] sm:$0xf]
        %v5242 = vld [vmem:[%s93 + $0x28] sm:$0xf]
        %v5243 = vld [vmem:[%s93 + $0x2c] sm:$0xf]
        %v5244 = vld [vmem:[%s93 + $0x30] sm:$0xf]
        %v5245 = vld [vmem:[%s93 + $0x34] sm:$0xf]
        %v5246 = vld [vmem:[%s93 + $0x38] sm:$0xf]
        %v5247 = vld [vmem:[%s93 + $0x3c] sm:$0xf]
        %v5264 = vunpack.c.l.b16 %v5232
        %v5265 = vunpack.c.l.b16 %v5233
        %v5266 = vunpack.c.l.b16 %v5234
        %v5267 = vunpack.c.l.b16 %v5235
        %v5268 = vunpack.c.l.b16 %v5236
        %v5269 = vunpack.c.l.b16 %v5237
        %v5270 = vunpack.c.l.b16 %v5238
        %v5271 = vunpack.c.l.b16 %v5239
        %v5272 = vunpack.c.l.b16 %v5240
        %v5273 = vunpack.c.l.b16 %v5241
        %v5274 = vunpack.c.l.b16 %v5242
        %v5275 = vunpack.c.l.b16 %v5243
        %v5276 = vunpack.c.l.b16 %v5244
        %v5277 = vunpack.c.l.b16 %v5245
        %v5278 = vunpack.c.l.b16 %v5246
        %v5279 = vunpack.c.l.b16 %v5247
        %v5280 = vpack.c.b16 %v5265, %v5264
        %v5281 = vpack.c.b16 %v5267, %v5266
        %v5282 = vpack.c.b16 %v5269, %v5268
        %v5283 = vpack.c.b16 %v5271, %v5270
        %v5284 = vpack.c.b16 %v5273, %v5272
        %v5285 = vpack.c.b16 %v5275, %v5274
        %v5286 = vpack.c.b16 %v5277, %v5276
        %v5287 = vpack.c.b16 %v5279, %v5278
        %5296 = vmatprep.subr.bf16.mxu0 0
        %5297 = vmatpush1.bf16.msra.mxu0 %v5287
        %5298 = vmatprep.subr.bf16.mxu0 0
        %5299 = vmatpush1.bf16.msra.mxu0 %v5286
        %5300 = vmatprep.subr.bf16.mxu0 0
        %5301 = vmatpush1.bf16.msra.mxu0 %v5285
        %5302 = vmatprep.subr.bf16.mxu0 0
        %5303 = vmatpush1.bf16.msra.mxu0 %v5284
        %5304 = vmatprep.subr.bf16.mxu0 0
        %5305 = vmatpush1.bf16.msra.mxu0 %v5283
        %5306 = vmatprep.subr.bf16.mxu0 0
        %5307 = vmatpush1.bf16.msra.mxu0 %v5282
        %5308 = vmatprep.subr.bf16.mxu0 0
        %5309 = vmatpush1.bf16.msra.mxu0 %v5281
        %5310 = vmatprep.subr.bf16.mxu0 0
        %5311 = vmatpush1.bf16.msra.mxu0 %v5280
        %5312 = vmatprep.subr.bf16.mxu0 0
        %5313 = vmatpush2.bf16.msra.mxu0 0
        %5314 = vmatprep.subr.bf16.mxu0 0
        %5315 = vmatpush2.bf16.msra.mxu0 0
        %5316 = vmatprep.subr.bf16.mxu0 0
        %5317 = vmatpush2.bf16.msra.mxu0 0
        %5318 = vmatprep.subr.bf16.mxu0 0
        %5319 = vmatpush2.bf16.msra.mxu0 0
        %5320 = vmatprep.subr.bf16.mxu0 0
        %5321 = vmatpush2.bf16.msra.mxu0 0
        %5322 = vmatprep.subr.bf16.mxu0 0
        %5323 = vmatpush2.bf16.msra.mxu0 0
        %5324 = vmatprep.subr.bf16.mxu0 0
        %5325 = vmatpush2.bf16.msra.mxu0 0
        %5326 = vmatprep.subr.bf16.mxu0 0
        %5327 = vmatpush2.bf16.msra.mxu0 0
        %5328 = vmatprep.mubr.bf16.mxu0 0
        %5329 = vmatmul.mubr.bf16.gmra.mxu0 %v5231
        %v5330 = vpop.f32.mrf.mxu0
        %v5331 = vadd.f32 0.0, %v5330
        %v5332 = vpop.f32.mrf.mxu0
        %v5333 = vpop.f32.mrf.mxu0
        %v5334 = vadd.f32 0.0, %v5333
        %v5335 = vpop.f32.mrf.mxu0
        %5336 = vdwg.mxu0
        %v5337 = vld [vmem:[#allocation40] sm:$0xff]
        %v5338 = vld [vmem:[#allocation40 + $0x8] sm:$0xff]
        %s5339 = scalar_lea.vmem %s93, 64
        %v5340 = vld [vmem:[%s5339] sm:$0xf]
        %v5341 = vld [vmem:[%s5339 + $0x4] sm:$0xf]
        %v5342 = vld [vmem:[%s5339 + $0x8] sm:$0xf]
        %v5343 = vld [vmem:[%s5339 + $0xc] sm:$0xf]
        %v5344 = vld [vmem:[%s5339 + $0x10] sm:$0xf]
        %v5345 = vld [vmem:[%s5339 + $0x14] sm:$0xf]
        %v5346 = vld [vmem:[%s5339 + $0x18] sm:$0xf]
        %v5347 = vld [vmem:[%s5339 + $0x1c] sm:$0xf]
        %v5348 = vld [vmem:[%s5339 + $0x20] sm:$0xf]
        %v5349 = vld [vmem:[%s5339 + $0x24] sm:$0xf]
        %v5350 = vld [vmem:[%s5339 + $0x28] sm:$0xf]
        %v5351 = vld [vmem:[%s5339 + $0x2c] sm:$0xf]
        %v5352 = vld [vmem:[%s5339 + $0x30] sm:$0xf]
        %v5353 = vld [vmem:[%s5339 + $0x34] sm:$0xf]
        %v5354 = vld [vmem:[%s5339 + $0x38] sm:$0xf]
        %v5355 = vld [vmem:[%s5339 + $0x3c] sm:$0xf]
        %v5372 = vunpack.c.l.b16 %v5340
        %v5373 = vunpack.c.l.b16 %v5341
        %v5374 = vunpack.c.l.b16 %v5342
        %v5375 = vunpack.c.l.b16 %v5343
        %v5376 = vunpack.c.l.b16 %v5344
        %v5377 = vunpack.c.l.b16 %v5345
        %v5378 = vunpack.c.l.b16 %v5346
        %v5379 = vunpack.c.l.b16 %v5347
        %v5380 = vunpack.c.l.b16 %v5348
        %v5381 = vunpack.c.l.b16 %v5349
        %v5382 = vunpack.c.l.b16 %v5350
        %v5383 = vunpack.c.l.b16 %v5351
        %v5384 = vunpack.c.l.b16 %v5352
        %v5385 = vunpack.c.l.b16 %v5353
        %v5386 = vunpack.c.l.b16 %v5354
        %v5387 = vunpack.c.l.b16 %v5355
        %v5388 = vpack.c.b16 %v5373, %v5372
        %v5389 = vpack.c.b16 %v5375, %v5374
        %v5390 = vpack.c.b16 %v5377, %v5376
        %v5391 = vpack.c.b16 %v5379, %v5378
        %v5392 = vpack.c.b16 %v5381, %v5380
        %v5393 = vpack.c.b16 %v5383, %v5382
        %v5394 = vpack.c.b16 %v5385, %v5384
        %v5395 = vpack.c.b16 %v5387, %v5386
        %5404 = vmatprep.subr.bf16.mxu0 0
        %5405 = vmatpush1.bf16.msra.mxu0 %v5395
        %5406 = vmatprep.subr.bf16.mxu0 0
        %5407 = vmatpush1.bf16.msra.mxu0 %v5394
        %5408 = vmatprep.subr.bf16.mxu0 0
        %5409 = vmatpush1.bf16.msra.mxu0 %v5393
        %5410 = vmatprep.subr.bf16.mxu0 0
        %5411 = vmatpush1.bf16.msra.mxu0 %v5392
        %5412 = vmatprep.subr.bf16.mxu0 0
        %5413 = vmatpush1.bf16.msra.mxu0 %v5391
        %5414 = vmatprep.subr.bf16.mxu0 0
        %5415 = vmatpush1.bf16.msra.mxu0 %v5390
        %5416 = vmatprep.subr.bf16.mxu0 0
        %5417 = vmatpush1.bf16.msra.mxu0 %v5389
        %5418 = vmatprep.subr.bf16.mxu0 0
        %5419 = vmatpush1.bf16.msra.mxu0 %v5388
        %5420 = vmatprep.subr.bf16.mxu0 0
        %5421 = vmatpush2.bf16.msra.mxu0 0
        %5422 = vmatprep.subr.bf16.mxu0 0
        %5423 = vmatpush2.bf16.msra.mxu0 0
        %5424 = vmatprep.subr.bf16.mxu0 0
        %5425 = vmatpush2.bf16.msra.mxu0 0
        %5426 = vmatprep.subr.bf16.mxu0 0
        %5427 = vmatpush2.bf16.msra.mxu0 0
        %5428 = vmatprep.subr.bf16.mxu0 0
        %5429 = vmatpush2.bf16.msra.mxu0 0
        %5430 = vmatprep.subr.bf16.mxu0 0
        %5431 = vmatpush2.bf16.msra.mxu0 0
        %5432 = vmatprep.subr.bf16.mxu0 0
        %5433 = vmatpush2.bf16.msra.mxu0 0
        %5434 = vmatprep.subr.bf16.mxu0 0
        %5435 = vmatpush2.bf16.msra.mxu0 0
        %5436 = vmatprep.mubr.bf16.mxu0 0
        %5437 = vmatmul.mubr.bf16.gmra.mxu0 %v5231
        %v5438 = vpop.f32.mrf.mxu0
        %v5439 = vadd.f32 0.0, %v5438
        %v5440 = vpop.f32.mrf.mxu0
        %v5441 = vpop.f32.mrf.mxu0
        %v5442 = vadd.f32 0.0, %v5441
        %v5443 = vpop.f32.mrf.mxu0
        %5444 = vdwg.mxu0
        %v5446 = vsel %vm4937, %v5337, 0
        %v5449 = vsel %vm4937, %v5338, 0
        %5451 = vmatprep.subr.mxu0 0.0
        %5452 = vmatpush1.msra.mxu0 0.0
        %5453 = vmatprep.subr.mxu0 0.0
        %5454 = vmatpush1.msra.mxu0 0.0
        %5455 = vmatprep.subr.mxu0 0.0
        %5456 = vmatpush1.msra.mxu0 0.0
        %5457 = vmatprep.subr.mxu0 0.0
        %5458 = vmatpush1.msra.mxu0 0.0
        %5459 = vmatprep.subr.mxu0 0.0
        %5460 = vmatpush1.msra.mxu0 0.0
        %5461 = vmatprep.subr.mxu0 0.0
        %5462 = vmatpush1.msra.mxu0 0.0
        %5463 = vmatprep.subr.mxu0 0.0
        %5464 = vmatpush1.msra.mxu0 0.0
        %5465 = vmatprep.subr.mxu0 0.0
        %5466 = vmatpush1.msra.mxu0 0.0
        %5467 = vmatprep.subr.mxu0 0.0
        %5468 = vmatpush1.msra.mxu0 0.0
        %5469 = vmatprep.subr.mxu0 0.0
        %5470 = vmatpush1.msra.mxu0 0.0
        %5471 = vmatprep.subr.mxu0 0.0
        %5472 = vmatpush1.msra.mxu0 0.0
        %5473 = vmatprep.subr.mxu0 0.0
        %5474 = vmatpush1.msra.mxu0 0.0
        %5475 = vmatprep.subr.mxu0 0.0
        %5476 = vmatpush1.msra.mxu0 0.0
        %5477 = vmatprep.subr.mxu0 0.0
        %5478 = vmatpush1.msra.mxu0 0.0
        %5479 = vmatprep.subr.mxu0 0.0
        %5480 = vmatpush1.msra.mxu0 %v5334
        %5481 = vmatprep.subr.mxu0 0.0
        %5482 = vmatpush1.msra.mxu0 %v5331
        %5483 = vmatprep.subr.mxu0 0.0
        %5484 = vmatpush2.msra.mxu0 0.0
        %5485 = vmatprep.subr.mxu0 0.0
        %5486 = vmatpush2.msra.mxu0 0.0
        %5487 = vmatprep.subr.mxu0 0.0
        %5488 = vmatpush2.msra.mxu0 0.0
        %5489 = vmatprep.subr.mxu0 0.0
        %5490 = vmatpush2.msra.mxu0 0.0
        %5491 = vmatprep.subr.mxu0 0.0
        %5492 = vmatpush2.msra.mxu0 0.0
        %5493 = vmatprep.subr.mxu0 0.0
        %5494 = vmatpush2.msra.mxu0 0.0
        %5495 = vmatprep.subr.mxu0 0.0
        %5496 = vmatpush2.msra.mxu0 0.0
        %5497 = vmatprep.subr.mxu0 0.0
        %5498 = vmatpush2.msra.mxu0 0.0
        %5499 = vmatprep.subr.mxu0 0.0
        %5500 = vmatpush2.msra.mxu0 0.0
        %5501 = vmatprep.subr.mxu0 0.0
        %5502 = vmatpush2.msra.mxu0 0.0
        %5503 = vmatprep.subr.mxu0 0.0
        %5504 = vmatpush2.msra.mxu0 0.0
        %5505 = vmatprep.subr.mxu0 0.0
        %5506 = vmatpush2.msra.mxu0 0.0
        %5507 = vmatprep.subr.mxu0 0.0
        %5508 = vmatpush2.msra.mxu0 0.0
        %5509 = vmatprep.subr.mxu0 0.0
        %5510 = vmatpush2.msra.mxu0 0.0
        %5511 = vmatprep.subr.mxu0 0.0
        %5512 = vmatpush2.msra.mxu0 0.0
        %5513 = vmatprep.subr.mxu0 0.0
        %5514 = vmatpush2.msra.mxu0 0.0
        %5515 = vmatprep.mubr.f32.mxu0 0.0
        %5516 = vmatmul.mubr.f32.gmra.mxu0 %v5446
        %v5517 = vpop.f32.mrf.mxu0
        %v5518 = vadd.f32 %v5439, %v5517
        %v5519 = vpop.f32.mrf.mxu0
        %5520 = vmatprep.mubr.f32.mxu0 0.0
        %5521 = vmatmul.mubr.f32.gmra.mxu0 %v5449
        %v5522 = vpop.f32.mrf.mxu0
        %v5523 = vadd.f32 %v5442, %v5522
        %v5524 = vpop.f32.mrf.mxu0
        %5525 = vdwg.mxu0
        %s5526 = scalar_lea.vmem %s93, 128
        %v5527 = vld [vmem:[%s5526] sm:$0xf]
        %v5528 = vld [vmem:[%s5526 + $0x4] sm:$0xf]
        %v5529 = vld [vmem:[%s5526 + $0x8] sm:$0xf]
        %v5530 = vld [vmem:[%s5526 + $0xc] sm:$0xf]
        %v5531 = vld [vmem:[%s5526 + $0x10] sm:$0xf]
        %v5532 = vld [vmem:[%s5526 + $0x14] sm:$0xf]
        %v5533 = vld [vmem:[%s5526 + $0x18] sm:$0xf]
        %v5534 = vld [vmem:[%s5526 + $0x1c] sm:$0xf]
        %v5535 = vld [vmem:[%s5526 + $0x20] sm:$0xf]
        %v5536 = vld [vmem:[%s5526 + $0x24] sm:$0xf]
        %v5537 = vld [vmem:[%s5526 + $0x28] sm:$0xf]
        %v5538 = vld [vmem:[%s5526 + $0x2c] sm:$0xf]
        %v5539 = vld [vmem:[%s5526 + $0x30] sm:$0xf]
        %v5540 = vld [vmem:[%s5526 + $0x34] sm:$0xf]
        %v5541 = vld [vmem:[%s5526 + $0x38] sm:$0xf]
        %v5542 = vld [vmem:[%s5526 + $0x3c] sm:$0xf]
        %v5559 = vunpack.c.l.b16 %v5527
        %v5560 = vunpack.c.l.b16 %v5528
        %v5561 = vunpack.c.l.b16 %v5529
        %v5562 = vunpack.c.l.b16 %v5530
        %v5563 = vunpack.c.l.b16 %v5531
        %v5564 = vunpack.c.l.b16 %v5532
        %v5565 = vunpack.c.l.b16 %v5533
        %v5566 = vunpack.c.l.b16 %v5534
        %v5567 = vunpack.c.l.b16 %v5535
        %v5568 = vunpack.c.l.b16 %v5536
        %v5569 = vunpack.c.l.b16 %v5537
        %v5570 = vunpack.c.l.b16 %v5538
        %v5571 = vunpack.c.l.b16 %v5539
        %v5572 = vunpack.c.l.b16 %v5540
        %v5573 = vunpack.c.l.b16 %v5541
        %v5574 = vunpack.c.l.b16 %v5542
        %v5575 = vpack.c.b16 %v5560, %v5559
        %v5576 = vpack.c.b16 %v5562, %v5561
        %v5577 = vpack.c.b16 %v5564, %v5563
        %v5578 = vpack.c.b16 %v5566, %v5565
        %v5579 = vpack.c.b16 %v5568, %v5567
        %v5580 = vpack.c.b16 %v5570, %v5569
        %v5581 = vpack.c.b16 %v5572, %v5571
        %v5582 = vpack.c.b16 %v5574, %v5573
        %5591 = vmatprep.subr.bf16.mxu0 0
        %5592 = vmatpush1.bf16.msra.mxu0 %v5582
        %5593 = vmatprep.subr.bf16.mxu0 0
        %5594 = vmatpush1.bf16.msra.mxu0 %v5581
        %5595 = vmatprep.subr.bf16.mxu0 0
        %5596 = vmatpush1.bf16.msra.mxu0 %v5580
        %5597 = vmatprep.subr.bf16.mxu0 0
        %5598 = vmatpush1.bf16.msra.mxu0 %v5579
        %5599 = vmatprep.subr.bf16.mxu0 0
        %5600 = vmatpush1.bf16.msra.mxu0 %v5578
        %5601 = vmatprep.subr.bf16.mxu0 0
        %5602 = vmatpush1.bf16.msra.mxu0 %v5577
        %5603 = vmatprep.subr.bf16.mxu0 0
        %5604 = vmatpush1.bf16.msra.mxu0 %v5576
        %5605 = vmatprep.subr.bf16.mxu0 0
        %5606 = vmatpush1.bf16.msra.mxu0 %v5575
        %5607 = vmatprep.subr.bf16.mxu0 0
        %5608 = vmatpush2.bf16.msra.mxu0 0
        %5609 = vmatprep.subr.bf16.mxu0 0
        %5610 = vmatpush2.bf16.msra.mxu0 0
        %5611 = vmatprep.subr.bf16.mxu0 0
        %5612 = vmatpush2.bf16.msra.mxu0 0
        %5613 = vmatprep.subr.bf16.mxu0 0
        %5614 = vmatpush2.bf16.msra.mxu0 0
        %5615 = vmatprep.subr.bf16.mxu0 0
        %5616 = vmatpush2.bf16.msra.mxu0 0
        %5617 = vmatprep.subr.bf16.mxu0 0
        %5618 = vmatpush2.bf16.msra.mxu0 0
        %5619 = vmatprep.subr.bf16.mxu0 0
        %5620 = vmatpush2.bf16.msra.mxu0 0
        %5621 = vmatprep.subr.bf16.mxu0 0
        %5622 = vmatpush2.bf16.msra.mxu0 0
        %5623 = vmatprep.mubr.bf16.mxu0 0
        %5624 = vmatmul.mubr.bf16.gmra.mxu0 %v5231
        %v5625 = vpop.f32.mrf.mxu0
        %v5626 = vadd.f32 0.0, %v5625
        %v5627 = vpop.f32.mrf.mxu0
        %v5628 = vpop.f32.mrf.mxu0
        %v5629 = vadd.f32 0.0, %v5628
        %v5630 = vpop.f32.mrf.mxu0
        %5631 = vdwg.mxu0
        %s5632 = scalar_lea.vmem [#allocation40], 16
        %v5633 = vld [vmem:[%s5632] sm:$0xff]
        %v5634 = vld [vmem:[%s5632 + $0x8] sm:$0xff]
        %v5636 = vsel %vm4937, %v5633, 0
        %v5639 = vsel %vm4937, %v5634, 0
        %5641 = vmatprep.subr.mxu0 0.0
        %5642 = vmatpush1.msra.mxu0 0.0
        %5643 = vmatprep.subr.mxu0 0.0
        %5644 = vmatpush1.msra.mxu0 0.0
        %5645 = vmatprep.subr.mxu0 0.0
        %5646 = vmatpush1.msra.mxu0 0.0
        %5647 = vmatprep.subr.mxu0 0.0
        %5648 = vmatpush1.msra.mxu0 0.0
        %5649 = vmatprep.subr.mxu0 0.0
        %5650 = vmatpush1.msra.mxu0 0.0
        %5651 = vmatprep.subr.mxu0 0.0
        %5652 = vmatpush1.msra.mxu0 0.0
        %5653 = vmatprep.subr.mxu0 0.0
        %5654 = vmatpush1.msra.mxu0 0.0
        %5655 = vmatprep.subr.mxu0 0.0
        %5656 = vmatpush1.msra.mxu0 0.0
        %5657 = vmatprep.subr.mxu0 0.0
        %5658 = vmatpush1.msra.mxu0 0.0
        %5659 = vmatprep.subr.mxu0 0.0
        %5660 = vmatpush1.msra.mxu0 0.0
        %5661 = vmatprep.subr.mxu0 0.0
        %5662 = vmatpush1.msra.mxu0 0.0
        %5663 = vmatprep.subr.mxu0 0.0
        %5664 = vmatpush1.msra.mxu0 0.0
        %5665 = vmatprep.subr.mxu0 0.0
        %5666 = vmatpush1.msra.mxu0 0.0
        %5667 = vmatprep.subr.mxu0 0.0
        %5668 = vmatpush1.msra.mxu0 0.0
        %5669 = vmatprep.subr.mxu0 0.0
        %5670 = vmatpush1.msra.mxu0 %v5629
        %5671 = vmatprep.subr.mxu0 0.0
        %5672 = vmatpush1.msra.mxu0 %v5626
        %5673 = vmatprep.subr.mxu0 0.0
        %5674 = vmatpush2.msra.mxu0 0.0
        %5675 = vmatprep.subr.mxu0 0.0
        %5676 = vmatpush2.msra.mxu0 0.0
        %5677 = vmatprep.subr.mxu0 0.0
        %5678 = vmatpush2.msra.mxu0 0.0
        %5679 = vmatprep.subr.mxu0 0.0
        %5680 = vmatpush2.msra.mxu0 0.0
        %5681 = vmatprep.subr.mxu0 0.0
        %5682 = vmatpush2.msra.mxu0 0.0
        %5683 = vmatprep.subr.mxu0 0.0
        %5684 = vmatpush2.msra.mxu0 0.0
        %5685 = vmatprep.subr.mxu0 0.0
        %5686 = vmatpush2.msra.mxu0 0.0
        %5687 = vmatprep.subr.mxu0 0.0
        %5688 = vmatpush2.msra.mxu0 0.0
        %5689 = vmatprep.subr.mxu0 0.0
        %5690 = vmatpush2.msra.mxu0 0.0
        %5691 = vmatprep.subr.mxu0 0.0
        %5692 = vmatpush2.msra.mxu0 0.0
        %5693 = vmatprep.subr.mxu0 0.0
        %5694 = vmatpush2.msra.mxu0 0.0
        %5695 = vmatprep.subr.mxu0 0.0
        %5696 = vmatpush2.msra.mxu0 0.0
        %5697 = vmatprep.subr.mxu0 0.0
        %5698 = vmatpush2.msra.mxu0 0.0
        %5699 = vmatprep.subr.mxu0 0.0
        %5700 = vmatpush2.msra.mxu0 0.0
        %5701 = vmatprep.subr.mxu0 0.0
        %5702 = vmatpush2.msra.mxu0 0.0
        %5703 = vmatprep.subr.mxu0 0.0
        %5704 = vmatpush2.msra.mxu0 0.0
        %5705 = vmatprep.mubr.f32.mxu0 0.0
        %5706 = vmatmul.mubr.f32.gmra.mxu0 %v5636
        %v5707 = vpop.f32.mrf.mxu0
        %v5708 = vadd.f32 0.0, %v5707
        %v5709 = vpop.f32.mrf.mxu0
        %5710 = vmatprep.mubr.f32.mxu0 0.0
        %5711 = vmatmul.mubr.f32.gmra.mxu0 %v5639
        %v5712 = vpop.f32.mrf.mxu0
        %v5713 = vadd.f32 0.0, %v5712
        %v5714 = vpop.f32.mrf.mxu0
        %5715 = vdwg.mxu0
        %v5716 = vadd.f32 %v5518, %v5708
        %v5717 = vadd.f32 %v5523, %v5713
        %v5718 = vld [vmem:[#allocation41] sm:$0x1]
        %v5720 = vlaneseq
        %v5721 = vshrl.u32 %v5720, 7
        %v5722 = vsub.s32 0, %v5721
        %v5723 = vrot.slane %v5718, %v5722
        %v5725 = vmul.f32 %v5716, %v5723
        %v5726 = vmul.f32 %v5717, %v5723
        %v5727 = vld [vmem:[#allocation43] sm:$0x1]
        %v5729 = vlaneseq
        %v5730 = vshrl.u32 %v5729, 7
        %v5731 = vsub.s32 0, %v5730
        %v5732 = vrot.slane %v5727, %v5731
        %v5734 = vadd.f32 %v5725, %v5732
        %v5735 = vadd.f32 %v5726, %v5732
        %v5736 = vmax.f32 %v5734, 0.0
        %v5737 = vmax.f32 %v5735, 0.0
        %v5738 = vpack.c.bf16 %v5737, %v5736
        %v5739 = vld [vmem:[%s15] sm:$0xf]
        %v5740 = vld [vmem:[%s15 + $0x4] sm:$0xf]
        %v5741 = vld [vmem:[%s15 + $0x8] sm:$0xf]
        %v5742 = vld [vmem:[%s15 + $0xc] sm:$0xf]
        %v5743 = vld [vmem:[%s15 + $0x10] sm:$0xf]
        %v5744 = vld [vmem:[%s15 + $0x14] sm:$0xf]
        %v5745 = vld [vmem:[%s15 + $0x18] sm:$0xf]
        %v5746 = vld [vmem:[%s15 + $0x1c] sm:$0xf]
        %v5747 = vld [vmem:[%s15 + $0x20] sm:$0xf]
        %v5748 = vld [vmem:[%s15 + $0x24] sm:$0xf]
        %v5749 = vld [vmem:[%s15 + $0x28] sm:$0xf]
        %v5750 = vld [vmem:[%s15 + $0x2c] sm:$0xf]
        %v5751 = vld [vmem:[%s15 + $0x30] sm:$0xf]
        %v5752 = vld [vmem:[%s15 + $0x34] sm:$0xf]
        %v5753 = vld [vmem:[%s15 + $0x38] sm:$0xf]
        %v5754 = vld [vmem:[%s15 + $0x3c] sm:$0xf]
        %v5771 = vunpack.c.l.b16 %v5739
        %v5772 = vunpack.c.l.b16 %v5740
        %v5773 = vunpack.c.l.b16 %v5741
        %v5774 = vunpack.c.l.b16 %v5742
        %v5775 = vunpack.c.l.b16 %v5743
        %v5776 = vunpack.c.l.b16 %v5744
        %v5777 = vunpack.c.l.b16 %v5745
        %v5778 = vunpack.c.l.b16 %v5746
        %v5779 = vunpack.c.l.b16 %v5747
        %v5780 = vunpack.c.l.b16 %v5748
        %v5781 = vunpack.c.l.b16 %v5749
        %v5782 = vunpack.c.l.b16 %v5750
        %v5783 = vunpack.c.l.b16 %v5751
        %v5784 = vunpack.c.l.b16 %v5752
        %v5785 = vunpack.c.l.b16 %v5753
        %v5786 = vunpack.c.l.b16 %v5754
        %v5787 = vpack.c.b16 %v5772, %v5771
        %v5788 = vpack.c.b16 %v5774, %v5773
        %v5789 = vpack.c.b16 %v5776, %v5775
        %v5790 = vpack.c.b16 %v5778, %v5777
        %v5791 = vpack.c.b16 %v5780, %v5779
        %v5792 = vpack.c.b16 %v5782, %v5781
        %v5793 = vpack.c.b16 %v5784, %v5783
        %v5794 = vpack.c.b16 %v5786, %v5785
        %5803 = vmatprep.subr.bf16.mxu0 0
        %5804 = vmatpush1.bf16.msra.mxu0 %v5794
        %5805 = vmatprep.subr.bf16.mxu0 0
        %5806 = vmatpush1.bf16.msra.mxu0 %v5793
        %5807 = vmatprep.subr.bf16.mxu0 0
        %5808 = vmatpush1.bf16.msra.mxu0 %v5792
        %5809 = vmatprep.subr.bf16.mxu0 0
        %5810 = vmatpush1.bf16.msra.mxu0 %v5791
        %5811 = vmatprep.subr.bf16.mxu0 0
        %5812 = vmatpush1.bf16.msra.mxu0 %v5790
        %5813 = vmatprep.subr.bf16.mxu0 0
        %5814 = vmatpush1.bf16.msra.mxu0 %v5789
        %5815 = vmatprep.subr.bf16.mxu0 0
        %5816 = vmatpush1.bf16.msra.mxu0 %v5788
        %5817 = vmatprep.subr.bf16.mxu0 0
        %5818 = vmatpush1.bf16.msra.mxu0 %v5787
        %5819 = vmatprep.subr.bf16.mxu0 0
        %5820 = vmatpush2.bf16.msra.mxu0 0
        %5821 = vmatprep.subr.bf16.mxu0 0
        %5822 = vmatpush2.bf16.msra.mxu0 0
        %5823 = vmatprep.subr.bf16.mxu0 0
        %5824 = vmatpush2.bf16.msra.mxu0 0
        %5825 = vmatprep.subr.bf16.mxu0 0
        %5826 = vmatpush2.bf16.msra.mxu0 0
        %5827 = vmatprep.subr.bf16.mxu0 0
        %5828 = vmatpush2.bf16.msra.mxu0 0
        %5829 = vmatprep.subr.bf16.mxu0 0
        %5830 = vmatpush2.bf16.msra.mxu0 0
        %5831 = vmatprep.subr.bf16.mxu0 0
        %5832 = vmatpush2.bf16.msra.mxu0 0
        %5833 = vmatprep.subr.bf16.mxu0 0
        %5834 = vmatpush2.bf16.msra.mxu0 0
        %5835 = vmatprep.mubr.bf16.mxu0 0
        %5836 = vmatmul.mubr.bf16.gmra.mxu0 %v5738
        %v5837 = vpop.f32.mrf.mxu0
        %v5838 = vadd.f32 0.0, %v5837
        %v5839 = vpop.f32.mrf.mxu0
        %v5840 = vpop.f32.mrf.mxu0
        %v5841 = vadd.f32 0.0, %v5840
        %v5842 = vpop.f32.mrf.mxu0
        %5843 = vdwg.mxu0
        %v5844 = vld [vmem:[#allocation2] sm:$0xff]
        %v5845 = vld [vmem:[#allocation2 + $0x8] sm:$0xff]
        %s5846 = scalar_lea.vmem %s15, 64
        %v5847 = vld [vmem:[%s5846] sm:$0xf]
        %v5848 = vld [vmem:[%s5846 + $0x4] sm:$0xf]
        %v5849 = vld [vmem:[%s5846 + $0x8] sm:$0xf]
        %v5850 = vld [vmem:[%s5846 + $0xc] sm:$0xf]
        %v5851 = vld [vmem:[%s5846 + $0x10] sm:$0xf]
        %v5852 = vld [vmem:[%s5846 + $0x14] sm:$0xf]
        %v5853 = vld [vmem:[%s5846 + $0x18] sm:$0xf]
        %v5854 = vld [vmem:[%s5846 + $0x1c] sm:$0xf]
        %v5855 = vld [vmem:[%s5846 + $0x20] sm:$0xf]
        %v5856 = vld [vmem:[%s5846 + $0x24] sm:$0xf]
        %v5857 = vld [vmem:[%s5846 + $0x28] sm:$0xf]
        %v5858 = vld [vmem:[%s5846 + $0x2c] sm:$0xf]
        %v5859 = vld [vmem:[%s5846 + $0x30] sm:$0xf]
        %v5860 = vld [vmem:[%s5846 + $0x34] sm:$0xf]
        %v5861 = vld [vmem:[%s5846 + $0x38] sm:$0xf]
        %v5862 = vld [vmem:[%s5846 + $0x3c] sm:$0xf]
        %v5879 = vunpack.c.l.b16 %v5847
        %v5880 = vunpack.c.l.b16 %v5848
        %v5881 = vunpack.c.l.b16 %v5849
        %v5882 = vunpack.c.l.b16 %v5850
        %v5883 = vunpack.c.l.b16 %v5851
        %v5884 = vunpack.c.l.b16 %v5852
        %v5885 = vunpack.c.l.b16 %v5853
        %v5886 = vunpack.c.l.b16 %v5854
        %v5887 = vunpack.c.l.b16 %v5855
        %v5888 = vunpack.c.l.b16 %v5856
        %v5889 = vunpack.c.l.b16 %v5857
        %v5890 = vunpack.c.l.b16 %v5858
        %v5891 = vunpack.c.l.b16 %v5859
        %v5892 = vunpack.c.l.b16 %v5860
        %v5893 = vunpack.c.l.b16 %v5861
        %v5894 = vunpack.c.l.b16 %v5862
        %v5895 = vpack.c.b16 %v5880, %v5879
        %v5896 = vpack.c.b16 %v5882, %v5881
        %v5897 = vpack.c.b16 %v5884, %v5883
        %v5898 = vpack.c.b16 %v5886, %v5885
        %v5899 = vpack.c.b16 %v5888, %v5887
        %v5900 = vpack.c.b16 %v5890, %v5889
        %v5901 = vpack.c.b16 %v5892, %v5891
        %v5902 = vpack.c.b16 %v5894, %v5893
        %5911 = vmatprep.subr.bf16.mxu0 0
        %5912 = vmatpush1.bf16.msra.mxu0 %v5902
        %5913 = vmatprep.subr.bf16.mxu0 0
        %5914 = vmatpush1.bf16.msra.mxu0 %v5901
        %5915 = vmatprep.subr.bf16.mxu0 0
        %5916 = vmatpush1.bf16.msra.mxu0 %v5900
        %5917 = vmatprep.subr.bf16.mxu0 0
        %5918 = vmatpush1.bf16.msra.mxu0 %v5899
        %5919 = vmatprep.subr.bf16.mxu0 0
        %5920 = vmatpush1.bf16.msra.mxu0 %v5898
        %5921 = vmatprep.subr.bf16.mxu0 0
        %5922 = vmatpush1.bf16.msra.mxu0 %v5897
        %5923 = vmatprep.subr.bf16.mxu0 0
        %5924 = vmatpush1.bf16.msra.mxu0 %v5896
        %5925 = vmatprep.subr.bf16.mxu0 0
        %5926 = vmatpush1.bf16.msra.mxu0 %v5895
        %5927 = vmatprep.subr.bf16.mxu0 0
        %5928 = vmatpush2.bf16.msra.mxu0 0
        %5929 = vmatprep.subr.bf16.mxu0 0
        %5930 = vmatpush2.bf16.msra.mxu0 0
        %5931 = vmatprep.subr.bf16.mxu0 0
        %5932 = vmatpush2.bf16.msra.mxu0 0
        %5933 = vmatprep.subr.bf16.mxu0 0
        %5934 = vmatpush2.bf16.msra.mxu0 0
        %5935 = vmatprep.subr.bf16.mxu0 0
        %5936 = vmatpush2.bf16.msra.mxu0 0
        %5937 = vmatprep.subr.bf16.mxu0 0
        %5938 = vmatpush2.bf16.msra.mxu0 0
        %5939 = vmatprep.subr.bf16.mxu0 0
        %5940 = vmatpush2.bf16.msra.mxu0 0
        %5941 = vmatprep.subr.bf16.mxu0 0
        %5942 = vmatpush2.bf16.msra.mxu0 0
        %5943 = vmatprep.mubr.bf16.mxu0 0
        %5944 = vmatmul.mubr.bf16.gmra.mxu0 %v5738
        %v5945 = vpop.f32.mrf.mxu0
        %v5946 = vadd.f32 0.0, %v5945
        %v5947 = vpop.f32.mrf.mxu0
        %v5948 = vpop.f32.mrf.mxu0
        %v5949 = vadd.f32 0.0, %v5948
        %v5950 = vpop.f32.mrf.mxu0
        %5951 = vdwg.mxu0
        %v5953 = vsel %vm4937, %v5844, 0
        %v5956 = vsel %vm4937, %v5845, 0
        %5958 = vmatprep.subr.mxu0 0.0
        %5959 = vmatpush1.msra.mxu0 0.0
        %5960 = vmatprep.subr.mxu0 0.0
        %5961 = vmatpush1.msra.mxu0 0.0
        %5962 = vmatprep.subr.mxu0 0.0
        %5963 = vmatpush1.msra.mxu0 0.0
        %5964 = vmatprep.subr.mxu0 0.0
        %5965 = vmatpush1.msra.mxu0 0.0
        %5966 = vmatprep.subr.mxu0 0.0
        %5967 = vmatpush1.msra.mxu0 0.0
        %5968 = vmatprep.subr.mxu0 0.0
        %5969 = vmatpush1.msra.mxu0 0.0
        %5970 = vmatprep.subr.mxu0 0.0
        %5971 = vmatpush1.msra.mxu0 0.0
        %5972 = vmatprep.subr.mxu0 0.0
        %5973 = vmatpush1.msra.mxu0 0.0
        %5974 = vmatprep.subr.mxu0 0.0
        %5975 = vmatpush1.msra.mxu0 0.0
        %5976 = vmatprep.subr.mxu0 0.0
        %5977 = vmatpush1.msra.mxu0 0.0
        %5978 = vmatprep.subr.mxu0 0.0
        %5979 = vmatpush1.msra.mxu0 0.0
        %5980 = vmatprep.subr.mxu0 0.0
        %5981 = vmatpush1.msra.mxu0 0.0
        %5982 = vmatprep.subr.mxu0 0.0
        %5983 = vmatpush1.msra.mxu0 0.0
        %5984 = vmatprep.subr.mxu0 0.0
        %5985 = vmatpush1.msra.mxu0 0.0
        %5986 = vmatprep.subr.mxu0 0.0
        %5987 = vmatpush1.msra.mxu0 %v5841
        %5988 = vmatprep.subr.mxu0 0.0
        %5989 = vmatpush1.msra.mxu0 %v5838
        %5990 = vmatprep.subr.mxu0 0.0
        %5991 = vmatpush2.msra.mxu0 0.0
        %5992 = vmatprep.subr.mxu0 0.0
        %5993 = vmatpush2.msra.mxu0 0.0
        %5994 = vmatprep.subr.mxu0 0.0
        %5995 = vmatpush2.msra.mxu0 0.0
        %5996 = vmatprep.subr.mxu0 0.0
        %5997 = vmatpush2.msra.mxu0 0.0
        %5998 = vmatprep.subr.mxu0 0.0
        %5999 = vmatpush2.msra.mxu0 0.0
        %6000 = vmatprep.subr.mxu0 0.0
        %6001 = vmatpush2.msra.mxu0 0.0
        %6002 = vmatprep.subr.mxu0 0.0
        %6003 = vmatpush2.msra.mxu0 0.0
        %6004 = vmatprep.subr.mxu0 0.0
        %6005 = vmatpush2.msra.mxu0 0.0
        %6006 = vmatprep.subr.mxu0 0.0
        %6007 = vmatpush2.msra.mxu0 0.0
        %6008 = vmatprep.subr.mxu0 0.0
        %6009 = vmatpush2.msra.mxu0 0.0
        %6010 = vmatprep.subr.mxu0 0.0
        %6011 = vmatpush2.msra.mxu0 0.0
        %6012 = vmatprep.subr.mxu0 0.0
        %6013 = vmatpush2.msra.mxu0 0.0
        %6014 = vmatprep.subr.mxu0 0.0
        %6015 = vmatpush2.msra.mxu0 0.0
        %6016 = vmatprep.subr.mxu0 0.0
        %6017 = vmatpush2.msra.mxu0 0.0
        %6018 = vmatprep.subr.mxu0 0.0
        %6019 = vmatpush2.msra.mxu0 0.0
        %6020 = vmatprep.subr.mxu0 0.0
        %6021 = vmatpush2.msra.mxu0 0.0
        %6022 = vmatprep.mubr.f32.mxu0 0.0
        %6023 = vmatmul.mubr.f32.gmra.mxu0 %v5953
        %v6024 = vpop.f32.mrf.mxu0
        %v6025 = vadd.f32 %v5946, %v6024
        %v6026 = vpop.f32.mrf.mxu0
        %6027 = vmatprep.mubr.f32.mxu0 0.0
        %6028 = vmatmul.mubr.f32.gmra.mxu0 %v5956
        %v6029 = vpop.f32.mrf.mxu0
        %v6030 = vadd.f32 %v5949, %v6029
        %v6031 = vpop.f32.mrf.mxu0
        %6032 = vdwg.mxu0
        %s6033 = scalar_lea.vmem %s15, 128
        %v6034 = vld [vmem:[%s6033] sm:$0xf]
        %v6035 = vld [vmem:[%s6033 + $0x4] sm:$0xf]
        %v6036 = vld [vmem:[%s6033 + $0x8] sm:$0xf]
        %v6037 = vld [vmem:[%s6033 + $0xc] sm:$0xf]
        %v6038 = vld [vmem:[%s6033 + $0x10] sm:$0xf]
        %v6039 = vld [vmem:[%s6033 + $0x14] sm:$0xf]
        %v6040 = vld [vmem:[%s6033 + $0x18] sm:$0xf]
        %v6041 = vld [vmem:[%s6033 + $0x1c] sm:$0xf]
        %v6042 = vld [vmem:[%s6033 + $0x20] sm:$0xf]
        %v6043 = vld [vmem:[%s6033 + $0x24] sm:$0xf]
        %v6044 = vld [vmem:[%s6033 + $0x28] sm:$0xf]
        %v6045 = vld [vmem:[%s6033 + $0x2c] sm:$0xf]
        %v6046 = vld [vmem:[%s6033 + $0x30] sm:$0xf]
        %v6047 = vld [vmem:[%s6033 + $0x34] sm:$0xf]
        %v6048 = vld [vmem:[%s6033 + $0x38] sm:$0xf]
        %v6049 = vld [vmem:[%s6033 + $0x3c] sm:$0xf]
        %v6066 = vunpack.c.l.b16 %v6034
        %v6067 = vunpack.c.l.b16 %v6035
        %v6068 = vunpack.c.l.b16 %v6036
        %v6069 = vunpack.c.l.b16 %v6037
        %v6070 = vunpack.c.l.b16 %v6038
        %v6071 = vunpack.c.l.b16 %v6039
        %v6072 = vunpack.c.l.b16 %v6040
        %v6073 = vunpack.c.l.b16 %v6041
        %v6074 = vunpack.c.l.b16 %v6042
        %v6075 = vunpack.c.l.b16 %v6043
        %v6076 = vunpack.c.l.b16 %v6044
        %v6077 = vunpack.c.l.b16 %v6045
        %v6078 = vunpack.c.l.b16 %v6046
        %v6079 = vunpack.c.l.b16 %v6047
        %v6080 = vunpack.c.l.b16 %v6048
        %v6081 = vunpack.c.l.b16 %v6049
        %v6082 = vpack.c.b16 %v6067, %v6066
        %v6083 = vpack.c.b16 %v6069, %v6068
        %v6084 = vpack.c.b16 %v6071, %v6070
        %v6085 = vpack.c.b16 %v6073, %v6072
        %v6086 = vpack.c.b16 %v6075, %v6074
        %v6087 = vpack.c.b16 %v6077, %v6076
        %v6088 = vpack.c.b16 %v6079, %v6078
        %v6089 = vpack.c.b16 %v6081, %v6080
        %6098 = vmatprep.subr.bf16.mxu0 0
        %6099 = vmatpush1.bf16.msra.mxu0 %v6089
        %6100 = vmatprep.subr.bf16.mxu0 0
        %6101 = vmatpush1.bf16.msra.mxu0 %v6088
        %6102 = vmatprep.subr.bf16.mxu0 0
        %6103 = vmatpush1.bf16.msra.mxu0 %v6087
        %6104 = vmatprep.subr.bf16.mxu0 0
        %6105 = vmatpush1.bf16.msra.mxu0 %v6086
        %6106 = vmatprep.subr.bf16.mxu0 0
        %6107 = vmatpush1.bf16.msra.mxu0 %v6085
        %6108 = vmatprep.subr.bf16.mxu0 0
        %6109 = vmatpush1.bf16.msra.mxu0 %v6084
        %6110 = vmatprep.subr.bf16.mxu0 0
        %6111 = vmatpush1.bf16.msra.mxu0 %v6083
        %6112 = vmatprep.subr.bf16.mxu0 0
        %6113 = vmatpush1.bf16.msra.mxu0 %v6082
        %6114 = vmatprep.subr.bf16.mxu0 0
        %6115 = vmatpush2.bf16.msra.mxu0 0
        %6116 = vmatprep.subr.bf16.mxu0 0
        %6117 = vmatpush2.bf16.msra.mxu0 0
        %6118 = vmatprep.subr.bf16.mxu0 0
        %6119 = vmatpush2.bf16.msra.mxu0 0
        %6120 = vmatprep.subr.bf16.mxu0 0
        %6121 = vmatpush2.bf16.msra.mxu0 0
        %6122 = vmatprep.subr.bf16.mxu0 0
        %6123 = vmatpush2.bf16.msra.mxu0 0
        %6124 = vmatprep.subr.bf16.mxu0 0
        %6125 = vmatpush2.bf16.msra.mxu0 0
        %6126 = vmatprep.subr.bf16.mxu0 0
        %6127 = vmatpush2.bf16.msra.mxu0 0
        %6128 = vmatprep.subr.bf16.mxu0 0
        %6129 = vmatpush2.bf16.msra.mxu0 0
        %6130 = vmatprep.mubr.bf16.mxu0 0
        %6131 = vmatmul.mubr.bf16.gmra.mxu0 %v5738
        %v6132 = vpop.f32.mrf.mxu0
        %v6133 = vadd.f32 0.0, %v6132
        %v6134 = vpop.f32.mrf.mxu0
        %v6135 = vpop.f32.mrf.mxu0
        %v6136 = vadd.f32 0.0, %v6135
        %v6137 = vpop.f32.mrf.mxu0
        %6138 = vdwg.mxu0
        %s6139 = scalar_lea.vmem [#allocation2], 16
        %v6140 = vld [vmem:[%s6139] sm:$0xff]
        %v6141 = vld [vmem:[%s6139 + $0x8] sm:$0xff]
        %v6143 = vsel %vm4937, %v6140, 0
        %v6146 = vsel %vm4937, %v6141, 0
        %6148 = vmatprep.subr.mxu0 0.0
        %6149 = vmatpush1.msra.mxu0 0.0
        %6150 = vmatprep.subr.mxu0 0.0
        %6151 = vmatpush1.msra.mxu0 0.0
        %6152 = vmatprep.subr.mxu0 0.0
        %6153 = vmatpush1.msra.mxu0 0.0
        %6154 = vmatprep.subr.mxu0 0.0
        %6155 = vmatpush1.msra.mxu0 0.0
        %6156 = vmatprep.subr.mxu0 0.0
        %6157 = vmatpush1.msra.mxu0 0.0
        %6158 = vmatprep.subr.mxu0 0.0
        %6159 = vmatpush1.msra.mxu0 0.0
        %6160 = vmatprep.subr.mxu0 0.0
        %6161 = vmatpush1.msra.mxu0 0.0
        %6162 = vmatprep.subr.mxu0 0.0
        %6163 = vmatpush1.msra.mxu0 0.0
        %6164 = vmatprep.subr.mxu0 0.0
        %6165 = vmatpush1.msra.mxu0 0.0
        %6166 = vmatprep.subr.mxu0 0.0
        %6167 = vmatpush1.msra.mxu0 0.0
        %6168 = vmatprep.subr.mxu0 0.0
        %6169 = vmatpush1.msra.mxu0 0.0
        %6170 = vmatprep.subr.mxu0 0.0
        %6171 = vmatpush1.msra.mxu0 0.0
        %6172 = vmatprep.subr.mxu0 0.0
        %6173 = vmatpush1.msra.mxu0 0.0
        %6174 = vmatprep.subr.mxu0 0.0
        %6175 = vmatpush1.msra.mxu0 0.0
        %6176 = vmatprep.subr.mxu0 0.0
        %6177 = vmatpush1.msra.mxu0 %v6136
        %6178 = vmatprep.subr.mxu0 0.0
        %6179 = vmatpush1.msra.mxu0 %v6133
        %6180 = vmatprep.subr.mxu0 0.0
        %6181 = vmatpush2.msra.mxu0 0.0
        %6182 = vmatprep.subr.mxu0 0.0
        %6183 = vmatpush2.msra.mxu0 0.0
        %6184 = vmatprep.subr.mxu0 0.0
        %6185 = vmatpush2.msra.mxu0 0.0
        %6186 = vmatprep.subr.mxu0 0.0
        %6187 = vmatpush2.msra.mxu0 0.0
        %6188 = vmatprep.subr.mxu0 0.0
        %6189 = vmatpush2.msra.mxu0 0.0
        %6190 = vmatprep.subr.mxu0 0.0
        %6191 = vmatpush2.msra.mxu0 0.0
        %6192 = vmatprep.subr.mxu0 0.0
        %6193 = vmatpush2.msra.mxu0 0.0
        %6194 = vmatprep.subr.mxu0 0.0
        %6195 = vmatpush2.msra.mxu0 0.0
        %6196 = vmatprep.subr.mxu0 0.0
        %6197 = vmatpush2.msra.mxu0 0.0
        %6198 = vmatprep.subr.mxu0 0.0
        %6199 = vmatpush2.msra.mxu0 0.0
        %6200 = vmatprep.subr.mxu0 0.0
        %6201 = vmatpush2.msra.mxu0 0.0
        %6202 = vmatprep.subr.mxu0 0.0
        %6203 = vmatpush2.msra.mxu0 0.0
        %6204 = vmatprep.subr.mxu0 0.0
        %6205 = vmatpush2.msra.mxu0 0.0
        %6206 = vmatprep.subr.mxu0 0.0
        %6207 = vmatpush2.msra.mxu0 0.0
        %6208 = vmatprep.subr.mxu0 0.0
        %6209 = vmatpush2.msra.mxu0 0.0
        %6210 = vmatprep.subr.mxu0 0.0
        %6211 = vmatpush2.msra.mxu0 0.0
        %6212 = vmatprep.mubr.f32.mxu0 0.0
        %6213 = vmatmul.mubr.f32.gmra.mxu0 %v6143
        %v6214 = vpop.f32.mrf.mxu0
        %v6215 = vadd.f32 0.0, %v6214
        %v6216 = vpop.f32.mrf.mxu0
        %6217 = vmatprep.mubr.f32.mxu0 0.0
        %6218 = vmatmul.mubr.f32.gmra.mxu0 %v6146
        %v6219 = vpop.f32.mrf.mxu0
        %v6220 = vadd.f32 0.0, %v6219
        %v6221 = vpop.f32.mrf.mxu0
        %6222 = vdwg.mxu0
        %v6223 = vadd.f32 %v6025, %v6215
        %v6224 = vadd.f32 %v6030, %v6220
        %v6225 = vpack.c.bf16 %v1954, %v1953
        %v6226 = vld [vmem:[%s11] sm:$0xf]
        %v6227 = vld [vmem:[%s11 + $0x4] sm:$0xf]
        %v6228 = vld [vmem:[%s11 + $0x8] sm:$0xf]
        %v6229 = vld [vmem:[%s11 + $0xc] sm:$0xf]
        %v6230 = vld [vmem:[%s11 + $0x10] sm:$0xf]
        %v6231 = vld [vmem:[%s11 + $0x14] sm:$0xf]
        %v6238 = vunpack.c.l.b16 %v6226
        %v6239 = vunpack.c.l.b16 %v6227
        %v6240 = vunpack.c.l.b16 %v6228
        %v6241 = vunpack.c.l.b16 %v6229
        %v6242 = vunpack.c.l.b16 %v6230
        %v6243 = vunpack.c.l.b16 %v6231
        %v6244 = vpack.c.b16 %v6239, %v6238
        %v6245 = vpack.c.b16 %v6241, %v6240
        %v6246 = vpack.c.b16 %v6243, %v6242
        %vm6250 = vcmask 392192
        %v6252 = vsel %vm6250, %v6225, 0
        %6254 = vmatprep.subr.bf16.mxu0 0
        %6255 = vmatpush1.bf16.msra.mxu0 0
        %6256 = vmatprep.subr.bf16.mxu0 0
        %6257 = vmatpush1.bf16.msra.mxu0 0
        %6258 = vmatprep.subr.bf16.mxu0 0
        %6259 = vmatpush1.bf16.msra.mxu0 0
        %6260 = vmatprep.subr.bf16.mxu0 0
        %6261 = vmatpush1.bf16.msra.mxu0 0
        %6262 = vmatprep.subr.bf16.mxu0 0
        %6263 = vmatpush1.bf16.msra.mxu0 0
        %6264 = vmatprep.subr.bf16.mxu0 0
        %6265 = vmatpush1.bf16.msra.mxu0 %v6246
        %6266 = vmatprep.subr.bf16.mxu0 0
        %6267 = vmatpush1.bf16.msra.mxu0 %v6245
        %6268 = vmatprep.subr.bf16.mxu0 0
        %6269 = vmatpush1.bf16.msra.mxu0 %v6244
        %6270 = vmatprep.subr.bf16.mxu0 0
        %6271 = vmatpush2.bf16.msra.mxu0 0
        %6272 = vmatprep.subr.bf16.mxu0 0
        %6273 = vmatpush2.bf16.msra.mxu0 0
        %6274 = vmatprep.subr.bf16.mxu0 0
        %6275 = vmatpush2.bf16.msra.mxu0 0
        %6276 = vmatprep.subr.bf16.mxu0 0
        %6277 = vmatpush2.bf16.msra.mxu0 0
        %6278 = vmatprep.subr.bf16.mxu0 0
        %6279 = vmatpush2.bf16.msra.mxu0 0
        %6280 = vmatprep.subr.bf16.mxu0 0
        %6281 = vmatpush2.bf16.msra.mxu0 0
        %6282 = vmatprep.subr.bf16.mxu0 0
        %6283 = vmatpush2.bf16.msra.mxu0 0
        %6284 = vmatprep.subr.bf16.mxu0 0
        %6285 = vmatpush2.bf16.msra.mxu0 0
        %6286 = vmatprep.mubr.bf16.mxu0 0
        %6287 = vmatmul.mubr.bf16.gmra.mxu0 %v6252
        %v6288 = vpop.f32.mrf.mxu0
        %v6289 = vadd.f32 0.0, %v6288
        %v6290 = vpop.f32.mrf.mxu0
        %v6291 = vpop.f32.mrf.mxu0
        %v6292 = vadd.f32 0.0, %v6291
        %v6293 = vpop.f32.mrf.mxu0
        %6294 = vdwg.mxu0
        %v6295 = vld [vmem:[%s13] sm:$0xff]
        %v6296 = vld [vmem:[%s13 + $0x8] sm:$0xff]
        %s6297 = scalar_lea.vmem %s11, 24
        %v6298 = vld [vmem:[%s6297] sm:$0xf]
        %v6299 = vld [vmem:[%s6297 + $0x4] sm:$0xf]
        %v6300 = vld [vmem:[%s6297 + $0x8] sm:$0xf]
        %v6301 = vld [vmem:[%s6297 + $0xc] sm:$0xf]
        %v6302 = vld [vmem:[%s6297 + $0x10] sm:$0xf]
        %v6303 = vld [vmem:[%s6297 + $0x14] sm:$0xf]
        %v6310 = vunpack.c.l.b16 %v6298
        %v6311 = vunpack.c.l.b16 %v6299
        %v6312 = vunpack.c.l.b16 %v6300
        %v6313 = vunpack.c.l.b16 %v6301
        %v6314 = vunpack.c.l.b16 %v6302
        %v6315 = vunpack.c.l.b16 %v6303
        %v6316 = vpack.c.b16 %v6311, %v6310
        %v6317 = vpack.c.b16 %v6313, %v6312
        %v6318 = vpack.c.b16 %v6315, %v6314
        %6322 = vmatprep.subr.bf16.mxu0 0
        %6323 = vmatpush1.bf16.msra.mxu0 0
        %6324 = vmatprep.subr.bf16.mxu0 0
        %6325 = vmatpush1.bf16.msra.mxu0 0
        %6326 = vmatprep.subr.bf16.mxu0 0
        %6327 = vmatpush1.bf16.msra.mxu0 0
        %6328 = vmatprep.subr.bf16.mxu0 0
        %6329 = vmatpush1.bf16.msra.mxu0 0
        %6330 = vmatprep.subr.bf16.mxu0 0
        %6331 = vmatpush1.bf16.msra.mxu0 0
        %6332 = vmatprep.subr.bf16.mxu0 0
        %6333 = vmatpush1.bf16.msra.mxu0 %v6318
        %6334 = vmatprep.subr.bf16.mxu0 0
        %6335 = vmatpush1.bf16.msra.mxu0 %v6317
        %6336 = vmatprep.subr.bf16.mxu0 0
        %6337 = vmatpush1.bf16.msra.mxu0 %v6316
        %6338 = vmatprep.subr.bf16.mxu0 0
        %6339 = vmatpush2.bf16.msra.mxu0 0
        %6340 = vmatprep.subr.bf16.mxu0 0
        %6341 = vmatpush2.bf16.msra.mxu0 0
        %6342 = vmatprep.subr.bf16.mxu0 0
        %6343 = vmatpush2.bf16.msra.mxu0 0
        %6344 = vmatprep.subr.bf16.mxu0 0
        %6345 = vmatpush2.bf16.msra.mxu0 0
        %6346 = vmatprep.subr.bf16.mxu0 0
        %6347 = vmatpush2.bf16.msra.mxu0 0
        %6348 = vmatprep.subr.bf16.mxu0 0
        %6349 = vmatpush2.bf16.msra.mxu0 0
        %6350 = vmatprep.subr.bf16.mxu0 0
        %6351 = vmatpush2.bf16.msra.mxu0 0
        %6352 = vmatprep.subr.bf16.mxu0 0
        %6353 = vmatpush2.bf16.msra.mxu0 0
        %6354 = vmatprep.mubr.bf16.mxu0 0
        %6355 = vmatmul.mubr.bf16.gmra.mxu0 %v6252
        %v6356 = vpop.f32.mrf.mxu0
        %v6357 = vadd.f32 0.0, %v6356
        %v6358 = vpop.f32.mrf.mxu0
        %v6359 = vpop.f32.mrf.mxu0
        %v6360 = vadd.f32 0.0, %v6359
        %v6361 = vpop.f32.mrf.mxu0
        %6362 = vdwg.mxu0
        %v6364 = vsel %vm4937, %v6295, 0
        %v6367 = vsel %vm4937, %v6296, 0
        %6369 = vmatprep.subr.mxu0 0.0
        %6370 = vmatpush1.msra.mxu0 0.0
        %6371 = vmatprep.subr.mxu0 0.0
        %6372 = vmatpush1.msra.mxu0 0.0
        %6373 = vmatprep.subr.mxu0 0.0
        %6374 = vmatpush1.msra.mxu0 0.0
        %6375 = vmatprep.subr.mxu0 0.0
        %6376 = vmatpush1.msra.mxu0 0.0
        %6377 = vmatprep.subr.mxu0 0.0
        %6378 = vmatpush1.msra.mxu0 0.0
        %6379 = vmatprep.subr.mxu0 0.0
        %6380 = vmatpush1.msra.mxu0 0.0
        %6381 = vmatprep.subr.mxu0 0.0
        %6382 = vmatpush1.msra.mxu0 0.0
        %6383 = vmatprep.subr.mxu0 0.0
        %6384 = vmatpush1.msra.mxu0 0.0
        %6385 = vmatprep.subr.mxu0 0.0
        %6386 = vmatpush1.msra.mxu0 0.0
        %6387 = vmatprep.subr.mxu0 0.0
        %6388 = vmatpush1.msra.mxu0 0.0
        %6389 = vmatprep.subr.mxu0 0.0
        %6390 = vmatpush1.msra.mxu0 0.0
        %6391 = vmatprep.subr.mxu0 0.0
        %6392 = vmatpush1.msra.mxu0 0.0
        %6393 = vmatprep.subr.mxu0 0.0
        %6394 = vmatpush1.msra.mxu0 0.0
        %6395 = vmatprep.subr.mxu0 0.0
        %6396 = vmatpush1.msra.mxu0 0.0
        %6397 = vmatprep.subr.mxu0 0.0
        %6398 = vmatpush1.msra.mxu0 %v6292
        %6399 = vmatprep.subr.mxu0 0.0
        %6400 = vmatpush1.msra.mxu0 %v6289
        %6401 = vmatprep.subr.mxu0 0.0
        %6402 = vmatpush2.msra.mxu0 0.0
        %6403 = vmatprep.subr.mxu0 0.0
        %6404 = vmatpush2.msra.mxu0 0.0
        %6405 = vmatprep.subr.mxu0 0.0
        %6406 = vmatpush2.msra.mxu0 0.0
        %6407 = vmatprep.subr.mxu0 0.0
        %6408 = vmatpush2.msra.mxu0 0.0
        %6409 = vmatprep.subr.mxu0 0.0
        %6410 = vmatpush2.msra.mxu0 0.0
        %6411 = vmatprep.subr.mxu0 0.0
        %6412 = vmatpush2.msra.mxu0 0.0
        %6413 = vmatprep.subr.mxu0 0.0
        %6414 = vmatpush2.msra.mxu0 0.0
        %6415 = vmatprep.subr.mxu0 0.0
        %6416 = vmatpush2.msra.mxu0 0.0
        %6417 = vmatprep.subr.mxu0 0.0
        %6418 = vmatpush2.msra.mxu0 0.0
        %6419 = vmatprep.subr.mxu0 0.0
        %6420 = vmatpush2.msra.mxu0 0.0
        %6421 = vmatprep.subr.mxu0 0.0
        %6422 = vmatpush2.msra.mxu0 0.0
        %6423 = vmatprep.subr.mxu0 0.0
        %6424 = vmatpush2.msra.mxu0 0.0
        %6425 = vmatprep.subr.mxu0 0.0
        %6426 = vmatpush2.msra.mxu0 0.0
        %6427 = vmatprep.subr.mxu0 0.0
        %6428 = vmatpush2.msra.mxu0 0.0
        %6429 = vmatprep.subr.mxu0 0.0
        %6430 = vmatpush2.msra.mxu0 0.0
        %6431 = vmatprep.subr.mxu0 0.0
        %6432 = vmatpush2.msra.mxu0 0.0
        %6433 = vmatprep.mubr.f32.mxu0 0.0
        %6434 = vmatmul.mubr.f32.gmra.mxu0 %v6364
        %v6435 = vpop.f32.mrf.mxu0
        %v6436 = vadd.f32 %v6357, %v6435
        %v6437 = vpop.f32.mrf.mxu0
        %6438 = vmatprep.mubr.f32.mxu0 0.0
        %6439 = vmatmul.mubr.f32.gmra.mxu0 %v6367
        %v6440 = vpop.f32.mrf.mxu0
        %v6441 = vadd.f32 %v6360, %v6440
        %v6442 = vpop.f32.mrf.mxu0
        %6443 = vdwg.mxu0
        %s6444 = scalar_lea.vmem %s11, 48
        %v6445 = vld [vmem:[%s6444] sm:$0xf]
        %v6446 = vld [vmem:[%s6444 + $0x4] sm:$0xf]
        %v6447 = vld [vmem:[%s6444 + $0x8] sm:$0xf]
        %v6448 = vld [vmem:[%s6444 + $0xc] sm:$0xf]
        %v6449 = vld [vmem:[%s6444 + $0x10] sm:$0xf]
        %v6450 = vld [vmem:[%s6444 + $0x14] sm:$0xf]
        %v6457 = vunpack.c.l.b16 %v6445
        %v6458 = vunpack.c.l.b16 %v6446
        %v6459 = vunpack.c.l.b16 %v6447
        %v6460 = vunpack.c.l.b16 %v6448
        %v6461 = vunpack.c.l.b16 %v6449
        %v6462 = vunpack.c.l.b16 %v6450
        %v6463 = vpack.c.b16 %v6458, %v6457
        %v6464 = vpack.c.b16 %v6460, %v6459
        %v6465 = vpack.c.b16 %v6462, %v6461
        %6469 = vmatprep.subr.bf16.mxu0 0
        %6470 = vmatpush1.bf16.msra.mxu0 0
        %6471 = vmatprep.subr.bf16.mxu0 0
        %6472 = vmatpush1.bf16.msra.mxu0 0
        %6473 = vmatprep.subr.bf16.mxu0 0
        %6474 = vmatpush1.bf16.msra.mxu0 0
        %6475 = vmatprep.subr.bf16.mxu0 0
        %6476 = vmatpush1.bf16.msra.mxu0 0
        %6477 = vmatprep.subr.bf16.mxu0 0
        %6478 = vmatpush1.bf16.msra.mxu0 0
        %6479 = vmatprep.subr.bf16.mxu0 0
        %6480 = vmatpush1.bf16.msra.mxu0 %v6465
        %6481 = vmatprep.subr.bf16.mxu0 0
        %6482 = vmatpush1.bf16.msra.mxu0 %v6464
        %6483 = vmatprep.subr.bf16.mxu0 0
        %6484 = vmatpush1.bf16.msra.mxu0 %v6463
        %6485 = vmatprep.subr.bf16.mxu0 0
        %6486 = vmatpush2.bf16.msra.mxu0 0
        %6487 = vmatprep.subr.bf16.mxu0 0
        %6488 = vmatpush2.bf16.msra.mxu0 0
        %6489 = vmatprep.subr.bf16.mxu0 0
        %6490 = vmatpush2.bf16.msra.mxu0 0
        %6491 = vmatprep.subr.bf16.mxu0 0
        %6492 = vmatpush2.bf16.msra.mxu0 0
        %6493 = vmatprep.subr.bf16.mxu0 0
        %6494 = vmatpush2.bf16.msra.mxu0 0
        %6495 = vmatprep.subr.bf16.mxu0 0
        %6496 = vmatpush2.bf16.msra.mxu0 0
        %6497 = vmatprep.subr.bf16.mxu0 0
        %6498 = vmatpush2.bf16.msra.mxu0 0
        %6499 = vmatprep.subr.bf16.mxu0 0
        %6500 = vmatpush2.bf16.msra.mxu0 0
        %6501 = vmatprep.mubr.bf16.mxu0 0
        %6502 = vmatmul.mubr.bf16.gmra.mxu0 %v6252
        %v6503 = vpop.f32.mrf.mxu0
        %v6504 = vadd.f32 0.0, %v6503
        %v6505 = vpop.f32.mrf.mxu0
        %v6506 = vpop.f32.mrf.mxu0
        %v6507 = vadd.f32 0.0, %v6506
        %v6508 = vpop.f32.mrf.mxu0
        %6509 = vdwg.mxu0
        %s6510 = scalar_lea.vmem %s13, 16
        %v6511 = vld [vmem:[%s6510] sm:$0xff]
        %v6512 = vld [vmem:[%s6510 + $0x8] sm:$0xff]
        %v6514 = vsel %vm4937, %v6511, 0
        %v6517 = vsel %vm4937, %v6512, 0
        %6519 = vmatprep.subr.mxu0 0.0
        %6520 = vmatpush1.msra.mxu0 0.0
        %6521 = vmatprep.subr.mxu0 0.0
        %6522 = vmatpush1.msra.mxu0 0.0
        %6523 = vmatprep.subr.mxu0 0.0
        %6524 = vmatpush1.msra.mxu0 0.0
        %6525 = vmatprep.subr.mxu0 0.0
        %6526 = vmatpush1.msra.mxu0 0.0
        %6527 = vmatprep.subr.mxu0 0.0
        %6528 = vmatpush1.msra.mxu0 0.0
        %6529 = vmatprep.subr.mxu0 0.0
        %6530 = vmatpush1.msra.mxu0 0.0
        %6531 = vmatprep.subr.mxu0 0.0
        %6532 = vmatpush1.msra.mxu0 0.0
        %6533 = vmatprep.subr.mxu0 0.0
        %6534 = vmatpush1.msra.mxu0 0.0
        %6535 = vmatprep.subr.mxu0 0.0
        %6536 = vmatpush1.msra.mxu0 0.0
        %6537 = vmatprep.subr.mxu0 0.0
        %6538 = vmatpush1.msra.mxu0 0.0
        %6539 = vmatprep.subr.mxu0 0.0
        %6540 = vmatpush1.msra.mxu0 0.0
        %6541 = vmatprep.subr.mxu0 0.0
        %6542 = vmatpush1.msra.mxu0 0.0
        %6543 = vmatprep.subr.mxu0 0.0
        %6544 = vmatpush1.msra.mxu0 0.0
        %6545 = vmatprep.subr.mxu0 0.0
        %6546 = vmatpush1.msra.mxu0 0.0
        %6547 = vmatprep.subr.mxu0 0.0
        %6548 = vmatpush1.msra.mxu0 %v6507
        %6549 = vmatprep.subr.mxu0 0.0
        %6550 = vmatpush1.msra.mxu0 %v6504
        %6551 = vmatprep.subr.mxu0 0.0
        %6552 = vmatpush2.msra.mxu0 0.0
        %6553 = vmatprep.subr.mxu0 0.0
        %6554 = vmatpush2.msra.mxu0 0.0
        %6555 = vmatprep.subr.mxu0 0.0
        %6556 = vmatpush2.msra.mxu0 0.0
        %6557 = vmatprep.subr.mxu0 0.0
        %6558 = vmatpush2.msra.mxu0 0.0
        %6559 = vmatprep.subr.mxu0 0.0
        %6560 = vmatpush2.msra.mxu0 0.0
        %6561 = vmatprep.subr.mxu0 0.0
        %6562 = vmatpush2.msra.mxu0 0.0
        %6563 = vmatprep.subr.mxu0 0.0
        %6564 = vmatpush2.msra.mxu0 0.0
        %6565 = vmatprep.subr.mxu0 0.0
        %6566 = vmatpush2.msra.mxu0 0.0
        %6567 = vmatprep.subr.mxu0 0.0
        %6568 = vmatpush2.msra.mxu0 0.0
        %6569 = vmatprep.subr.mxu0 0.0
        %6570 = vmatpush2.msra.mxu0 0.0
        %6571 = vmatprep.subr.mxu0 0.0
        %6572 = vmatpush2.msra.mxu0 0.0
        %6573 = vmatprep.subr.mxu0 0.0
        %6574 = vmatpush2.msra.mxu0 0.0
        %6575 = vmatprep.subr.mxu0 0.0
        %6576 = vmatpush2.msra.mxu0 0.0
        %6577 = vmatprep.subr.mxu0 0.0
        %6578 = vmatpush2.msra.mxu0 0.0
        %6579 = vmatprep.subr.mxu0 0.0
        %6580 = vmatpush2.msra.mxu0 0.0
        %6581 = vmatprep.subr.mxu0 0.0
        %6582 = vmatpush2.msra.mxu0 0.0
        %6583 = vmatprep.mubr.f32.mxu0 0.0
        %6584 = vmatmul.mubr.f32.gmra.mxu0 %v6514
        %v6585 = vpop.f32.mrf.mxu0
        %v6586 = vadd.f32 0.0, %v6585
        %v6587 = vpop.f32.mrf.mxu0
        %6588 = vmatprep.mubr.f32.mxu0 0.0
        %6589 = vmatmul.mubr.f32.gmra.mxu0 %v6517
        %v6590 = vpop.f32.mrf.mxu0
        %v6591 = vadd.f32 0.0, %v6590
        %v6592 = vpop.f32.mrf.mxu0
        %6593 = vdwg.mxu0
        %v6594 = vadd.f32 %v6436, %v6586
        %v6595 = vadd.f32 %v6441, %v6591
        %v6596 = vadd.f32 %v6223, %v6594
        %v6597 = vadd.f32 %v6224, %v6595
        %v6598 = vld [vmem:[%s7] sm:$0x1]
        %v6600 = vlaneseq
        %v6601 = vshrl.u32 %v6600, 7
        %v6602 = vsub.s32 0, %v6601
        %v6603 = vrot.slane %v6598, %v6602
        %v6605 = vmul.f32 %v6596, %v6603
        %v6606 = vmul.f32 %v6597, %v6603
        %v6607 = vld [vmem:[%s9] sm:$0x1]
        %v6609 = vlaneseq
        %v6610 = vshrl.u32 %v6609, 7
        %v6611 = vsub.s32 0, %v6610
        %v6612 = vrot.slane %v6607, %v6611
        %v6614 = vadd.f32 %v6605, %v6612
        %v6615 = vadd.f32 %v6606, %v6612
        %v6616 = vmax.f32 %v6614, 0.0
        %v6617 = vmax.f32 %v6615, 0.0
        %v6618 = vpack.c.bf16 %v6617, %v6616
        %v6619 = vld [vmem:[%s19] sm:$0xf]
        %v6620 = vld [vmem:[%s19 + $0x4] sm:$0xf]
        %v6621 = vld [vmem:[%s19 + $0x8] sm:$0xf]
        %v6622 = vld [vmem:[%s19 + $0xc] sm:$0xf]
        %v6623 = vld [vmem:[%s19 + $0x10] sm:$0xf]
        %v6624 = vld [vmem:[%s19 + $0x14] sm:$0xf]
        %v6625 = vld [vmem:[%s19 + $0x18] sm:$0xf]
        %v6626 = vld [vmem:[%s19 + $0x1c] sm:$0xf]
        %v6627 = vld [vmem:[%s19 + $0x20] sm:$0xf]
        %v6628 = vld [vmem:[%s19 + $0x24] sm:$0xf]
        %v6629 = vld [vmem:[%s19 + $0x28] sm:$0xf]
        %v6630 = vld [vmem:[%s19 + $0x2c] sm:$0xf]
        %v6631 = vld [vmem:[%s19 + $0x30] sm:$0xf]
        %v6632 = vld [vmem:[%s19 + $0x34] sm:$0xf]
        %v6633 = vld [vmem:[%s19 + $0x38] sm:$0xf]
        %v6634 = vld [vmem:[%s19 + $0x3c] sm:$0xf]
        %v6651 = vunpack.c.l.b16 %v6619
        %v6652 = vunpack.c.l.b16 %v6620
        %v6653 = vunpack.c.l.b16 %v6621
        %v6654 = vunpack.c.l.b16 %v6622
        %v6655 = vunpack.c.l.b16 %v6623
        %v6656 = vunpack.c.l.b16 %v6624
        %v6657 = vunpack.c.l.b16 %v6625
        %v6658 = vunpack.c.l.b16 %v6626
        %v6659 = vunpack.c.l.b16 %v6627
        %v6660 = vunpack.c.l.b16 %v6628
        %v6661 = vunpack.c.l.b16 %v6629
        %v6662 = vunpack.c.l.b16 %v6630
        %v6663 = vunpack.c.l.b16 %v6631
        %v6664 = vunpack.c.l.b16 %v6632
        %v6665 = vunpack.c.l.b16 %v6633
        %v6666 = vunpack.c.l.b16 %v6634
        %v6667 = vpack.c.b16 %v6652, %v6651
        %v6668 = vpack.c.b16 %v6654, %v6653
        %v6669 = vpack.c.b16 %v6656, %v6655
        %v6670 = vpack.c.b16 %v6658, %v6657
        %v6671 = vpack.c.b16 %v6660, %v6659
        %v6672 = vpack.c.b16 %v6662, %v6661
        %v6673 = vpack.c.b16 %v6664, %v6663
        %v6674 = vpack.c.b16 %v6666, %v6665
        %6683 = vmatprep.subr.bf16.mxu0 0
        %6684 = vmatpush1.bf16.msra.mxu0 %v6674
        %6685 = vmatprep.subr.bf16.mxu0 0
        %6686 = vmatpush1.bf16.msra.mxu0 %v6673
        %6687 = vmatprep.subr.bf16.mxu0 0
        %6688 = vmatpush1.bf16.msra.mxu0 %v6672
        %6689 = vmatprep.subr.bf16.mxu0 0
        %6690 = vmatpush1.bf16.msra.mxu0 %v6671
        %6691 = vmatprep.subr.bf16.mxu0 0
        %6692 = vmatpush1.bf16.msra.mxu0 %v6670
        %6693 = vmatprep.subr.bf16.mxu0 0
        %6694 = vmatpush1.bf16.msra.mxu0 %v6669
        %6695 = vmatprep.subr.bf16.mxu0 0
        %6696 = vmatpush1.bf16.msra.mxu0 %v6668
        %6697 = vmatprep.subr.bf16.mxu0 0
        %6698 = vmatpush1.bf16.msra.mxu0 %v6667
        %6699 = vmatprep.subr.bf16.mxu0 0
        %6700 = vmatpush2.bf16.msra.mxu0 0
        %6701 = vmatprep.subr.bf16.mxu0 0
        %6702 = vmatpush2.bf16.msra.mxu0 0
        %6703 = vmatprep.subr.bf16.mxu0 0
        %6704 = vmatpush2.bf16.msra.mxu0 0
        %6705 = vmatprep.subr.bf16.mxu0 0
        %6706 = vmatpush2.bf16.msra.mxu0 0
        %6707 = vmatprep.subr.bf16.mxu0 0
        %6708 = vmatpush2.bf16.msra.mxu0 0
        %6709 = vmatprep.subr.bf16.mxu0 0
        %6710 = vmatpush2.bf16.msra.mxu0 0
        %6711 = vmatprep.subr.bf16.mxu0 0
        %6712 = vmatpush2.bf16.msra.mxu0 0
        %6713 = vmatprep.subr.bf16.mxu0 0
        %6714 = vmatpush2.bf16.msra.mxu0 0
        %6715 = vmatprep.mubr.bf16.mxu0 0
        %6716 = vmatmul.mubr.bf16.gmra.mxu0 %v6618
        %v6717 = vpop.f32.mrf.mxu0
        %v6718 = vadd.f32 0.0, %v6717
        %v6719 = vpop.f32.mrf.mxu0
        %v6720 = vpop.f32.mrf.mxu0
        %v6721 = vadd.f32 0.0, %v6720
        %v6722 = vpop.f32.mrf.mxu0
        %6723 = vdwg.mxu0
        %v6724 = vld [vmem:[#allocation5] sm:$0xff]
        %v6725 = vld [vmem:[#allocation5 + $0x8] sm:$0xff]
        %s6726 = scalar_lea.vmem %s19, 64
        %v6727 = vld [vmem:[%s6726] sm:$0xf]
        %v6728 = vld [vmem:[%s6726 + $0x4] sm:$0xf]
        %v6729 = vld [vmem:[%s6726 + $0x8] sm:$0xf]
        %v6730 = vld [vmem:[%s6726 + $0xc] sm:$0xf]
        %v6731 = vld [vmem:[%s6726 + $0x10] sm:$0xf]
        %v6732 = vld [vmem:[%s6726 + $0x14] sm:$0xf]
        %v6733 = vld [vmem:[%s6726 + $0x18] sm:$0xf]
        %v6734 = vld [vmem:[%s6726 + $0x1c] sm:$0xf]
        %v6735 = vld [vmem:[%s6726 + $0x20] sm:$0xf]
        %v6736 = vld [vmem:[%s6726 + $0x24] sm:$0xf]
        %v6737 = vld [vmem:[%s6726 + $0x28] sm:$0xf]
        %v6738 = vld [vmem:[%s6726 + $0x2c] sm:$0xf]
        %v6739 = vld [vmem:[%s6726 + $0x30] sm:$0xf]
        %v6740 = vld [vmem:[%s6726 + $0x34] sm:$0xf]
        %v6741 = vld [vmem:[%s6726 + $0x38] sm:$0xf]
        %v6742 = vld [vmem:[%s6726 + $0x3c] sm:$0xf]
        %v6759 = vunpack.c.l.b16 %v6727
        %v6760 = vunpack.c.l.b16 %v6728
        %v6761 = vunpack.c.l.b16 %v6729
        %v6762 = vunpack.c.l.b16 %v6730
        %v6763 = vunpack.c.l.b16 %v6731
        %v6764 = vunpack.c.l.b16 %v6732
        %v6765 = vunpack.c.l.b16 %v6733
        %v6766 = vunpack.c.l.b16 %v6734
        %v6767 = vunpack.c.l.b16 %v6735
        %v6768 = vunpack.c.l.b16 %v6736
        %v6769 = vunpack.c.l.b16 %v6737
        %v6770 = vunpack.c.l.b16 %v6738
        %v6771 = vunpack.c.l.b16 %v6739
        %v6772 = vunpack.c.l.b16 %v6740
        %v6773 = vunpack.c.l.b16 %v6741
        %v6774 = vunpack.c.l.b16 %v6742
        %v6775 = vpack.c.b16 %v6760, %v6759
        %v6776 = vpack.c.b16 %v6762, %v6761
        %v6777 = vpack.c.b16 %v6764, %v6763
        %v6778 = vpack.c.b16 %v6766, %v6765
        %v6779 = vpack.c.b16 %v6768, %v6767
        %v6780 = vpack.c.b16 %v6770, %v6769
        %v6781 = vpack.c.b16 %v6772, %v6771
        %v6782 = vpack.c.b16 %v6774, %v6773
        %6791 = vmatprep.subr.bf16.mxu0 0
        %6792 = vmatpush1.bf16.msra.mxu0 %v6782
        %6793 = vmatprep.subr.bf16.mxu0 0
        %6794 = vmatpush1.bf16.msra.mxu0 %v6781
        %6795 = vmatprep.subr.bf16.mxu0 0
        %6796 = vmatpush1.bf16.msra.mxu0 %v6780
        %6797 = vmatprep.subr.bf16.mxu0 0
        %6798 = vmatpush1.bf16.msra.mxu0 %v6779
        %6799 = vmatprep.subr.bf16.mxu0 0
        %6800 = vmatpush1.bf16.msra.mxu0 %v6778
        %6801 = vmatprep.subr.bf16.mxu0 0
        %6802 = vmatpush1.bf16.msra.mxu0 %v6777
        %6803 = vmatprep.subr.bf16.mxu0 0
        %6804 = vmatpush1.bf16.msra.mxu0 %v6776
        %6805 = vmatprep.subr.bf16.mxu0 0
        %6806 = vmatpush1.bf16.msra.mxu0 %v6775
        %6807 = vmatprep.subr.bf16.mxu0 0
        %6808 = vmatpush2.bf16.msra.mxu0 0
        %6809 = vmatprep.subr.bf16.mxu0 0
        %6810 = vmatpush2.bf16.msra.mxu0 0
        %6811 = vmatprep.subr.bf16.mxu0 0
        %6812 = vmatpush2.bf16.msra.mxu0 0
        %6813 = vmatprep.subr.bf16.mxu0 0
        %6814 = vmatpush2.bf16.msra.mxu0 0
        %6815 = vmatprep.subr.bf16.mxu0 0
        %6816 = vmatpush2.bf16.msra.mxu0 0
        %6817 = vmatprep.subr.bf16.mxu0 0
        %6818 = vmatpush2.bf16.msra.mxu0 0
        %6819 = vmatprep.subr.bf16.mxu0 0
        %6820 = vmatpush2.bf16.msra.mxu0 0
        %6821 = vmatprep.subr.bf16.mxu0 0
        %6822 = vmatpush2.bf16.msra.mxu0 0
        %6823 = vmatprep.mubr.bf16.mxu0 0
        %6824 = vmatmul.mubr.bf16.gmra.mxu0 %v6618
        %v6825 = vpop.f32.mrf.mxu0
        %v6826 = vadd.f32 0.0, %v6825
        %v6827 = vpop.f32.mrf.mxu0
        %v6828 = vpop.f32.mrf.mxu0
        %v6829 = vadd.f32 0.0, %v6828
        %v6830 = vpop.f32.mrf.mxu0
        %6831 = vdwg.mxu0
        %v6833 = vsel %vm4937, %v6724, 0
        %v6836 = vsel %vm4937, %v6725, 0
        %6838 = vmatprep.subr.mxu0 0.0
        %6839 = vmatpush1.msra.mxu0 0.0
        %6840 = vmatprep.subr.mxu0 0.0
        %6841 = vmatpush1.msra.mxu0 0.0
        %6842 = vmatprep.subr.mxu0 0.0
        %6843 = vmatpush1.msra.mxu0 0.0
        %6844 = vmatprep.subr.mxu0 0.0
        %6845 = vmatpush1.msra.mxu0 0.0
        %6846 = vmatprep.subr.mxu0 0.0
        %6847 = vmatpush1.msra.mxu0 0.0
        %6848 = vmatprep.subr.mxu0 0.0
        %6849 = vmatpush1.msra.mxu0 0.0
        %6850 = vmatprep.subr.mxu0 0.0
        %6851 = vmatpush1.msra.mxu0 0.0
        %6852 = vmatprep.subr.mxu0 0.0
        %6853 = vmatpush1.msra.mxu0 0.0
        %6854 = vmatprep.subr.mxu0 0.0
        %6855 = vmatpush1.msra.mxu0 0.0
        %6856 = vmatprep.subr.mxu0 0.0
        %6857 = vmatpush1.msra.mxu0 0.0
        %6858 = vmatprep.subr.mxu0 0.0
        %6859 = vmatpush1.msra.mxu0 0.0
        %6860 = vmatprep.subr.mxu0 0.0
        %6861 = vmatpush1.msra.mxu0 0.0
        %6862 = vmatprep.subr.mxu0 0.0
        %6863 = vmatpush1.msra.mxu0 0.0
        %6864 = vmatprep.subr.mxu0 0.0
        %6865 = vmatpush1.msra.mxu0 0.0
        %6866 = vmatprep.subr.mxu0 0.0
        %6867 = vmatpush1.msra.mxu0 %v6721
        %6868 = vmatprep.subr.mxu0 0.0
        %6869 = vmatpush1.msra.mxu0 %v6718
        %6870 = vmatprep.subr.mxu0 0.0
        %6871 = vmatpush2.msra.mxu0 0.0
        %6872 = vmatprep.subr.mxu0 0.0
        %6873 = vmatpush2.msra.mxu0 0.0
        %6874 = vmatprep.subr.mxu0 0.0
        %6875 = vmatpush2.msra.mxu0 0.0
        %6876 = vmatprep.subr.mxu0 0.0
        %6877 = vmatpush2.msra.mxu0 0.0
        %6878 = vmatprep.subr.mxu0 0.0
        %6879 = vmatpush2.msra.mxu0 0.0
        %6880 = vmatprep.subr.mxu0 0.0
        %6881 = vmatpush2.msra.mxu0 0.0
        %6882 = vmatprep.subr.mxu0 0.0
        %6883 = vmatpush2.msra.mxu0 0.0
        %6884 = vmatprep.subr.mxu0 0.0
        %6885 = vmatpush2.msra.mxu0 0.0
        %6886 = vmatprep.subr.mxu0 0.0
        %6887 = vmatpush2.msra.mxu0 0.0
        %6888 = vmatprep.subr.mxu0 0.0
        %6889 = vmatpush2.msra.mxu0 0.0
        %6890 = vmatprep.subr.mxu0 0.0
        %6891 = vmatpush2.msra.mxu0 0.0
        %6892 = vmatprep.subr.mxu0 0.0
        %6893 = vmatpush2.msra.mxu0 0.0
        %6894 = vmatprep.subr.mxu0 0.0
        %6895 = vmatpush2.msra.mxu0 0.0
        %6896 = vmatprep.subr.mxu0 0.0
        %6897 = vmatpush2.msra.mxu0 0.0
        %6898 = vmatprep.subr.mxu0 0.0
        %6899 = vmatpush2.msra.mxu0 0.0
        %6900 = vmatprep.subr.mxu0 0.0
        %6901 = vmatpush2.msra.mxu0 0.0
        %6902 = vmatprep.mubr.f32.mxu0 0.0
        %6903 = vmatmul.mubr.f32.gmra.mxu0 %v6833
        %v6904 = vpop.f32.mrf.mxu0
        %v6905 = vadd.f32 %v6826, %v6904
        %v6906 = vpop.f32.mrf.mxu0
        %6907 = vmatprep.mubr.f32.mxu0 0.0
        %6908 = vmatmul.mubr.f32.gmra.mxu0 %v6836
        %v6909 = vpop.f32.mrf.mxu0
        %v6910 = vadd.f32 %v6829, %v6909
        %v6911 = vpop.f32.mrf.mxu0
        %6912 = vdwg.mxu0
        %s6913 = scalar_lea.vmem %s19, 128
        %v6914 = vld [vmem:[%s6913] sm:$0xf]
        %v6915 = vld [vmem:[%s6913 + $0x4] sm:$0xf]
        %v6916 = vld [vmem:[%s6913 + $0x8] sm:$0xf]
        %v6917 = vld [vmem:[%s6913 + $0xc] sm:$0xf]
        %v6918 = vld [vmem:[%s6913 + $0x10] sm:$0xf]
        %v6919 = vld [vmem:[%s6913 + $0x14] sm:$0xf]
        %v6920 = vld [vmem:[%s6913 + $0x18] sm:$0xf]
        %v6921 = vld [vmem:[%s6913 + $0x1c] sm:$0xf]
        %v6922 = vld [vmem:[%s6913 + $0x20] sm:$0xf]
        %v6923 = vld [vmem:[%s6913 + $0x24] sm:$0xf]
        %v6924 = vld [vmem:[%s6913 + $0x28] sm:$0xf]
        %v6925 = vld [vmem:[%s6913 + $0x2c] sm:$0xf]
        %v6926 = vld [vmem:[%s6913 + $0x30] sm:$0xf]
        %v6927 = vld [vmem:[%s6913 + $0x34] sm:$0xf]
        %v6928 = vld [vmem:[%s6913 + $0x38] sm:$0xf]
        %v6929 = vld [vmem:[%s6913 + $0x3c] sm:$0xf]
        %v6946 = vunpack.c.l.b16 %v6914
        %v6947 = vunpack.c.l.b16 %v6915
        %v6948 = vunpack.c.l.b16 %v6916
        %v6949 = vunpack.c.l.b16 %v6917
        %v6950 = vunpack.c.l.b16 %v6918
        %v6951 = vunpack.c.l.b16 %v6919
        %v6952 = vunpack.c.l.b16 %v6920
        %v6953 = vunpack.c.l.b16 %v6921
        %v6954 = vunpack.c.l.b16 %v6922
        %v6955 = vunpack.c.l.b16 %v6923
        %v6956 = vunpack.c.l.b16 %v6924
        %v6957 = vunpack.c.l.b16 %v6925
        %v6958 = vunpack.c.l.b16 %v6926
        %v6959 = vunpack.c.l.b16 %v6927
        %v6960 = vunpack.c.l.b16 %v6928
        %v6961 = vunpack.c.l.b16 %v6929
        %v6962 = vpack.c.b16 %v6947, %v6946
        %v6963 = vpack.c.b16 %v6949, %v6948
        %v6964 = vpack.c.b16 %v6951, %v6950
        %v6965 = vpack.c.b16 %v6953, %v6952
        %v6966 = vpack.c.b16 %v6955, %v6954
        %v6967 = vpack.c.b16 %v6957, %v6956
        %v6968 = vpack.c.b16 %v6959, %v6958
        %v6969 = vpack.c.b16 %v6961, %v6960
        %6978 = vmatprep.subr.bf16.mxu0 0
        %6979 = vmatpush1.bf16.msra.mxu0 %v6969
        %6980 = vmatprep.subr.bf16.mxu0 0
        %6981 = vmatpush1.bf16.msra.mxu0 %v6968
        %6982 = vmatprep.subr.bf16.mxu0 0
        %6983 = vmatpush1.bf16.msra.mxu0 %v6967
        %6984 = vmatprep.subr.bf16.mxu0 0
        %6985 = vmatpush1.bf16.msra.mxu0 %v6966
        %6986 = vmatprep.subr.bf16.mxu0 0
        %6987 = vmatpush1.bf16.msra.mxu0 %v6965
        %6988 = vmatprep.subr.bf16.mxu0 0
        %6989 = vmatpush1.bf16.msra.mxu0 %v6964
        %6990 = vmatprep.subr.bf16.mxu0 0
        %6991 = vmatpush1.bf16.msra.mxu0 %v6963
        %6992 = vmatprep.subr.bf16.mxu0 0
        %6993 = vmatpush1.bf16.msra.mxu0 %v6962
        %6994 = vmatprep.subr.bf16.mxu0 0
        %6995 = vmatpush2.bf16.msra.mxu0 0
        %6996 = vmatprep.subr.bf16.mxu0 0
        %6997 = vmatpush2.bf16.msra.mxu0 0
        %6998 = vmatprep.subr.bf16.mxu0 0
        %6999 = vmatpush2.bf16.msra.mxu0 0
        %7000 = vmatprep.subr.bf16.mxu0 0
        %7001 = vmatpush2.bf16.msra.mxu0 0
        %7002 = vmatprep.subr.bf16.mxu0 0
        %7003 = vmatpush2.bf16.msra.mxu0 0
        %7004 = vmatprep.subr.bf16.mxu0 0
        %7005 = vmatpush2.bf16.msra.mxu0 0
        %7006 = vmatprep.subr.bf16.mxu0 0
        %7007 = vmatpush2.bf16.msra.mxu0 0
        %7008 = vmatprep.subr.bf16.mxu0 0
        %7009 = vmatpush2.bf16.msra.mxu0 0
        %7010 = vmatprep.mubr.bf16.mxu0 0
        %7011 = vmatmul.mubr.bf16.gmra.mxu0 %v6618
        %v7012 = vpop.f32.mrf.mxu0
        %v7013 = vadd.f32 0.0, %v7012
        %v7014 = vpop.f32.mrf.mxu0
        %v7015 = vpop.f32.mrf.mxu0
        %v7016 = vadd.f32 0.0, %v7015
        %v7017 = vpop.f32.mrf.mxu0
        %7018 = vdwg.mxu0
        %s7019 = scalar_lea.vmem [#allocation5], 16
        %v7020 = vld [vmem:[%s7019] sm:$0xff]
        %v7021 = vld [vmem:[%s7019 + $0x8] sm:$0xff]
        %v7023 = vsel %vm4937, %v7020, 0
        %v7026 = vsel %vm4937, %v7021, 0
        %7028 = vmatprep.subr.mxu0 0.0
        %7029 = vmatpush1.msra.mxu0 0.0
        %7030 = vmatprep.subr.mxu0 0.0
        %7031 = vmatpush1.msra.mxu0 0.0
        %7032 = vmatprep.subr.mxu0 0.0
        %7033 = vmatpush1.msra.mxu0 0.0
        %7034 = vmatprep.subr.mxu0 0.0
        %7035 = vmatpush1.msra.mxu0 0.0
        %7036 = vmatprep.subr.mxu0 0.0
        %7037 = vmatpush1.msra.mxu0 0.0
        %7038 = vmatprep.subr.mxu0 0.0
        %7039 = vmatpush1.msra.mxu0 0.0
        %7040 = vmatprep.subr.mxu0 0.0
        %7041 = vmatpush1.msra.mxu0 0.0
        %7042 = vmatprep.subr.mxu0 0.0
        %7043 = vmatpush1.msra.mxu0 0.0
        %7044 = vmatprep.subr.mxu0 0.0
        %7045 = vmatpush1.msra.mxu0 0.0
        %7046 = vmatprep.subr.mxu0 0.0
        %7047 = vmatpush1.msra.mxu0 0.0
        %7048 = vmatprep.subr.mxu0 0.0
        %7049 = vmatpush1.msra.mxu0 0.0
        %7050 = vmatprep.subr.mxu0 0.0
        %7051 = vmatpush1.msra.mxu0 0.0
        %7052 = vmatprep.subr.mxu0 0.0
        %7053 = vmatpush1.msra.mxu0 0.0
        %7054 = vmatprep.subr.mxu0 0.0
        %7055 = vmatpush1.msra.mxu0 0.0
        %7056 = vmatprep.subr.mxu0 0.0
        %7057 = vmatpush1.msra.mxu0 %v7016
        %7058 = vmatprep.subr.mxu0 0.0
        %7059 = vmatpush1.msra.mxu0 %v7013
        %7060 = vmatprep.subr.mxu0 0.0
        %7061 = vmatpush2.msra.mxu0 0.0
        %7062 = vmatprep.subr.mxu0 0.0
        %7063 = vmatpush2.msra.mxu0 0.0
        %7064 = vmatprep.subr.mxu0 0.0
        %7065 = vmatpush2.msra.mxu0 0.0
        %7066 = vmatprep.subr.mxu0 0.0
        %7067 = vmatpush2.msra.mxu0 0.0
        %7068 = vmatprep.subr.mxu0 0.0
        %7069 = vmatpush2.msra.mxu0 0.0
        %7070 = vmatprep.subr.mxu0 0.0
        %7071 = vmatpush2.msra.mxu0 0.0
        %7072 = vmatprep.subr.mxu0 0.0
        %7073 = vmatpush2.msra.mxu0 0.0
        %7074 = vmatprep.subr.mxu0 0.0
        %7075 = vmatpush2.msra.mxu0 0.0
        %7076 = vmatprep.subr.mxu0 0.0
        %7077 = vmatpush2.msra.mxu0 0.0
        %7078 = vmatprep.subr.mxu0 0.0
        %7079 = vmatpush2.msra.mxu0 0.0
        %7080 = vmatprep.subr.mxu0 0.0
        %7081 = vmatpush2.msra.mxu0 0.0
        %7082 = vmatprep.subr.mxu0 0.0
        %7083 = vmatpush2.msra.mxu0 0.0
        %7084 = vmatprep.subr.mxu0 0.0
        %7085 = vmatpush2.msra.mxu0 0.0
        %7086 = vmatprep.subr.mxu0 0.0
        %7087 = vmatpush2.msra.mxu0 0.0
        %7088 = vmatprep.subr.mxu0 0.0
        %7089 = vmatpush2.msra.mxu0 0.0
        %7090 = vmatprep.subr.mxu0 0.0
        %7091 = vmatpush2.msra.mxu0 0.0
        %7092 = vmatprep.mubr.f32.mxu0 0.0
        %7093 = vmatmul.mubr.f32.gmra.mxu0 %v7023
        %v7094 = vpop.f32.mrf.mxu0
        %v7095 = vadd.f32 0.0, %v7094
        %v7096 = vpop.f32.mrf.mxu0
        %7097 = vmatprep.mubr.f32.mxu0 0.0
        %7098 = vmatmul.mubr.f32.gmra.mxu0 %v7026
        %v7099 = vpop.f32.mrf.mxu0
        %v7100 = vadd.f32 0.0, %v7099
        %v7101 = vpop.f32.mrf.mxu0
        %7102 = vdwg.mxu0
        %v7103 = vadd.f32 %v6905, %v7095
        %v7104 = vadd.f32 %v6910, %v7100
        %v7105 = vld [vmem:[%s23] sm:$0x1]
        %v7107 = vlaneseq
        %v7108 = vshrl.u32 %v7107, 7
        %v7109 = vsub.s32 0, %v7108
        %v7110 = vrot.slane %v7105, %v7109
        %v7112 = vmul.f32 %v7103, %v7110
        %v7113 = vmul.f32 %v7104, %v7110
        %v7114 = vld [vmem:[%s25] sm:$0x1]
        %v7116 = vlaneseq
        %v7117 = vshrl.u32 %v7116, 7
        %v7118 = vsub.s32 0, %v7117
        %v7119 = vrot.slane %v7114, %v7118
        %v7121 = vadd.f32 %v7112, %v7119
        %v7122 = vadd.f32 %v7113, %v7119
        %v7123 = vmax.f32 %v7121, 0.0
        %v7124 = vmax.f32 %v7122, 0.0
        %v7125 = vpack.c.bf16 %v7124, %v7123
        %v7126 = vld [vmem:[%s27] sm:$0xf]
        %v7127 = vld [vmem:[%s27 + $0x4] sm:$0xf]
        %v7128 = vld [vmem:[%s27 + $0x8] sm:$0xf]
        %v7129 = vld [vmem:[%s27 + $0xc] sm:$0xf]
        %v7130 = vld [vmem:[%s27 + $0x10] sm:$0xf]
        %v7131 = vld [vmem:[%s27 + $0x14] sm:$0xf]
        %v7132 = vld [vmem:[%s27 + $0x18] sm:$0xf]
        %v7133 = vld [vmem:[%s27 + $0x1c] sm:$0xf]
        %v7142 = vunpack.c.l.b16 %v7126
        %v7143 = vunpack.c.l.b16 %v7127
        %v7144 = vunpack.c.l.b16 %v7128
        %v7145 = vunpack.c.l.b16 %v7129
        %v7146 = vunpack.c.l.b16 %v7130
        %v7147 = vunpack.c.l.b16 %v7131
        %v7148 = vunpack.c.l.b16 %v7132
        %v7149 = vunpack.c.l.b16 %v7133
        %v7150 = vpack.c.b16 %v7143, %v7142
        %v7151 = vpack.c.b16 %v7145, %v7144
        %v7152 = vpack.c.b16 %v7147, %v7146
        %v7153 = vpack.c.b16 %v7149, %v7148
        %v7159 = vsel %vm1989, %v7125, 0
        %7161 = vmatprep.subr.bf16.mxu0 0
        %7162 = vmatpush1.bf16.msra.mxu0 0
        %7163 = vmatprep.subr.bf16.mxu0 0
        %7164 = vmatpush1.bf16.msra.mxu0 0
        %7165 = vmatprep.subr.bf16.mxu0 0
        %7166 = vmatpush1.bf16.msra.mxu0 0
        %7167 = vmatprep.subr.bf16.mxu0 0
        %7168 = vmatpush1.bf16.msra.mxu0 0
        %7169 = vmatprep.subr.bf16.mxu0 0
        %7170 = vmatpush1.bf16.msra.mxu0 %v7153
        %7171 = vmatprep.subr.bf16.mxu0 0
        %7172 = vmatpush1.bf16.msra.mxu0 %v7152
        %7173 = vmatprep.subr.bf16.mxu0 0
        %7174 = vmatpush1.bf16.msra.mxu0 %v7151
        %7175 = vmatprep.subr.bf16.mxu0 0
        %7176 = vmatpush1.bf16.msra.mxu0 %v7150
        %7177 = vmatprep.subr.bf16.mxu0 0
        %7178 = vmatpush2.bf16.msra.mxu0 0
        %7179 = vmatprep.subr.bf16.mxu0 0
        %7180 = vmatpush2.bf16.msra.mxu0 0
        %7181 = vmatprep.subr.bf16.mxu0 0
        %7182 = vmatpush2.bf16.msra.mxu0 0
        %7183 = vmatprep.subr.bf16.mxu0 0
        %7184 = vmatpush2.bf16.msra.mxu0 0
        %7185 = vmatprep.subr.bf16.mxu0 0
        %7186 = vmatpush2.bf16.msra.mxu0 0
        %7187 = vmatprep.subr.bf16.mxu0 0
        %7188 = vmatpush2.bf16.msra.mxu0 0
        %7189 = vmatprep.subr.bf16.mxu0 0
        %7190 = vmatpush2.bf16.msra.mxu0 0
        %7191 = vmatprep.subr.bf16.mxu0 0
        %7192 = vmatpush2.bf16.msra.mxu0 0
        %7193 = vmatprep.mubr.bf16.mxu0 0
        %7194 = vmatmul.mubr.bf16.gmra.mxu0 %v7159
        %v7195 = vpop.f32.mrf.mxu0
        %v7196 = vadd.f32 0.0, %v7195
        %v7197 = vpop.f32.mrf.mxu0
        %v7198 = vpop.f32.mrf.mxu0
        %v7199 = vadd.f32 0.0, %v7198
        %v7200 = vpop.f32.mrf.mxu0
        %7201 = vdwg.mxu0
        %v7202 = vld [vmem:[%s29] sm:$0xff]
        %v7203 = vld [vmem:[%s29 + $0x8] sm:$0xff]
        %s7204 = scalar_lea.vmem %s27, 32
        %v7205 = vld [vmem:[%s7204] sm:$0xf]
        %v7206 = vld [vmem:[%s7204 + $0x4] sm:$0xf]
        %v7207 = vld [vmem:[%s7204 + $0x8] sm:$0xf]
        %v7208 = vld [vmem:[%s7204 + $0xc] sm:$0xf]
        %v7209 = vld [vmem:[%s7204 + $0x10] sm:$0xf]
        %v7210 = vld [vmem:[%s7204 + $0x14] sm:$0xf]
        %v7211 = vld [vmem:[%s7204 + $0x18] sm:$0xf]
        %v7212 = vld [vmem:[%s7204 + $0x1c] sm:$0xf]
        %v7221 = vunpack.c.l.b16 %v7205
        %v7222 = vunpack.c.l.b16 %v7206
        %v7223 = vunpack.c.l.b16 %v7207
        %v7224 = vunpack.c.l.b16 %v7208
        %v7225 = vunpack.c.l.b16 %v7209
        %v7226 = vunpack.c.l.b16 %v7210
        %v7227 = vunpack.c.l.b16 %v7211
        %v7228 = vunpack.c.l.b16 %v7212
        %v7229 = vpack.c.b16 %v7222, %v7221
        %v7230 = vpack.c.b16 %v7224, %v7223
        %v7231 = vpack.c.b16 %v7226, %v7225
        %v7232 = vpack.c.b16 %v7228, %v7227
        %7237 = vmatprep.subr.bf16.mxu0 0
        %7238 = vmatpush1.bf16.msra.mxu0 0
        %7239 = vmatprep.subr.bf16.mxu0 0
        %7240 = vmatpush1.bf16.msra.mxu0 0
        %7241 = vmatprep.subr.bf16.mxu0 0
        %7242 = vmatpush1.bf16.msra.mxu0 0
        %7243 = vmatprep.subr.bf16.mxu0 0
        %7244 = vmatpush1.bf16.msra.mxu0 0
        %7245 = vmatprep.subr.bf16.mxu0 0
        %7246 = vmatpush1.bf16.msra.mxu0 %v7232
        %7247 = vmatprep.subr.bf16.mxu0 0
        %7248 = vmatpush1.bf16.msra.mxu0 %v7231
        %7249 = vmatprep.subr.bf16.mxu0 0
        %7250 = vmatpush1.bf16.msra.mxu0 %v7230
        %7251 = vmatprep.subr.bf16.mxu0 0
        %7252 = vmatpush1.bf16.msra.mxu0 %v7229
        %7253 = vmatprep.subr.bf16.mxu0 0
        %7254 = vmatpush2.bf16.msra.mxu0 0
        %7255 = vmatprep.subr.bf16.mxu0 0
        %7256 = vmatpush2.bf16.msra.mxu0 0
        %7257 = vmatprep.subr.bf16.mxu0 0
        %7258 = vmatpush2.bf16.msra.mxu0 0
        %7259 = vmatprep.subr.bf16.mxu0 0
        %7260 = vmatpush2.bf16.msra.mxu0 0
        %7261 = vmatprep.subr.bf16.mxu0 0
        %7262 = vmatpush2.bf16.msra.mxu0 0
        %7263 = vmatprep.subr.bf16.mxu0 0
        %7264 = vmatpush2.bf16.msra.mxu0 0
        %7265 = vmatprep.subr.bf16.mxu0 0
        %7266 = vmatpush2.bf16.msra.mxu0 0
        %7267 = vmatprep.subr.bf16.mxu0 0
        %7268 = vmatpush2.bf16.msra.mxu0 0
        %7269 = vmatprep.mubr.bf16.mxu0 0
        %7270 = vmatmul.mubr.bf16.gmra.mxu0 %v7159
        %v7271 = vpop.f32.mrf.mxu0
        %v7272 = vadd.f32 0.0, %v7271
        %v7273 = vpop.f32.mrf.mxu0
        %v7274 = vpop.f32.mrf.mxu0
        %v7275 = vadd.f32 0.0, %v7274
        %v7276 = vpop.f32.mrf.mxu0
        %7277 = vdwg.mxu0
        %s7278 = scalar_lea.vmem %s29, 16
        %v7279 = vld [vmem:[%s7278] sm:$0xff]
        %v7280 = vld [vmem:[%s7278 + $0x8] sm:$0xff]
        %v7282 = vsel %vm4937, %v7279, 0
        %v7285 = vsel %vm4937, %v7280, 0
        %7287 = vmatprep.subr.mxu0 0.0
        %7288 = vmatpush1.msra.mxu0 0.0
        %7289 = vmatprep.subr.mxu0 0.0
        %7290 = vmatpush1.msra.mxu0 0.0
        %7291 = vmatprep.subr.mxu0 0.0
        %7292 = vmatpush1.msra.mxu0 0.0
        %7293 = vmatprep.subr.mxu0 0.0
        %7294 = vmatpush1.msra.mxu0 0.0
        %7295 = vmatprep.subr.mxu0 0.0
        %7296 = vmatpush1.msra.mxu0 0.0
        %7297 = vmatprep.subr.mxu0 0.0
        %7298 = vmatpush1.msra.mxu0 0.0
        %7299 = vmatprep.subr.mxu0 0.0
        %7300 = vmatpush1.msra.mxu0 0.0
        %7301 = vmatprep.subr.mxu0 0.0
        %7302 = vmatpush1.msra.mxu0 0.0
        %7303 = vmatprep.subr.mxu0 0.0
        %7304 = vmatpush1.msra.mxu0 0.0
        %7305 = vmatprep.subr.mxu0 0.0
        %7306 = vmatpush1.msra.mxu0 0.0
        %7307 = vmatprep.subr.mxu0 0.0
        %7308 = vmatpush1.msra.mxu0 0.0
        %7309 = vmatprep.subr.mxu0 0.0
        %7310 = vmatpush1.msra.mxu0 0.0
        %7311 = vmatprep.subr.mxu0 0.0
        %7312 = vmatpush1.msra.mxu0 0.0
        %7313 = vmatprep.subr.mxu0 0.0
        %7314 = vmatpush1.msra.mxu0 0.0
        %7315 = vmatprep.subr.mxu0 0.0
        %7316 = vmatpush1.msra.mxu0 %v7275
        %7317 = vmatprep.subr.mxu0 0.0
        %7318 = vmatpush1.msra.mxu0 %v7272
        %7319 = vmatprep.subr.mxu0 0.0
        %7320 = vmatpush2.msra.mxu0 0.0
        %7321 = vmatprep.subr.mxu0 0.0
        %7322 = vmatpush2.msra.mxu0 0.0
        %7323 = vmatprep.subr.mxu0 0.0
        %7324 = vmatpush2.msra.mxu0 0.0
        %7325 = vmatprep.subr.mxu0 0.0
        %7326 = vmatpush2.msra.mxu0 0.0
        %7327 = vmatprep.subr.mxu0 0.0
        %7328 = vmatpush2.msra.mxu0 0.0
        %7329 = vmatprep.subr.mxu0 0.0
        %7330 = vmatpush2.msra.mxu0 0.0
        %7331 = vmatprep.subr.mxu0 0.0
        %7332 = vmatpush2.msra.mxu0 0.0
        %7333 = vmatprep.subr.mxu0 0.0
        %7334 = vmatpush2.msra.mxu0 0.0
        %7335 = vmatprep.subr.mxu0 0.0
        %7336 = vmatpush2.msra.mxu0 0.0
        %7337 = vmatprep.subr.mxu0 0.0
        %7338 = vmatpush2.msra.mxu0 0.0
        %7339 = vmatprep.subr.mxu0 0.0
        %7340 = vmatpush2.msra.mxu0 0.0
        %7341 = vmatprep.subr.mxu0 0.0
        %7342 = vmatpush2.msra.mxu0 0.0
        %7343 = vmatprep.subr.mxu0 0.0
        %7344 = vmatpush2.msra.mxu0 0.0
        %7345 = vmatprep.subr.mxu0 0.0
        %7346 = vmatpush2.msra.mxu0 0.0
        %7347 = vmatprep.subr.mxu0 0.0
        %7348 = vmatpush2.msra.mxu0 0.0
        %7349 = vmatprep.subr.mxu0 0.0
        %7350 = vmatpush2.msra.mxu0 0.0
        %7351 = vmatprep.mubr.f32.mxu0 0.0
        %7352 = vmatmul.mubr.f32.gmra.mxu0 %v7282
        %v7353 = vpop.f32.mrf.mxu0
        %v7354 = vadd.f32 0.0, %v7353
        %v7355 = vpop.f32.mrf.mxu0
        %7356 = vmatprep.mubr.f32.mxu0 0.0
        %7357 = vmatmul.mubr.f32.gmra.mxu0 %v7285
        %v7358 = vpop.f32.mrf.mxu0
        %v7359 = vadd.f32 0.0, %v7358
        %v7360 = vpop.f32.mrf.mxu0
        %7361 = vdwg.mxu0
        %v7363 = vsel %vm4937, %v7202, 0
        %v7366 = vsel %vm4937, %v7203, 0
        %7368 = vmatprep.subr.mxu0 0.0
        %7369 = vmatpush1.msra.mxu0 0.0
        %7370 = vmatprep.subr.mxu0 0.0
        %7371 = vmatpush1.msra.mxu0 0.0
        %7372 = vmatprep.subr.mxu0 0.0
        %7373 = vmatpush1.msra.mxu0 0.0
        %7374 = vmatprep.subr.mxu0 0.0
        %7375 = vmatpush1.msra.mxu0 0.0
        %7376 = vmatprep.subr.mxu0 0.0
        %7377 = vmatpush1.msra.mxu0 0.0
        %7378 = vmatprep.subr.mxu0 0.0
        %7379 = vmatpush1.msra.mxu0 0.0
        %7380 = vmatprep.subr.mxu0 0.0
        %7381 = vmatpush1.msra.mxu0 0.0
        %7382 = vmatprep.subr.mxu0 0.0
        %7383 = vmatpush1.msra.mxu0 0.0
        %7384 = vmatprep.subr.mxu0 0.0
        %7385 = vmatpush1.msra.mxu0 0.0
        %7386 = vmatprep.subr.mxu0 0.0
        %7387 = vmatpush1.msra.mxu0 0.0
        %7388 = vmatprep.subr.mxu0 0.0
        %7389 = vmatpush1.msra.mxu0 0.0
        %7390 = vmatprep.subr.mxu0 0.0
        %7391 = vmatpush1.msra.mxu0 0.0
        %7392 = vmatprep.subr.mxu0 0.0
        %7393 = vmatpush1.msra.mxu0 0.0
        %7394 = vmatprep.subr.mxu0 0.0
        %7395 = vmatpush1.msra.mxu0 0.0
        %7396 = vmatprep.subr.mxu0 0.0
        %7397 = vmatpush1.msra.mxu0 %v7199
        %7398 = vmatprep.subr.mxu0 0.0
        %7399 = vmatpush1.msra.mxu0 %v7196
        %7400 = vmatprep.subr.mxu0 0.0
        %7401 = vmatpush2.msra.mxu0 0.0
        %7402 = vmatprep.subr.mxu0 0.0
        %7403 = vmatpush2.msra.mxu0 0.0
        %7404 = vmatprep.subr.mxu0 0.0
        %7405 = vmatpush2.msra.mxu0 0.0
        %7406 = vmatprep.subr.mxu0 0.0
        %7407 = vmatpush2.msra.mxu0 0.0
        %7408 = vmatprep.subr.mxu0 0.0
        %7409 = vmatpush2.msra.mxu0 0.0
        %7410 = vmatprep.subr.mxu0 0.0
        %7411 = vmatpush2.msra.mxu0 0.0
        %7412 = vmatprep.subr.mxu0 0.0
        %7413 = vmatpush2.msra.mxu0 0.0
        %7414 = vmatprep.subr.mxu0 0.0
        %7415 = vmatpush2.msra.mxu0 0.0
        %7416 = vmatprep.subr.mxu0 0.0
        %7417 = vmatpush2.msra.mxu0 0.0
        %7418 = vmatprep.subr.mxu0 0.0
        %7419 = vmatpush2.msra.mxu0 0.0
        %7420 = vmatprep.subr.mxu0 0.0
        %7421 = vmatpush2.msra.mxu0 0.0
        %7422 = vmatprep.subr.mxu0 0.0
        %7423 = vmatpush2.msra.mxu0 0.0
        %7424 = vmatprep.subr.mxu0 0.0
        %7425 = vmatpush2.msra.mxu0 0.0
        %7426 = vmatprep.subr.mxu0 0.0
        %7427 = vmatpush2.msra.mxu0 0.0
        %7428 = vmatprep.subr.mxu0 0.0
        %7429 = vmatpush2.msra.mxu0 0.0
        %7430 = vmatprep.subr.mxu0 0.0
        %7431 = vmatpush2.msra.mxu0 0.0
        %7432 = vmatprep.mubr.f32.mxu0 0.0
        %7433 = vmatmul.mubr.f32.gmra.mxu0 %v7363
        %v7434 = vpop.f32.mrf.mxu0
        %v7435 = vadd.f32 %v7354, %v7434
        %v7436 = vpop.f32.mrf.mxu0
        %7437 = vmatprep.mubr.f32.mxu0 0.0
        %7438 = vmatmul.mubr.f32.gmra.mxu0 %v7366
        %v7439 = vpop.f32.mrf.mxu0
        %v7440 = vadd.f32 %v7359, %v7439
        %v7441 = vpop.f32.mrf.mxu0
        %7442 = vdwg.mxu0
        %s7443 = scalar_lea.vmem %s27, 64
        %v7444 = vld [vmem:[%s7443] sm:$0xf]
        %v7445 = vld [vmem:[%s7443 + $0x4] sm:$0xf]
        %v7446 = vld [vmem:[%s7443 + $0x8] sm:$0xf]
        %v7447 = vld [vmem:[%s7443 + $0xc] sm:$0xf]
        %v7448 = vld [vmem:[%s7443 + $0x10] sm:$0xf]
        %v7449 = vld [vmem:[%s7443 + $0x14] sm:$0xf]
        %v7450 = vld [vmem:[%s7443 + $0x18] sm:$0xf]
        %v7451 = vld [vmem:[%s7443 + $0x1c] sm:$0xf]
        %v7460 = vunpack.c.l.b16 %v7444
        %v7461 = vunpack.c.l.b16 %v7445
        %v7462 = vunpack.c.l.b16 %v7446
        %v7463 = vunpack.c.l.b16 %v7447
        %v7464 = vunpack.c.l.b16 %v7448
        %v7465 = vunpack.c.l.b16 %v7449
        %v7466 = vunpack.c.l.b16 %v7450
        %v7467 = vunpack.c.l.b16 %v7451
        %v7468 = vpack.c.b16 %v7461, %v7460
        %v7469 = vpack.c.b16 %v7463, %v7462
        %v7470 = vpack.c.b16 %v7465, %v7464
        %v7471 = vpack.c.b16 %v7467, %v7466
        %7476 = vmatprep.subr.bf16.mxu0 0
        %7477 = vmatpush1.bf16.msra.mxu0 0
        %7478 = vmatprep.subr.bf16.mxu0 0
        %7479 = vmatpush1.bf16.msra.mxu0 0
        %7480 = vmatprep.subr.bf16.mxu0 0
        %7481 = vmatpush1.bf16.msra.mxu0 0
        %7482 = vmatprep.subr.bf16.mxu0 0
        %7483 = vmatpush1.bf16.msra.mxu0 0
        %7484 = vmatprep.subr.bf16.mxu0 0
        %7485 = vmatpush1.bf16.msra.mxu0 %v7471
        %7486 = vmatprep.subr.bf16.mxu0 0
        %7487 = vmatpush1.bf16.msra.mxu0 %v7470
        %7488 = vmatprep.subr.bf16.mxu0 0
        %7489 = vmatpush1.bf16.msra.mxu0 %v7469
        %7490 = vmatprep.subr.bf16.mxu0 0
        %7491 = vmatpush1.bf16.msra.mxu0 %v7468
        %7492 = vmatprep.subr.bf16.mxu0 0
        %7493 = vmatpush2.bf16.msra.mxu0 0
        %7494 = vmatprep.subr.bf16.mxu0 0
        %7495 = vmatpush2.bf16.msra.mxu0 0
        %7496 = vmatprep.subr.bf16.mxu0 0
        %7497 = vmatpush2.bf16.msra.mxu0 0
        %7498 = vmatprep.subr.bf16.mxu0 0
        %7499 = vmatpush2.bf16.msra.mxu0 0
        %7500 = vmatprep.subr.bf16.mxu0 0
        %7501 = vmatpush2.bf16.msra.mxu0 0
        %7502 = vmatprep.subr.bf16.mxu0 0
        %7503 = vmatpush2.bf16.msra.mxu0 0
        %7504 = vmatprep.subr.bf16.mxu0 0
        %7505 = vmatpush2.bf16.msra.mxu0 0
        %7506 = vmatprep.subr.bf16.mxu0 0
        %7507 = vmatpush2.bf16.msra.mxu0 0
        %7508 = vmatprep.mubr.bf16.mxu0 0
        %7509 = vmatmul.mubr.bf16.gmra.mxu0 %v7159
        %v7510 = vpop.f32.mrf.mxu0
        %v7511 = vadd.f32 0.0, %v7510
        %v7512 = vpop.f32.mrf.mxu0
        %v7513 = vpop.f32.mrf.mxu0
        %v7514 = vadd.f32 0.0, %v7513
        %v7515 = vpop.f32.mrf.mxu0
        %7516 = vdwg.mxu0
        %s7517 = scalar_lea.vmem %s29, 32
        %v7518 = vld [vmem:[%s7517] sm:$0xff]
        %v7519 = vld [vmem:[%s7517 + $0x8] sm:$0xff]
        %v7521 = vsel %vm4937, %v7518, 0
        %v7524 = vsel %vm4937, %v7519, 0
        %7526 = vmatprep.subr.mxu0 0.0
        %7527 = vmatpush1.msra.mxu0 0.0
        %7528 = vmatprep.subr.mxu0 0.0
        %7529 = vmatpush1.msra.mxu0 0.0
        %7530 = vmatprep.subr.mxu0 0.0
        %7531 = vmatpush1.msra.mxu0 0.0
        %7532 = vmatprep.subr.mxu0 0.0
        %7533 = vmatpush1.msra.mxu0 0.0
        %7534 = vmatprep.subr.mxu0 0.0
        %7535 = vmatpush1.msra.mxu0 0.0
        %7536 = vmatprep.subr.mxu0 0.0
        %7537 = vmatpush1.msra.mxu0 0.0
        %7538 = vmatprep.subr.mxu0 0.0
        %7539 = vmatpush1.msra.mxu0 0.0
        %7540 = vmatprep.subr.mxu0 0.0
        %7541 = vmatpush1.msra.mxu0 0.0
        %7542 = vmatprep.subr.mxu0 0.0
        %7543 = vmatpush1.msra.mxu0 0.0
        %7544 = vmatprep.subr.mxu0 0.0
        %7545 = vmatpush1.msra.mxu0 0.0
        %7546 = vmatprep.subr.mxu0 0.0
        %7547 = vmatpush1.msra.mxu0 0.0
        %7548 = vmatprep.subr.mxu0 0.0
        %7549 = vmatpush1.msra.mxu0 0.0
        %7550 = vmatprep.subr.mxu0 0.0
        %7551 = vmatpush1.msra.mxu0 0.0
        %7552 = vmatprep.subr.mxu0 0.0
        %7553 = vmatpush1.msra.mxu0 0.0
        %7554 = vmatprep.subr.mxu0 0.0
        %7555 = vmatpush1.msra.mxu0 %v7514
        %7556 = vmatprep.subr.mxu0 0.0
        %7557 = vmatpush1.msra.mxu0 %v7511
        %7558 = vmatprep.subr.mxu0 0.0
        %7559 = vmatpush2.msra.mxu0 0.0
        %7560 = vmatprep.subr.mxu0 0.0
        %7561 = vmatpush2.msra.mxu0 0.0
        %7562 = vmatprep.subr.mxu0 0.0
        %7563 = vmatpush2.msra.mxu0 0.0
        %7564 = vmatprep.subr.mxu0 0.0
        %7565 = vmatpush2.msra.mxu0 0.0
        %7566 = vmatprep.subr.mxu0 0.0
        %7567 = vmatpush2.msra.mxu0 0.0
        %7568 = vmatprep.subr.mxu0 0.0
        %7569 = vmatpush2.msra.mxu0 0.0
        %7570 = vmatprep.subr.mxu0 0.0
        %7571 = vmatpush2.msra.mxu0 0.0
        %7572 = vmatprep.subr.mxu0 0.0
        %7573 = vmatpush2.msra.mxu0 0.0
        %7574 = vmatprep.subr.mxu0 0.0
        %7575 = vmatpush2.msra.mxu0 0.0
        %7576 = vmatprep.subr.mxu0 0.0
        %7577 = vmatpush2.msra.mxu0 0.0
        %7578 = vmatprep.subr.mxu0 0.0
        %7579 = vmatpush2.msra.mxu0 0.0
        %7580 = vmatprep.subr.mxu0 0.0
        %7581 = vmatpush2.msra.mxu0 0.0
        %7582 = vmatprep.subr.mxu0 0.0
        %7583 = vmatpush2.msra.mxu0 0.0
        %7584 = vmatprep.subr.mxu0 0.0
        %7585 = vmatpush2.msra.mxu0 0.0
        %7586 = vmatprep.subr.mxu0 0.0
        %7587 = vmatpush2.msra.mxu0 0.0
        %7588 = vmatprep.subr.mxu0 0.0
        %7589 = vmatpush2.msra.mxu0 0.0
        %7590 = vmatprep.mubr.f32.mxu0 0.0
        %7591 = vmatmul.mubr.f32.gmra.mxu0 %v7521
        %v7592 = vpop.f32.mrf.mxu0
        %v7593 = vadd.f32 0.0, %v7592
        %v7594 = vpop.f32.mrf.mxu0
        %7595 = vmatprep.mubr.f32.mxu0 0.0
        %7596 = vmatmul.mubr.f32.gmra.mxu0 %v7524
        %v7597 = vpop.f32.mrf.mxu0
        %v7598 = vadd.f32 0.0, %v7597
        %v7599 = vpop.f32.mrf.mxu0
        %7600 = vdwg.mxu0
        %v7601 = vadd.f32 %v7435, %v7593
        %v7602 = vadd.f32 %v7440, %v7598
        %s7603 = scalar_lea.vmem %s27, 96
        %v7604 = vld [vmem:[%s7603] sm:$0xf]
        %v7605 = vld [vmem:[%s7603 + $0x4] sm:$0xf]
        %v7606 = vld [vmem:[%s7603 + $0x8] sm:$0xf]
        %v7607 = vld [vmem:[%s7603 + $0xc] sm:$0xf]
        %v7608 = vld [vmem:[%s7603 + $0x10] sm:$0xf]
        %v7609 = vld [vmem:[%s7603 + $0x14] sm:$0xf]
        %v7610 = vld [vmem:[%s7603 + $0x18] sm:$0xf]
        %v7611 = vld [vmem:[%s7603 + $0x1c] sm:$0xf]
        %v7620 = vunpack.c.l.b16 %v7604
        %v7621 = vunpack.c.l.b16 %v7605
        %v7622 = vunpack.c.l.b16 %v7606
        %v7623 = vunpack.c.l.b16 %v7607
        %v7624 = vunpack.c.l.b16 %v7608
        %v7625 = vunpack.c.l.b16 %v7609
        %v7626 = vunpack.c.l.b16 %v7610
        %v7627 = vunpack.c.l.b16 %v7611
        %v7628 = vpack.c.b16 %v7621, %v7620
        %v7629 = vpack.c.b16 %v7623, %v7622
        %v7630 = vpack.c.b16 %v7625, %v7624
        %v7631 = vpack.c.b16 %v7627, %v7626
        %7636 = vmatprep.subr.bf16.mxu0 0
        %7637 = vmatpush1.bf16.msra.mxu0 0
        %7638 = vmatprep.subr.bf16.mxu0 0
        %7639 = vmatpush1.bf16.msra.mxu0 0
        %7640 = vmatprep.subr.bf16.mxu0 0
        %7641 = vmatpush1.bf16.msra.mxu0 0
        %7642 = vmatprep.subr.bf16.mxu0 0
        %7643 = vmatpush1.bf16.msra.mxu0 0
        %7644 = vmatprep.subr.bf16.mxu0 0
        %7645 = vmatpush1.bf16.msra.mxu0 %v7631
        %7646 = vmatprep.subr.bf16.mxu0 0
        %7647 = vmatpush1.bf16.msra.mxu0 %v7630
        %7648 = vmatprep.subr.bf16.mxu0 0
        %7649 = vmatpush1.bf16.msra.mxu0 %v7629
        %7650 = vmatprep.subr.bf16.mxu0 0
        %7651 = vmatpush1.bf16.msra.mxu0 %v7628
        %7652 = vmatprep.subr.bf16.mxu0 0
        %7653 = vmatpush2.bf16.msra.mxu0 0
        %7654 = vmatprep.subr.bf16.mxu0 0
        %7655 = vmatpush2.bf16.msra.mxu0 0
        %7656 = vmatprep.subr.bf16.mxu0 0
        %7657 = vmatpush2.bf16.msra.mxu0 0
        %7658 = vmatprep.subr.bf16.mxu0 0
        %7659 = vmatpush2.bf16.msra.mxu0 0
        %7660 = vmatprep.subr.bf16.mxu0 0
        %7661 = vmatpush2.bf16.msra.mxu0 0
        %7662 = vmatprep.subr.bf16.mxu0 0
        %7663 = vmatpush2.bf16.msra.mxu0 0
        %7664 = vmatprep.subr.bf16.mxu0 0
        %7665 = vmatpush2.bf16.msra.mxu0 0
        %7666 = vmatprep.subr.bf16.mxu0 0
        %7667 = vmatpush2.bf16.msra.mxu0 0
        %7668 = vmatprep.mubr.bf16.mxu0 0
        %7669 = vmatmul.mubr.bf16.gmra.mxu0 %v7159
        %v7670 = vpop.f32.mrf.mxu0
        %v7671 = vadd.f32 0.0, %v7670
        %v7672 = vpop.f32.mrf.mxu0
        %v7673 = vpop.f32.mrf.mxu0
        %v7674 = vadd.f32 0.0, %v7673
        %v7675 = vpop.f32.mrf.mxu0
        %7676 = vdwg.mxu0
        %v7677 = vadd.f32 %v7601, %v7671
        %v7678 = vadd.f32 %v7602, %v7674
        %s7679 = scalar_lea.vmem %s27, 128
        %v7680 = vld [vmem:[%s7679] sm:$0xf]
        %v7681 = vld [vmem:[%s7679 + $0x4] sm:$0xf]
        %v7682 = vld [vmem:[%s7679 + $0x8] sm:$0xf]
        %v7683 = vld [vmem:[%s7679 + $0xc] sm:$0xf]
        %v7684 = vld [vmem:[%s7679 + $0x10] sm:$0xf]
        %v7685 = vld [vmem:[%s7679 + $0x14] sm:$0xf]
        %v7686 = vld [vmem:[%s7679 + $0x18] sm:$0xf]
        %v7687 = vld [vmem:[%s7679 + $0x1c] sm:$0xf]
        %v7696 = vunpack.c.l.b16 %v7680
        %v7697 = vunpack.c.l.b16 %v7681
        %v7698 = vunpack.c.l.b16 %v7682
        %v7699 = vunpack.c.l.b16 %v7683
        %v7700 = vunpack.c.l.b16 %v7684
        %v7701 = vunpack.c.l.b16 %v7685
        %v7702 = vunpack.c.l.b16 %v7686
        %v7703 = vunpack.c.l.b16 %v7687
        %v7704 = vpack.c.b16 %v7697, %v7696
        %v7705 = vpack.c.b16 %v7699, %v7698
        %v7706 = vpack.c.b16 %v7701, %v7700
        %v7707 = vpack.c.b16 %v7703, %v7702
        %7712 = vmatprep.subr.bf16.mxu0 0
        %7713 = vmatpush1.bf16.msra.mxu0 0
        %7714 = vmatprep.subr.bf16.mxu0 0
        %7715 = vmatpush1.bf16.msra.mxu0 0
        %7716 = vmatprep.subr.bf16.mxu0 0
        %7717 = vmatpush1.bf16.msra.mxu0 0
        %7718 = vmatprep.subr.bf16.mxu0 0
        %7719 = vmatpush1.bf16.msra.mxu0 0
        %7720 = vmatprep.subr.bf16.mxu0 0
        %7721 = vmatpush1.bf16.msra.mxu0 %v7707
        %7722 = vmatprep.subr.bf16.mxu0 0
        %7723 = vmatpush1.bf16.msra.mxu0 %v7706
        %7724 = vmatprep.subr.bf16.mxu0 0
        %7725 = vmatpush1.bf16.msra.mxu0 %v7705
        %7726 = vmatprep.subr.bf16.mxu0 0
        %7727 = vmatpush1.bf16.msra.mxu0 %v7704
        %7728 = vmatprep.subr.bf16.mxu0 0
        %7729 = vmatpush2.bf16.msra.mxu0 0
        %7730 = vmatprep.subr.bf16.mxu0 0
        %7731 = vmatpush2.bf16.msra.mxu0 0
        %7732 = vmatprep.subr.bf16.mxu0 0
        %7733 = vmatpush2.bf16.msra.mxu0 0
        %7734 = vmatprep.subr.bf16.mxu0 0
        %7735 = vmatpush2.bf16.msra.mxu0 0
        %7736 = vmatprep.subr.bf16.mxu0 0
        %7737 = vmatpush2.bf16.msra.mxu0 0
        %7738 = vmatprep.subr.bf16.mxu0 0
        %7739 = vmatpush2.bf16.msra.mxu0 0
        %7740 = vmatprep.subr.bf16.mxu0 0
        %7741 = vmatpush2.bf16.msra.mxu0 0
        %7742 = vmatprep.subr.bf16.mxu0 0
        %7743 = vmatpush2.bf16.msra.mxu0 0
        %7744 = vmatprep.mubr.bf16.mxu0 0
        %7745 = vmatmul.mubr.bf16.gmra.mxu0 %v7159
        %v7746 = vpop.f32.mrf.mxu0
        %v7747 = vadd.f32 0.0, %v7746
        %v7748 = vpop.f32.mrf.mxu0
        %v7749 = vpop.f32.mrf.mxu0
        %v7750 = vadd.f32 0.0, %v7749
        %v7751 = vpop.f32.mrf.mxu0
        %7752 = vdwg.mxu0
        %s7753 = scalar_lea.vmem %s29, 48
        %v7754 = vld [vmem:[%s7753] sm:$0xff]
        %v7755 = vld [vmem:[%s7753 + $0x8] sm:$0xff]
        %v7757 = vsel %vm4937, %v7754, 0
        %v7760 = vsel %vm4937, %v7755, 0
        %7762 = vmatprep.subr.mxu0 0.0
        %7763 = vmatpush1.msra.mxu0 0.0
        %7764 = vmatprep.subr.mxu0 0.0
        %7765 = vmatpush1.msra.mxu0 0.0
        %7766 = vmatprep.subr.mxu0 0.0
        %7767 = vmatpush1.msra.mxu0 0.0
        %7768 = vmatprep.subr.mxu0 0.0
        %7769 = vmatpush1.msra.mxu0 0.0
        %7770 = vmatprep.subr.mxu0 0.0
        %7771 = vmatpush1.msra.mxu0 0.0
        %7772 = vmatprep.subr.mxu0 0.0
        %7773 = vmatpush1.msra.mxu0 0.0
        %7774 = vmatprep.subr.mxu0 0.0
        %7775 = vmatpush1.msra.mxu0 0.0
        %7776 = vmatprep.subr.mxu0 0.0
        %7777 = vmatpush1.msra.mxu0 0.0
        %7778 = vmatprep.subr.mxu0 0.0
        %7779 = vmatpush1.msra.mxu0 0.0
        %7780 = vmatprep.subr.mxu0 0.0
        %7781 = vmatpush1.msra.mxu0 0.0
        %7782 = vmatprep.subr.mxu0 0.0
        %7783 = vmatpush1.msra.mxu0 0.0
        %7784 = vmatprep.subr.mxu0 0.0
        %7785 = vmatpush1.msra.mxu0 0.0
        %7786 = vmatprep.subr.mxu0 0.0
        %7787 = vmatpush1.msra.mxu0 0.0
        %7788 = vmatprep.subr.mxu0 0.0
        %7789 = vmatpush1.msra.mxu0 0.0
        %7790 = vmatprep.subr.mxu0 0.0
        %7791 = vmatpush1.msra.mxu0 %v7750
        %7792 = vmatprep.subr.mxu0 0.0
        %7793 = vmatpush1.msra.mxu0 %v7747
        %7794 = vmatprep.subr.mxu0 0.0
        %7795 = vmatpush2.msra.mxu0 0.0
        %7796 = vmatprep.subr.mxu0 0.0
        %7797 = vmatpush2.msra.mxu0 0.0
        %7798 = vmatprep.subr.mxu0 0.0
        %7799 = vmatpush2.msra.mxu0 0.0
        %7800 = vmatprep.subr.mxu0 0.0
        %7801 = vmatpush2.msra.mxu0 0.0
        %7802 = vmatprep.subr.mxu0 0.0
        %7803 = vmatpush2.msra.mxu0 0.0
        %7804 = vmatprep.subr.mxu0 0.0
        %7805 = vmatpush2.msra.mxu0 0.0
        %7806 = vmatprep.subr.mxu0 0.0
        %7807 = vmatpush2.msra.mxu0 0.0
        %7808 = vmatprep.subr.mxu0 0.0
        %7809 = vmatpush2.msra.mxu0 0.0
        %7810 = vmatprep.subr.mxu0 0.0
        %7811 = vmatpush2.msra.mxu0 0.0
        %7812 = vmatprep.subr.mxu0 0.0
        %7813 = vmatpush2.msra.mxu0 0.0
        %7814 = vmatprep.subr.mxu0 0.0
        %7815 = vmatpush2.msra.mxu0 0.0
        %7816 = vmatprep.subr.mxu0 0.0
        %7817 = vmatpush2.msra.mxu0 0.0
        %7818 = vmatprep.subr.mxu0 0.0
        %7819 = vmatpush2.msra.mxu0 0.0
        %7820 = vmatprep.subr.mxu0 0.0
        %7821 = vmatpush2.msra.mxu0 0.0
        %7822 = vmatprep.subr.mxu0 0.0
        %7823 = vmatpush2.msra.mxu0 0.0
        %7824 = vmatprep.subr.mxu0 0.0
        %7825 = vmatpush2.msra.mxu0 0.0
        %7826 = vmatprep.mubr.f32.mxu0 0.0
        %7827 = vmatmul.mubr.f32.gmra.mxu0 %v7757
        %v7828 = vpop.f32.mrf.mxu0
        %v7829 = vadd.f32 0.0, %v7828
        %v7830 = vpop.f32.mrf.mxu0
        %7831 = vmatprep.mubr.f32.mxu0 0.0
        %7832 = vmatmul.mubr.f32.gmra.mxu0 %v7760
        %v7833 = vpop.f32.mrf.mxu0
        %v7834 = vadd.f32 0.0, %v7833
        %v7835 = vpop.f32.mrf.mxu0
        %7836 = vdwg.mxu0
        %v7837 = vadd.f32 %v7677, %v7829
        %v7838 = vadd.f32 %v7678, %v7834
        %s7839 = scalar_lea.vmem %s27, 160
        %v7840 = vld [vmem:[%s7839] sm:$0xf]
        %v7841 = vld [vmem:[%s7839 + $0x4] sm:$0xf]
        %v7842 = vld [vmem:[%s7839 + $0x8] sm:$0xf]
        %v7843 = vld [vmem:[%s7839 + $0xc] sm:$0xf]
        %v7844 = vld [vmem:[%s7839 + $0x10] sm:$0xf]
        %v7845 = vld [vmem:[%s7839 + $0x14] sm:$0xf]
        %v7846 = vld [vmem:[%s7839 + $0x18] sm:$0xf]
        %v7847 = vld [vmem:[%s7839 + $0x1c] sm:$0xf]
        %v7856 = vunpack.c.l.b16 %v7840
        %v7857 = vunpack.c.l.b16 %v7841
        %v7858 = vunpack.c.l.b16 %v7842
        %v7859 = vunpack.c.l.b16 %v7843
        %v7860 = vunpack.c.l.b16 %v7844
        %v7861 = vunpack.c.l.b16 %v7845
        %v7862 = vunpack.c.l.b16 %v7846
        %v7863 = vunpack.c.l.b16 %v7847
        %v7864 = vpack.c.b16 %v7857, %v7856
        %v7865 = vpack.c.b16 %v7859, %v7858
        %v7866 = vpack.c.b16 %v7861, %v7860
        %v7867 = vpack.c.b16 %v7863, %v7862
        %7872 = vmatprep.subr.bf16.mxu0 0
        %7873 = vmatpush1.bf16.msra.mxu0 0
        %7874 = vmatprep.subr.bf16.mxu0 0
        %7875 = vmatpush1.bf16.msra.mxu0 0
        %7876 = vmatprep.subr.bf16.mxu0 0
        %7877 = vmatpush1.bf16.msra.mxu0 0
        %7878 = vmatprep.subr.bf16.mxu0 0
        %7879 = vmatpush1.bf16.msra.mxu0 0
        %7880 = vmatprep.subr.bf16.mxu0 0
        %7881 = vmatpush1.bf16.msra.mxu0 %v7867
        %7882 = vmatprep.subr.bf16.mxu0 0
        %7883 = vmatpush1.bf16.msra.mxu0 %v7866
        %7884 = vmatprep.subr.bf16.mxu0 0
        %7885 = vmatpush1.bf16.msra.mxu0 %v7865
        %7886 = vmatprep.subr.bf16.mxu0 0
        %7887 = vmatpush1.bf16.msra.mxu0 %v7864
        %7888 = vmatprep.subr.bf16.mxu0 0
        %7889 = vmatpush2.bf16.msra.mxu0 0
        %7890 = vmatprep.subr.bf16.mxu0 0
        %7891 = vmatpush2.bf16.msra.mxu0 0
        %7892 = vmatprep.subr.bf16.mxu0 0
        %7893 = vmatpush2.bf16.msra.mxu0 0
        %7894 = vmatprep.subr.bf16.mxu0 0
        %7895 = vmatpush2.bf16.msra.mxu0 0
        %7896 = vmatprep.subr.bf16.mxu0 0
        %7897 = vmatpush2.bf16.msra.mxu0 0
        %7898 = vmatprep.subr.bf16.mxu0 0
        %7899 = vmatpush2.bf16.msra.mxu0 0
        %7900 = vmatprep.subr.bf16.mxu0 0
        %7901 = vmatpush2.bf16.msra.mxu0 0
        %7902 = vmatprep.subr.bf16.mxu0 0
        %7903 = vmatpush2.bf16.msra.mxu0 0
        %7904 = vmatprep.mubr.bf16.mxu0 0
        %7905 = vmatmul.mubr.bf16.gmra.mxu0 %v7159
        %v7906 = vpop.f32.mrf.mxu0
        %v7907 = vadd.f32 0.0, %v7906
        %v7908 = vpop.f32.mrf.mxu0
        %v7909 = vpop.f32.mrf.mxu0
        %v7910 = vadd.f32 0.0, %v7909
        %v7911 = vpop.f32.mrf.mxu0
        %7912 = vdwg.mxu0
        %s7913 = scalar_lea.vmem %s29, 64
        %v7914 = vld [vmem:[%s7913] sm:$0xff]
        %v7915 = vld [vmem:[%s7913 + $0x8] sm:$0xff]
        %v7917 = vsel %vm4937, %v7914, 0
        %v7920 = vsel %vm4937, %v7915, 0
        %7922 = vmatprep.subr.mxu0 0.0
        %7923 = vmatpush1.msra.mxu0 0.0
        %7924 = vmatprep.subr.mxu0 0.0
        %7925 = vmatpush1.msra.mxu0 0.0
        %7926 = vmatprep.subr.mxu0 0.0
        %7927 = vmatpush1.msra.mxu0 0.0
        %7928 = vmatprep.subr.mxu0 0.0
        %7929 = vmatpush1.msra.mxu0 0.0
        %7930 = vmatprep.subr.mxu0 0.0
        %7931 = vmatpush1.msra.mxu0 0.0
        %7932 = vmatprep.subr.mxu0 0.0
        %7933 = vmatpush1.msra.mxu0 0.0
        %7934 = vmatprep.subr.mxu0 0.0
        %7935 = vmatpush1.msra.mxu0 0.0
        %7936 = vmatprep.subr.mxu0 0.0
        %7937 = vmatpush1.msra.mxu0 0.0
        %7938 = vmatprep.subr.mxu0 0.0
        %7939 = vmatpush1.msra.mxu0 0.0
        %7940 = vmatprep.subr.mxu0 0.0
        %7941 = vmatpush1.msra.mxu0 0.0
        %7942 = vmatprep.subr.mxu0 0.0
        %7943 = vmatpush1.msra.mxu0 0.0
        %7944 = vmatprep.subr.mxu0 0.0
        %7945 = vmatpush1.msra.mxu0 0.0
        %7946 = vmatprep.subr.mxu0 0.0
        %7947 = vmatpush1.msra.mxu0 0.0
        %7948 = vmatprep.subr.mxu0 0.0
        %7949 = vmatpush1.msra.mxu0 0.0
        %7950 = vmatprep.subr.mxu0 0.0
        %7951 = vmatpush1.msra.mxu0 %v7910
        %7952 = vmatprep.subr.mxu0 0.0
        %7953 = vmatpush1.msra.mxu0 %v7907
        %7954 = vmatprep.subr.mxu0 0.0
        %7955 = vmatpush2.msra.mxu0 0.0
        %7956 = vmatprep.subr.mxu0 0.0
        %7957 = vmatpush2.msra.mxu0 0.0
        %7958 = vmatprep.subr.mxu0 0.0
        %7959 = vmatpush2.msra.mxu0 0.0
        %7960 = vmatprep.subr.mxu0 0.0
        %7961 = vmatpush2.msra.mxu0 0.0
        %7962 = vmatprep.subr.mxu0 0.0
        %7963 = vmatpush2.msra.mxu0 0.0
        %7964 = vmatprep.subr.mxu0 0.0
        %7965 = vmatpush2.msra.mxu0 0.0
        %7966 = vmatprep.subr.mxu0 0.0
        %7967 = vmatpush2.msra.mxu0 0.0
        %7968 = vmatprep.subr.mxu0 0.0
        %7969 = vmatpush2.msra.mxu0 0.0
        %7970 = vmatprep.subr.mxu0 0.0
        %7971 = vmatpush2.msra.mxu0 0.0
        %7972 = vmatprep.subr.mxu0 0.0
        %7973 = vmatpush2.msra.mxu0 0.0
        %7974 = vmatprep.subr.mxu0 0.0
        %7975 = vmatpush2.msra.mxu0 0.0
        %7976 = vmatprep.subr.mxu0 0.0
        %7977 = vmatpush2.msra.mxu0 0.0
        %7978 = vmatprep.subr.mxu0 0.0
        %7979 = vmatpush2.msra.mxu0 0.0
        %7980 = vmatprep.subr.mxu0 0.0
        %7981 = vmatpush2.msra.mxu0 0.0
        %7982 = vmatprep.subr.mxu0 0.0
        %7983 = vmatpush2.msra.mxu0 0.0
        %7984 = vmatprep.subr.mxu0 0.0
        %7985 = vmatpush2.msra.mxu0 0.0
        %7986 = vmatprep.mubr.f32.mxu0 0.0
        %7987 = vmatmul.mubr.f32.gmra.mxu0 %v7917
        %v7988 = vpop.f32.mrf.mxu0
        %v7989 = vadd.f32 0.0, %v7988
        %v7990 = vpop.f32.mrf.mxu0
        %7991 = vmatprep.mubr.f32.mxu0 0.0
        %7992 = vmatmul.mubr.f32.gmra.mxu0 %v7920
        %v7993 = vpop.f32.mrf.mxu0
        %v7994 = vadd.f32 0.0, %v7993
        %v7995 = vpop.f32.mrf.mxu0
        %7996 = vdwg.mxu0
        %v7997 = vadd.f32 %v7837, %v7989
        %v7998 = vadd.f32 %v7838, %v7994
        %s7999 = scalar_lea.vmem %s27, 192
        %v8000 = vld [vmem:[%s7999] sm:$0xf]
        %v8001 = vld [vmem:[%s7999 + $0x4] sm:$0xf]
        %v8002 = vld [vmem:[%s7999 + $0x8] sm:$0xf]
        %v8003 = vld [vmem:[%s7999 + $0xc] sm:$0xf]
        %v8004 = vld [vmem:[%s7999 + $0x10] sm:$0xf]
        %v8005 = vld [vmem:[%s7999 + $0x14] sm:$0xf]
        %v8006 = vld [vmem:[%s7999 + $0x18] sm:$0xf]
        %v8007 = vld [vmem:[%s7999 + $0x1c] sm:$0xf]
        %v8016 = vunpack.c.l.b16 %v8000
        %v8017 = vunpack.c.l.b16 %v8001
        %v8018 = vunpack.c.l.b16 %v8002
        %v8019 = vunpack.c.l.b16 %v8003
        %v8020 = vunpack.c.l.b16 %v8004
        %v8021 = vunpack.c.l.b16 %v8005
        %v8022 = vunpack.c.l.b16 %v8006
        %v8023 = vunpack.c.l.b16 %v8007
        %v8024 = vpack.c.b16 %v8017, %v8016
        %v8025 = vpack.c.b16 %v8019, %v8018
        %v8026 = vpack.c.b16 %v8021, %v8020
        %v8027 = vpack.c.b16 %v8023, %v8022
        %8032 = vmatprep.subr.bf16.mxu0 0
        %8033 = vmatpush1.bf16.msra.mxu0 0
        %8034 = vmatprep.subr.bf16.mxu0 0
        %8035 = vmatpush1.bf16.msra.mxu0 0
        %8036 = vmatprep.subr.bf16.mxu0 0
        %8037 = vmatpush1.bf16.msra.mxu0 0
        %8038 = vmatprep.subr.bf16.mxu0 0
        %8039 = vmatpush1.bf16.msra.mxu0 0
        %8040 = vmatprep.subr.bf16.mxu0 0
        %8041 = vmatpush1.bf16.msra.mxu0 %v8027
        %8042 = vmatprep.subr.bf16.mxu0 0
        %8043 = vmatpush1.bf16.msra.mxu0 %v8026
        %8044 = vmatprep.subr.bf16.mxu0 0
        %8045 = vmatpush1.bf16.msra.mxu0 %v8025
        %8046 = vmatprep.subr.bf16.mxu0 0
        %8047 = vmatpush1.bf16.msra.mxu0 %v8024
        %8048 = vmatprep.subr.bf16.mxu0 0
        %8049 = vmatpush2.bf16.msra.mxu0 0
        %8050 = vmatprep.subr.bf16.mxu0 0
        %8051 = vmatpush2.bf16.msra.mxu0 0
        %8052 = vmatprep.subr.bf16.mxu0 0
        %8053 = vmatpush2.bf16.msra.mxu0 0
        %8054 = vmatprep.subr.bf16.mxu0 0
        %8055 = vmatpush2.bf16.msra.mxu0 0
        %8056 = vmatprep.subr.bf16.mxu0 0
        %8057 = vmatpush2.bf16.msra.mxu0 0
        %8058 = vmatprep.subr.bf16.mxu0 0
        %8059 = vmatpush2.bf16.msra.mxu0 0
        %8060 = vmatprep.subr.bf16.mxu0 0
        %8061 = vmatpush2.bf16.msra.mxu0 0
        %8062 = vmatprep.subr.bf16.mxu0 0
        %8063 = vmatpush2.bf16.msra.mxu0 0
        %8064 = vmatprep.mubr.bf16.mxu0 0
        %8065 = vmatmul.mubr.bf16.gmra.mxu0 %v7159
        %v8066 = vpop.f32.mrf.mxu0
        %v8067 = vadd.f32 0.0, %v8066
        %v8068 = vpop.f32.mrf.mxu0
        %v8069 = vpop.f32.mrf.mxu0
        %v8070 = vadd.f32 0.0, %v8069
        %v8071 = vpop.f32.mrf.mxu0
        %8072 = vdwg.mxu0
        %s8073 = scalar_lea.vmem %s29, 80
        %v8074 = vld [vmem:[%s8073] sm:$0xff]
        %v8075 = vld [vmem:[%s8073 + $0x8] sm:$0xff]
        %v8077 = vsel %vm4937, %v8074, 0
        %v8080 = vsel %vm4937, %v8075, 0
        %8082 = vmatprep.subr.mxu0 0.0
        %8083 = vmatpush1.msra.mxu0 0.0
        %8084 = vmatprep.subr.mxu0 0.0
        %8085 = vmatpush1.msra.mxu0 0.0
        %8086 = vmatprep.subr.mxu0 0.0
        %8087 = vmatpush1.msra.mxu0 0.0
        %8088 = vmatprep.subr.mxu0 0.0
        %8089 = vmatpush1.msra.mxu0 0.0
        %8090 = vmatprep.subr.mxu0 0.0
        %8091 = vmatpush1.msra.mxu0 0.0
        %8092 = vmatprep.subr.mxu0 0.0
        %8093 = vmatpush1.msra.mxu0 0.0
        %8094 = vmatprep.subr.mxu0 0.0
        %8095 = vmatpush1.msra.mxu0 0.0
        %8096 = vmatprep.subr.mxu0 0.0
        %8097 = vmatpush1.msra.mxu0 0.0
        %8098 = vmatprep.subr.mxu0 0.0
        %8099 = vmatpush1.msra.mxu0 0.0
        %8100 = vmatprep.subr.mxu0 0.0
        %8101 = vmatpush1.msra.mxu0 0.0
        %8102 = vmatprep.subr.mxu0 0.0
        %8103 = vmatpush1.msra.mxu0 0.0
        %8104 = vmatprep.subr.mxu0 0.0
        %8105 = vmatpush1.msra.mxu0 0.0
        %8106 = vmatprep.subr.mxu0 0.0
        %8107 = vmatpush1.msra.mxu0 0.0
        %8108 = vmatprep.subr.mxu0 0.0
        %8109 = vmatpush1.msra.mxu0 0.0
        %8110 = vmatprep.subr.mxu0 0.0
        %8111 = vmatpush1.msra.mxu0 %v8070
        %8112 = vmatprep.subr.mxu0 0.0
        %8113 = vmatpush1.msra.mxu0 %v8067
        %8114 = vmatprep.subr.mxu0 0.0
        %8115 = vmatpush2.msra.mxu0 0.0
        %8116 = vmatprep.subr.mxu0 0.0
        %8117 = vmatpush2.msra.mxu0 0.0
        %8118 = vmatprep.subr.mxu0 0.0
        %8119 = vmatpush2.msra.mxu0 0.0
        %8120 = vmatprep.subr.mxu0 0.0
        %8121 = vmatpush2.msra.mxu0 0.0
        %8122 = vmatprep.subr.mxu0 0.0
        %8123 = vmatpush2.msra.mxu0 0.0
        %8124 = vmatprep.subr.mxu0 0.0
        %8125 = vmatpush2.msra.mxu0 0.0
        %8126 = vmatprep.subr.mxu0 0.0
        %8127 = vmatpush2.msra.mxu0 0.0
        %8128 = vmatprep.subr.mxu0 0.0
        %8129 = vmatpush2.msra.mxu0 0.0
        %8130 = vmatprep.subr.mxu0 0.0
        %8131 = vmatpush2.msra.mxu0 0.0
        %8132 = vmatprep.subr.mxu0 0.0
        %8133 = vmatpush2.msra.mxu0 0.0
        %8134 = vmatprep.subr.mxu0 0.0
        %8135 = vmatpush2.msra.mxu0 0.0
        %8136 = vmatprep.subr.mxu0 0.0
        %8137 = vmatpush2.msra.mxu0 0.0
        %8138 = vmatprep.subr.mxu0 0.0
        %8139 = vmatpush2.msra.mxu0 0.0
        %8140 = vmatprep.subr.mxu0 0.0
        %8141 = vmatpush2.msra.mxu0 0.0
        %8142 = vmatprep.subr.mxu0 0.0
        %8143 = vmatpush2.msra.mxu0 0.0
        %8144 = vmatprep.subr.mxu0 0.0
        %8145 = vmatpush2.msra.mxu0 0.0
        %8146 = vmatprep.mubr.f32.mxu0 0.0
        %8147 = vmatmul.mubr.f32.gmra.mxu0 %v8077
        %v8148 = vpop.f32.mrf.mxu0
        %v8149 = vadd.f32 0.0, %v8148
        %v8150 = vpop.f32.mrf.mxu0
        %8151 = vmatprep.mubr.f32.mxu0 0.0
        %8152 = vmatmul.mubr.f32.gmra.mxu0 %v8080
        %v8153 = vpop.f32.mrf.mxu0
        %v8154 = vadd.f32 0.0, %v8153
        %v8155 = vpop.f32.mrf.mxu0
        %8156 = vdwg.mxu0
        %v8157 = vadd.f32 %v7997, %v8149
        %v8158 = vadd.f32 %v7998, %v8154
        %v8159 = vld [vmem:[#allocation7] sm:$0x1]
        %v8161 = vlaneseq
        %v8162 = vshrl.u32 %v8161, 7
        %v8163 = vsub.s32 0, %v8162
        %v8164 = vrot.slane %v8159, %v8163
        %v8166 = vadd.f32 %v8157, %v8164
        %v8167 = vadd.f32 %v8158, %v8164
        %8170 = vrot.lane.b32.xlu0 %v8166, 16
        %v8171 = vpop.permute.xlu0 %8170
        %8172 = vrot.lane.b32.xlu0 %v8167, 16
        %v8173 = vpop.permute.xlu0 %8172
        %v8176 = vsub.f32 %v8166, %v8171
        %v8177 = vsub.f32 %v8167, %v8173
        %v8178 = vsub.f32 0.0, %v8176
        %v8179 = vsub.f32 0.0, %v8177
        %v8180 = vmul.f32 %v8178, 1.442695
        %v8181 = vpow.pop %v8180
        %v8182 = vmul.f32 %v8179, 1.442695
        %v8183 = vpow.pop %v8182
        %v8184 = vadd.f32 %v8181, 1.0
        %v8185 = vadd.f32 %v8183, 1.0
        %v8186 = vrcp.pop %v8184
        %v8187 = vmul.f32 1.0, %v8186
        %v8188 = vrcp.pop %v8185
        %v8189 = vmul.f32 1.0, %v8188
        %v8190 = vsub.f32 1.0, %v8187
        %v8191 = vsub.f32 1.0, %v8189
        %8194 = vrot.lane.b32.xlu0 %v8190, 112
        %v8195 = vpop.permute.xlu0 %8194
        %8196 = vrot.lane.b32.xlu0 %v8191, 112
        %v8197 = vpop.permute.xlu0 %8196
        %8200 = vst.msk [vmem:[%s1938] sm:$0xff] %vm4937, %v8195
        %8201 = vst.msk [vmem:[%s1938 + $0x8] sm:$0xff] %vm4937, %v8197
        %8204 = vrot.lane.b32.xlu0 %v8187, 112
        %v8205 = vpop.permute.xlu0 %8204
        %8206 = vrot.lane.b32.xlu0 %v8189, 112
        %v8207 = vpop.permute.xlu0 %8206
        %s8210 = scalar_lea.vmem %s1938, 16 [#allocation46]
        %8211 = vst.msk [vmem:[%s8210] sm:$0xff] %vm4937, %v8205
        %8212 = vst.msk [vmem:[%s8210 + $0x8] sm:$0xff] %vm4937, %v8207
        %s8213 = sand.u32 %s1249, 1
        %s8214 = scalar_lea.sflag [#allocation4], %s8213
        %s8215 = sand.u32 %s1249, 1
        %s8216 = smul.addr %s8215, 32
        %s8217 = scalar_lea.vmem [#allocation46], %s8216
        // Predicated region
        $region341: #{unet_forward.1} parent=227 // pred_check
          %p8218 = pneg %p1259
        $region342: #{unet_forward.1} parent=227 // pred_check_branch
          %8220 = sbr.rel (%p8218) target = $region344
        $region343: #{unet_forward.1} parent=227 // pred_region
          %s8222 = ssub.s32 512, 512
          %8223 = vsyncadd %s8214, %s8222
          %s8224 = smul.addr %s134, 4
          %s8225 = smul.addr %s8224, 128
          %s8226 = scalar_lea.hbm %s105, %s8225
          %s8227 = sshll.u32 %s8217, 4
          %s8228 = int_to_ptr.vmem [resolvable:$true] %s8227
          %8233 = dma.vmem_to_hbm [thread:$0]  %s8228, 512, %s8226, %s8214, 128, 128, 8
        $region344: #{unet_forward.1} parent=227 // pred_fallthru
          _
      $region228: #{unet_forward.1} parent=5 // pred_fallthru
        _
      %p8234 = scmp.le.s32.totalorder 2, %s129
      // Predicated region
      $region345: #{unet_forward.1} parent=5 // pred_check
        %p8235 = pneg %p8234
      $region346: #{unet_forward.1} parent=5 // pred_check_branch
        %8237 = sbr.rel (%p8235) target = $region348
      $region347: #{unet_forward.1} parent=5 // pred_region
        %s8238 = ssub.s32 %s129, 2
        // Predicated region
        $region349: #{unet_forward.1} parent=347 // pred_check
          %p8239 = pneg %p1265
        $region350: #{unet_forward.1} parent=347 // pred_check_branch
          %8241 = sbr.rel (%p8239) target = $region352
        $region351: #{unet_forward.1} parent=347 // pred_region
          %s8242 = sand.u32 %s1250, 1
          %s8243 = scalar_lea.sflag [#allocation4], %s8242
          %s8244 = sand.u32 %s1250, 1
          %s8245 = smul.addr %s8244, 32
          %s8246 = scalar_lea.vmem [#allocation46], %s8245
          %8247 = dma.done %s8243, 512
        $region352: #{unet_forward.1} parent=347 // pred_fallthru
          _
      $region348: #{unet_forward.1} parent=5 // pred_fallthru
        _
    $region6: #{unet_forward.1} parent=1 // loop_footer
      %s133 = sadd.s32 1, %s129
    $region7: #{unet_forward.1} parent=1 // loop_footer_branch
      %128 = sbr.rel target = $region3
    $region8: #{unet_forward.1} parent=1 // loop_exit
      _
    %8248 = vsyncpa [#allocation3], 1
    %s8249 = scalar_lea.sflag [#allocation3], 1
    %8250 = vsyncpa %s8249, 1
    %8251 = vsyncpa [#allocation6], 1
    %8252 = vsyncpa [#allocation9], 1
    %8253 = vsyncpa [#allocation12], 1
    %8254 = vsyncpa [#allocation15], 1
    %8255 = vsyncpa [#allocation18], 1
    %8256 = vsyncpa [#allocation21], 1
    %8257 = vsyncpa [#allocation24], 1
    %8258 = vsyncpa [#allocation27], 1
    %8259 = vsyncpa [#allocation30], 1
    %8260 = vsyncpa [#allocation33], 1
    %8261 = vsyncpa [#allocation36], 1
    %8262 = vsyncpa [#allocation39], 1
    %8263 = vsyncpa [#allocation42], 1
    %8264 = vsyncpa [#allocation45], 1
    %8265 = vsyncpa [#allocation4], 1
    %s8266 = scalar_lea.sflag [#allocation4], 1
    %8267 = vsyncpa %s8266, 1

</llo_original>
